<compile_context>
chip_gen: v7x
topology: tpu7x:2x2x1
jax: 0.10.0
libtpu: 0.0.40
codegen_flags: <defaults>
</compile_context>

<pallas_src>
import jax
import jax.numpy as jnp
from jax.experimental import pallas as pl
from jax.experimental.pallas import tpu as pltpu

IN_DIM = 28 * 28      # 784 (PyTorch nn.Flatten output)
IN_PAD = 896          # 7 * 128: lane-aligned K for layer 1 (zero-padded)
HID = 1024
OUT_DIM = 10
OUT_PAD = 128         # lane-dense padded output width (unmasked vst)
MAX_TILE_B = 512      # cap keeps working set well under 32 MiB scoped VMEM (v7x-safe)


def _round_up(n, m):
    return ((n + m - 1) // m) * m


def _pick_tile_b(batch):
    """Adaptive batch tile: tiny tiles for tiny batches (v5e), big tiles + >=2
    grid steps for big batches (per-step overhead amortization, v7x megacore)."""
    rb = _round_up(max(batch, 1), 16)
    if rb <= 256:
        return rb
    return min(MAX_TILE_B, _round_up(-(-rb // 2), 16))


def fcnet_kernel(x_ref, w1_ref, b1_ref, w2_ref, b2_ref, w3_ref, b3_ref, o_ref):
    """One batch tile of the fused 3-layer MLP. Weights/biases are VMEM-resident."""
    # f32 -> bf16 cast happens here (free VPU work under the MXU), not in the wrapper.
    x = x_ref[...].astype(jnp.bfloat16)                                   # [TB, 896]
    # Layer 1: 896(=784 zero-padded) -> 1024, ReLU (f32 accumulation + bias/ReLU)
    h1 = jnp.dot(x, w1_ref[...], preferred_element_type=jnp.float32)      # [TB, 1024] f32
    h1 = jnp.maximum(h1 + b1_ref[...], 0.0)
    # Layer 2: 1024 -> 1024, ReLU
    h2 = jnp.dot(h1.astype(jnp.bfloat16), w2_ref[...],
                 preferred_element_type=jnp.float32)                      # [TB, 1024] f32
    h2 = jnp.maximum(h2 + b2_ref[...], 0.0)
    # Layer 3: 1024 -> 128 (zero-padded from 10), bf16 lane-dense store
    logits = jnp.dot(h2.astype(jnp.bfloat16), w3_ref[...],
                     preferred_element_type=jnp.float32) + b3_ref[...]    # [TB, 128] f32
    o_ref[...] = logits.astype(o_ref.dtype)


def prepare_params(params):
    """One-time conversion of PyTorch-layout params to kernel layout.

    PyTorch: W is [out, in] f32, b is [out] f32.
    Kernel:  W is [in, out] bf16 (w1 K-padded 784->896, w3 out-padded 10->128),
             b is [1, out] f32 (b3 padded to 128).
    """
    w1, b1, w2, b2, w3, b3 = params
    w1k = jnp.zeros((IN_PAD, HID), jnp.float32).at[:IN_DIM, :].set(w1.T)
    w1k = w1k.astype(jnp.bfloat16)                                  # [896, 1024]
    w2k = w2.T.astype(jnp.bfloat16)                                 # [1024, 1024]
    w3k = jnp.zeros((HID, OUT_PAD), jnp.float32).at[:, :OUT_DIM].set(w3.T)
    w3k = w3k.astype(jnp.bfloat16)                                  # [1024, 128]
    b1k = b1.reshape(1, -1).astype(jnp.float32)                     # [1, 1024]
    b2k = b2.reshape(1, -1).astype(jnp.float32)                     # [1, 1024]
    b3k = jnp.zeros((1, OUT_PAD), jnp.float32).at[0, :OUT_DIM].set(b3)   # [1, 128]
    return (w1k, b1k, w2k, b2k, w3k, b3k)


def fcnet_forward(x_nchw, kernel_params):
    """nn.Flatten (free reshape) + single fused Pallas call over a batch grid."""
    w1, b1, w2, b2, w3, b3 = kernel_params
    B = x_nchw.shape[0]
    x_flat = x_nchw.reshape(B, -1)                       # [B, 784] f32 (no wrapper cast)

    tile_b = _pick_tile_b(B)
    n_tiles = pl.cdiv(B, tile_b)
    Bp = n_tiles * tile_b
    # Single fused pad: batch rows -> Bp, feature dim 784 -> 896 (lane-aligned K).
    if Bp != B or IN_PAD != IN_DIM:
        x_flat = jnp.pad(x_flat, ((0, Bp - B), (0, IN_PAD - IN_DIM)))

    def resident(shape):
        # Same block every grid step: DMA'd once, VMEM-resident, single-buffered.
        return pl.BlockSpec(shape, lambda i: (0, 0), pipeline_mode=pl.Buffered(1))

    out = pl.pallas_call(
        fcnet_kernel,
        out_shape=jax.ShapeDtypeStruct((Bp, OUT_PAD), jnp.bfloat16),
        grid=(n_tiles,),
        in_specs=[
            pl.BlockSpec((tile_b, IN_PAD), lambda i: (i, 0)),   # x tile (double-buffered)
            resident((IN_PAD, HID)),                            # w1
            resident((1, HID)),                                 # b1
            resident((HID, HID)),                               # w2
            resident((1, HID)),                                 # b2
            resident((HID, OUT_PAD)),                           # w3 (padded)
            resident((1, OUT_PAD)),                             # b3 (padded)
        ],
        out_specs=pl.BlockSpec((tile_b, OUT_PAD), lambda i: (i, 0)),
        compiler_params=pltpu.CompilerParams(
            dimension_semantics=("parallel",),
            vmem_limit_bytes=32 * 1024 * 1024,
        ),
    )(x_flat, w1, b1, w2, b2, w3, b3)
    return out[:B, :OUT_DIM]                            # bf16 logits


def init_params(key):
    """Deterministic init matching PyTorch nn.Linear shapes: W is [out, in]."""
    dims = [(HID, IN_DIM), (HID, HID), (OUT_DIM, HID)]
    params = []
    for out_dim, in_dim in dims:
        key, kw, kb = jax.random.split(key, 3)
        bound = 1.0 / jnp.sqrt(in_dim)
        w = jax.random.uniform(kw, (out_dim, in_dim), jnp.float32, -bound, bound)
        b = jax.random.uniform(kb, (out_dim,), jnp.float32, -bound, bound)
        params += [w, b]
    return tuple(params)


def reference_forward(x_nchw, params):
    """Plain-JAX f32 reference mirroring the PyTorch forward (for verification)."""
    w1, b1, w2, b2, w3, b3 = params
    x = x_nchw.reshape(x_nchw.shape[0], -1)
    h = jnp.maximum(x @ w1.T + b1, 0.0)
    h = jnp.maximum(h @ w2.T + b2, 0.0)
    return h @ w3.T + b3


if __name__ == "__main__":
    key = jax.random.PRNGKey(0)
    key, kx = jax.random.split(key)

    B = 8  # small batch; MNIST-like input [B, 1, 28, 28]
    x = jax.random.normal(kx, (B, 1, 28, 28), dtype=jnp.float32)
    params = init_params(key)                 # PyTorch-layout f32 params
    kernel_params = prepare_params(params)    # one-time transpose/cast/pad

    logits = fcnet_forward(x, kernel_params)
    logits = jax.block_until_ready(logits)

    ref = reference_forward(x, params)
    assert logits.shape == (B, OUT_DIM)
    # bf16 matmul inputs + bf16 logits (f32 accumulation) vs f32 reference.
    assert jnp.allclose(logits.astype(jnp.float32), ref, atol=5e-2, rtol=5e-2), \
        "mismatch vs reference"

    print("KERNEL_OK")
</pallas_src>

<mosaic_0001>
module attributes {stable_mosaic.version = 11 : i64} {
  func.func @fcnet_kernel(%arg0: i32, %arg1: memref<16x896xf32, #tpu.memory_space<vmem>>, %arg2: memref<896x1024xbf16, #tpu.memory_space<vmem>>, %arg3: memref<1x1024xf32, #tpu.memory_space<vmem>>, %arg4: memref<1024x1024xbf16, #tpu.memory_space<vmem>>, %arg5: memref<1x1024xf32, #tpu.memory_space<vmem>>, %arg6: memref<1024x128xbf16, #tpu.memory_space<vmem>>, %arg7: memref<1x128xf32, #tpu.memory_space<vmem>>, %arg8: memref<16x128xbf16, #tpu.memory_space<vmem>>) attributes {dimension_semantics = [#tpu.dimension_semantics<parallel>], iteration_bounds = array<i64: 1>, scalar_prefetch = 0 : i64, scratch_operands = 0 : i64, tpu.core_type = #tpu.core_type<tc>, window_params = [{transform_indices = @transform_0, window_bounds = array<i64: 16, 896>}, {pipeline_mode = #tpu.pipeline_mode<synchronous>, transform_indices = @transform_1, window_bounds = array<i64: 896, 1024>}, {pipeline_mode = #tpu.pipeline_mode<synchronous>, transform_indices = @transform_2, window_bounds = array<i64: 1, 1024>}, {pipeline_mode = #tpu.pipeline_mode<synchronous>, transform_indices = @transform_3, window_bounds = array<i64: 1024, 1024>}, {pipeline_mode = #tpu.pipeline_mode<synchronous>, transform_indices = @transform_4, window_bounds = array<i64: 1, 1024>}, {pipeline_mode = #tpu.pipeline_mode<synchronous>, transform_indices = @transform_5, window_bounds = array<i64: 1024, 128>}, {pipeline_mode = #tpu.pipeline_mode<synchronous>, transform_indices = @transform_6, window_bounds = array<i64: 1, 128>}, {transform_indices = @transform_7, window_bounds = array<i64: 16, 128>}]} {
    %c0 = arith.constant 0 : index
    %c0_0 = arith.constant 0 : index
    %0 = vector.load %arg1[%c0, %c0_0] : memref<16x896xf32, #tpu.memory_space<vmem>>, vector<16x896xf32>
    %1 = arith.truncf %0 : vector<16x896xf32> to vector<16x896xbf16>
    %c0_1 = arith.constant 0 : index
    %c0_2 = arith.constant 0 : index
    %2 = vector.load %arg2[%c0_1, %c0_2] : memref<896x1024xbf16, #tpu.memory_space<vmem>>, vector<896x1024xbf16>
    %cst = arith.constant dense<0.000000e+00> : vector<16x1024xf32>
    %3 = tpu.matmul %1, %2, %cst {dimension_numbers = #tpu.dot_dimension_numbers<[1], [0], [0], [1], [0, 0, 1, 1], [], []>} : vector<16x896xbf16>, vector<896x1024xbf16>, vector<16x1024xf32> -> vector<16x1024xf32>
    %c0_3 = arith.constant 0 : index
    %c0_4 = arith.constant 0 : index
    %4 = vector.load %arg3[%c0_3, %c0_4] : memref<1x1024xf32, #tpu.memory_space<vmem>>, vector<1x1024xf32>
    %5 = vector.broadcast %4 : vector<1x1024xf32> to vector<16x1024xf32>
    %6 = arith.addf %3, %5 : vector<16x1024xf32>
    %cst_5 = arith.constant 0.000000e+00 : f32
    %7 = vector.broadcast %cst_5 : f32 to vector<16x1024xf32>
    %8 = arith.maximumf %6, %7 : vector<16x1024xf32>
    %9 = arith.truncf %8 : vector<16x1024xf32> to vector<16x1024xbf16>
    %c0_6 = arith.constant 0 : index
    %c0_7 = arith.constant 0 : index
    %10 = vector.load %arg4[%c0_6, %c0_7] : memref<1024x1024xbf16, #tpu.memory_space<vmem>>, vector<1024x1024xbf16>
    %cst_8 = arith.constant dense<0.000000e+00> : vector<16x1024xf32>
    %11 = tpu.matmul %9, %10, %cst_8 {dimension_numbers = #tpu.dot_dimension_numbers<[1], [0], [0], [1], [0, 0, 1, 1], [], []>} : vector<16x1024xbf16>, vector<1024x1024xbf16>, vector<16x1024xf32> -> vector<16x1024xf32>
    %c0_9 = arith.constant 0 : index
    %c0_10 = arith.constant 0 : index
    %12 = vector.load %arg5[%c0_9, %c0_10] : memref<1x1024xf32, #tpu.memory_space<vmem>>, vector<1x1024xf32>
    %13 = vector.broadcast %12 : vector<1x1024xf32> to vector<16x1024xf32>
    %14 = arith.addf %11, %13 : vector<16x1024xf32>
    %cst_11 = arith.constant 0.000000e+00 : f32
    %15 = vector.broadcast %cst_11 : f32 to vector<16x1024xf32>
    %16 = arith.maximumf %14, %15 : vector<16x1024xf32>
    %17 = arith.truncf %16 : vector<16x1024xf32> to vector<16x1024xbf16>
    %c0_12 = arith.constant 0 : index
    %c0_13 = arith.constant 0 : index
    %18 = vector.load %arg6[%c0_12, %c0_13] : memref<1024x128xbf16, #tpu.memory_space<vmem>>, vector<1024x128xbf16>
    %cst_14 = arith.constant dense<0.000000e+00> : vector<16x128xf32>
    %19 = tpu.matmul %17, %18, %cst_14 {dimension_numbers = #tpu.dot_dimension_numbers<[1], [0], [0], [1], [0, 0, 1, 1], [], []>} : vector<16x1024xbf16>, vector<1024x128xbf16>, vector<16x128xf32> -> vector<16x128xf32>
    %c0_15 = arith.constant 0 : index
    %c0_16 = arith.constant 0 : index
    %20 = vector.load %arg7[%c0_15, %c0_16] : memref<1x128xf32, #tpu.memory_space<vmem>>, vector<1x128xf32>
    %21 = vector.broadcast %20 : vector<1x128xf32> to vector<16x128xf32>
    %22 = arith.addf %19, %21 : vector<16x128xf32>
    %23 = arith.truncf %22 : vector<16x128xf32> to vector<16x128xbf16>
    %c0_17 = arith.constant 0 : index
    %c0_18 = arith.constant 0 : index
    %24 = vector.load %arg8[%c0_17, %c0_18] : memref<16x128xbf16, #tpu.memory_space<vmem>>, vector<16x128xbf16>
    tpu.vector_store %arg8[%c0_17, %c0_18], %23 {strides = array<i32>} : memref<16x128xbf16, #tpu.memory_space<vmem>>, vector<16x128xbf16>,
    return
  }
  func.func @transform_0(%arg0: i32) -> (i32, i32) {
    %c0_i32 = arith.constant 0 : i32
    %c0_i32_0 = arith.constant 0 : i32
    return %arg0, %c0_i32 : i32, i32
  }
  func.func @transform_1(%arg0: i32) -> (i32, i32) {
    %c0_i32 = arith.constant 0 : i32
    %c0_i32_0 = arith.constant 0 : i32
    %c0_i32_1 = arith.constant 0 : i32
    return %c0_i32, %c0_i32_0 : i32, i32
  }
  func.func @transform_2(%arg0: i32) -> (i32, i32) {
    %c0_i32 = arith.constant 0 : i32
    %c0_i32_0 = arith.constant 0 : i32
    %c0_i32_1 = arith.constant 0 : i32
    return %c0_i32, %c0_i32_0 : i32, i32
  }
  func.func @transform_3(%arg0: i32) -> (i32, i32) {
    %c0_i32 = arith.constant 0 : i32
    %c0_i32_0 = arith.constant 0 : i32
    %c0_i32_1 = arith.constant 0 : i32
    return %c0_i32, %c0_i32_0 : i32, i32
  }
  func.func @transform_4(%arg0: i32) -> (i32, i32) {
    %c0_i32 = arith.constant 0 : i32
    %c0_i32_0 = arith.constant 0 : i32
    %c0_i32_1 = arith.constant 0 : i32
    return %c0_i32, %c0_i32_0 : i32, i32
  }
  func.func @transform_5(%arg0: i32) -> (i32, i32) {
    %c0_i32 = arith.constant 0 : i32
    %c0_i32_0 = arith.constant 0 : i32
    %c0_i32_1 = arith.constant 0 : i32
    return %c0_i32, %c0_i32_0 : i32, i32
  }
  func.func @transform_6(%arg0: i32) -> (i32, i32) {
    %c0_i32 = arith.constant 0 : i32
    %c0_i32_0 = arith.constant 0 : i32
    %c0_i32_1 = arith.constant 0 : i32
    return %c0_i32, %c0_i32_0 : i32, i32
  }
  func.func @transform_7(%arg0: i32) -> (i32, i32) {
    %c0_i32 = arith.constant 0 : i32
    %c0_i32_0 = arith.constant 0 : i32
    return %arg0, %c0_i32 : i32, i32
  }
}

</mosaic_0001>

<llo_original>
// kernel: tpu_custom_call.1
$region0: #{tpu_custom_call.1}
  #allocation0 [shape = 'u32[]', space=smem, size = 0x4, offset = 0x4, fixed_abs, tag = 'smem constant byte address 0x4 - core index']
  #allocation1 [shape = 'u32[144,128]{1,0:T(1,128)}', space=vmem, size = 0x12000, scoped, tag = 'internal scratch']
  %s0 = inlined_call_operand.hbm [shape: f32[16,896], index: 0, kind: input, shape index: {}]
  %s1 = inlined_call_operand.hbm [shape: bf16[896,1024], index: 1, kind: input, shape index: {}]
  %s2 = inlined_call_operand.hbm [shape: f32[1,1024], index: 2, kind: input, shape index: {}]
  %s3 = inlined_call_operand.hbm [shape: bf16[1024,1024], index: 3, kind: input, shape index: {}]
  %s4 = inlined_call_operand.hbm [shape: f32[1,1024], index: 4, kind: input, shape index: {}]
  %s5 = inlined_call_operand.hbm [shape: bf16[1024,128], index: 5, kind: input, shape index: {}]
  %s6 = inlined_call_operand.hbm [shape: f32[1,128], index: 6, kind: input, shape index: {}]
  %s7 = inlined_call_operand.hbm [shape: bf16[16,128], index: 7, kind: output, shape index: {}]
  %s8 = sld [smem:[#allocation0]]
  $region66: #{tpu_custom_call.1} parent=0
    _
  %s10 = ssub.s32 1, %s8
  %s11 = scalar_select 0, %s10, %s8
  $region1: #{tpu_custom_call.1} parent=0
    #allocation2 [shape = 'u8[57344]{0}', space=vmem, size = 0xe000, scoped, tag = 'input window, operand 0, single buffered']
    #allocation3 [shape = 's32[1]{0}', space=sflag, size = 0x4, scoped, tag = 'scoped memory for tpu_custom_call.1']
    #allocation4 [shape = 's32[1]{0}', space=sflag, size = 0x4, scoped, tag = 'scoped memory for tpu_custom_call.1']
    #allocation5 [shape = 'u8[1835008]{0}', space=vmem, size = 0x1c0000, scoped, tag = 'input window, operand 1, single buffered']
    #allocation6 [shape = 's32[1]{0}', space=sflag, size = 0x4, scoped, tag = 'scoped memory for tpu_custom_call.1']
    #allocation7 [shape = 'u8[4096]{0}', space=vmem, size = 0x1000, scoped, tag = 'input window, operand 2, single buffered']
    #allocation8 [shape = 'u8[2097152]{0}', space=vmem, size = 0x200000, scoped, tag = 'input window, operand 3, single buffered']
    #allocation9 [shape = 's32[1]{0}', space=sflag, size = 0x4, scoped, tag = 'scoped memory for tpu_custom_call.1']
    #allocation10 [shape = 'u8[4096]{0}', space=vmem, size = 0x1000, scoped, tag = 'input window, operand 4, single buffered']
    #allocation11 [shape = 'u8[262144]{0}', space=vmem, size = 0x40000, scoped, tag = 'input window, operand 5, single buffered']
    #allocation12 [shape = 's32[1]{0}', space=sflag, size = 0x4, scoped, tag = 'scoped memory for tpu_custom_call.1']
    #allocation13 [shape = 'u8[512]{0}', space=vmem, size = 0x400, scoped, tag = 'input window, operand 6, single buffered']
    #allocation14 [shape = 'u8[4096]{0}', space=vmem, size = 0x1000, scoped, tag = 'output window, operand 0, single buffered']
    %12 = vsyncpa [#allocation3], 0
    %13 = vsyncpa [#allocation6], 0
    %14 = vsyncpa [#allocation9], 0
    %15 = vsyncpa [#allocation12], 0
    %16 = vsyncpa [#allocation4], 0
    // Predicated region
    $region2: #{tpu_custom_call.1} parent=1 // pred_check
      _
    $region3: #{tpu_custom_call.1} parent=1 // pred_check_branch
      %18 = sbr.rel (0) target = $region5
    $region4: #{tpu_custom_call.1} parent=1 // pred_region
      %s20 = ssub.s32 1792, 1792
      %21 = vsyncadd [#allocation3], %s20
      %s22 = sshll.u32 [#allocation2], 4
      %s23 = int_to_ptr.vmem [resolvable:$true] %s22
      %28 = dma.hbm_to_vmem [thread:$0]  %s0, 1792, %s23, [#allocation3], 896, 896, 56
    $region5: #{tpu_custom_call.1} parent=1 // pred_fallthru
      _
    // Predicated region
    $region6: #{tpu_custom_call.1} parent=1 // pred_check
      _
    $region7: #{tpu_custom_call.1} parent=1 // pred_check_branch
      %30 = sbr.rel (0) target = $region9
    $region8: #{tpu_custom_call.1} parent=1 // pred_region
      %s32 = ssub.s32 57344, 57344
      %33 = vsyncadd [#allocation6], %s32
      %s34 = sshll.u32 [#allocation5], 4
      %s35 = int_to_ptr.vmem [resolvable:$true] %s34
      %40 = dma.hbm_to_vmem [thread:$0]  %s1, 57344, %s35, [#allocation6], 512, 512, 32
    $region9: #{tpu_custom_call.1} parent=1 // pred_fallthru
      _
    // Predicated region
    $region10: #{tpu_custom_call.1} parent=1 // pred_check
      _
    $region11: #{tpu_custom_call.1} parent=1 // pred_check_branch
      %42 = sbr.rel (0) target = $region13
    $region12: #{tpu_custom_call.1} parent=1 // pred_region
      %s44 = ssub.s32 128, 128
      %45 = vsyncadd [#allocation6], %s44
      %s47 = sshll.u32 [#allocation7], 4
      %s48 = int_to_ptr.vmem [resolvable:$true] %s47
      %50 = dma.hbm_to_vmem [thread:$0]  %s2, 128, %s48, [#allocation6]
    $region13: #{tpu_custom_call.1} parent=1 // pred_fallthru
      _
    // Predicated region
    $region14: #{tpu_custom_call.1} parent=1 // pred_check
      _
    $region15: #{tpu_custom_call.1} parent=1 // pred_check_branch
      %52 = sbr.rel (0) target = $region17
    $region16: #{tpu_custom_call.1} parent=1 // pred_region
      %s54 = ssub.s32 65536, 65536
      %55 = vsyncadd [#allocation9], %s54
      %s56 = sshll.u32 [#allocation8], 4
      %s57 = int_to_ptr.vmem [resolvable:$true] %s56
      %62 = dma.hbm_to_vmem [thread:$0]  %s3, 65536, %s57, [#allocation9], 512, 512, 32
    $region17: #{tpu_custom_call.1} parent=1 // pred_fallthru
      _
    // Predicated region
    $region18: #{tpu_custom_call.1} parent=1 // pred_check
      _
    $region19: #{tpu_custom_call.1} parent=1 // pred_check_branch
      %64 = sbr.rel (0) target = $region21
    $region20: #{tpu_custom_call.1} parent=1 // pred_region
      %s66 = ssub.s32 128, 128
      %67 = vsyncadd [#allocation9], %s66
      %s69 = sshll.u32 [#allocation10], 4
      %s70 = int_to_ptr.vmem [resolvable:$true] %s69
      %72 = dma.hbm_to_vmem [thread:$0]  %s4, 128, %s70, [#allocation9]
    $region21: #{tpu_custom_call.1} parent=1 // pred_fallthru
      _
    // Predicated region
    $region22: #{tpu_custom_call.1} parent=1 // pred_check
      _
    $region23: #{tpu_custom_call.1} parent=1 // pred_check_branch
      %74 = sbr.rel (0) target = $region25
    $region24: #{tpu_custom_call.1} parent=1 // pred_region
      %s76 = ssub.s32 8192, 8192
      %77 = vsyncadd [#allocation12], %s76
      %s78 = sshll.u32 [#allocation11], 4
      %s79 = int_to_ptr.vmem [resolvable:$true] %s78
      %84 = dma.hbm_to_vmem [thread:$0]  %s5, 8192, %s79, [#allocation12], 64, 64, 4
    $region25: #{tpu_custom_call.1} parent=1 // pred_fallthru
      _
    // Predicated region
    $region26: #{tpu_custom_call.1} parent=1 // pred_check
      _
    $region27: #{tpu_custom_call.1} parent=1 // pred_check_branch
      %86 = sbr.rel (0) target = $region29
    $region28: #{tpu_custom_call.1} parent=1 // pred_region
      %s88 = ssub.s32 16, 16
      %89 = vsyncadd [#allocation12], %s88
      %s91 = sshll.u32 [#allocation13], 4
      %s92 = int_to_ptr.vmem [resolvable:$true] %s91
      %94 = dma.hbm_to_vmem [thread:$0]  %s6, 16, %s92, [#allocation12]
    $region29: #{tpu_custom_call.1} parent=1 // pred_fallthru
      _
    // Predicated region
    $region30: #{tpu_custom_call.1} parent=1 // pred_check
      _
    $region31: #{tpu_custom_call.1} parent=1 // pred_check_branch
      %96 = sbr.rel (0) target = $region33
    $region32: #{tpu_custom_call.1} parent=1 // pred_region
      %97 = dma.done [#allocation3], 1792
    $region33: #{tpu_custom_call.1} parent=1 // pred_fallthru
      _
    // Predicated region
    $region34: #{tpu_custom_call.1} parent=1 // pred_check
      _
    $region35: #{tpu_custom_call.1} parent=1 // pred_check_branch
      %99 = sbr.rel (0) target = $region37
    $region36: #{tpu_custom_call.1} parent=1 // pred_region
      %100 = dma.done [#allocation6], 57344
    $region37: #{tpu_custom_call.1} parent=1 // pred_fallthru
      _
    // Predicated region
    $region38: #{tpu_custom_call.1} parent=1 // pred_check
      _
    $region39: #{tpu_custom_call.1} parent=1 // pred_check_branch
      %102 = sbr.rel (0) target = $region41
    $region40: #{tpu_custom_call.1} parent=1 // pred_region
      %103 = dma.done [#allocation6], 128
    $region41: #{tpu_custom_call.1} parent=1 // pred_fallthru
      _
    // Predicated region
    $region42: #{tpu_custom_call.1} parent=1 // pred_check
      _
    $region43: #{tpu_custom_call.1} parent=1 // pred_check_branch
      %105 = sbr.rel (0) target = $region45
    $region44: #{tpu_custom_call.1} parent=1 // pred_region
      %106 = dma.done [#allocation9], 65536
    $region45: #{tpu_custom_call.1} parent=1 // pred_fallthru
      _
    // Predicated region
    $region46: #{tpu_custom_call.1} parent=1 // pred_check
      _
    $region47: #{tpu_custom_call.1} parent=1 // pred_check_branch
      %108 = sbr.rel (0) target = $region49
    $region48: #{tpu_custom_call.1} parent=1 // pred_region
      %109 = dma.done [#allocation9], 128
    $region49: #{tpu_custom_call.1} parent=1 // pred_fallthru
      _
    // Predicated region
    $region50: #{tpu_custom_call.1} parent=1 // pred_check
      _
    $region51: #{tpu_custom_call.1} parent=1 // pred_check_branch
      %111 = sbr.rel (0) target = $region53
    $region52: #{tpu_custom_call.1} parent=1 // pred_region
      %112 = dma.done [#allocation12], 8192
    $region53: #{tpu_custom_call.1} parent=1 // pred_fallthru
      _
    // Predicated region
    $region54: #{tpu_custom_call.1} parent=1 // pred_check
      _
    $region55: #{tpu_custom_call.1} parent=1 // pred_check_branch
      %114 = sbr.rel (0) target = $region57
    $region56: #{tpu_custom_call.1} parent=1 // pred_region
      %115 = dma.done [#allocation12], 16
    $region57: #{tpu_custom_call.1} parent=1 // pred_fallthru
      _
    %v117 = vld [vmem:[#allocation2] sm:$0xff]
    %v118 = vld [vmem:[#allocation2 + $0x8] sm:$0xff]
    %v119 = vld [vmem:[#allocation2 + $0x10] sm:$0xff]
    %v120 = vld [vmem:[#allocation2 + $0x18] sm:$0xff]
    %v121 = vld [vmem:[#allocation2 + $0x20] sm:$0xff]
    %v122 = vld [vmem:[#allocation2 + $0x28] sm:$0xff]
    %v123 = vld [vmem:[#allocation2 + $0x30] sm:$0xff]
    %v124 = vld [vmem:[#allocation2 + $0x38] sm:$0xff]
    %v125 = vld [vmem:[#allocation2 + $0x40] sm:$0xff]
    %v126 = vld [vmem:[#allocation2 + $0x48] sm:$0xff]
    %v127 = vld [vmem:[#allocation2 + $0x50] sm:$0xff]
    %v128 = vld [vmem:[#allocation2 + $0x58] sm:$0xff]
    %v129 = vld [vmem:[#allocation2 + $0x60] sm:$0xff]
    %v130 = vld [vmem:[#allocation2 + $0x68] sm:$0xff]
    %v131 = vpack.c.bf16 %v124, %v117
    %v132 = vpack.c.bf16 %v125, %v118
    %v133 = vpack.c.bf16 %v126, %v119
    %v134 = vpack.c.bf16 %v127, %v120
    %v135 = vpack.c.bf16 %v128, %v121
    %v136 = vpack.c.bf16 %v129, %v122
    %v137 = vpack.c.bf16 %v130, %v123
    %v138 = vld [vmem:[#allocation5] sm:$0xff]
    %v139 = vld [vmem:[#allocation5 + $0x8] sm:$0xff]
    %v140 = vld [vmem:[#allocation5 + $0x10] sm:$0xff]
    %v141 = vld [vmem:[#allocation5 + $0x18] sm:$0xff]
    %v142 = vld [vmem:[#allocation5 + $0x20] sm:$0xff]
    %v143 = vld [vmem:[#allocation5 + $0x28] sm:$0xff]
    %v144 = vld [vmem:[#allocation5 + $0x30] sm:$0xff]
    %v145 = vld [vmem:[#allocation5 + $0x38] sm:$0xff]
    %v146 = vld [vmem:[#allocation5 + $0x40] sm:$0xff]
    %v147 = vld [vmem:[#allocation5 + $0x48] sm:$0xff]
    %v148 = vld [vmem:[#allocation5 + $0x50] sm:$0xff]
    %v149 = vld [vmem:[#allocation5 + $0x58] sm:$0xff]
    %v150 = vld [vmem:[#allocation5 + $0x60] sm:$0xff]
    %v151 = vld [vmem:[#allocation5 + $0x68] sm:$0xff]
    %v152 = vld [vmem:[#allocation5 + $0x70] sm:$0xff]
    %v153 = vld [vmem:[#allocation5 + $0x78] sm:$0xff]
    %v154 = vld [vmem:[#allocation5 + $0x80] sm:$0xff]
    %v155 = vld [vmem:[#allocation5 + $0x88] sm:$0xff]
    %v156 = vld [vmem:[#allocation5 + $0x90] sm:$0xff]
    %v157 = vld [vmem:[#allocation5 + $0x98] sm:$0xff]
    %v158 = vld [vmem:[#allocation5 + $0xa0] sm:$0xff]
    %v159 = vld [vmem:[#allocation5 + $0xa8] sm:$0xff]
    %v160 = vld [vmem:[#allocation5 + $0xb0] sm:$0xff]
    %v161 = vld [vmem:[#allocation5 + $0xb8] sm:$0xff]
    %v162 = vld [vmem:[#allocation5 + $0xc0] sm:$0xff]
    %v163 = vld [vmem:[#allocation5 + $0xc8] sm:$0xff]
    %v164 = vld [vmem:[#allocation5 + $0xd0] sm:$0xff]
    %v165 = vld [vmem:[#allocation5 + $0xd8] sm:$0xff]
    %v166 = vld [vmem:[#allocation5 + $0xe0] sm:$0xff]
    %v167 = vld [vmem:[#allocation5 + $0xe8] sm:$0xff]
    %v168 = vld [vmem:[#allocation5 + $0xf0] sm:$0xff]
    %v169 = vld [vmem:[#allocation5 + $0xf8] sm:$0xff]
    %v170 = vld [vmem:[#allocation5 + $0x100] sm:$0xff]
    %v171 = vld [vmem:[#allocation5 + $0x108] sm:$0xff]
    %v172 = vld [vmem:[#allocation5 + $0x110] sm:$0xff]
    %v173 = vld [vmem:[#allocation5 + $0x118] sm:$0xff]
    %v174 = vld [vmem:[#allocation5 + $0x120] sm:$0xff]
    %v175 = vld [vmem:[#allocation5 + $0x128] sm:$0xff]
    %v176 = vld [vmem:[#allocation5 + $0x130] sm:$0xff]
    %v177 = vld [vmem:[#allocation5 + $0x138] sm:$0xff]
    %v178 = vld [vmem:[#allocation5 + $0x140] sm:$0xff]
    %v179 = vld [vmem:[#allocation5 + $0x148] sm:$0xff]
    %v180 = vld [vmem:[#allocation5 + $0x150] sm:$0xff]
    %v181 = vld [vmem:[#allocation5 + $0x158] sm:$0xff]
    %v182 = vld [vmem:[#allocation5 + $0x160] sm:$0xff]
    %v183 = vld [vmem:[#allocation5 + $0x168] sm:$0xff]
    %v184 = vld [vmem:[#allocation5 + $0x170] sm:$0xff]
    %v185 = vld [vmem:[#allocation5 + $0x178] sm:$0xff]
    %v186 = vld [vmem:[#allocation5 + $0x180] sm:$0xff]
    %v187 = vld [vmem:[#allocation5 + $0x188] sm:$0xff]
    %v188 = vld [vmem:[#allocation5 + $0x190] sm:$0xff]
    %v189 = vld [vmem:[#allocation5 + $0x198] sm:$0xff]
    %v190 = vld [vmem:[#allocation5 + $0x1a0] sm:$0xff]
    %v191 = vld [vmem:[#allocation5 + $0x1a8] sm:$0xff]
    %v192 = vld [vmem:[#allocation5 + $0x1b0] sm:$0xff]
    %v193 = vld [vmem:[#allocation5 + $0x1b8] sm:$0xff]
    %v194 = vld [vmem:[#allocation5 + $0x1c0] sm:$0xff]
    %v195 = vld [vmem:[#allocation5 + $0x1c8] sm:$0xff]
    %v196 = vld [vmem:[#allocation5 + $0x1d0] sm:$0xff]
    %v197 = vld [vmem:[#allocation5 + $0x1d8] sm:$0xff]
    %v198 = vld [vmem:[#allocation5 + $0x1e0] sm:$0xff]
    %v199 = vld [vmem:[#allocation5 + $0x1e8] sm:$0xff]
    %v200 = vld [vmem:[#allocation5 + $0x1f0] sm:$0xff]
    %v201 = vld [vmem:[#allocation5 + $0x1f8] sm:$0xff]
    %v202 = vld [vmem:[#allocation5 + $0x200] sm:$0xff]
    %v203 = vld [vmem:[#allocation5 + $0x208] sm:$0xff]
    %v204 = vld [vmem:[#allocation5 + $0x210] sm:$0xff]
    %v205 = vld [vmem:[#allocation5 + $0x218] sm:$0xff]
    %v206 = vld [vmem:[#allocation5 + $0x220] sm:$0xff]
    %v207 = vld [vmem:[#allocation5 + $0x228] sm:$0xff]
    %v208 = vld [vmem:[#allocation5 + $0x230] sm:$0xff]
    %v209 = vld [vmem:[#allocation5 + $0x238] sm:$0xff]
    %v210 = vld [vmem:[#allocation5 + $0x240] sm:$0xff]
    %v211 = vld [vmem:[#allocation5 + $0x248] sm:$0xff]
    %v212 = vld [vmem:[#allocation5 + $0x250] sm:$0xff]
    %v213 = vld [vmem:[#allocation5 + $0x258] sm:$0xff]
    %v214 = vld [vmem:[#allocation5 + $0x260] sm:$0xff]
    %v215 = vld [vmem:[#allocation5 + $0x268] sm:$0xff]
    %v216 = vld [vmem:[#allocation5 + $0x270] sm:$0xff]
    %v217 = vld [vmem:[#allocation5 + $0x278] sm:$0xff]
    %v218 = vld [vmem:[#allocation5 + $0x280] sm:$0xff]
    %v219 = vld [vmem:[#allocation5 + $0x288] sm:$0xff]
    %v220 = vld [vmem:[#allocation5 + $0x290] sm:$0xff]
    %v221 = vld [vmem:[#allocation5 + $0x298] sm:$0xff]
    %v222 = vld [vmem:[#allocation5 + $0x2a0] sm:$0xff]
    %v223 = vld [vmem:[#allocation5 + $0x2a8] sm:$0xff]
    %v224 = vld [vmem:[#allocation5 + $0x2b0] sm:$0xff]
    %v225 = vld [vmem:[#allocation5 + $0x2b8] sm:$0xff]
    %v226 = vld [vmem:[#allocation5 + $0x2c0] sm:$0xff]
    %v227 = vld [vmem:[#allocation5 + $0x2c8] sm:$0xff]
    %v228 = vld [vmem:[#allocation5 + $0x2d0] sm:$0xff]
    %v229 = vld [vmem:[#allocation5 + $0x2d8] sm:$0xff]
    %v230 = vld [vmem:[#allocation5 + $0x2e0] sm:$0xff]
    %v231 = vld [vmem:[#allocation5 + $0x2e8] sm:$0xff]
    %v232 = vld [vmem:[#allocation5 + $0x2f0] sm:$0xff]
    %v233 = vld [vmem:[#allocation5 + $0x2f8] sm:$0xff]
    %v234 = vld [vmem:[#allocation5 + $0x300] sm:$0xff]
    %v235 = vld [vmem:[#allocation5 + $0x308] sm:$0xff]
    %v236 = vld [vmem:[#allocation5 + $0x310] sm:$0xff]
    %v237 = vld [vmem:[#allocation5 + $0x318] sm:$0xff]
    %v238 = vld [vmem:[#allocation5 + $0x320] sm:$0xff]
    %v239 = vld [vmem:[#allocation5 + $0x328] sm:$0xff]
    %v240 = vld [vmem:[#allocation5 + $0x330] sm:$0xff]
    %v241 = vld [vmem:[#allocation5 + $0x338] sm:$0xff]
    %v242 = vld [vmem:[#allocation5 + $0x340] sm:$0xff]
    %v243 = vld [vmem:[#allocation5 + $0x348] sm:$0xff]
    %v244 = vld [vmem:[#allocation5 + $0x350] sm:$0xff]
    %v245 = vld [vmem:[#allocation5 + $0x358] sm:$0xff]
    %v246 = vld [vmem:[#allocation5 + $0x360] sm:$0xff]
    %v247 = vld [vmem:[#allocation5 + $0x368] sm:$0xff]
    %v248 = vld [vmem:[#allocation5 + $0x370] sm:$0xff]
    %v249 = vld [vmem:[#allocation5 + $0x378] sm:$0xff]
    %v250 = vld [vmem:[#allocation5 + $0x380] sm:$0xff]
    %v251 = vld [vmem:[#allocation5 + $0x388] sm:$0xff]
    %v252 = vld [vmem:[#allocation5 + $0x390] sm:$0xff]
    %v253 = vld [vmem:[#allocation5 + $0x398] sm:$0xff]
    %v254 = vld [vmem:[#allocation5 + $0x3a0] sm:$0xff]
    %v255 = vld [vmem:[#allocation5 + $0x3a8] sm:$0xff]
    %v256 = vld [vmem:[#allocation5 + $0x3b0] sm:$0xff]
    %v257 = vld [vmem:[#allocation5 + $0x3b8] sm:$0xff]
    %v258 = vld [vmem:[#allocation5 + $0x3c0] sm:$0xff]
    %v259 = vld [vmem:[#allocation5 + $0x3c8] sm:$0xff]
    %v260 = vld [vmem:[#allocation5 + $0x3d0] sm:$0xff]
    %v261 = vld [vmem:[#allocation5 + $0x3d8] sm:$0xff]
    %v262 = vld [vmem:[#allocation5 + $0x3e0] sm:$0xff]
    %v263 = vld [vmem:[#allocation5 + $0x3e8] sm:$0xff]
    %v264 = vld [vmem:[#allocation5 + $0x3f0] sm:$0xff]
    %v265 = vld [vmem:[#allocation5 + $0x3f8] sm:$0xff]
    %v266 = vld [vmem:[#allocation5 + $0x400] sm:$0xff]
    %v267 = vld [vmem:[#allocation5 + $0x408] sm:$0xff]
    %v268 = vld [vmem:[#allocation5 + $0x410] sm:$0xff]
    %v269 = vld [vmem:[#allocation5 + $0x418] sm:$0xff]
    %v270 = vld [vmem:[#allocation5 + $0x420] sm:$0xff]
    %v271 = vld [vmem:[#allocation5 + $0x428] sm:$0xff]
    %v272 = vld [vmem:[#allocation5 + $0x430] sm:$0xff]
    %v273 = vld [vmem:[#allocation5 + $0x438] sm:$0xff]
    %v274 = vld [vmem:[#allocation5 + $0x440] sm:$0xff]
    %v275 = vld [vmem:[#allocation5 + $0x448] sm:$0xff]
    %v276 = vld [vmem:[#allocation5 + $0x450] sm:$0xff]
    %v277 = vld [vmem:[#allocation5 + $0x458] sm:$0xff]
    %v278 = vld [vmem:[#allocation5 + $0x460] sm:$0xff]
    %v279 = vld [vmem:[#allocation5 + $0x468] sm:$0xff]
    %v280 = vld [vmem:[#allocation5 + $0x470] sm:$0xff]
    %v281 = vld [vmem:[#allocation5 + $0x478] sm:$0xff]
    %v282 = vld [vmem:[#allocation5 + $0x480] sm:$0xff]
    %v283 = vld [vmem:[#allocation5 + $0x488] sm:$0xff]
    %v284 = vld [vmem:[#allocation5 + $0x490] sm:$0xff]
    %v285 = vld [vmem:[#allocation5 + $0x498] sm:$0xff]
    %v286 = vld [vmem:[#allocation5 + $0x4a0] sm:$0xff]
    %v287 = vld [vmem:[#allocation5 + $0x4a8] sm:$0xff]
    %v288 = vld [vmem:[#allocation5 + $0x4b0] sm:$0xff]
    %v289 = vld [vmem:[#allocation5 + $0x4b8] sm:$0xff]
    %v290 = vld [vmem:[#allocation5 + $0x4c0] sm:$0xff]
    %v291 = vld [vmem:[#allocation5 + $0x4c8] sm:$0xff]
    %v292 = vld [vmem:[#allocation5 + $0x4d0] sm:$0xff]
    %v293 = vld [vmem:[#allocation5 + $0x4d8] sm:$0xff]
    %v294 = vld [vmem:[#allocation5 + $0x4e0] sm:$0xff]
    %v295 = vld [vmem:[#allocation5 + $0x4e8] sm:$0xff]
    %v296 = vld [vmem:[#allocation5 + $0x4f0] sm:$0xff]
    %v297 = vld [vmem:[#allocation5 + $0x4f8] sm:$0xff]
    %v298 = vld [vmem:[#allocation5 + $0x500] sm:$0xff]
    %v299 = vld [vmem:[#allocation5 + $0x508] sm:$0xff]
    %v300 = vld [vmem:[#allocation5 + $0x510] sm:$0xff]
    %v301 = vld [vmem:[#allocation5 + $0x518] sm:$0xff]
    %v302 = vld [vmem:[#allocation5 + $0x520] sm:$0xff]
    %v303 = vld [vmem:[#allocation5 + $0x528] sm:$0xff]
    %v304 = vld [vmem:[#allocation5 + $0x530] sm:$0xff]
    %v305 = vld [vmem:[#allocation5 + $0x538] sm:$0xff]
    %v306 = vld [vmem:[#allocation5 + $0x540] sm:$0xff]
    %v307 = vld [vmem:[#allocation5 + $0x548] sm:$0xff]
    %v308 = vld [vmem:[#allocation5 + $0x550] sm:$0xff]
    %v309 = vld [vmem:[#allocation5 + $0x558] sm:$0xff]
    %v310 = vld [vmem:[#allocation5 + $0x560] sm:$0xff]
    %v311 = vld [vmem:[#allocation5 + $0x568] sm:$0xff]
    %v312 = vld [vmem:[#allocation5 + $0x570] sm:$0xff]
    %v313 = vld [vmem:[#allocation5 + $0x578] sm:$0xff]
    %v314 = vld [vmem:[#allocation5 + $0x580] sm:$0xff]
    %v315 = vld [vmem:[#allocation5 + $0x588] sm:$0xff]
    %v316 = vld [vmem:[#allocation5 + $0x590] sm:$0xff]
    %v317 = vld [vmem:[#allocation5 + $0x598] sm:$0xff]
    %v318 = vld [vmem:[#allocation5 + $0x5a0] sm:$0xff]
    %v319 = vld [vmem:[#allocation5 + $0x5a8] sm:$0xff]
    %v320 = vld [vmem:[#allocation5 + $0x5b0] sm:$0xff]
    %v321 = vld [vmem:[#allocation5 + $0x5b8] sm:$0xff]
    %v322 = vld [vmem:[#allocation5 + $0x5c0] sm:$0xff]
    %v323 = vld [vmem:[#allocation5 + $0x5c8] sm:$0xff]
    %v324 = vld [vmem:[#allocation5 + $0x5d0] sm:$0xff]
    %v325 = vld [vmem:[#allocation5 + $0x5d8] sm:$0xff]
    %v326 = vld [vmem:[#allocation5 + $0x5e0] sm:$0xff]
    %v327 = vld [vmem:[#allocation5 + $0x5e8] sm:$0xff]
    %v328 = vld [vmem:[#allocation5 + $0x5f0] sm:$0xff]
    %v329 = vld [vmem:[#allocation5 + $0x5f8] sm:$0xff]
    %v330 = vld [vmem:[#allocation5 + $0x600] sm:$0xff]
    %v331 = vld [vmem:[#allocation5 + $0x608] sm:$0xff]
    %v332 = vld [vmem:[#allocation5 + $0x610] sm:$0xff]
    %v333 = vld [vmem:[#allocation5 + $0x618] sm:$0xff]
    %v334 = vld [vmem:[#allocation5 + $0x620] sm:$0xff]
    %v335 = vld [vmem:[#allocation5 + $0x628] sm:$0xff]
    %v336 = vld [vmem:[#allocation5 + $0x630] sm:$0xff]
    %v337 = vld [vmem:[#allocation5 + $0x638] sm:$0xff]
    %v338 = vld [vmem:[#allocation5 + $0x640] sm:$0xff]
    %v339 = vld [vmem:[#allocation5 + $0x648] sm:$0xff]
    %v340 = vld [vmem:[#allocation5 + $0x650] sm:$0xff]
    %v341 = vld [vmem:[#allocation5 + $0x658] sm:$0xff]
    %v342 = vld [vmem:[#allocation5 + $0x660] sm:$0xff]
    %v343 = vld [vmem:[#allocation5 + $0x668] sm:$0xff]
    %v344 = vld [vmem:[#allocation5 + $0x670] sm:$0xff]
    %v345 = vld [vmem:[#allocation5 + $0x678] sm:$0xff]
    %v346 = vld [vmem:[#allocation5 + $0x680] sm:$0xff]
    %v347 = vld [vmem:[#allocation5 + $0x688] sm:$0xff]
    %v348 = vld [vmem:[#allocation5 + $0x690] sm:$0xff]
    %v349 = vld [vmem:[#allocation5 + $0x698] sm:$0xff]
    %v350 = vld [vmem:[#allocation5 + $0x6a0] sm:$0xff]
    %v351 = vld [vmem:[#allocation5 + $0x6a8] sm:$0xff]
    %v352 = vld [vmem:[#allocation5 + $0x6b0] sm:$0xff]
    %v353 = vld [vmem:[#allocation5 + $0x6b8] sm:$0xff]
    %v354 = vld [vmem:[#allocation5 + $0x6c0] sm:$0xff]
    %v355 = vld [vmem:[#allocation5 + $0x6c8] sm:$0xff]
    %v356 = vld [vmem:[#allocation5 + $0x6d0] sm:$0xff]
    %v357 = vld [vmem:[#allocation5 + $0x6d8] sm:$0xff]
    %v358 = vld [vmem:[#allocation5 + $0x6e0] sm:$0xff]
    %v359 = vld [vmem:[#allocation5 + $0x6e8] sm:$0xff]
    %v360 = vld [vmem:[#allocation5 + $0x6f0] sm:$0xff]
    %v361 = vld [vmem:[#allocation5 + $0x6f8] sm:$0xff]
    %v362 = vld [vmem:[#allocation5 + $0x700] sm:$0xff]
    %v363 = vld [vmem:[#allocation5 + $0x708] sm:$0xff]
    %v364 = vld [vmem:[#allocation5 + $0x710] sm:$0xff]
    %v365 = vld [vmem:[#allocation5 + $0x718] sm:$0xff]
    %v366 = vld [vmem:[#allocation5 + $0x720] sm:$0xff]
    %v367 = vld [vmem:[#allocation5 + $0x728] sm:$0xff]
    %v368 = vld [vmem:[#allocation5 + $0x730] sm:$0xff]
    %v369 = vld [vmem:[#allocation5 + $0x738] sm:$0xff]
    %v370 = vld [vmem:[#allocation5 + $0x740] sm:$0xff]
    %v371 = vld [vmem:[#allocation5 + $0x748] sm:$0xff]
    %v372 = vld [vmem:[#allocation5 + $0x750] sm:$0xff]
    %v373 = vld [vmem:[#allocation5 + $0x758] sm:$0xff]
    %v374 = vld [vmem:[#allocation5 + $0x760] sm:$0xff]
    %v375 = vld [vmem:[#allocation5 + $0x768] sm:$0xff]
    %v376 = vld [vmem:[#allocation5 + $0x770] sm:$0xff]
    %v377 = vld [vmem:[#allocation5 + $0x778] sm:$0xff]
    %v378 = vld [vmem:[#allocation5 + $0x780] sm:$0xff]
    %v379 = vld [vmem:[#allocation5 + $0x788] sm:$0xff]
    %v380 = vld [vmem:[#allocation5 + $0x790] sm:$0xff]
    %v381 = vld [vmem:[#allocation5 + $0x798] sm:$0xff]
    %v382 = vld [vmem:[#allocation5 + $0x7a0] sm:$0xff]
    %v383 = vld [vmem:[#allocation5 + $0x7a8] sm:$0xff]
    %v384 = vld [vmem:[#allocation5 + $0x7b0] sm:$0xff]
    %v385 = vld [vmem:[#allocation5 + $0x7b8] sm:$0xff]
    %v386 = vld [vmem:[#allocation5 + $0x7c0] sm:$0xff]
    %v387 = vld [vmem:[#allocation5 + $0x7c8] sm:$0xff]
    %v388 = vld [vmem:[#allocation5 + $0x7d0] sm:$0xff]
    %v389 = vld [vmem:[#allocation5 + $0x7d8] sm:$0xff]
    %v390 = vld [vmem:[#allocation5 + $0x7e0] sm:$0xff]
    %v391 = vld [vmem:[#allocation5 + $0x7e8] sm:$0xff]
    %v392 = vld [vmem:[#allocation5 + $0x7f0] sm:$0xff]
    %v393 = vld [vmem:[#allocation5 + $0x7f8] sm:$0xff]
    %v394 = vld [vmem:[#allocation5 + $0x800] sm:$0xff]
    %v395 = vld [vmem:[#allocation5 + $0x808] sm:$0xff]
    %v396 = vld [vmem:[#allocation5 + $0x810] sm:$0xff]
    %v397 = vld [vmem:[#allocation5 + $0x818] sm:$0xff]
    %v398 = vld [vmem:[#allocation5 + $0x820] sm:$0xff]
    %v399 = vld [vmem:[#allocation5 + $0x828] sm:$0xff]
    %v400 = vld [vmem:[#allocation5 + $0x830] sm:$0xff]
    %v401 = vld [vmem:[#allocation5 + $0x838] sm:$0xff]
    %v402 = vld [vmem:[#allocation5 + $0x840] sm:$0xff]
    %v403 = vld [vmem:[#allocation5 + $0x848] sm:$0xff]
    %v404 = vld [vmem:[#allocation5 + $0x850] sm:$0xff]
    %v405 = vld [vmem:[#allocation5 + $0x858] sm:$0xff]
    %v406 = vld [vmem:[#allocation5 + $0x860] sm:$0xff]
    %v407 = vld [vmem:[#allocation5 + $0x868] sm:$0xff]
    %v408 = vld [vmem:[#allocation5 + $0x870] sm:$0xff]
    %v409 = vld [vmem:[#allocation5 + $0x878] sm:$0xff]
    %v410 = vld [vmem:[#allocation5 + $0x880] sm:$0xff]
    %v411 = vld [vmem:[#allocation5 + $0x888] sm:$0xff]
    %v412 = vld [vmem:[#allocation5 + $0x890] sm:$0xff]
    %v413 = vld [vmem:[#allocation5 + $0x898] sm:$0xff]
    %v414 = vld [vmem:[#allocation5 + $0x8a0] sm:$0xff]
    %v415 = vld [vmem:[#allocation5 + $0x8a8] sm:$0xff]
    %v416 = vld [vmem:[#allocation5 + $0x8b0] sm:$0xff]
    %v417 = vld [vmem:[#allocation5 + $0x8b8] sm:$0xff]
    %v418 = vld [vmem:[#allocation5 + $0x8c0] sm:$0xff]
    %v419 = vld [vmem:[#allocation5 + $0x8c8] sm:$0xff]
    %v420 = vld [vmem:[#allocation5 + $0x8d0] sm:$0xff]
    %v421 = vld [vmem:[#allocation5 + $0x8d8] sm:$0xff]
    %v422 = vld [vmem:[#allocation5 + $0x8e0] sm:$0xff]
    %v423 = vld [vmem:[#allocation5 + $0x8e8] sm:$0xff]
    %v424 = vld [vmem:[#allocation5 + $0x8f0] sm:$0xff]
    %v425 = vld [vmem:[#allocation5 + $0x8f8] sm:$0xff]
    %v426 = vld [vmem:[#allocation5 + $0x900] sm:$0xff]
    %v427 = vld [vmem:[#allocation5 + $0x908] sm:$0xff]
    %v428 = vld [vmem:[#allocation5 + $0x910] sm:$0xff]
    %v429 = vld [vmem:[#allocation5 + $0x918] sm:$0xff]
    %v430 = vld [vmem:[#allocation5 + $0x920] sm:$0xff]
    %v431 = vld [vmem:[#allocation5 + $0x928] sm:$0xff]
    %v432 = vld [vmem:[#allocation5 + $0x930] sm:$0xff]
    %v433 = vld [vmem:[#allocation5 + $0x938] sm:$0xff]
    %v434 = vld [vmem:[#allocation5 + $0x940] sm:$0xff]
    %v435 = vld [vmem:[#allocation5 + $0x948] sm:$0xff]
    %v436 = vld [vmem:[#allocation5 + $0x950] sm:$0xff]
    %v437 = vld [vmem:[#allocation5 + $0x958] sm:$0xff]
    %v438 = vld [vmem:[#allocation5 + $0x960] sm:$0xff]
    %v439 = vld [vmem:[#allocation5 + $0x968] sm:$0xff]
    %v440 = vld [vmem:[#allocation5 + $0x970] sm:$0xff]
    %v441 = vld [vmem:[#allocation5 + $0x978] sm:$0xff]
    %v442 = vld [vmem:[#allocation5 + $0x980] sm:$0xff]
    %v443 = vld [vmem:[#allocation5 + $0x988] sm:$0xff]
    %v444 = vld [vmem:[#allocation5 + $0x990] sm:$0xff]
    %v445 = vld [vmem:[#allocation5 + $0x998] sm:$0xff]
    %v446 = vld [vmem:[#allocation5 + $0x9a0] sm:$0xff]
    %v447 = vld [vmem:[#allocation5 + $0x9a8] sm:$0xff]
    %v448 = vld [vmem:[#allocation5 + $0x9b0] sm:$0xff]
    %v449 = vld [vmem:[#allocation5 + $0x9b8] sm:$0xff]
    %v450 = vld [vmem:[#allocation5 + $0x9c0] sm:$0xff]
    %v451 = vld [vmem:[#allocation5 + $0x9c8] sm:$0xff]
    %v452 = vld [vmem:[#allocation5 + $0x9d0] sm:$0xff]
    %v453 = vld [vmem:[#allocation5 + $0x9d8] sm:$0xff]
    %v454 = vld [vmem:[#allocation5 + $0x9e0] sm:$0xff]
    %v455 = vld [vmem:[#allocation5 + $0x9e8] sm:$0xff]
    %v456 = vld [vmem:[#allocation5 + $0x9f0] sm:$0xff]
    %v457 = vld [vmem:[#allocation5 + $0x9f8] sm:$0xff]
    %v458 = vld [vmem:[#allocation5 + $0xa00] sm:$0xff]
    %v459 = vld [vmem:[#allocation5 + $0xa08] sm:$0xff]
    %v460 = vld [vmem:[#allocation5 + $0xa10] sm:$0xff]
    %v461 = vld [vmem:[#allocation5 + $0xa18] sm:$0xff]
    %v462 = vld [vmem:[#allocation5 + $0xa20] sm:$0xff]
    %v463 = vld [vmem:[#allocation5 + $0xa28] sm:$0xff]
    %v464 = vld [vmem:[#allocation5 + $0xa30] sm:$0xff]
    %v465 = vld [vmem:[#allocation5 + $0xa38] sm:$0xff]
    %v466 = vld [vmem:[#allocation5 + $0xa40] sm:$0xff]
    %v467 = vld [vmem:[#allocation5 + $0xa48] sm:$0xff]
    %v468 = vld [vmem:[#allocation5 + $0xa50] sm:$0xff]
    %v469 = vld [vmem:[#allocation5 + $0xa58] sm:$0xff]
    %v470 = vld [vmem:[#allocation5 + $0xa60] sm:$0xff]
    %v471 = vld [vmem:[#allocation5 + $0xa68] sm:$0xff]
    %v472 = vld [vmem:[#allocation5 + $0xa70] sm:$0xff]
    %v473 = vld [vmem:[#allocation5 + $0xa78] sm:$0xff]
    %v474 = vld [vmem:[#allocation5 + $0xa80] sm:$0xff]
    %v475 = vld [vmem:[#allocation5 + $0xa88] sm:$0xff]
    %v476 = vld [vmem:[#allocation5 + $0xa90] sm:$0xff]
    %v477 = vld [vmem:[#allocation5 + $0xa98] sm:$0xff]
    %v478 = vld [vmem:[#allocation5 + $0xaa0] sm:$0xff]
    %v479 = vld [vmem:[#allocation5 + $0xaa8] sm:$0xff]
    %v480 = vld [vmem:[#allocation5 + $0xab0] sm:$0xff]
    %v481 = vld [vmem:[#allocation5 + $0xab8] sm:$0xff]
    %v482 = vld [vmem:[#allocation5 + $0xac0] sm:$0xff]
    %v483 = vld [vmem:[#allocation5 + $0xac8] sm:$0xff]
    %v484 = vld [vmem:[#allocation5 + $0xad0] sm:$0xff]
    %v485 = vld [vmem:[#allocation5 + $0xad8] sm:$0xff]
    %v486 = vld [vmem:[#allocation5 + $0xae0] sm:$0xff]
    %v487 = vld [vmem:[#allocation5 + $0xae8] sm:$0xff]
    %v488 = vld [vmem:[#allocation5 + $0xaf0] sm:$0xff]
    %v489 = vld [vmem:[#allocation5 + $0xaf8] sm:$0xff]
    %v490 = vld [vmem:[#allocation5 + $0xb00] sm:$0xff]
    %v491 = vld [vmem:[#allocation5 + $0xb08] sm:$0xff]
    %v492 = vld [vmem:[#allocation5 + $0xb10] sm:$0xff]
    %v493 = vld [vmem:[#allocation5 + $0xb18] sm:$0xff]
    %v494 = vld [vmem:[#allocation5 + $0xb20] sm:$0xff]
    %v495 = vld [vmem:[#allocation5 + $0xb28] sm:$0xff]
    %v496 = vld [vmem:[#allocation5 + $0xb30] sm:$0xff]
    %v497 = vld [vmem:[#allocation5 + $0xb38] sm:$0xff]
    %v498 = vld [vmem:[#allocation5 + $0xb40] sm:$0xff]
    %v499 = vld [vmem:[#allocation5 + $0xb48] sm:$0xff]
    %v500 = vld [vmem:[#allocation5 + $0xb50] sm:$0xff]
    %v501 = vld [vmem:[#allocation5 + $0xb58] sm:$0xff]
    %v502 = vld [vmem:[#allocation5 + $0xb60] sm:$0xff]
    %v503 = vld [vmem:[#allocation5 + $0xb68] sm:$0xff]
    %v504 = vld [vmem:[#allocation5 + $0xb70] sm:$0xff]
    %v505 = vld [vmem:[#allocation5 + $0xb78] sm:$0xff]
    %v506 = vld [vmem:[#allocation5 + $0xb80] sm:$0xff]
    %v507 = vld [vmem:[#allocation5 + $0xb88] sm:$0xff]
    %v508 = vld [vmem:[#allocation5 + $0xb90] sm:$0xff]
    %v509 = vld [vmem:[#allocation5 + $0xb98] sm:$0xff]
    %v510 = vld [vmem:[#allocation5 + $0xba0] sm:$0xff]
    %v511 = vld [vmem:[#allocation5 + $0xba8] sm:$0xff]
    %v512 = vld [vmem:[#allocation5 + $0xbb0] sm:$0xff]
    %v513 = vld [vmem:[#allocation5 + $0xbb8] sm:$0xff]
    %v514 = vld [vmem:[#allocation5 + $0xbc0] sm:$0xff]
    %v515 = vld [vmem:[#allocation5 + $0xbc8] sm:$0xff]
    %v516 = vld [vmem:[#allocation5 + $0xbd0] sm:$0xff]
    %v517 = vld [vmem:[#allocation5 + $0xbd8] sm:$0xff]
    %v518 = vld [vmem:[#allocation5 + $0xbe0] sm:$0xff]
    %v519 = vld [vmem:[#allocation5 + $0xbe8] sm:$0xff]
    %v520 = vld [vmem:[#allocation5 + $0xbf0] sm:$0xff]
    %v521 = vld [vmem:[#allocation5 + $0xbf8] sm:$0xff]
    %v522 = vld [vmem:[#allocation5 + $0xc00] sm:$0xff]
    %v523 = vld [vmem:[#allocation5 + $0xc08] sm:$0xff]
    %v524 = vld [vmem:[#allocation5 + $0xc10] sm:$0xff]
    %v525 = vld [vmem:[#allocation5 + $0xc18] sm:$0xff]
    %v526 = vld [vmem:[#allocation5 + $0xc20] sm:$0xff]
    %v527 = vld [vmem:[#allocation5 + $0xc28] sm:$0xff]
    %v528 = vld [vmem:[#allocation5 + $0xc30] sm:$0xff]
    %v529 = vld [vmem:[#allocation5 + $0xc38] sm:$0xff]
    %v530 = vld [vmem:[#allocation5 + $0xc40] sm:$0xff]
    %v531 = vld [vmem:[#allocation5 + $0xc48] sm:$0xff]
    %v532 = vld [vmem:[#allocation5 + $0xc50] sm:$0xff]
    %v533 = vld [vmem:[#allocation5 + $0xc58] sm:$0xff]
    %v534 = vld [vmem:[#allocation5 + $0xc60] sm:$0xff]
    %v535 = vld [vmem:[#allocation5 + $0xc68] sm:$0xff]
    %v536 = vld [vmem:[#allocation5 + $0xc70] sm:$0xff]
    %v537 = vld [vmem:[#allocation5 + $0xc78] sm:$0xff]
    %v538 = vld [vmem:[#allocation5 + $0xc80] sm:$0xff]
    %v539 = vld [vmem:[#allocation5 + $0xc88] sm:$0xff]
    %v540 = vld [vmem:[#allocation5 + $0xc90] sm:$0xff]
    %v541 = vld [vmem:[#allocation5 + $0xc98] sm:$0xff]
    %v542 = vld [vmem:[#allocation5 + $0xca0] sm:$0xff]
    %v543 = vld [vmem:[#allocation5 + $0xca8] sm:$0xff]
    %v544 = vld [vmem:[#allocation5 + $0xcb0] sm:$0xff]
    %v545 = vld [vmem:[#allocation5 + $0xcb8] sm:$0xff]
    %v546 = vld [vmem:[#allocation5 + $0xcc0] sm:$0xff]
    %v547 = vld [vmem:[#allocation5 + $0xcc8] sm:$0xff]
    %v548 = vld [vmem:[#allocation5 + $0xcd0] sm:$0xff]
    %v549 = vld [vmem:[#allocation5 + $0xcd8] sm:$0xff]
    %v550 = vld [vmem:[#allocation5 + $0xce0] sm:$0xff]
    %v551 = vld [vmem:[#allocation5 + $0xce8] sm:$0xff]
    %v552 = vld [vmem:[#allocation5 + $0xcf0] sm:$0xff]
    %v553 = vld [vmem:[#allocation5 + $0xcf8] sm:$0xff]
    %v554 = vld [vmem:[#allocation5 + $0xd00] sm:$0xff]
    %v555 = vld [vmem:[#allocation5 + $0xd08] sm:$0xff]
    %v556 = vld [vmem:[#allocation5 + $0xd10] sm:$0xff]
    %v557 = vld [vmem:[#allocation5 + $0xd18] sm:$0xff]
    %v558 = vld [vmem:[#allocation5 + $0xd20] sm:$0xff]
    %v559 = vld [vmem:[#allocation5 + $0xd28] sm:$0xff]
    %v560 = vld [vmem:[#allocation5 + $0xd30] sm:$0xff]
    %v561 = vld [vmem:[#allocation5 + $0xd38] sm:$0xff]
    %v562 = vld [vmem:[#allocation5 + $0xd40] sm:$0xff]
    %v563 = vld [vmem:[#allocation5 + $0xd48] sm:$0xff]
    %v564 = vld [vmem:[#allocation5 + $0xd50] sm:$0xff]
    %v565 = vld [vmem:[#allocation5 + $0xd58] sm:$0xff]
    %v566 = vld [vmem:[#allocation5 + $0xd60] sm:$0xff]
    %v567 = vld [vmem:[#allocation5 + $0xd68] sm:$0xff]
    %v568 = vld [vmem:[#allocation5 + $0xd70] sm:$0xff]
    %v569 = vld [vmem:[#allocation5 + $0xd78] sm:$0xff]
    %v570 = vld [vmem:[#allocation5 + $0xd80] sm:$0xff]
    %v571 = vld [vmem:[#allocation5 + $0xd88] sm:$0xff]
    %v572 = vld [vmem:[#allocation5 + $0xd90] sm:$0xff]
    %v573 = vld [vmem:[#allocation5 + $0xd98] sm:$0xff]
    %v574 = vld [vmem:[#allocation5 + $0xda0] sm:$0xff]
    %v575 = vld [vmem:[#allocation5 + $0xda8] sm:$0xff]
    %v576 = vld [vmem:[#allocation5 + $0xdb0] sm:$0xff]
    %v577 = vld [vmem:[#allocation5 + $0xdb8] sm:$0xff]
    %v578 = vld [vmem:[#allocation5 + $0xdc0] sm:$0xff]
    %v579 = vld [vmem:[#allocation5 + $0xdc8] sm:$0xff]
    %v580 = vld [vmem:[#allocation5 + $0xdd0] sm:$0xff]
    %v581 = vld [vmem:[#allocation5 + $0xdd8] sm:$0xff]
    %v582 = vld [vmem:[#allocation5 + $0xde0] sm:$0xff]
    %v583 = vld [vmem:[#allocation5 + $0xde8] sm:$0xff]
    %v584 = vld [vmem:[#allocation5 + $0xdf0] sm:$0xff]
    %v585 = vld [vmem:[#allocation5 + $0xdf8] sm:$0xff]
    %v586 = vld [vmem:[#allocation7] sm:$0xff]
    %v588 = vlaneseq
    %v589 = vshrl.u32 %v588, 7
    %v590 = vsub.s32 0, %v589
    %v591 = vrot.slane %v586, %v590
    %v592 = vlaneseq
    %v593 = vshrl.u32 %v592, 7
    %v594 = vsub.s32 1, %v593
    %v595 = vrot.slane %v586, %v594
    %v596 = vlaneseq
    %v597 = vshrl.u32 %v596, 7
    %v598 = vsub.s32 2, %v597
    %v599 = vrot.slane %v586, %v598
    %v600 = vlaneseq
    %v601 = vshrl.u32 %v600, 7
    %v602 = vsub.s32 3, %v601
    %v603 = vrot.slane %v586, %v602
    %v604 = vlaneseq
    %v605 = vshrl.u32 %v604, 7
    %v606 = vsub.s32 4, %v605
    %v607 = vrot.slane %v586, %v606
    %v608 = vlaneseq
    %v609 = vshrl.u32 %v608, 7
    %v610 = vsub.s32 5, %v609
    %v611 = vrot.slane %v586, %v610
    %v612 = vlaneseq
    %v613 = vshrl.u32 %v612, 7
    %v614 = vsub.s32 6, %v613
    %v615 = vrot.slane %v586, %v614
    %v616 = vlaneseq
    %v617 = vshrl.u32 %v616, 7
    %v618 = vsub.s32 7, %v617
    %v619 = vrot.slane %v586, %v618
    %v1076 = vunpack.c.l.b16 %v138
    %v1077 = vunpack.c.h.b16 %v138
    %v1078 = vunpack.c.l.b16 %v139
    %v1079 = vunpack.c.h.b16 %v139
    %v1080 = vunpack.c.l.b16 %v140
    %v1081 = vunpack.c.h.b16 %v140
    %v1082 = vunpack.c.l.b16 %v141
    %v1083 = vunpack.c.h.b16 %v141
    %v1084 = vunpack.c.l.b16 %v142
    %v1085 = vunpack.c.h.b16 %v142
    %v1086 = vunpack.c.l.b16 %v143
    %v1087 = vunpack.c.h.b16 %v143
    %v1088 = vunpack.c.l.b16 %v144
    %v1089 = vunpack.c.h.b16 %v144
    %v1090 = vunpack.c.l.b16 %v145
    %v1091 = vunpack.c.h.b16 %v145
    %v1092 = vunpack.c.l.b16 %v146
    %v1093 = vunpack.c.h.b16 %v146
    %v1094 = vunpack.c.l.b16 %v147
    %v1095 = vunpack.c.h.b16 %v147
    %v1096 = vunpack.c.l.b16 %v148
    %v1097 = vunpack.c.h.b16 %v148
    %v1098 = vunpack.c.l.b16 %v149
    %v1099 = vunpack.c.h.b16 %v149
    %v1100 = vunpack.c.l.b16 %v150
    %v1101 = vunpack.c.h.b16 %v150
    %v1102 = vunpack.c.l.b16 %v151
    %v1103 = vunpack.c.h.b16 %v151
    %v1104 = vunpack.c.l.b16 %v152
    %v1105 = vunpack.c.h.b16 %v152
    %v1106 = vunpack.c.l.b16 %v153
    %v1107 = vunpack.c.h.b16 %v153
    %v1108 = vunpack.c.l.b16 %v154
    %v1109 = vunpack.c.h.b16 %v154
    %v1110 = vunpack.c.l.b16 %v155
    %v1111 = vunpack.c.h.b16 %v155
    %v1112 = vunpack.c.l.b16 %v156
    %v1113 = vunpack.c.h.b16 %v156
    %v1114 = vunpack.c.l.b16 %v157
    %v1115 = vunpack.c.h.b16 %v157
    %v1116 = vunpack.c.l.b16 %v158
    %v1117 = vunpack.c.h.b16 %v158
    %v1118 = vunpack.c.l.b16 %v159
    %v1119 = vunpack.c.h.b16 %v159
    %v1120 = vunpack.c.l.b16 %v160
    %v1121 = vunpack.c.h.b16 %v160
    %v1122 = vunpack.c.l.b16 %v161
    %v1123 = vunpack.c.h.b16 %v161
    %v1124 = vunpack.c.l.b16 %v162
    %v1125 = vunpack.c.h.b16 %v162
    %v1126 = vunpack.c.l.b16 %v163
    %v1127 = vunpack.c.h.b16 %v163
    %v1128 = vunpack.c.l.b16 %v164
    %v1129 = vunpack.c.h.b16 %v164
    %v1130 = vunpack.c.l.b16 %v165
    %v1131 = vunpack.c.h.b16 %v165
    %v1132 = vunpack.c.l.b16 %v166
    %v1133 = vunpack.c.h.b16 %v166
    %v1134 = vunpack.c.l.b16 %v167
    %v1135 = vunpack.c.h.b16 %v167
    %v1136 = vunpack.c.l.b16 %v168
    %v1137 = vunpack.c.h.b16 %v168
    %v1138 = vunpack.c.l.b16 %v169
    %v1139 = vunpack.c.h.b16 %v169
    %v1140 = vunpack.c.l.b16 %v170
    %v1141 = vunpack.c.h.b16 %v170
    %v1142 = vunpack.c.l.b16 %v171
    %v1143 = vunpack.c.h.b16 %v171
    %v1144 = vunpack.c.l.b16 %v172
    %v1145 = vunpack.c.h.b16 %v172
    %v1146 = vunpack.c.l.b16 %v173
    %v1147 = vunpack.c.h.b16 %v173
    %v1148 = vunpack.c.l.b16 %v174
    %v1149 = vunpack.c.h.b16 %v174
    %v1150 = vunpack.c.l.b16 %v175
    %v1151 = vunpack.c.h.b16 %v175
    %v1152 = vunpack.c.l.b16 %v176
    %v1153 = vunpack.c.h.b16 %v176
    %v1154 = vunpack.c.l.b16 %v177
    %v1155 = vunpack.c.h.b16 %v177
    %v1156 = vunpack.c.l.b16 %v178
    %v1157 = vunpack.c.h.b16 %v178
    %v1158 = vunpack.c.l.b16 %v179
    %v1159 = vunpack.c.h.b16 %v179
    %v1160 = vunpack.c.l.b16 %v180
    %v1161 = vunpack.c.h.b16 %v180
    %v1162 = vunpack.c.l.b16 %v181
    %v1163 = vunpack.c.h.b16 %v181
    %v1164 = vunpack.c.l.b16 %v182
    %v1165 = vunpack.c.h.b16 %v182
    %v1166 = vunpack.c.l.b16 %v183
    %v1167 = vunpack.c.h.b16 %v183
    %v1168 = vunpack.c.l.b16 %v184
    %v1169 = vunpack.c.h.b16 %v184
    %v1170 = vunpack.c.l.b16 %v185
    %v1171 = vunpack.c.h.b16 %v185
    %v1172 = vunpack.c.l.b16 %v186
    %v1173 = vunpack.c.h.b16 %v186
    %v1174 = vunpack.c.l.b16 %v187
    %v1175 = vunpack.c.h.b16 %v187
    %v1176 = vunpack.c.l.b16 %v188
    %v1177 = vunpack.c.h.b16 %v188
    %v1178 = vunpack.c.l.b16 %v189
    %v1179 = vunpack.c.h.b16 %v189
    %v1180 = vunpack.c.l.b16 %v190
    %v1181 = vunpack.c.h.b16 %v190
    %v1182 = vunpack.c.l.b16 %v191
    %v1183 = vunpack.c.h.b16 %v191
    %v1184 = vunpack.c.l.b16 %v192
    %v1185 = vunpack.c.h.b16 %v192
    %v1186 = vunpack.c.l.b16 %v193
    %v1187 = vunpack.c.h.b16 %v193
    %v1188 = vunpack.c.l.b16 %v194
    %v1189 = vunpack.c.h.b16 %v194
    %v1190 = vunpack.c.l.b16 %v195
    %v1191 = vunpack.c.h.b16 %v195
    %v1192 = vunpack.c.l.b16 %v196
    %v1193 = vunpack.c.h.b16 %v196
    %v1194 = vunpack.c.l.b16 %v197
    %v1195 = vunpack.c.h.b16 %v197
    %v1196 = vunpack.c.l.b16 %v198
    %v1197 = vunpack.c.h.b16 %v198
    %v1198 = vunpack.c.l.b16 %v199
    %v1199 = vunpack.c.h.b16 %v199
    %v1200 = vunpack.c.l.b16 %v200
    %v1201 = vunpack.c.h.b16 %v200
    %v1202 = vunpack.c.l.b16 %v201
    %v1203 = vunpack.c.h.b16 %v201
    %v1204 = vunpack.c.l.b16 %v202
    %v1205 = vunpack.c.h.b16 %v202
    %v1206 = vunpack.c.l.b16 %v203
    %v1207 = vunpack.c.h.b16 %v203
    %v1208 = vunpack.c.l.b16 %v204
    %v1209 = vunpack.c.h.b16 %v204
    %v1210 = vunpack.c.l.b16 %v205
    %v1211 = vunpack.c.h.b16 %v205
    %v1212 = vunpack.c.l.b16 %v206
    %v1213 = vunpack.c.h.b16 %v206
    %v1214 = vunpack.c.l.b16 %v207
    %v1215 = vunpack.c.h.b16 %v207
    %v1216 = vunpack.c.l.b16 %v208
    %v1217 = vunpack.c.h.b16 %v208
    %v1218 = vunpack.c.l.b16 %v209
    %v1219 = vunpack.c.h.b16 %v209
    %v1220 = vunpack.c.l.b16 %v210
    %v1221 = vunpack.c.h.b16 %v210
    %v1222 = vunpack.c.l.b16 %v211
    %v1223 = vunpack.c.h.b16 %v211
    %v1224 = vunpack.c.l.b16 %v212
    %v1225 = vunpack.c.h.b16 %v212
    %v1226 = vunpack.c.l.b16 %v213
    %v1227 = vunpack.c.h.b16 %v213
    %v1228 = vunpack.c.l.b16 %v214
    %v1229 = vunpack.c.h.b16 %v214
    %v1230 = vunpack.c.l.b16 %v215
    %v1231 = vunpack.c.h.b16 %v215
    %v1232 = vunpack.c.l.b16 %v216
    %v1233 = vunpack.c.h.b16 %v216
    %v1234 = vunpack.c.l.b16 %v217
    %v1235 = vunpack.c.h.b16 %v217
    %v1236 = vunpack.c.l.b16 %v218
    %v1237 = vunpack.c.h.b16 %v218
    %v1238 = vunpack.c.l.b16 %v219
    %v1239 = vunpack.c.h.b16 %v219
    %v1240 = vunpack.c.l.b16 %v220
    %v1241 = vunpack.c.h.b16 %v220
    %v1242 = vunpack.c.l.b16 %v221
    %v1243 = vunpack.c.h.b16 %v221
    %v1244 = vunpack.c.l.b16 %v222
    %v1245 = vunpack.c.h.b16 %v222
    %v1246 = vunpack.c.l.b16 %v223
    %v1247 = vunpack.c.h.b16 %v223
    %v1248 = vunpack.c.l.b16 %v224
    %v1249 = vunpack.c.h.b16 %v224
    %v1250 = vunpack.c.l.b16 %v225
    %v1251 = vunpack.c.h.b16 %v225
    %v1252 = vunpack.c.l.b16 %v226
    %v1253 = vunpack.c.h.b16 %v226
    %v1254 = vunpack.c.l.b16 %v227
    %v1255 = vunpack.c.h.b16 %v227
    %v1256 = vunpack.c.l.b16 %v228
    %v1257 = vunpack.c.h.b16 %v228
    %v1258 = vunpack.c.l.b16 %v229
    %v1259 = vunpack.c.h.b16 %v229
    %v1260 = vunpack.c.l.b16 %v230
    %v1261 = vunpack.c.h.b16 %v230
    %v1262 = vunpack.c.l.b16 %v231
    %v1263 = vunpack.c.h.b16 %v231
    %v1264 = vunpack.c.l.b16 %v232
    %v1265 = vunpack.c.h.b16 %v232
    %v1266 = vunpack.c.l.b16 %v233
    %v1267 = vunpack.c.h.b16 %v233
    %v1268 = vunpack.c.l.b16 %v234
    %v1269 = vunpack.c.h.b16 %v234
    %v1270 = vunpack.c.l.b16 %v235
    %v1271 = vunpack.c.h.b16 %v235
    %v1272 = vunpack.c.l.b16 %v236
    %v1273 = vunpack.c.h.b16 %v236
    %v1274 = vunpack.c.l.b16 %v237
    %v1275 = vunpack.c.h.b16 %v237
    %v1276 = vunpack.c.l.b16 %v238
    %v1277 = vunpack.c.h.b16 %v238
    %v1278 = vunpack.c.l.b16 %v239
    %v1279 = vunpack.c.h.b16 %v239
    %v1280 = vunpack.c.l.b16 %v240
    %v1281 = vunpack.c.h.b16 %v240
    %v1282 = vunpack.c.l.b16 %v241
    %v1283 = vunpack.c.h.b16 %v241
    %v1284 = vunpack.c.l.b16 %v242
    %v1285 = vunpack.c.h.b16 %v242
    %v1286 = vunpack.c.l.b16 %v243
    %v1287 = vunpack.c.h.b16 %v243
    %v1288 = vunpack.c.l.b16 %v244
    %v1289 = vunpack.c.h.b16 %v244
    %v1290 = vunpack.c.l.b16 %v245
    %v1291 = vunpack.c.h.b16 %v245
    %v1292 = vunpack.c.l.b16 %v246
    %v1293 = vunpack.c.h.b16 %v246
    %v1294 = vunpack.c.l.b16 %v247
    %v1295 = vunpack.c.h.b16 %v247
    %v1296 = vunpack.c.l.b16 %v248
    %v1297 = vunpack.c.h.b16 %v248
    %v1298 = vunpack.c.l.b16 %v249
    %v1299 = vunpack.c.h.b16 %v249
    %v1300 = vunpack.c.l.b16 %v250
    %v1301 = vunpack.c.h.b16 %v250
    %v1302 = vunpack.c.l.b16 %v251
    %v1303 = vunpack.c.h.b16 %v251
    %v1304 = vunpack.c.l.b16 %v252
    %v1305 = vunpack.c.h.b16 %v252
    %v1306 = vunpack.c.l.b16 %v253
    %v1307 = vunpack.c.h.b16 %v253
    %v1308 = vunpack.c.l.b16 %v254
    %v1309 = vunpack.c.h.b16 %v254
    %v1310 = vunpack.c.l.b16 %v255
    %v1311 = vunpack.c.h.b16 %v255
    %v1312 = vunpack.c.l.b16 %v256
    %v1313 = vunpack.c.h.b16 %v256
    %v1314 = vunpack.c.l.b16 %v257
    %v1315 = vunpack.c.h.b16 %v257
    %v1316 = vunpack.c.l.b16 %v258
    %v1317 = vunpack.c.h.b16 %v258
    %v1318 = vunpack.c.l.b16 %v259
    %v1319 = vunpack.c.h.b16 %v259
    %v1320 = vunpack.c.l.b16 %v260
    %v1321 = vunpack.c.h.b16 %v260
    %v1322 = vunpack.c.l.b16 %v261
    %v1323 = vunpack.c.h.b16 %v261
    %v1324 = vunpack.c.l.b16 %v262
    %v1325 = vunpack.c.h.b16 %v262
    %v1326 = vunpack.c.l.b16 %v263
    %v1327 = vunpack.c.h.b16 %v263
    %v1328 = vunpack.c.l.b16 %v264
    %v1329 = vunpack.c.h.b16 %v264
    %v1330 = vunpack.c.l.b16 %v265
    %v1331 = vunpack.c.h.b16 %v265
    %v1332 = vunpack.c.l.b16 %v266
    %v1333 = vunpack.c.h.b16 %v266
    %v1334 = vunpack.c.l.b16 %v267
    %v1335 = vunpack.c.h.b16 %v267
    %v1336 = vunpack.c.l.b16 %v268
    %v1337 = vunpack.c.h.b16 %v268
    %v1338 = vunpack.c.l.b16 %v269
    %v1339 = vunpack.c.h.b16 %v269
    %v1340 = vunpack.c.l.b16 %v270
    %v1341 = vunpack.c.h.b16 %v270
    %v1342 = vunpack.c.l.b16 %v271
    %v1343 = vunpack.c.h.b16 %v271
    %v1344 = vunpack.c.l.b16 %v272
    %v1345 = vunpack.c.h.b16 %v272
    %v1346 = vunpack.c.l.b16 %v273
    %v1347 = vunpack.c.h.b16 %v273
    %v1348 = vunpack.c.l.b16 %v274
    %v1349 = vunpack.c.h.b16 %v274
    %v1350 = vunpack.c.l.b16 %v275
    %v1351 = vunpack.c.h.b16 %v275
    %v1352 = vunpack.c.l.b16 %v276
    %v1353 = vunpack.c.h.b16 %v276
    %v1354 = vunpack.c.l.b16 %v277
    %v1355 = vunpack.c.h.b16 %v277
    %v1356 = vunpack.c.l.b16 %v278
    %v1357 = vunpack.c.h.b16 %v278
    %v1358 = vunpack.c.l.b16 %v279
    %v1359 = vunpack.c.h.b16 %v279
    %v1360 = vunpack.c.l.b16 %v280
    %v1361 = vunpack.c.h.b16 %v280
    %v1362 = vunpack.c.l.b16 %v281
    %v1363 = vunpack.c.h.b16 %v281
    %v1364 = vunpack.c.l.b16 %v282
    %v1365 = vunpack.c.h.b16 %v282
    %v1366 = vunpack.c.l.b16 %v283
    %v1367 = vunpack.c.h.b16 %v283
    %v1368 = vunpack.c.l.b16 %v284
    %v1369 = vunpack.c.h.b16 %v284
    %v1370 = vunpack.c.l.b16 %v285
    %v1371 = vunpack.c.h.b16 %v285
    %v1372 = vunpack.c.l.b16 %v286
    %v1373 = vunpack.c.h.b16 %v286
    %v1374 = vunpack.c.l.b16 %v287
    %v1375 = vunpack.c.h.b16 %v287
    %v1376 = vunpack.c.l.b16 %v288
    %v1377 = vunpack.c.h.b16 %v288
    %v1378 = vunpack.c.l.b16 %v289
    %v1379 = vunpack.c.h.b16 %v289
    %v1380 = vunpack.c.l.b16 %v290
    %v1381 = vunpack.c.h.b16 %v290
    %v1382 = vunpack.c.l.b16 %v291
    %v1383 = vunpack.c.h.b16 %v291
    %v1384 = vunpack.c.l.b16 %v292
    %v1385 = vunpack.c.h.b16 %v292
    %v1386 = vunpack.c.l.b16 %v293
    %v1387 = vunpack.c.h.b16 %v293
    %v1388 = vunpack.c.l.b16 %v294
    %v1389 = vunpack.c.h.b16 %v294
    %v1390 = vunpack.c.l.b16 %v295
    %v1391 = vunpack.c.h.b16 %v295
    %v1392 = vunpack.c.l.b16 %v296
    %v1393 = vunpack.c.h.b16 %v296
    %v1394 = vunpack.c.l.b16 %v297
    %v1395 = vunpack.c.h.b16 %v297
    %v1396 = vunpack.c.l.b16 %v298
    %v1397 = vunpack.c.h.b16 %v298
    %v1398 = vunpack.c.l.b16 %v299
    %v1399 = vunpack.c.h.b16 %v299
    %v1400 = vunpack.c.l.b16 %v300
    %v1401 = vunpack.c.h.b16 %v300
    %v1402 = vunpack.c.l.b16 %v301
    %v1403 = vunpack.c.h.b16 %v301
    %v1404 = vunpack.c.l.b16 %v302
    %v1405 = vunpack.c.h.b16 %v302
    %v1406 = vunpack.c.l.b16 %v303
    %v1407 = vunpack.c.h.b16 %v303
    %v1408 = vunpack.c.l.b16 %v304
    %v1409 = vunpack.c.h.b16 %v304
    %v1410 = vunpack.c.l.b16 %v305
    %v1411 = vunpack.c.h.b16 %v305
    %v1412 = vunpack.c.l.b16 %v306
    %v1413 = vunpack.c.h.b16 %v306
    %v1414 = vunpack.c.l.b16 %v307
    %v1415 = vunpack.c.h.b16 %v307
    %v1416 = vunpack.c.l.b16 %v308
    %v1417 = vunpack.c.h.b16 %v308
    %v1418 = vunpack.c.l.b16 %v309
    %v1419 = vunpack.c.h.b16 %v309
    %v1420 = vunpack.c.l.b16 %v310
    %v1421 = vunpack.c.h.b16 %v310
    %v1422 = vunpack.c.l.b16 %v311
    %v1423 = vunpack.c.h.b16 %v311
    %v1424 = vunpack.c.l.b16 %v312
    %v1425 = vunpack.c.h.b16 %v312
    %v1426 = vunpack.c.l.b16 %v313
    %v1427 = vunpack.c.h.b16 %v313
    %v1428 = vunpack.c.l.b16 %v314
    %v1429 = vunpack.c.h.b16 %v314
    %v1430 = vunpack.c.l.b16 %v315
    %v1431 = vunpack.c.h.b16 %v315
    %v1432 = vunpack.c.l.b16 %v316
    %v1433 = vunpack.c.h.b16 %v316
    %v1434 = vunpack.c.l.b16 %v317
    %v1435 = vunpack.c.h.b16 %v317
    %v1436 = vunpack.c.l.b16 %v318
    %v1437 = vunpack.c.h.b16 %v318
    %v1438 = vunpack.c.l.b16 %v319
    %v1439 = vunpack.c.h.b16 %v319
    %v1440 = vunpack.c.l.b16 %v320
    %v1441 = vunpack.c.h.b16 %v320
    %v1442 = vunpack.c.l.b16 %v321
    %v1443 = vunpack.c.h.b16 %v321
    %v1444 = vunpack.c.l.b16 %v322
    %v1445 = vunpack.c.h.b16 %v322
    %v1446 = vunpack.c.l.b16 %v323
    %v1447 = vunpack.c.h.b16 %v323
    %v1448 = vunpack.c.l.b16 %v324
    %v1449 = vunpack.c.h.b16 %v324
    %v1450 = vunpack.c.l.b16 %v325
    %v1451 = vunpack.c.h.b16 %v325
    %v1452 = vunpack.c.l.b16 %v326
    %v1453 = vunpack.c.h.b16 %v326
    %v1454 = vunpack.c.l.b16 %v327
    %v1455 = vunpack.c.h.b16 %v327
    %v1456 = vunpack.c.l.b16 %v328
    %v1457 = vunpack.c.h.b16 %v328
    %v1458 = vunpack.c.l.b16 %v329
    %v1459 = vunpack.c.h.b16 %v329
    %v1460 = vunpack.c.l.b16 %v330
    %v1461 = vunpack.c.h.b16 %v330
    %v1462 = vunpack.c.l.b16 %v331
    %v1463 = vunpack.c.h.b16 %v331
    %v1464 = vunpack.c.l.b16 %v332
    %v1465 = vunpack.c.h.b16 %v332
    %v1466 = vunpack.c.l.b16 %v333
    %v1467 = vunpack.c.h.b16 %v333
    %v1468 = vunpack.c.l.b16 %v334
    %v1469 = vunpack.c.h.b16 %v334
    %v1470 = vunpack.c.l.b16 %v335
    %v1471 = vunpack.c.h.b16 %v335
    %v1472 = vunpack.c.l.b16 %v336
    %v1473 = vunpack.c.h.b16 %v336
    %v1474 = vunpack.c.l.b16 %v337
    %v1475 = vunpack.c.h.b16 %v337
    %v1476 = vunpack.c.l.b16 %v338
    %v1477 = vunpack.c.h.b16 %v338
    %v1478 = vunpack.c.l.b16 %v339
    %v1479 = vunpack.c.h.b16 %v339
    %v1480 = vunpack.c.l.b16 %v340
    %v1481 = vunpack.c.h.b16 %v340
    %v1482 = vunpack.c.l.b16 %v341
    %v1483 = vunpack.c.h.b16 %v341
    %v1484 = vunpack.c.l.b16 %v342
    %v1485 = vunpack.c.h.b16 %v342
    %v1486 = vunpack.c.l.b16 %v343
    %v1487 = vunpack.c.h.b16 %v343
    %v1488 = vunpack.c.l.b16 %v344
    %v1489 = vunpack.c.h.b16 %v344
    %v1490 = vunpack.c.l.b16 %v345
    %v1491 = vunpack.c.h.b16 %v345
    %v1492 = vunpack.c.l.b16 %v346
    %v1493 = vunpack.c.h.b16 %v346
    %v1494 = vunpack.c.l.b16 %v347
    %v1495 = vunpack.c.h.b16 %v347
    %v1496 = vunpack.c.l.b16 %v348
    %v1497 = vunpack.c.h.b16 %v348
    %v1498 = vunpack.c.l.b16 %v349
    %v1499 = vunpack.c.h.b16 %v349
    %v1500 = vunpack.c.l.b16 %v350
    %v1501 = vunpack.c.h.b16 %v350
    %v1502 = vunpack.c.l.b16 %v351
    %v1503 = vunpack.c.h.b16 %v351
    %v1504 = vunpack.c.l.b16 %v352
    %v1505 = vunpack.c.h.b16 %v352
    %v1506 = vunpack.c.l.b16 %v353
    %v1507 = vunpack.c.h.b16 %v353
    %v1508 = vunpack.c.l.b16 %v354
    %v1509 = vunpack.c.h.b16 %v354
    %v1510 = vunpack.c.l.b16 %v355
    %v1511 = vunpack.c.h.b16 %v355
    %v1512 = vunpack.c.l.b16 %v356
    %v1513 = vunpack.c.h.b16 %v356
    %v1514 = vunpack.c.l.b16 %v357
    %v1515 = vunpack.c.h.b16 %v357
    %v1516 = vunpack.c.l.b16 %v358
    %v1517 = vunpack.c.h.b16 %v358
    %v1518 = vunpack.c.l.b16 %v359
    %v1519 = vunpack.c.h.b16 %v359
    %v1520 = vunpack.c.l.b16 %v360
    %v1521 = vunpack.c.h.b16 %v360
    %v1522 = vunpack.c.l.b16 %v361
    %v1523 = vunpack.c.h.b16 %v361
    %v1524 = vunpack.c.l.b16 %v362
    %v1525 = vunpack.c.h.b16 %v362
    %v1526 = vunpack.c.l.b16 %v363
    %v1527 = vunpack.c.h.b16 %v363
    %v1528 = vunpack.c.l.b16 %v364
    %v1529 = vunpack.c.h.b16 %v364
    %v1530 = vunpack.c.l.b16 %v365
    %v1531 = vunpack.c.h.b16 %v365
    %v1532 = vunpack.c.l.b16 %v366
    %v1533 = vunpack.c.h.b16 %v366
    %v1534 = vunpack.c.l.b16 %v367
    %v1535 = vunpack.c.h.b16 %v367
    %v1536 = vunpack.c.l.b16 %v368
    %v1537 = vunpack.c.h.b16 %v368
    %v1538 = vunpack.c.l.b16 %v369
    %v1539 = vunpack.c.h.b16 %v369
    %v1540 = vunpack.c.l.b16 %v370
    %v1541 = vunpack.c.h.b16 %v370
    %v1542 = vunpack.c.l.b16 %v371
    %v1543 = vunpack.c.h.b16 %v371
    %v1544 = vunpack.c.l.b16 %v372
    %v1545 = vunpack.c.h.b16 %v372
    %v1546 = vunpack.c.l.b16 %v373
    %v1547 = vunpack.c.h.b16 %v373
    %v1548 = vunpack.c.l.b16 %v374
    %v1549 = vunpack.c.h.b16 %v374
    %v1550 = vunpack.c.l.b16 %v375
    %v1551 = vunpack.c.h.b16 %v375
    %v1552 = vunpack.c.l.b16 %v376
    %v1553 = vunpack.c.h.b16 %v376
    %v1554 = vunpack.c.l.b16 %v377
    %v1555 = vunpack.c.h.b16 %v377
    %v1556 = vunpack.c.l.b16 %v378
    %v1557 = vunpack.c.h.b16 %v378
    %v1558 = vunpack.c.l.b16 %v379
    %v1559 = vunpack.c.h.b16 %v379
    %v1560 = vunpack.c.l.b16 %v380
    %v1561 = vunpack.c.h.b16 %v380
    %v1562 = vunpack.c.l.b16 %v381
    %v1563 = vunpack.c.h.b16 %v381
    %v1564 = vunpack.c.l.b16 %v382
    %v1565 = vunpack.c.h.b16 %v382
    %v1566 = vunpack.c.l.b16 %v383
    %v1567 = vunpack.c.h.b16 %v383
    %v1568 = vunpack.c.l.b16 %v384
    %v1569 = vunpack.c.h.b16 %v384
    %v1570 = vunpack.c.l.b16 %v385
    %v1571 = vunpack.c.h.b16 %v385
    %v1572 = vunpack.c.l.b16 %v386
    %v1573 = vunpack.c.h.b16 %v386
    %v1574 = vunpack.c.l.b16 %v387
    %v1575 = vunpack.c.h.b16 %v387
    %v1576 = vunpack.c.l.b16 %v388
    %v1577 = vunpack.c.h.b16 %v388
    %v1578 = vunpack.c.l.b16 %v389
    %v1579 = vunpack.c.h.b16 %v389
    %v1580 = vunpack.c.l.b16 %v390
    %v1581 = vunpack.c.h.b16 %v390
    %v1582 = vunpack.c.l.b16 %v391
    %v1583 = vunpack.c.h.b16 %v391
    %v1584 = vunpack.c.l.b16 %v392
    %v1585 = vunpack.c.h.b16 %v392
    %v1586 = vunpack.c.l.b16 %v393
    %v1587 = vunpack.c.h.b16 %v393
    %v1588 = vunpack.c.l.b16 %v394
    %v1589 = vunpack.c.h.b16 %v394
    %v1590 = vunpack.c.l.b16 %v395
    %v1591 = vunpack.c.h.b16 %v395
    %v1592 = vunpack.c.l.b16 %v396
    %v1593 = vunpack.c.h.b16 %v396
    %v1594 = vunpack.c.l.b16 %v397
    %v1595 = vunpack.c.h.b16 %v397
    %v1596 = vunpack.c.l.b16 %v398
    %v1597 = vunpack.c.h.b16 %v398
    %v1598 = vunpack.c.l.b16 %v399
    %v1599 = vunpack.c.h.b16 %v399
    %v1600 = vunpack.c.l.b16 %v400
    %v1601 = vunpack.c.h.b16 %v400
    %v1602 = vunpack.c.l.b16 %v401
    %v1603 = vunpack.c.h.b16 %v401
    %v1604 = vunpack.c.l.b16 %v402
    %v1605 = vunpack.c.h.b16 %v402
    %v1606 = vunpack.c.l.b16 %v403
    %v1607 = vunpack.c.h.b16 %v403
    %v1608 = vunpack.c.l.b16 %v404
    %v1609 = vunpack.c.h.b16 %v404
    %v1610 = vunpack.c.l.b16 %v405
    %v1611 = vunpack.c.h.b16 %v405
    %v1612 = vunpack.c.l.b16 %v406
    %v1613 = vunpack.c.h.b16 %v406
    %v1614 = vunpack.c.l.b16 %v407
    %v1615 = vunpack.c.h.b16 %v407
    %v1616 = vunpack.c.l.b16 %v408
    %v1617 = vunpack.c.h.b16 %v408
    %v1618 = vunpack.c.l.b16 %v409
    %v1619 = vunpack.c.h.b16 %v409
    %v1620 = vunpack.c.l.b16 %v410
    %v1621 = vunpack.c.h.b16 %v410
    %v1622 = vunpack.c.l.b16 %v411
    %v1623 = vunpack.c.h.b16 %v411
    %v1624 = vunpack.c.l.b16 %v412
    %v1625 = vunpack.c.h.b16 %v412
    %v1626 = vunpack.c.l.b16 %v413
    %v1627 = vunpack.c.h.b16 %v413
    %v1628 = vunpack.c.l.b16 %v414
    %v1629 = vunpack.c.h.b16 %v414
    %v1630 = vunpack.c.l.b16 %v415
    %v1631 = vunpack.c.h.b16 %v415
    %v1632 = vunpack.c.l.b16 %v416
    %v1633 = vunpack.c.h.b16 %v416
    %v1634 = vunpack.c.l.b16 %v417
    %v1635 = vunpack.c.h.b16 %v417
    %v1636 = vunpack.c.l.b16 %v418
    %v1637 = vunpack.c.h.b16 %v418
    %v1638 = vunpack.c.l.b16 %v419
    %v1639 = vunpack.c.h.b16 %v419
    %v1640 = vunpack.c.l.b16 %v420
    %v1641 = vunpack.c.h.b16 %v420
    %v1642 = vunpack.c.l.b16 %v421
    %v1643 = vunpack.c.h.b16 %v421
    %v1644 = vunpack.c.l.b16 %v422
    %v1645 = vunpack.c.h.b16 %v422
    %v1646 = vunpack.c.l.b16 %v423
    %v1647 = vunpack.c.h.b16 %v423
    %v1648 = vunpack.c.l.b16 %v424
    %v1649 = vunpack.c.h.b16 %v424
    %v1650 = vunpack.c.l.b16 %v425
    %v1651 = vunpack.c.h.b16 %v425
    %v1652 = vunpack.c.l.b16 %v426
    %v1653 = vunpack.c.h.b16 %v426
    %v1654 = vunpack.c.l.b16 %v427
    %v1655 = vunpack.c.h.b16 %v427
    %v1656 = vunpack.c.l.b16 %v428
    %v1657 = vunpack.c.h.b16 %v428
    %v1658 = vunpack.c.l.b16 %v429
    %v1659 = vunpack.c.h.b16 %v429
    %v1660 = vunpack.c.l.b16 %v430
    %v1661 = vunpack.c.h.b16 %v430
    %v1662 = vunpack.c.l.b16 %v431
    %v1663 = vunpack.c.h.b16 %v431
    %v1664 = vunpack.c.l.b16 %v432
    %v1665 = vunpack.c.h.b16 %v432
    %v1666 = vunpack.c.l.b16 %v433
    %v1667 = vunpack.c.h.b16 %v433
    %v1668 = vunpack.c.l.b16 %v434
    %v1669 = vunpack.c.h.b16 %v434
    %v1670 = vunpack.c.l.b16 %v435
    %v1671 = vunpack.c.h.b16 %v435
    %v1672 = vunpack.c.l.b16 %v436
    %v1673 = vunpack.c.h.b16 %v436
    %v1674 = vunpack.c.l.b16 %v437
    %v1675 = vunpack.c.h.b16 %v437
    %v1676 = vunpack.c.l.b16 %v438
    %v1677 = vunpack.c.h.b16 %v438
    %v1678 = vunpack.c.l.b16 %v439
    %v1679 = vunpack.c.h.b16 %v439
    %v1680 = vunpack.c.l.b16 %v440
    %v1681 = vunpack.c.h.b16 %v440
    %v1682 = vunpack.c.l.b16 %v441
    %v1683 = vunpack.c.h.b16 %v441
    %v1684 = vunpack.c.l.b16 %v442
    %v1685 = vunpack.c.h.b16 %v442
    %v1686 = vunpack.c.l.b16 %v443
    %v1687 = vunpack.c.h.b16 %v443
    %v1688 = vunpack.c.l.b16 %v444
    %v1689 = vunpack.c.h.b16 %v444
    %v1690 = vunpack.c.l.b16 %v445
    %v1691 = vunpack.c.h.b16 %v445
    %v1692 = vunpack.c.l.b16 %v446
    %v1693 = vunpack.c.h.b16 %v446
    %v1694 = vunpack.c.l.b16 %v447
    %v1695 = vunpack.c.h.b16 %v447
    %v1696 = vunpack.c.l.b16 %v448
    %v1697 = vunpack.c.h.b16 %v448
    %v1698 = vunpack.c.l.b16 %v449
    %v1699 = vunpack.c.h.b16 %v449
    %v1700 = vunpack.c.l.b16 %v450
    %v1701 = vunpack.c.h.b16 %v450
    %v1702 = vunpack.c.l.b16 %v451
    %v1703 = vunpack.c.h.b16 %v451
    %v1704 = vunpack.c.l.b16 %v452
    %v1705 = vunpack.c.h.b16 %v452
    %v1706 = vunpack.c.l.b16 %v453
    %v1707 = vunpack.c.h.b16 %v453
    %v1708 = vunpack.c.l.b16 %v454
    %v1709 = vunpack.c.h.b16 %v454
    %v1710 = vunpack.c.l.b16 %v455
    %v1711 = vunpack.c.h.b16 %v455
    %v1712 = vunpack.c.l.b16 %v456
    %v1713 = vunpack.c.h.b16 %v456
    %v1714 = vunpack.c.l.b16 %v457
    %v1715 = vunpack.c.h.b16 %v457
    %v1716 = vunpack.c.l.b16 %v458
    %v1717 = vunpack.c.h.b16 %v458
    %v1718 = vunpack.c.l.b16 %v459
    %v1719 = vunpack.c.h.b16 %v459
    %v1720 = vunpack.c.l.b16 %v460
    %v1721 = vunpack.c.h.b16 %v460
    %v1722 = vunpack.c.l.b16 %v461
    %v1723 = vunpack.c.h.b16 %v461
    %v1724 = vunpack.c.l.b16 %v462
    %v1725 = vunpack.c.h.b16 %v462
    %v1726 = vunpack.c.l.b16 %v463
    %v1727 = vunpack.c.h.b16 %v463
    %v1728 = vunpack.c.l.b16 %v464
    %v1729 = vunpack.c.h.b16 %v464
    %v1730 = vunpack.c.l.b16 %v465
    %v1731 = vunpack.c.h.b16 %v465
    %v1732 = vunpack.c.l.b16 %v466
    %v1733 = vunpack.c.h.b16 %v466
    %v1734 = vunpack.c.l.b16 %v467
    %v1735 = vunpack.c.h.b16 %v467
    %v1736 = vunpack.c.l.b16 %v468
    %v1737 = vunpack.c.h.b16 %v468
    %v1738 = vunpack.c.l.b16 %v469
    %v1739 = vunpack.c.h.b16 %v469
    %v1740 = vunpack.c.l.b16 %v470
    %v1741 = vunpack.c.h.b16 %v470
    %v1742 = vunpack.c.l.b16 %v471
    %v1743 = vunpack.c.h.b16 %v471
    %v1744 = vunpack.c.l.b16 %v472
    %v1745 = vunpack.c.h.b16 %v472
    %v1746 = vunpack.c.l.b16 %v473
    %v1747 = vunpack.c.h.b16 %v473
    %v1748 = vunpack.c.l.b16 %v474
    %v1749 = vunpack.c.h.b16 %v474
    %v1750 = vunpack.c.l.b16 %v475
    %v1751 = vunpack.c.h.b16 %v475
    %v1752 = vunpack.c.l.b16 %v476
    %v1753 = vunpack.c.h.b16 %v476
    %v1754 = vunpack.c.l.b16 %v477
    %v1755 = vunpack.c.h.b16 %v477
    %v1756 = vunpack.c.l.b16 %v478
    %v1757 = vunpack.c.h.b16 %v478
    %v1758 = vunpack.c.l.b16 %v479
    %v1759 = vunpack.c.h.b16 %v479
    %v1760 = vunpack.c.l.b16 %v480
    %v1761 = vunpack.c.h.b16 %v480
    %v1762 = vunpack.c.l.b16 %v481
    %v1763 = vunpack.c.h.b16 %v481
    %v1764 = vunpack.c.l.b16 %v482
    %v1765 = vunpack.c.h.b16 %v482
    %v1766 = vunpack.c.l.b16 %v483
    %v1767 = vunpack.c.h.b16 %v483
    %v1768 = vunpack.c.l.b16 %v484
    %v1769 = vunpack.c.h.b16 %v484
    %v1770 = vunpack.c.l.b16 %v485
    %v1771 = vunpack.c.h.b16 %v485
    %v1772 = vunpack.c.l.b16 %v486
    %v1773 = vunpack.c.h.b16 %v486
    %v1774 = vunpack.c.l.b16 %v487
    %v1775 = vunpack.c.h.b16 %v487
    %v1776 = vunpack.c.l.b16 %v488
    %v1777 = vunpack.c.h.b16 %v488
    %v1778 = vunpack.c.l.b16 %v489
    %v1779 = vunpack.c.h.b16 %v489
    %v1780 = vunpack.c.l.b16 %v490
    %v1781 = vunpack.c.h.b16 %v490
    %v1782 = vunpack.c.l.b16 %v491
    %v1783 = vunpack.c.h.b16 %v491
    %v1784 = vunpack.c.l.b16 %v492
    %v1785 = vunpack.c.h.b16 %v492
    %v1786 = vunpack.c.l.b16 %v493
    %v1787 = vunpack.c.h.b16 %v493
    %v1788 = vunpack.c.l.b16 %v494
    %v1789 = vunpack.c.h.b16 %v494
    %v1790 = vunpack.c.l.b16 %v495
    %v1791 = vunpack.c.h.b16 %v495
    %v1792 = vunpack.c.l.b16 %v496
    %v1793 = vunpack.c.h.b16 %v496
    %v1794 = vunpack.c.l.b16 %v497
    %v1795 = vunpack.c.h.b16 %v497
    %v1796 = vunpack.c.l.b16 %v498
    %v1797 = vunpack.c.h.b16 %v498
    %v1798 = vunpack.c.l.b16 %v499
    %v1799 = vunpack.c.h.b16 %v499
    %v1800 = vunpack.c.l.b16 %v500
    %v1801 = vunpack.c.h.b16 %v500
    %v1802 = vunpack.c.l.b16 %v501
    %v1803 = vunpack.c.h.b16 %v501
    %v1804 = vunpack.c.l.b16 %v502
    %v1805 = vunpack.c.h.b16 %v502
    %v1806 = vunpack.c.l.b16 %v503
    %v1807 = vunpack.c.h.b16 %v503
    %v1808 = vunpack.c.l.b16 %v504
    %v1809 = vunpack.c.h.b16 %v504
    %v1810 = vunpack.c.l.b16 %v505
    %v1811 = vunpack.c.h.b16 %v505
    %v1812 = vunpack.c.l.b16 %v506
    %v1813 = vunpack.c.h.b16 %v506
    %v1814 = vunpack.c.l.b16 %v507
    %v1815 = vunpack.c.h.b16 %v507
    %v1816 = vunpack.c.l.b16 %v508
    %v1817 = vunpack.c.h.b16 %v508
    %v1818 = vunpack.c.l.b16 %v509
    %v1819 = vunpack.c.h.b16 %v509
    %v1820 = vunpack.c.l.b16 %v510
    %v1821 = vunpack.c.h.b16 %v510
    %v1822 = vunpack.c.l.b16 %v511
    %v1823 = vunpack.c.h.b16 %v511
    %v1824 = vunpack.c.l.b16 %v512
    %v1825 = vunpack.c.h.b16 %v512
    %v1826 = vunpack.c.l.b16 %v513
    %v1827 = vunpack.c.h.b16 %v513
    %v1828 = vunpack.c.l.b16 %v514
    %v1829 = vunpack.c.h.b16 %v514
    %v1830 = vunpack.c.l.b16 %v515
    %v1831 = vunpack.c.h.b16 %v515
    %v1832 = vunpack.c.l.b16 %v516
    %v1833 = vunpack.c.h.b16 %v516
    %v1834 = vunpack.c.l.b16 %v517
    %v1835 = vunpack.c.h.b16 %v517
    %v1836 = vunpack.c.l.b16 %v518
    %v1837 = vunpack.c.h.b16 %v518
    %v1838 = vunpack.c.l.b16 %v519
    %v1839 = vunpack.c.h.b16 %v519
    %v1840 = vunpack.c.l.b16 %v520
    %v1841 = vunpack.c.h.b16 %v520
    %v1842 = vunpack.c.l.b16 %v521
    %v1843 = vunpack.c.h.b16 %v521
    %v1844 = vunpack.c.l.b16 %v522
    %v1845 = vunpack.c.h.b16 %v522
    %v1846 = vunpack.c.l.b16 %v523
    %v1847 = vunpack.c.h.b16 %v523
    %v1848 = vunpack.c.l.b16 %v524
    %v1849 = vunpack.c.h.b16 %v524
    %v1850 = vunpack.c.l.b16 %v525
    %v1851 = vunpack.c.h.b16 %v525
    %v1852 = vunpack.c.l.b16 %v526
    %v1853 = vunpack.c.h.b16 %v526
    %v1854 = vunpack.c.l.b16 %v527
    %v1855 = vunpack.c.h.b16 %v527
    %v1856 = vunpack.c.l.b16 %v528
    %v1857 = vunpack.c.h.b16 %v528
    %v1858 = vunpack.c.l.b16 %v529
    %v1859 = vunpack.c.h.b16 %v529
    %v1860 = vunpack.c.l.b16 %v530
    %v1861 = vunpack.c.h.b16 %v530
    %v1862 = vunpack.c.l.b16 %v531
    %v1863 = vunpack.c.h.b16 %v531
    %v1864 = vunpack.c.l.b16 %v532
    %v1865 = vunpack.c.h.b16 %v532
    %v1866 = vunpack.c.l.b16 %v533
    %v1867 = vunpack.c.h.b16 %v533
    %v1868 = vunpack.c.l.b16 %v534
    %v1869 = vunpack.c.h.b16 %v534
    %v1870 = vunpack.c.l.b16 %v535
    %v1871 = vunpack.c.h.b16 %v535
    %v1872 = vunpack.c.l.b16 %v536
    %v1873 = vunpack.c.h.b16 %v536
    %v1874 = vunpack.c.l.b16 %v537
    %v1875 = vunpack.c.h.b16 %v537
    %v1876 = vunpack.c.l.b16 %v538
    %v1877 = vunpack.c.h.b16 %v538
    %v1878 = vunpack.c.l.b16 %v539
    %v1879 = vunpack.c.h.b16 %v539
    %v1880 = vunpack.c.l.b16 %v540
    %v1881 = vunpack.c.h.b16 %v540
    %v1882 = vunpack.c.l.b16 %v541
    %v1883 = vunpack.c.h.b16 %v541
    %v1884 = vunpack.c.l.b16 %v542
    %v1885 = vunpack.c.h.b16 %v542
    %v1886 = vunpack.c.l.b16 %v543
    %v1887 = vunpack.c.h.b16 %v543
    %v1888 = vunpack.c.l.b16 %v544
    %v1889 = vunpack.c.h.b16 %v544
    %v1890 = vunpack.c.l.b16 %v545
    %v1891 = vunpack.c.h.b16 %v545
    %v1892 = vunpack.c.l.b16 %v546
    %v1893 = vunpack.c.h.b16 %v546
    %v1894 = vunpack.c.l.b16 %v547
    %v1895 = vunpack.c.h.b16 %v547
    %v1896 = vunpack.c.l.b16 %v548
    %v1897 = vunpack.c.h.b16 %v548
    %v1898 = vunpack.c.l.b16 %v549
    %v1899 = vunpack.c.h.b16 %v549
    %v1900 = vunpack.c.l.b16 %v550
    %v1901 = vunpack.c.h.b16 %v550
    %v1902 = vunpack.c.l.b16 %v551
    %v1903 = vunpack.c.h.b16 %v551
    %v1904 = vunpack.c.l.b16 %v552
    %v1905 = vunpack.c.h.b16 %v552
    %v1906 = vunpack.c.l.b16 %v553
    %v1907 = vunpack.c.h.b16 %v553
    %v1908 = vunpack.c.l.b16 %v554
    %v1909 = vunpack.c.h.b16 %v554
    %v1910 = vunpack.c.l.b16 %v555
    %v1911 = vunpack.c.h.b16 %v555
    %v1912 = vunpack.c.l.b16 %v556
    %v1913 = vunpack.c.h.b16 %v556
    %v1914 = vunpack.c.l.b16 %v557
    %v1915 = vunpack.c.h.b16 %v557
    %v1916 = vunpack.c.l.b16 %v558
    %v1917 = vunpack.c.h.b16 %v558
    %v1918 = vunpack.c.l.b16 %v559
    %v1919 = vunpack.c.h.b16 %v559
    %v1920 = vunpack.c.l.b16 %v560
    %v1921 = vunpack.c.h.b16 %v560
    %v1922 = vunpack.c.l.b16 %v561
    %v1923 = vunpack.c.h.b16 %v561
    %v1924 = vunpack.c.l.b16 %v562
    %v1925 = vunpack.c.h.b16 %v562
    %v1926 = vunpack.c.l.b16 %v563
    %v1927 = vunpack.c.h.b16 %v563
    %v1928 = vunpack.c.l.b16 %v564
    %v1929 = vunpack.c.h.b16 %v564
    %v1930 = vunpack.c.l.b16 %v565
    %v1931 = vunpack.c.h.b16 %v565
    %v1932 = vunpack.c.l.b16 %v566
    %v1933 = vunpack.c.h.b16 %v566
    %v1934 = vunpack.c.l.b16 %v567
    %v1935 = vunpack.c.h.b16 %v567
    %v1936 = vunpack.c.l.b16 %v568
    %v1937 = vunpack.c.h.b16 %v568
    %v1938 = vunpack.c.l.b16 %v569
    %v1939 = vunpack.c.h.b16 %v569
    %v1940 = vunpack.c.l.b16 %v570
    %v1941 = vunpack.c.h.b16 %v570
    %v1942 = vunpack.c.l.b16 %v571
    %v1943 = vunpack.c.h.b16 %v571
    %v1944 = vunpack.c.l.b16 %v572
    %v1945 = vunpack.c.h.b16 %v572
    %v1946 = vunpack.c.l.b16 %v573
    %v1947 = vunpack.c.h.b16 %v573
    %v1948 = vunpack.c.l.b16 %v574
    %v1949 = vunpack.c.h.b16 %v574
    %v1950 = vunpack.c.l.b16 %v575
    %v1951 = vunpack.c.h.b16 %v575
    %v1952 = vunpack.c.l.b16 %v576
    %v1953 = vunpack.c.h.b16 %v576
    %v1954 = vunpack.c.l.b16 %v577
    %v1955 = vunpack.c.h.b16 %v577
    %v1956 = vunpack.c.l.b16 %v578
    %v1957 = vunpack.c.h.b16 %v578
    %v1958 = vunpack.c.l.b16 %v579
    %v1959 = vunpack.c.h.b16 %v579
    %v1960 = vunpack.c.l.b16 %v580
    %v1961 = vunpack.c.h.b16 %v580
    %v1962 = vunpack.c.l.b16 %v581
    %v1963 = vunpack.c.h.b16 %v581
    %v1964 = vunpack.c.l.b16 %v582
    %v1965 = vunpack.c.h.b16 %v582
    %v1966 = vunpack.c.l.b16 %v583
    %v1967 = vunpack.c.h.b16 %v583
    %v1968 = vunpack.c.l.b16 %v584
    %v1969 = vunpack.c.h.b16 %v584
    %v1970 = vunpack.c.l.b16 %v585
    %v1971 = vunpack.c.h.b16 %v585
    %v1972 = vpack.c.b16 %v1084, %v1076
    %v1973 = vpack.c.b16 %v1085, %v1077
    %v1974 = vpack.c.b16 %v1086, %v1078
    %v1975 = vpack.c.b16 %v1087, %v1079
    %v1976 = vpack.c.b16 %v1088, %v1080
    %v1977 = vpack.c.b16 %v1089, %v1081
    %v1978 = vpack.c.b16 %v1090, %v1082
    %v1979 = vpack.c.b16 %v1091, %v1083
    %v1980 = vpack.c.b16 %v1100, %v1092
    %v1981 = vpack.c.b16 %v1101, %v1093
    %v1982 = vpack.c.b16 %v1102, %v1094
    %v1983 = vpack.c.b16 %v1103, %v1095
    %v1984 = vpack.c.b16 %v1104, %v1096
    %v1985 = vpack.c.b16 %v1105, %v1097
    %v1986 = vpack.c.b16 %v1106, %v1098
    %v1987 = vpack.c.b16 %v1107, %v1099
    %v1988 = vpack.c.b16 %v1116, %v1108
    %v1989 = vpack.c.b16 %v1117, %v1109
    %v1990 = vpack.c.b16 %v1118, %v1110
    %v1991 = vpack.c.b16 %v1119, %v1111
    %v1992 = vpack.c.b16 %v1120, %v1112
    %v1993 = vpack.c.b16 %v1121, %v1113
    %v1994 = vpack.c.b16 %v1122, %v1114
    %v1995 = vpack.c.b16 %v1123, %v1115
    %v1996 = vpack.c.b16 %v1132, %v1124
    %v1997 = vpack.c.b16 %v1133, %v1125
    %v1998 = vpack.c.b16 %v1134, %v1126
    %v1999 = vpack.c.b16 %v1135, %v1127
    %v2000 = vpack.c.b16 %v1136, %v1128
    %v2001 = vpack.c.b16 %v1137, %v1129
    %v2002 = vpack.c.b16 %v1138, %v1130
    %v2003 = vpack.c.b16 %v1139, %v1131
    %v2004 = vpack.c.b16 %v1148, %v1140
    %v2005 = vpack.c.b16 %v1149, %v1141
    %v2006 = vpack.c.b16 %v1150, %v1142
    %v2007 = vpack.c.b16 %v1151, %v1143
    %v2008 = vpack.c.b16 %v1152, %v1144
    %v2009 = vpack.c.b16 %v1153, %v1145
    %v2010 = vpack.c.b16 %v1154, %v1146
    %v2011 = vpack.c.b16 %v1155, %v1147
    %v2012 = vpack.c.b16 %v1164, %v1156
    %v2013 = vpack.c.b16 %v1165, %v1157
    %v2014 = vpack.c.b16 %v1166, %v1158
    %v2015 = vpack.c.b16 %v1167, %v1159
    %v2016 = vpack.c.b16 %v1168, %v1160
    %v2017 = vpack.c.b16 %v1169, %v1161
    %v2018 = vpack.c.b16 %v1170, %v1162
    %v2019 = vpack.c.b16 %v1171, %v1163
    %v2020 = vpack.c.b16 %v1180, %v1172
    %v2021 = vpack.c.b16 %v1181, %v1173
    %v2022 = vpack.c.b16 %v1182, %v1174
    %v2023 = vpack.c.b16 %v1183, %v1175
    %v2024 = vpack.c.b16 %v1184, %v1176
    %v2025 = vpack.c.b16 %v1185, %v1177
    %v2026 = vpack.c.b16 %v1186, %v1178
    %v2027 = vpack.c.b16 %v1187, %v1179
    %v2028 = vpack.c.b16 %v1196, %v1188
    %v2029 = vpack.c.b16 %v1197, %v1189
    %v2030 = vpack.c.b16 %v1198, %v1190
    %v2031 = vpack.c.b16 %v1199, %v1191
    %v2032 = vpack.c.b16 %v1200, %v1192
    %v2033 = vpack.c.b16 %v1201, %v1193
    %v2034 = vpack.c.b16 %v1202, %v1194
    %v2035 = vpack.c.b16 %v1203, %v1195
    %v2036 = vpack.c.b16 %v1212, %v1204
    %v2037 = vpack.c.b16 %v1213, %v1205
    %v2038 = vpack.c.b16 %v1214, %v1206
    %v2039 = vpack.c.b16 %v1215, %v1207
    %v2040 = vpack.c.b16 %v1216, %v1208
    %v2041 = vpack.c.b16 %v1217, %v1209
    %v2042 = vpack.c.b16 %v1218, %v1210
    %v2043 = vpack.c.b16 %v1219, %v1211
    %v2044 = vpack.c.b16 %v1228, %v1220
    %v2045 = vpack.c.b16 %v1229, %v1221
    %v2046 = vpack.c.b16 %v1230, %v1222
    %v2047 = vpack.c.b16 %v1231, %v1223
    %v2048 = vpack.c.b16 %v1232, %v1224
    %v2049 = vpack.c.b16 %v1233, %v1225
    %v2050 = vpack.c.b16 %v1234, %v1226
    %v2051 = vpack.c.b16 %v1235, %v1227
    %v2052 = vpack.c.b16 %v1244, %v1236
    %v2053 = vpack.c.b16 %v1245, %v1237
    %v2054 = vpack.c.b16 %v1246, %v1238
    %v2055 = vpack.c.b16 %v1247, %v1239
    %v2056 = vpack.c.b16 %v1248, %v1240
    %v2057 = vpack.c.b16 %v1249, %v1241
    %v2058 = vpack.c.b16 %v1250, %v1242
    %v2059 = vpack.c.b16 %v1251, %v1243
    %v2060 = vpack.c.b16 %v1260, %v1252
    %v2061 = vpack.c.b16 %v1261, %v1253
    %v2062 = vpack.c.b16 %v1262, %v1254
    %v2063 = vpack.c.b16 %v1263, %v1255
    %v2064 = vpack.c.b16 %v1264, %v1256
    %v2065 = vpack.c.b16 %v1265, %v1257
    %v2066 = vpack.c.b16 %v1266, %v1258
    %v2067 = vpack.c.b16 %v1267, %v1259
    %v2068 = vpack.c.b16 %v1276, %v1268
    %v2069 = vpack.c.b16 %v1277, %v1269
    %v2070 = vpack.c.b16 %v1278, %v1270
    %v2071 = vpack.c.b16 %v1279, %v1271
    %v2072 = vpack.c.b16 %v1280, %v1272
    %v2073 = vpack.c.b16 %v1281, %v1273
    %v2074 = vpack.c.b16 %v1282, %v1274
    %v2075 = vpack.c.b16 %v1283, %v1275
    %v2076 = vpack.c.b16 %v1292, %v1284
    %v2077 = vpack.c.b16 %v1293, %v1285
    %v2078 = vpack.c.b16 %v1294, %v1286
    %v2079 = vpack.c.b16 %v1295, %v1287
    %v2080 = vpack.c.b16 %v1296, %v1288
    %v2081 = vpack.c.b16 %v1297, %v1289
    %v2082 = vpack.c.b16 %v1298, %v1290
    %v2083 = vpack.c.b16 %v1299, %v1291
    %v2084 = vpack.c.b16 %v1308, %v1300
    %v2085 = vpack.c.b16 %v1309, %v1301
    %v2086 = vpack.c.b16 %v1310, %v1302
    %v2087 = vpack.c.b16 %v1311, %v1303
    %v2088 = vpack.c.b16 %v1312, %v1304
    %v2089 = vpack.c.b16 %v1313, %v1305
    %v2090 = vpack.c.b16 %v1314, %v1306
    %v2091 = vpack.c.b16 %v1315, %v1307
    %v2092 = vpack.c.b16 %v1324, %v1316
    %v2093 = vpack.c.b16 %v1325, %v1317
    %v2094 = vpack.c.b16 %v1326, %v1318
    %v2095 = vpack.c.b16 %v1327, %v1319
    %v2096 = vpack.c.b16 %v1328, %v1320
    %v2097 = vpack.c.b16 %v1329, %v1321
    %v2098 = vpack.c.b16 %v1330, %v1322
    %v2099 = vpack.c.b16 %v1331, %v1323
    %v2100 = vpack.c.b16 %v1340, %v1332
    %v2101 = vpack.c.b16 %v1341, %v1333
    %v2102 = vpack.c.b16 %v1342, %v1334
    %v2103 = vpack.c.b16 %v1343, %v1335
    %v2104 = vpack.c.b16 %v1344, %v1336
    %v2105 = vpack.c.b16 %v1345, %v1337
    %v2106 = vpack.c.b16 %v1346, %v1338
    %v2107 = vpack.c.b16 %v1347, %v1339
    %v2108 = vpack.c.b16 %v1356, %v1348
    %v2109 = vpack.c.b16 %v1357, %v1349
    %v2110 = vpack.c.b16 %v1358, %v1350
    %v2111 = vpack.c.b16 %v1359, %v1351
    %v2112 = vpack.c.b16 %v1360, %v1352
    %v2113 = vpack.c.b16 %v1361, %v1353
    %v2114 = vpack.c.b16 %v1362, %v1354
    %v2115 = vpack.c.b16 %v1363, %v1355
    %v2116 = vpack.c.b16 %v1372, %v1364
    %v2117 = vpack.c.b16 %v1373, %v1365
    %v2118 = vpack.c.b16 %v1374, %v1366
    %v2119 = vpack.c.b16 %v1375, %v1367
    %v2120 = vpack.c.b16 %v1376, %v1368
    %v2121 = vpack.c.b16 %v1377, %v1369
    %v2122 = vpack.c.b16 %v1378, %v1370
    %v2123 = vpack.c.b16 %v1379, %v1371
    %v2124 = vpack.c.b16 %v1388, %v1380
    %v2125 = vpack.c.b16 %v1389, %v1381
    %v2126 = vpack.c.b16 %v1390, %v1382
    %v2127 = vpack.c.b16 %v1391, %v1383
    %v2128 = vpack.c.b16 %v1392, %v1384
    %v2129 = vpack.c.b16 %v1393, %v1385
    %v2130 = vpack.c.b16 %v1394, %v1386
    %v2131 = vpack.c.b16 %v1395, %v1387
    %v2132 = vpack.c.b16 %v1404, %v1396
    %v2133 = vpack.c.b16 %v1405, %v1397
    %v2134 = vpack.c.b16 %v1406, %v1398
    %v2135 = vpack.c.b16 %v1407, %v1399
    %v2136 = vpack.c.b16 %v1408, %v1400
    %v2137 = vpack.c.b16 %v1409, %v1401
    %v2138 = vpack.c.b16 %v1410, %v1402
    %v2139 = vpack.c.b16 %v1411, %v1403
    %v2140 = vpack.c.b16 %v1420, %v1412
    %v2141 = vpack.c.b16 %v1421, %v1413
    %v2142 = vpack.c.b16 %v1422, %v1414
    %v2143 = vpack.c.b16 %v1423, %v1415
    %v2144 = vpack.c.b16 %v1424, %v1416
    %v2145 = vpack.c.b16 %v1425, %v1417
    %v2146 = vpack.c.b16 %v1426, %v1418
    %v2147 = vpack.c.b16 %v1427, %v1419
    %v2148 = vpack.c.b16 %v1436, %v1428
    %v2149 = vpack.c.b16 %v1437, %v1429
    %v2150 = vpack.c.b16 %v1438, %v1430
    %v2151 = vpack.c.b16 %v1439, %v1431
    %v2152 = vpack.c.b16 %v1440, %v1432
    %v2153 = vpack.c.b16 %v1441, %v1433
    %v2154 = vpack.c.b16 %v1442, %v1434
    %v2155 = vpack.c.b16 %v1443, %v1435
    %v2156 = vpack.c.b16 %v1452, %v1444
    %v2157 = vpack.c.b16 %v1453, %v1445
    %v2158 = vpack.c.b16 %v1454, %v1446
    %v2159 = vpack.c.b16 %v1455, %v1447
    %v2160 = vpack.c.b16 %v1456, %v1448
    %v2161 = vpack.c.b16 %v1457, %v1449
    %v2162 = vpack.c.b16 %v1458, %v1450
    %v2163 = vpack.c.b16 %v1459, %v1451
    %v2164 = vpack.c.b16 %v1468, %v1460
    %v2165 = vpack.c.b16 %v1469, %v1461
    %v2166 = vpack.c.b16 %v1470, %v1462
    %v2167 = vpack.c.b16 %v1471, %v1463
    %v2168 = vpack.c.b16 %v1472, %v1464
    %v2169 = vpack.c.b16 %v1473, %v1465
    %v2170 = vpack.c.b16 %v1474, %v1466
    %v2171 = vpack.c.b16 %v1475, %v1467
    %v2172 = vpack.c.b16 %v1484, %v1476
    %v2173 = vpack.c.b16 %v1485, %v1477
    %v2174 = vpack.c.b16 %v1486, %v1478
    %v2175 = vpack.c.b16 %v1487, %v1479
    %v2176 = vpack.c.b16 %v1488, %v1480
    %v2177 = vpack.c.b16 %v1489, %v1481
    %v2178 = vpack.c.b16 %v1490, %v1482
    %v2179 = vpack.c.b16 %v1491, %v1483
    %v2180 = vpack.c.b16 %v1500, %v1492
    %v2181 = vpack.c.b16 %v1501, %v1493
    %v2182 = vpack.c.b16 %v1502, %v1494
    %v2183 = vpack.c.b16 %v1503, %v1495
    %v2184 = vpack.c.b16 %v1504, %v1496
    %v2185 = vpack.c.b16 %v1505, %v1497
    %v2186 = vpack.c.b16 %v1506, %v1498
    %v2187 = vpack.c.b16 %v1507, %v1499
    %v2188 = vpack.c.b16 %v1516, %v1508
    %v2189 = vpack.c.b16 %v1517, %v1509
    %v2190 = vpack.c.b16 %v1518, %v1510
    %v2191 = vpack.c.b16 %v1519, %v1511
    %v2192 = vpack.c.b16 %v1520, %v1512
    %v2193 = vpack.c.b16 %v1521, %v1513
    %v2194 = vpack.c.b16 %v1522, %v1514
    %v2195 = vpack.c.b16 %v1523, %v1515
    %v2196 = vpack.c.b16 %v1532, %v1524
    %v2197 = vpack.c.b16 %v1533, %v1525
    %v2198 = vpack.c.b16 %v1534, %v1526
    %v2199 = vpack.c.b16 %v1535, %v1527
    %v2200 = vpack.c.b16 %v1536, %v1528
    %v2201 = vpack.c.b16 %v1537, %v1529
    %v2202 = vpack.c.b16 %v1538, %v1530
    %v2203 = vpack.c.b16 %v1539, %v1531
    %v2204 = vpack.c.b16 %v1548, %v1540
    %v2205 = vpack.c.b16 %v1549, %v1541
    %v2206 = vpack.c.b16 %v1550, %v1542
    %v2207 = vpack.c.b16 %v1551, %v1543
    %v2208 = vpack.c.b16 %v1552, %v1544
    %v2209 = vpack.c.b16 %v1553, %v1545
    %v2210 = vpack.c.b16 %v1554, %v1546
    %v2211 = vpack.c.b16 %v1555, %v1547
    %v2212 = vpack.c.b16 %v1564, %v1556
    %v2213 = vpack.c.b16 %v1565, %v1557
    %v2214 = vpack.c.b16 %v1566, %v1558
    %v2215 = vpack.c.b16 %v1567, %v1559
    %v2216 = vpack.c.b16 %v1568, %v1560
    %v2217 = vpack.c.b16 %v1569, %v1561
    %v2218 = vpack.c.b16 %v1570, %v1562
    %v2219 = vpack.c.b16 %v1571, %v1563
    %v2220 = vpack.c.b16 %v1580, %v1572
    %v2221 = vpack.c.b16 %v1581, %v1573
    %v2222 = vpack.c.b16 %v1582, %v1574
    %v2223 = vpack.c.b16 %v1583, %v1575
    %v2224 = vpack.c.b16 %v1584, %v1576
    %v2225 = vpack.c.b16 %v1585, %v1577
    %v2226 = vpack.c.b16 %v1586, %v1578
    %v2227 = vpack.c.b16 %v1587, %v1579
    %v2228 = vpack.c.b16 %v1596, %v1588
    %v2229 = vpack.c.b16 %v1597, %v1589
    %v2230 = vpack.c.b16 %v1598, %v1590
    %v2231 = vpack.c.b16 %v1599, %v1591
    %v2232 = vpack.c.b16 %v1600, %v1592
    %v2233 = vpack.c.b16 %v1601, %v1593
    %v2234 = vpack.c.b16 %v1602, %v1594
    %v2235 = vpack.c.b16 %v1603, %v1595
    %v2236 = vpack.c.b16 %v1612, %v1604
    %v2237 = vpack.c.b16 %v1613, %v1605
    %v2238 = vpack.c.b16 %v1614, %v1606
    %v2239 = vpack.c.b16 %v1615, %v1607
    %v2240 = vpack.c.b16 %v1616, %v1608
    %v2241 = vpack.c.b16 %v1617, %v1609
    %v2242 = vpack.c.b16 %v1618, %v1610
    %v2243 = vpack.c.b16 %v1619, %v1611
    %v2244 = vpack.c.b16 %v1628, %v1620
    %v2245 = vpack.c.b16 %v1629, %v1621
    %v2246 = vpack.c.b16 %v1630, %v1622
    %v2247 = vpack.c.b16 %v1631, %v1623
    %v2248 = vpack.c.b16 %v1632, %v1624
    %v2249 = vpack.c.b16 %v1633, %v1625
    %v2250 = vpack.c.b16 %v1634, %v1626
    %v2251 = vpack.c.b16 %v1635, %v1627
    %v2252 = vpack.c.b16 %v1644, %v1636
    %v2253 = vpack.c.b16 %v1645, %v1637
    %v2254 = vpack.c.b16 %v1646, %v1638
    %v2255 = vpack.c.b16 %v1647, %v1639
    %v2256 = vpack.c.b16 %v1648, %v1640
    %v2257 = vpack.c.b16 %v1649, %v1641
    %v2258 = vpack.c.b16 %v1650, %v1642
    %v2259 = vpack.c.b16 %v1651, %v1643
    %v2260 = vpack.c.b16 %v1660, %v1652
    %v2261 = vpack.c.b16 %v1661, %v1653
    %v2262 = vpack.c.b16 %v1662, %v1654
    %v2263 = vpack.c.b16 %v1663, %v1655
    %v2264 = vpack.c.b16 %v1664, %v1656
    %v2265 = vpack.c.b16 %v1665, %v1657
    %v2266 = vpack.c.b16 %v1666, %v1658
    %v2267 = vpack.c.b16 %v1667, %v1659
    %v2268 = vpack.c.b16 %v1676, %v1668
    %v2269 = vpack.c.b16 %v1677, %v1669
    %v2270 = vpack.c.b16 %v1678, %v1670
    %v2271 = vpack.c.b16 %v1679, %v1671
    %v2272 = vpack.c.b16 %v1680, %v1672
    %v2273 = vpack.c.b16 %v1681, %v1673
    %v2274 = vpack.c.b16 %v1682, %v1674
    %v2275 = vpack.c.b16 %v1683, %v1675
    %v2276 = vpack.c.b16 %v1692, %v1684
    %v2277 = vpack.c.b16 %v1693, %v1685
    %v2278 = vpack.c.b16 %v1694, %v1686
    %v2279 = vpack.c.b16 %v1695, %v1687
    %v2280 = vpack.c.b16 %v1696, %v1688
    %v2281 = vpack.c.b16 %v1697, %v1689
    %v2282 = vpack.c.b16 %v1698, %v1690
    %v2283 = vpack.c.b16 %v1699, %v1691
    %v2284 = vpack.c.b16 %v1708, %v1700
    %v2285 = vpack.c.b16 %v1709, %v1701
    %v2286 = vpack.c.b16 %v1710, %v1702
    %v2287 = vpack.c.b16 %v1711, %v1703
    %v2288 = vpack.c.b16 %v1712, %v1704
    %v2289 = vpack.c.b16 %v1713, %v1705
    %v2290 = vpack.c.b16 %v1714, %v1706
    %v2291 = vpack.c.b16 %v1715, %v1707
    %v2292 = vpack.c.b16 %v1724, %v1716
    %v2293 = vpack.c.b16 %v1725, %v1717
    %v2294 = vpack.c.b16 %v1726, %v1718
    %v2295 = vpack.c.b16 %v1727, %v1719
    %v2296 = vpack.c.b16 %v1728, %v1720
    %v2297 = vpack.c.b16 %v1729, %v1721
    %v2298 = vpack.c.b16 %v1730, %v1722
    %v2299 = vpack.c.b16 %v1731, %v1723
    %v2300 = vpack.c.b16 %v1740, %v1732
    %v2301 = vpack.c.b16 %v1741, %v1733
    %v2302 = vpack.c.b16 %v1742, %v1734
    %v2303 = vpack.c.b16 %v1743, %v1735
    %v2304 = vpack.c.b16 %v1744, %v1736
    %v2305 = vpack.c.b16 %v1745, %v1737
    %v2306 = vpack.c.b16 %v1746, %v1738
    %v2307 = vpack.c.b16 %v1747, %v1739
    %v2308 = vpack.c.b16 %v1756, %v1748
    %v2309 = vpack.c.b16 %v1757, %v1749
    %v2310 = vpack.c.b16 %v1758, %v1750
    %v2311 = vpack.c.b16 %v1759, %v1751
    %v2312 = vpack.c.b16 %v1760, %v1752
    %v2313 = vpack.c.b16 %v1761, %v1753
    %v2314 = vpack.c.b16 %v1762, %v1754
    %v2315 = vpack.c.b16 %v1763, %v1755
    %v2316 = vpack.c.b16 %v1772, %v1764
    %v2317 = vpack.c.b16 %v1773, %v1765
    %v2318 = vpack.c.b16 %v1774, %v1766
    %v2319 = vpack.c.b16 %v1775, %v1767
    %v2320 = vpack.c.b16 %v1776, %v1768
    %v2321 = vpack.c.b16 %v1777, %v1769
    %v2322 = vpack.c.b16 %v1778, %v1770
    %v2323 = vpack.c.b16 %v1779, %v1771
    %v2324 = vpack.c.b16 %v1788, %v1780
    %v2325 = vpack.c.b16 %v1789, %v1781
    %v2326 = vpack.c.b16 %v1790, %v1782
    %v2327 = vpack.c.b16 %v1791, %v1783
    %v2328 = vpack.c.b16 %v1792, %v1784
    %v2329 = vpack.c.b16 %v1793, %v1785
    %v2330 = vpack.c.b16 %v1794, %v1786
    %v2331 = vpack.c.b16 %v1795, %v1787
    %v2332 = vpack.c.b16 %v1804, %v1796
    %v2333 = vpack.c.b16 %v1805, %v1797
    %v2334 = vpack.c.b16 %v1806, %v1798
    %v2335 = vpack.c.b16 %v1807, %v1799
    %v2336 = vpack.c.b16 %v1808, %v1800
    %v2337 = vpack.c.b16 %v1809, %v1801
    %v2338 = vpack.c.b16 %v1810, %v1802
    %v2339 = vpack.c.b16 %v1811, %v1803
    %v2340 = vpack.c.b16 %v1820, %v1812
    %v2341 = vpack.c.b16 %v1821, %v1813
    %v2342 = vpack.c.b16 %v1822, %v1814
    %v2343 = vpack.c.b16 %v1823, %v1815
    %v2344 = vpack.c.b16 %v1824, %v1816
    %v2345 = vpack.c.b16 %v1825, %v1817
    %v2346 = vpack.c.b16 %v1826, %v1818
    %v2347 = vpack.c.b16 %v1827, %v1819
    %v2348 = vpack.c.b16 %v1836, %v1828
    %v2349 = vpack.c.b16 %v1837, %v1829
    %v2350 = vpack.c.b16 %v1838, %v1830
    %v2351 = vpack.c.b16 %v1839, %v1831
    %v2352 = vpack.c.b16 %v1840, %v1832
    %v2353 = vpack.c.b16 %v1841, %v1833
    %v2354 = vpack.c.b16 %v1842, %v1834
    %v2355 = vpack.c.b16 %v1843, %v1835
    %v2356 = vpack.c.b16 %v1852, %v1844
    %v2357 = vpack.c.b16 %v1853, %v1845
    %v2358 = vpack.c.b16 %v1854, %v1846
    %v2359 = vpack.c.b16 %v1855, %v1847
    %v2360 = vpack.c.b16 %v1856, %v1848
    %v2361 = vpack.c.b16 %v1857, %v1849
    %v2362 = vpack.c.b16 %v1858, %v1850
    %v2363 = vpack.c.b16 %v1859, %v1851
    %v2364 = vpack.c.b16 %v1868, %v1860
    %v2365 = vpack.c.b16 %v1869, %v1861
    %v2366 = vpack.c.b16 %v1870, %v1862
    %v2367 = vpack.c.b16 %v1871, %v1863
    %v2368 = vpack.c.b16 %v1872, %v1864
    %v2369 = vpack.c.b16 %v1873, %v1865
    %v2370 = vpack.c.b16 %v1874, %v1866
    %v2371 = vpack.c.b16 %v1875, %v1867
    %v2372 = vpack.c.b16 %v1884, %v1876
    %v2373 = vpack.c.b16 %v1885, %v1877
    %v2374 = vpack.c.b16 %v1886, %v1878
    %v2375 = vpack.c.b16 %v1887, %v1879
    %v2376 = vpack.c.b16 %v1888, %v1880
    %v2377 = vpack.c.b16 %v1889, %v1881
    %v2378 = vpack.c.b16 %v1890, %v1882
    %v2379 = vpack.c.b16 %v1891, %v1883
    %v2380 = vpack.c.b16 %v1900, %v1892
    %v2381 = vpack.c.b16 %v1901, %v1893
    %v2382 = vpack.c.b16 %v1902, %v1894
    %v2383 = vpack.c.b16 %v1903, %v1895
    %v2384 = vpack.c.b16 %v1904, %v1896
    %v2385 = vpack.c.b16 %v1905, %v1897
    %v2386 = vpack.c.b16 %v1906, %v1898
    %v2387 = vpack.c.b16 %v1907, %v1899
    %v2388 = vpack.c.b16 %v1916, %v1908
    %v2389 = vpack.c.b16 %v1917, %v1909
    %v2390 = vpack.c.b16 %v1918, %v1910
    %v2391 = vpack.c.b16 %v1919, %v1911
    %v2392 = vpack.c.b16 %v1920, %v1912
    %v2393 = vpack.c.b16 %v1921, %v1913
    %v2394 = vpack.c.b16 %v1922, %v1914
    %v2395 = vpack.c.b16 %v1923, %v1915
    %v2396 = vpack.c.b16 %v1932, %v1924
    %v2397 = vpack.c.b16 %v1933, %v1925
    %v2398 = vpack.c.b16 %v1934, %v1926
    %v2399 = vpack.c.b16 %v1935, %v1927
    %v2400 = vpack.c.b16 %v1936, %v1928
    %v2401 = vpack.c.b16 %v1937, %v1929
    %v2402 = vpack.c.b16 %v1938, %v1930
    %v2403 = vpack.c.b16 %v1939, %v1931
    %v2404 = vpack.c.b16 %v1948, %v1940
    %v2405 = vpack.c.b16 %v1949, %v1941
    %v2406 = vpack.c.b16 %v1950, %v1942
    %v2407 = vpack.c.b16 %v1951, %v1943
    %v2408 = vpack.c.b16 %v1952, %v1944
    %v2409 = vpack.c.b16 %v1953, %v1945
    %v2410 = vpack.c.b16 %v1954, %v1946
    %v2411 = vpack.c.b16 %v1955, %v1947
    %v2412 = vpack.c.b16 %v1964, %v1956
    %v2413 = vpack.c.b16 %v1965, %v1957
    %v2414 = vpack.c.b16 %v1966, %v1958
    %v2415 = vpack.c.b16 %v1967, %v1959
    %v2416 = vpack.c.b16 %v1968, %v1960
    %v2417 = vpack.c.b16 %v1969, %v1961
    %v2418 = vpack.c.b16 %v1970, %v1962
    %v2419 = vpack.c.b16 %v1971, %v1963
    %2868 = vmatprep.subr.bf16.mxu0 %v1973
    %2869 = vmatpush1.bf16.msra.mxu0 %v1972
    %2870 = vmatprep.subr.bf16.mxu0 %v1981
    %2871 = vmatpush1.bf16.msra.mxu0 %v1980
    %2872 = vmatprep.subr.bf16.mxu0 %v1989
    %2873 = vmatpush1.bf16.msra.mxu0 %v1988
    %2874 = vmatprep.subr.bf16.mxu0 %v1997
    %2875 = vmatpush1.bf16.msra.mxu0 %v1996
    %2876 = vmatprep.subr.bf16.mxu0 %v2005
    %2877 = vmatpush1.bf16.msra.mxu0 %v2004
    %2878 = vmatprep.subr.bf16.mxu0 %v2013
    %2879 = vmatpush1.bf16.msra.mxu0 %v2012
    %2880 = vmatprep.subr.bf16.mxu0 %v2021
    %2881 = vmatpush1.bf16.msra.mxu0 %v2020
    %2882 = vmatprep.subr.bf16.mxu0 %v2029
    %2883 = vmatpush1.bf16.msra.mxu0 %v2028
    %2884 = vmatprep.subr.bf16.mxu0 %v2037
    %2885 = vmatpush1.bf16.msra.mxu0 %v2036
    %2886 = vmatprep.subr.bf16.mxu0 %v2045
    %2887 = vmatpush1.bf16.msra.mxu0 %v2044
    %2888 = vmatprep.subr.bf16.mxu0 %v2053
    %2889 = vmatpush1.bf16.msra.mxu0 %v2052
    %2890 = vmatprep.subr.bf16.mxu0 %v2061
    %2891 = vmatpush1.bf16.msra.mxu0 %v2060
    %2892 = vmatprep.subr.bf16.mxu0 %v2069
    %2893 = vmatpush1.bf16.msra.mxu0 %v2068
    %2894 = vmatprep.subr.bf16.mxu0 %v2077
    %2895 = vmatpush1.bf16.msra.mxu0 %v2076
    %2896 = vmatprep.subr.bf16.mxu0 %v2085
    %2897 = vmatpush1.bf16.msra.mxu0 %v2084
    %2898 = vmatprep.subr.bf16.mxu0 %v2093
    %2899 = vmatpush1.bf16.msra.mxu0 %v2092
    %2900 = vmatprep.mubr.bf16.mxu0 %v132
    %2901 = vmatmul.mubr.bf16.gmra.mrb[0].mxu0 %v131
    %v2902 = vpop.f32.mrb[0].mxu0
    %v2903 = vadd.f32 %v591, %v2902
    %v2904 = vpop.f32.mrb[0].mxu0
    %v2905 = vadd.f32 %v595, %v2904
    %v2906 = vpop.f32.mrb[0].mxu0
    %v2907 = vadd.f32 %v591, %v2906
    %v2908 = vpop.f32.mrb[0].mxu0
    %v2909 = vadd.f32 %v595, %v2908
    %2910 = vdwg.mxu0
    %2911 = vmatprep.subr.bf16.mxu0 %v2101
    %2912 = vmatpush1.bf16.msra.mxu0 %v2100
    %2913 = vmatprep.subr.bf16.mxu0 %v2109
    %2914 = vmatpush1.bf16.msra.mxu0 %v2108
    %2915 = vmatprep.subr.bf16.mxu0 %v2117
    %2916 = vmatpush1.bf16.msra.mxu0 %v2116
    %2917 = vmatprep.subr.bf16.mxu0 %v2125
    %2918 = vmatpush1.bf16.msra.mxu0 %v2124
    %2919 = vmatprep.subr.bf16.mxu0 %v2133
    %2920 = vmatpush1.bf16.msra.mxu0 %v2132
    %2921 = vmatprep.subr.bf16.mxu0 %v2141
    %2922 = vmatpush1.bf16.msra.mxu0 %v2140
    %2923 = vmatprep.subr.bf16.mxu0 %v2149
    %2924 = vmatpush1.bf16.msra.mxu0 %v2148
    %2925 = vmatprep.subr.bf16.mxu0 %v2157
    %2926 = vmatpush1.bf16.msra.mxu0 %v2156
    %2927 = vmatprep.subr.bf16.mxu0 %v2165
    %2928 = vmatpush1.bf16.msra.mxu0 %v2164
    %2929 = vmatprep.subr.bf16.mxu0 %v2173
    %2930 = vmatpush1.bf16.msra.mxu0 %v2172
    %2931 = vmatprep.subr.bf16.mxu0 %v2181
    %2932 = vmatpush1.bf16.msra.mxu0 %v2180
    %2933 = vmatprep.subr.bf16.mxu0 %v2189
    %2934 = vmatpush1.bf16.msra.mxu0 %v2188
    %2935 = vmatprep.subr.bf16.mxu0 %v2197
    %2936 = vmatpush1.bf16.msra.mxu0 %v2196
    %2937 = vmatprep.subr.bf16.mxu0 %v2205
    %2938 = vmatpush1.bf16.msra.mxu0 %v2204
    %2939 = vmatprep.subr.bf16.mxu0 %v2213
    %2940 = vmatpush1.bf16.msra.mxu0 %v2212
    %2941 = vmatprep.subr.bf16.mxu0 %v2221
    %2942 = vmatpush1.bf16.msra.mxu0 %v2220
    %2943 = vmatprep.mubr.bf16.mxu0 %v134
    %2944 = vmatmul.mubr.bf16.gmra.mrb[0].mxu0 %v133
    %v2945 = vpop.f32.mrb[0].mxu0
    %v2946 = vadd.f32 %v2903, %v2945
    %v2947 = vpop.f32.mrb[0].mxu0
    %v2948 = vadd.f32 %v2905, %v2947
    %v2949 = vpop.f32.mrb[0].mxu0
    %v2950 = vadd.f32 %v2907, %v2949
    %v2951 = vpop.f32.mrb[0].mxu0
    %v2952 = vadd.f32 %v2909, %v2951
    %2953 = vdwg.mxu0
    %2954 = vmatprep.subr.bf16.mxu0 %v2229
    %2955 = vmatpush1.bf16.msra.mxu0 %v2228
    %2956 = vmatprep.subr.bf16.mxu0 %v2237
    %2957 = vmatpush1.bf16.msra.mxu0 %v2236
    %2958 = vmatprep.subr.bf16.mxu0 %v2245
    %2959 = vmatpush1.bf16.msra.mxu0 %v2244
    %2960 = vmatprep.subr.bf16.mxu0 %v2253
    %2961 = vmatpush1.bf16.msra.mxu0 %v2252
    %2962 = vmatprep.subr.bf16.mxu0 %v2261
    %2963 = vmatpush1.bf16.msra.mxu0 %v2260
    %2964 = vmatprep.subr.bf16.mxu0 %v2269
    %2965 = vmatpush1.bf16.msra.mxu0 %v2268
    %2966 = vmatprep.subr.bf16.mxu0 %v2277
    %2967 = vmatpush1.bf16.msra.mxu0 %v2276
    %2968 = vmatprep.subr.bf16.mxu0 %v2285
    %2969 = vmatpush1.bf16.msra.mxu0 %v2284
    %2970 = vmatprep.subr.bf16.mxu0 %v2293
    %2971 = vmatpush1.bf16.msra.mxu0 %v2292
    %2972 = vmatprep.subr.bf16.mxu0 %v2301
    %2973 = vmatpush1.bf16.msra.mxu0 %v2300
    %2974 = vmatprep.subr.bf16.mxu0 %v2309
    %2975 = vmatpush1.bf16.msra.mxu0 %v2308
    %2976 = vmatprep.subr.bf16.mxu0 %v2317
    %2977 = vmatpush1.bf16.msra.mxu0 %v2316
    %2978 = vmatprep.subr.bf16.mxu0 %v2325
    %2979 = vmatpush1.bf16.msra.mxu0 %v2324
    %2980 = vmatprep.subr.bf16.mxu0 %v2333
    %2981 = vmatpush1.bf16.msra.mxu0 %v2332
    %2982 = vmatprep.subr.bf16.mxu0 %v2341
    %2983 = vmatpush1.bf16.msra.mxu0 %v2340
    %2984 = vmatprep.subr.bf16.mxu0 %v2349
    %2985 = vmatpush1.bf16.msra.mxu0 %v2348
    %2986 = vmatprep.mubr.bf16.mxu0 %v136
    %2987 = vmatmul.mubr.bf16.gmra.mrb[0].mxu0 %v135
    %v2988 = vpop.f32.mrb[0].mxu0
    %v2989 = vadd.f32 %v2946, %v2988
    %v2990 = vpop.f32.mrb[0].mxu0
    %v2991 = vadd.f32 %v2948, %v2990
    %v2992 = vpop.f32.mrb[0].mxu0
    %v2993 = vadd.f32 %v2950, %v2992
    %v2994 = vpop.f32.mrb[0].mxu0
    %v2995 = vadd.f32 %v2952, %v2994
    %2996 = vdwg.mxu0
    %2997 = vmatprep.subr.bf16.mxu0 %v2357
    %2998 = vmatpush1.bf16.msra.mxu0 %v2356
    %2999 = vmatprep.subr.bf16.mxu0 %v2365
    %3000 = vmatpush1.bf16.msra.mxu0 %v2364
    %3001 = vmatprep.subr.bf16.mxu0 %v2373
    %3002 = vmatpush1.bf16.msra.mxu0 %v2372
    %3003 = vmatprep.subr.bf16.mxu0 %v2381
    %3004 = vmatpush1.bf16.msra.mxu0 %v2380
    %3005 = vmatprep.subr.bf16.mxu0 %v2389
    %3006 = vmatpush1.bf16.msra.mxu0 %v2388
    %3007 = vmatprep.subr.bf16.mxu0 %v2397
    %3008 = vmatpush1.bf16.msra.mxu0 %v2396
    %3009 = vmatprep.subr.bf16.mxu0 %v2405
    %3010 = vmatpush1.bf16.msra.mxu0 %v2404
    %3011 = vmatprep.subr.bf16.mxu0 %v2413
    %3012 = vmatpush1.bf16.msra.mxu0 %v2412
    %3013 = vmatprep.subr.bf16.mxu0 0
    %3014 = vmatpush1.bf16.msra.mxu0 0
    %3015 = vmatprep.subr.bf16.mxu0 0
    %3016 = vmatpush1.bf16.msra.mxu0 0
    %3017 = vmatprep.subr.bf16.mxu0 0
    %3018 = vmatpush1.bf16.msra.mxu0 0
    %3019 = vmatprep.subr.bf16.mxu0 0
    %3020 = vmatpush1.bf16.msra.mxu0 0
    %3021 = vmatprep.subr.bf16.mxu0 0
    %3022 = vmatpush1.bf16.msra.mxu0 0
    %3023 = vmatprep.subr.bf16.mxu0 0
    %3024 = vmatpush1.bf16.msra.mxu0 0
    %3025 = vmatprep.subr.bf16.mxu0 0
    %3026 = vmatpush1.bf16.msra.mxu0 0
    %3027 = vmatprep.subr.bf16.mxu0 0
    %3028 = vmatpush1.bf16.msra.mxu0 0
    %3029 = vmatprep.mubr.bf16.mxu0 0
    %3030 = vmatmul.mubr.bf16.gmra.mrb[0].mxu0 %v137
    %v3031 = vpop.f32.mrb[0].mxu0
    %v3032 = vadd.f32 %v2989, %v3031
    %v3033 = vpop.f32.mrb[0].mxu0
    %v3034 = vadd.f32 %v2991, %v3033
    %v3035 = vpop.f32.mrb[0].mxu0
    %v3036 = vadd.f32 %v2993, %v3035
    %v3037 = vpop.f32.mrb[0].mxu0
    %v3038 = vadd.f32 %v2995, %v3037
    %3039 = vdwg.mxu0
    %3040 = vmatprep.subr.bf16.mxu0 %v1975
    %3041 = vmatpush1.bf16.msra.mxu0 %v1974
    %3042 = vmatprep.subr.bf16.mxu0 %v1983
    %3043 = vmatpush1.bf16.msra.mxu0 %v1982
    %3044 = vmatprep.subr.bf16.mxu0 %v1991
    %3045 = vmatpush1.bf16.msra.mxu0 %v1990
    %3046 = vmatprep.subr.bf16.mxu0 %v1999
    %3047 = vmatpush1.bf16.msra.mxu0 %v1998
    %3048 = vmatprep.subr.bf16.mxu0 %v2007
    %3049 = vmatpush1.bf16.msra.mxu0 %v2006
    %3050 = vmatprep.subr.bf16.mxu0 %v2015
    %3051 = vmatpush1.bf16.msra.mxu0 %v2014
    %3052 = vmatprep.subr.bf16.mxu0 %v2023
    %3053 = vmatpush1.bf16.msra.mxu0 %v2022
    %3054 = vmatprep.subr.bf16.mxu0 %v2031
    %3055 = vmatpush1.bf16.msra.mxu0 %v2030
    %3056 = vmatprep.subr.bf16.mxu0 %v2039
    %3057 = vmatpush1.bf16.msra.mxu0 %v2038
    %3058 = vmatprep.subr.bf16.mxu0 %v2047
    %3059 = vmatpush1.bf16.msra.mxu0 %v2046
    %3060 = vmatprep.subr.bf16.mxu0 %v2055
    %3061 = vmatpush1.bf16.msra.mxu0 %v2054
    %3062 = vmatprep.subr.bf16.mxu0 %v2063
    %3063 = vmatpush1.bf16.msra.mxu0 %v2062
    %3064 = vmatprep.subr.bf16.mxu0 %v2071
    %3065 = vmatpush1.bf16.msra.mxu0 %v2070
    %3066 = vmatprep.subr.bf16.mxu0 %v2079
    %3067 = vmatpush1.bf16.msra.mxu0 %v2078
    %3068 = vmatprep.subr.bf16.mxu0 %v2087
    %3069 = vmatpush1.bf16.msra.mxu0 %v2086
    %3070 = vmatprep.subr.bf16.mxu0 %v2095
    %3071 = vmatpush1.bf16.msra.mxu0 %v2094
    %3072 = vmatprep.mubr.bf16.mxu0 %v132
    %3073 = vmatmul.mubr.bf16.gmra.mrb[0].mxu0 %v131
    %v3074 = vpop.f32.mrb[0].mxu0
    %v3075 = vadd.f32 %v599, %v3074
    %v3076 = vpop.f32.mrb[0].mxu0
    %v3077 = vadd.f32 %v603, %v3076
    %v3078 = vpop.f32.mrb[0].mxu0
    %v3079 = vadd.f32 %v599, %v3078
    %v3080 = vpop.f32.mrb[0].mxu0
    %v3081 = vadd.f32 %v603, %v3080
    %3082 = vdwg.mxu0
    %3083 = vmatprep.subr.bf16.mxu0 %v2103
    %3084 = vmatpush1.bf16.msra.mxu0 %v2102
    %3085 = vmatprep.subr.bf16.mxu0 %v2111
    %3086 = vmatpush1.bf16.msra.mxu0 %v2110
    %3087 = vmatprep.subr.bf16.mxu0 %v2119
    %3088 = vmatpush1.bf16.msra.mxu0 %v2118
    %3089 = vmatprep.subr.bf16.mxu0 %v2127
    %3090 = vmatpush1.bf16.msra.mxu0 %v2126
    %3091 = vmatprep.subr.bf16.mxu0 %v2135
    %3092 = vmatpush1.bf16.msra.mxu0 %v2134
    %3093 = vmatprep.subr.bf16.mxu0 %v2143
    %3094 = vmatpush1.bf16.msra.mxu0 %v2142
    %3095 = vmatprep.subr.bf16.mxu0 %v2151
    %3096 = vmatpush1.bf16.msra.mxu0 %v2150
    %3097 = vmatprep.subr.bf16.mxu0 %v2159
    %3098 = vmatpush1.bf16.msra.mxu0 %v2158
    %3099 = vmatprep.subr.bf16.mxu0 %v2167
    %3100 = vmatpush1.bf16.msra.mxu0 %v2166
    %3101 = vmatprep.subr.bf16.mxu0 %v2175
    %3102 = vmatpush1.bf16.msra.mxu0 %v2174
    %3103 = vmatprep.subr.bf16.mxu0 %v2183
    %3104 = vmatpush1.bf16.msra.mxu0 %v2182
    %3105 = vmatprep.subr.bf16.mxu0 %v2191
    %3106 = vmatpush1.bf16.msra.mxu0 %v2190
    %3107 = vmatprep.subr.bf16.mxu0 %v2199
    %3108 = vmatpush1.bf16.msra.mxu0 %v2198
    %3109 = vmatprep.subr.bf16.mxu0 %v2207
    %3110 = vmatpush1.bf16.msra.mxu0 %v2206
    %3111 = vmatprep.subr.bf16.mxu0 %v2215
    %3112 = vmatpush1.bf16.msra.mxu0 %v2214
    %3113 = vmatprep.subr.bf16.mxu0 %v2223
    %3114 = vmatpush1.bf16.msra.mxu0 %v2222
    %3115 = vmatprep.mubr.bf16.mxu0 %v134
    %3116 = vmatmul.mubr.bf16.gmra.mrb[0].mxu0 %v133
    %v3117 = vpop.f32.mrb[0].mxu0
    %v3118 = vadd.f32 %v3075, %v3117
    %v3119 = vpop.f32.mrb[0].mxu0
    %v3120 = vadd.f32 %v3077, %v3119
    %v3121 = vpop.f32.mrb[0].mxu0
    %v3122 = vadd.f32 %v3079, %v3121
    %v3123 = vpop.f32.mrb[0].mxu0
    %v3124 = vadd.f32 %v3081, %v3123
    %3125 = vdwg.mxu0
    %3126 = vmatprep.subr.bf16.mxu0 %v2231
    %3127 = vmatpush1.bf16.msra.mxu0 %v2230
    %3128 = vmatprep.subr.bf16.mxu0 %v2239
    %3129 = vmatpush1.bf16.msra.mxu0 %v2238
    %3130 = vmatprep.subr.bf16.mxu0 %v2247
    %3131 = vmatpush1.bf16.msra.mxu0 %v2246
    %3132 = vmatprep.subr.bf16.mxu0 %v2255
    %3133 = vmatpush1.bf16.msra.mxu0 %v2254
    %3134 = vmatprep.subr.bf16.mxu0 %v2263
    %3135 = vmatpush1.bf16.msra.mxu0 %v2262
    %3136 = vmatprep.subr.bf16.mxu0 %v2271
    %3137 = vmatpush1.bf16.msra.mxu0 %v2270
    %3138 = vmatprep.subr.bf16.mxu0 %v2279
    %3139 = vmatpush1.bf16.msra.mxu0 %v2278
    %3140 = vmatprep.subr.bf16.mxu0 %v2287
    %3141 = vmatpush1.bf16.msra.mxu0 %v2286
    %3142 = vmatprep.subr.bf16.mxu0 %v2295
    %3143 = vmatpush1.bf16.msra.mxu0 %v2294
    %3144 = vmatprep.subr.bf16.mxu0 %v2303
    %3145 = vmatpush1.bf16.msra.mxu0 %v2302
    %3146 = vmatprep.subr.bf16.mxu0 %v2311
    %3147 = vmatpush1.bf16.msra.mxu0 %v2310
    %3148 = vmatprep.subr.bf16.mxu0 %v2319
    %3149 = vmatpush1.bf16.msra.mxu0 %v2318
    %3150 = vmatprep.subr.bf16.mxu0 %v2327
    %3151 = vmatpush1.bf16.msra.mxu0 %v2326
    %3152 = vmatprep.subr.bf16.mxu0 %v2335
    %3153 = vmatpush1.bf16.msra.mxu0 %v2334
    %3154 = vmatprep.subr.bf16.mxu0 %v2343
    %3155 = vmatpush1.bf16.msra.mxu0 %v2342
    %3156 = vmatprep.subr.bf16.mxu0 %v2351
    %3157 = vmatpush1.bf16.msra.mxu0 %v2350
    %3158 = vmatprep.mubr.bf16.mxu0 %v136
    %3159 = vmatmul.mubr.bf16.gmra.mrb[0].mxu0 %v135
    %v3160 = vpop.f32.mrb[0].mxu0
    %v3161 = vadd.f32 %v3118, %v3160
    %v3162 = vpop.f32.mrb[0].mxu0
    %v3163 = vadd.f32 %v3120, %v3162
    %v3164 = vpop.f32.mrb[0].mxu0
    %v3165 = vadd.f32 %v3122, %v3164
    %v3166 = vpop.f32.mrb[0].mxu0
    %v3167 = vadd.f32 %v3124, %v3166
    %3168 = vdwg.mxu0
    %3169 = vmatprep.subr.bf16.mxu0 %v2359
    %3170 = vmatpush1.bf16.msra.mxu0 %v2358
    %3171 = vmatprep.subr.bf16.mxu0 %v2367
    %3172 = vmatpush1.bf16.msra.mxu0 %v2366
    %3173 = vmatprep.subr.bf16.mxu0 %v2375
    %3174 = vmatpush1.bf16.msra.mxu0 %v2374
    %3175 = vmatprep.subr.bf16.mxu0 %v2383
    %3176 = vmatpush1.bf16.msra.mxu0 %v2382
    %3177 = vmatprep.subr.bf16.mxu0 %v2391
    %3178 = vmatpush1.bf16.msra.mxu0 %v2390
    %3179 = vmatprep.subr.bf16.mxu0 %v2399
    %3180 = vmatpush1.bf16.msra.mxu0 %v2398
    %3181 = vmatprep.subr.bf16.mxu0 %v2407
    %3182 = vmatpush1.bf16.msra.mxu0 %v2406
    %3183 = vmatprep.subr.bf16.mxu0 %v2415
    %3184 = vmatpush1.bf16.msra.mxu0 %v2414
    %3185 = vmatprep.subr.bf16.mxu0 0
    %3186 = vmatpush1.bf16.msra.mxu0 0
    %3187 = vmatprep.subr.bf16.mxu0 0
    %3188 = vmatpush1.bf16.msra.mxu0 0
    %3189 = vmatprep.subr.bf16.mxu0 0
    %3190 = vmatpush1.bf16.msra.mxu0 0
    %3191 = vmatprep.subr.bf16.mxu0 0
    %3192 = vmatpush1.bf16.msra.mxu0 0
    %3193 = vmatprep.subr.bf16.mxu0 0
    %3194 = vmatpush1.bf16.msra.mxu0 0
    %3195 = vmatprep.subr.bf16.mxu0 0
    %3196 = vmatpush1.bf16.msra.mxu0 0
    %3197 = vmatprep.subr.bf16.mxu0 0
    %3198 = vmatpush1.bf16.msra.mxu0 0
    %3199 = vmatprep.subr.bf16.mxu0 0
    %3200 = vmatpush1.bf16.msra.mxu0 0
    %3201 = vmatprep.mubr.bf16.mxu0 0
    %3202 = vmatmul.mubr.bf16.gmra.mrb[0].mxu0 %v137
    %v3203 = vpop.f32.mrb[0].mxu0
    %v3204 = vadd.f32 %v3161, %v3203
    %v3205 = vpop.f32.mrb[0].mxu0
    %v3206 = vadd.f32 %v3163, %v3205
    %v3207 = vpop.f32.mrb[0].mxu0
    %v3208 = vadd.f32 %v3165, %v3207
    %v3209 = vpop.f32.mrb[0].mxu0
    %v3210 = vadd.f32 %v3167, %v3209
    %3211 = vdwg.mxu0
    %3212 = vmatprep.subr.bf16.mxu0 %v1977
    %3213 = vmatpush1.bf16.msra.mxu0 %v1976
    %3214 = vmatprep.subr.bf16.mxu0 %v1985
    %3215 = vmatpush1.bf16.msra.mxu0 %v1984
    %3216 = vmatprep.subr.bf16.mxu0 %v1993
    %3217 = vmatpush1.bf16.msra.mxu0 %v1992
    %3218 = vmatprep.subr.bf16.mxu0 %v2001
    %3219 = vmatpush1.bf16.msra.mxu0 %v2000
    %3220 = vmatprep.subr.bf16.mxu0 %v2009
    %3221 = vmatpush1.bf16.msra.mxu0 %v2008
    %3222 = vmatprep.subr.bf16.mxu0 %v2017
    %3223 = vmatpush1.bf16.msra.mxu0 %v2016
    %3224 = vmatprep.subr.bf16.mxu0 %v2025
    %3225 = vmatpush1.bf16.msra.mxu0 %v2024
    %3226 = vmatprep.subr.bf16.mxu0 %v2033
    %3227 = vmatpush1.bf16.msra.mxu0 %v2032
    %3228 = vmatprep.subr.bf16.mxu0 %v2041
    %3229 = vmatpush1.bf16.msra.mxu0 %v2040
    %3230 = vmatprep.subr.bf16.mxu0 %v2049
    %3231 = vmatpush1.bf16.msra.mxu0 %v2048
    %3232 = vmatprep.subr.bf16.mxu0 %v2057
    %3233 = vmatpush1.bf16.msra.mxu0 %v2056
    %3234 = vmatprep.subr.bf16.mxu0 %v2065
    %3235 = vmatpush1.bf16.msra.mxu0 %v2064
    %3236 = vmatprep.subr.bf16.mxu0 %v2073
    %3237 = vmatpush1.bf16.msra.mxu0 %v2072
    %3238 = vmatprep.subr.bf16.mxu0 %v2081
    %3239 = vmatpush1.bf16.msra.mxu0 %v2080
    %3240 = vmatprep.subr.bf16.mxu0 %v2089
    %3241 = vmatpush1.bf16.msra.mxu0 %v2088
    %3242 = vmatprep.subr.bf16.mxu0 %v2097
    %3243 = vmatpush1.bf16.msra.mxu0 %v2096
    %3244 = vmatprep.mubr.bf16.mxu0 %v132
    %3245 = vmatmul.mubr.bf16.gmra.mrb[0].mxu0 %v131
    %v3246 = vpop.f32.mrb[0].mxu0
    %v3247 = vadd.f32 %v607, %v3246
    %v3248 = vpop.f32.mrb[0].mxu0
    %v3249 = vadd.f32 %v611, %v3248
    %v3250 = vpop.f32.mrb[0].mxu0
    %v3251 = vadd.f32 %v607, %v3250
    %v3252 = vpop.f32.mrb[0].mxu0
    %v3253 = vadd.f32 %v611, %v3252
    %3254 = vdwg.mxu0
    %3255 = vmatprep.subr.bf16.mxu0 %v2105
    %3256 = vmatpush1.bf16.msra.mxu0 %v2104
    %3257 = vmatprep.subr.bf16.mxu0 %v2113
    %3258 = vmatpush1.bf16.msra.mxu0 %v2112
    %3259 = vmatprep.subr.bf16.mxu0 %v2121
    %3260 = vmatpush1.bf16.msra.mxu0 %v2120
    %3261 = vmatprep.subr.bf16.mxu0 %v2129
    %3262 = vmatpush1.bf16.msra.mxu0 %v2128
    %3263 = vmatprep.subr.bf16.mxu0 %v2137
    %3264 = vmatpush1.bf16.msra.mxu0 %v2136
    %3265 = vmatprep.subr.bf16.mxu0 %v2145
    %3266 = vmatpush1.bf16.msra.mxu0 %v2144
    %3267 = vmatprep.subr.bf16.mxu0 %v2153
    %3268 = vmatpush1.bf16.msra.mxu0 %v2152
    %3269 = vmatprep.subr.bf16.mxu0 %v2161
    %3270 = vmatpush1.bf16.msra.mxu0 %v2160
    %3271 = vmatprep.subr.bf16.mxu0 %v2169
    %3272 = vmatpush1.bf16.msra.mxu0 %v2168
    %3273 = vmatprep.subr.bf16.mxu0 %v2177
    %3274 = vmatpush1.bf16.msra.mxu0 %v2176
    %3275 = vmatprep.subr.bf16.mxu0 %v2185
    %3276 = vmatpush1.bf16.msra.mxu0 %v2184
    %3277 = vmatprep.subr.bf16.mxu0 %v2193
    %3278 = vmatpush1.bf16.msra.mxu0 %v2192
    %3279 = vmatprep.subr.bf16.mxu0 %v2201
    %3280 = vmatpush1.bf16.msra.mxu0 %v2200
    %3281 = vmatprep.subr.bf16.mxu0 %v2209
    %3282 = vmatpush1.bf16.msra.mxu0 %v2208
    %3283 = vmatprep.subr.bf16.mxu0 %v2217
    %3284 = vmatpush1.bf16.msra.mxu0 %v2216
    %3285 = vmatprep.subr.bf16.mxu0 %v2225
    %3286 = vmatpush1.bf16.msra.mxu0 %v2224
    %3287 = vmatprep.mubr.bf16.mxu0 %v134
    %3288 = vmatmul.mubr.bf16.gmra.mrb[0].mxu0 %v133
    %v3289 = vpop.f32.mrb[0].mxu0
    %v3290 = vadd.f32 %v3247, %v3289
    %v3291 = vpop.f32.mrb[0].mxu0
    %v3292 = vadd.f32 %v3249, %v3291
    %v3293 = vpop.f32.mrb[0].mxu0
    %v3294 = vadd.f32 %v3251, %v3293
    %v3295 = vpop.f32.mrb[0].mxu0
    %v3296 = vadd.f32 %v3253, %v3295
    %3297 = vdwg.mxu0
    %3298 = vmatprep.subr.bf16.mxu0 %v2233
    %3299 = vmatpush1.bf16.msra.mxu0 %v2232
    %3300 = vmatprep.subr.bf16.mxu0 %v2241
    %3301 = vmatpush1.bf16.msra.mxu0 %v2240
    %3302 = vmatprep.subr.bf16.mxu0 %v2249
    %3303 = vmatpush1.bf16.msra.mxu0 %v2248
    %3304 = vmatprep.subr.bf16.mxu0 %v2257
    %3305 = vmatpush1.bf16.msra.mxu0 %v2256
    %3306 = vmatprep.subr.bf16.mxu0 %v2265
    %3307 = vmatpush1.bf16.msra.mxu0 %v2264
    %3308 = vmatprep.subr.bf16.mxu0 %v2273
    %3309 = vmatpush1.bf16.msra.mxu0 %v2272
    %3310 = vmatprep.subr.bf16.mxu0 %v2281
    %3311 = vmatpush1.bf16.msra.mxu0 %v2280
    %3312 = vmatprep.subr.bf16.mxu0 %v2289
    %3313 = vmatpush1.bf16.msra.mxu0 %v2288
    %3314 = vmatprep.subr.bf16.mxu0 %v2297
    %3315 = vmatpush1.bf16.msra.mxu0 %v2296
    %3316 = vmatprep.subr.bf16.mxu0 %v2305
    %3317 = vmatpush1.bf16.msra.mxu0 %v2304
    %3318 = vmatprep.subr.bf16.mxu0 %v2313
    %3319 = vmatpush1.bf16.msra.mxu0 %v2312
    %3320 = vmatprep.subr.bf16.mxu0 %v2321
    %3321 = vmatpush1.bf16.msra.mxu0 %v2320
    %3322 = vmatprep.subr.bf16.mxu0 %v2329
    %3323 = vmatpush1.bf16.msra.mxu0 %v2328
    %3324 = vmatprep.subr.bf16.mxu0 %v2337
    %3325 = vmatpush1.bf16.msra.mxu0 %v2336
    %3326 = vmatprep.subr.bf16.mxu0 %v2345
    %3327 = vmatpush1.bf16.msra.mxu0 %v2344
    %3328 = vmatprep.subr.bf16.mxu0 %v2353
    %3329 = vmatpush1.bf16.msra.mxu0 %v2352
    %3330 = vmatprep.mubr.bf16.mxu0 %v136
    %3331 = vmatmul.mubr.bf16.gmra.mrb[0].mxu0 %v135
    %v3332 = vpop.f32.mrb[0].mxu0
    %v3333 = vadd.f32 %v3290, %v3332
    %v3334 = vpop.f32.mrb[0].mxu0
    %v3335 = vadd.f32 %v3292, %v3334
    %v3336 = vpop.f32.mrb[0].mxu0
    %v3337 = vadd.f32 %v3294, %v3336
    %v3338 = vpop.f32.mrb[0].mxu0
    %v3339 = vadd.f32 %v3296, %v3338
    %3340 = vdwg.mxu0
    %3341 = vmatprep.subr.bf16.mxu0 %v2361
    %3342 = vmatpush1.bf16.msra.mxu0 %v2360
    %3343 = vmatprep.subr.bf16.mxu0 %v2369
    %3344 = vmatpush1.bf16.msra.mxu0 %v2368
    %3345 = vmatprep.subr.bf16.mxu0 %v2377
    %3346 = vmatpush1.bf16.msra.mxu0 %v2376
    %3347 = vmatprep.subr.bf16.mxu0 %v2385
    %3348 = vmatpush1.bf16.msra.mxu0 %v2384
    %3349 = vmatprep.subr.bf16.mxu0 %v2393
    %3350 = vmatpush1.bf16.msra.mxu0 %v2392
    %3351 = vmatprep.subr.bf16.mxu0 %v2401
    %3352 = vmatpush1.bf16.msra.mxu0 %v2400
    %3353 = vmatprep.subr.bf16.mxu0 %v2409
    %3354 = vmatpush1.bf16.msra.mxu0 %v2408
    %3355 = vmatprep.subr.bf16.mxu0 %v2417
    %3356 = vmatpush1.bf16.msra.mxu0 %v2416
    %3357 = vmatprep.subr.bf16.mxu0 0
    %3358 = vmatpush1.bf16.msra.mxu0 0
    %3359 = vmatprep.subr.bf16.mxu0 0
    %3360 = vmatpush1.bf16.msra.mxu0 0
    %3361 = vmatprep.subr.bf16.mxu0 0
    %3362 = vmatpush1.bf16.msra.mxu0 0
    %3363 = vmatprep.subr.bf16.mxu0 0
    %3364 = vmatpush1.bf16.msra.mxu0 0
    %3365 = vmatprep.subr.bf16.mxu0 0
    %3366 = vmatpush1.bf16.msra.mxu0 0
    %3367 = vmatprep.subr.bf16.mxu0 0
    %3368 = vmatpush1.bf16.msra.mxu0 0
    %3369 = vmatprep.subr.bf16.mxu0 0
    %3370 = vmatpush1.bf16.msra.mxu0 0
    %3371 = vmatprep.subr.bf16.mxu0 0
    %3372 = vmatpush1.bf16.msra.mxu0 0
    %3373 = vmatprep.mubr.bf16.mxu0 0
    %3374 = vmatmul.mubr.bf16.gmra.mrb[0].mxu0 %v137
    %v3375 = vpop.f32.mrb[0].mxu0
    %v3376 = vadd.f32 %v3333, %v3375
    %v3377 = vpop.f32.mrb[0].mxu0
    %v3378 = vadd.f32 %v3335, %v3377
    %v3379 = vpop.f32.mrb[0].mxu0
    %v3380 = vadd.f32 %v3337, %v3379
    %v3381 = vpop.f32.mrb[0].mxu0
    %v3382 = vadd.f32 %v3339, %v3381
    %3383 = vdwg.mxu0
    %3384 = vmatprep.subr.bf16.mxu0 %v1979
    %3385 = vmatpush1.bf16.msra.mxu0 %v1978
    %3386 = vmatprep.subr.bf16.mxu0 %v1987
    %3387 = vmatpush1.bf16.msra.mxu0 %v1986
    %3388 = vmatprep.subr.bf16.mxu0 %v1995
    %3389 = vmatpush1.bf16.msra.mxu0 %v1994
    %3390 = vmatprep.subr.bf16.mxu0 %v2003
    %3391 = vmatpush1.bf16.msra.mxu0 %v2002
    %3392 = vmatprep.subr.bf16.mxu0 %v2011
    %3393 = vmatpush1.bf16.msra.mxu0 %v2010
    %3394 = vmatprep.subr.bf16.mxu0 %v2019
    %3395 = vmatpush1.bf16.msra.mxu0 %v2018
    %3396 = vmatprep.subr.bf16.mxu0 %v2027
    %3397 = vmatpush1.bf16.msra.mxu0 %v2026
    %3398 = vmatprep.subr.bf16.mxu0 %v2035
    %3399 = vmatpush1.bf16.msra.mxu0 %v2034
    %3400 = vmatprep.subr.bf16.mxu0 %v2043
    %3401 = vmatpush1.bf16.msra.mxu0 %v2042
    %3402 = vmatprep.subr.bf16.mxu0 %v2051
    %3403 = vmatpush1.bf16.msra.mxu0 %v2050
    %3404 = vmatprep.subr.bf16.mxu0 %v2059
    %3405 = vmatpush1.bf16.msra.mxu0 %v2058
    %3406 = vmatprep.subr.bf16.mxu0 %v2067
    %3407 = vmatpush1.bf16.msra.mxu0 %v2066
    %3408 = vmatprep.subr.bf16.mxu0 %v2075
    %3409 = vmatpush1.bf16.msra.mxu0 %v2074
    %3410 = vmatprep.subr.bf16.mxu0 %v2083
    %3411 = vmatpush1.bf16.msra.mxu0 %v2082
    %3412 = vmatprep.subr.bf16.mxu0 %v2091
    %3413 = vmatpush1.bf16.msra.mxu0 %v2090
    %3414 = vmatprep.subr.bf16.mxu0 %v2099
    %3415 = vmatpush1.bf16.msra.mxu0 %v2098
    %3416 = vmatprep.mubr.bf16.mxu0 %v132
    %3417 = vmatmul.mubr.bf16.gmra.mrb[0].mxu0 %v131
    %v3418 = vpop.f32.mrb[0].mxu0
    %v3419 = vadd.f32 %v615, %v3418
    %v3420 = vpop.f32.mrb[0].mxu0
    %v3421 = vadd.f32 %v619, %v3420
    %v3422 = vpop.f32.mrb[0].mxu0
    %v3423 = vadd.f32 %v615, %v3422
    %v3424 = vpop.f32.mrb[0].mxu0
    %v3425 = vadd.f32 %v619, %v3424
    %3426 = vdwg.mxu0
    %3427 = vmatprep.subr.bf16.mxu0 %v2107
    %3428 = vmatpush1.bf16.msra.mxu0 %v2106
    %3429 = vmatprep.subr.bf16.mxu0 %v2115
    %3430 = vmatpush1.bf16.msra.mxu0 %v2114
    %3431 = vmatprep.subr.bf16.mxu0 %v2123
    %3432 = vmatpush1.bf16.msra.mxu0 %v2122
    %3433 = vmatprep.subr.bf16.mxu0 %v2131
    %3434 = vmatpush1.bf16.msra.mxu0 %v2130
    %3435 = vmatprep.subr.bf16.mxu0 %v2139
    %3436 = vmatpush1.bf16.msra.mxu0 %v2138
    %3437 = vmatprep.subr.bf16.mxu0 %v2147
    %3438 = vmatpush1.bf16.msra.mxu0 %v2146
    %3439 = vmatprep.subr.bf16.mxu0 %v2155
    %3440 = vmatpush1.bf16.msra.mxu0 %v2154
    %3441 = vmatprep.subr.bf16.mxu0 %v2163
    %3442 = vmatpush1.bf16.msra.mxu0 %v2162
    %3443 = vmatprep.subr.bf16.mxu0 %v2171
    %3444 = vmatpush1.bf16.msra.mxu0 %v2170
    %3445 = vmatprep.subr.bf16.mxu0 %v2179
    %3446 = vmatpush1.bf16.msra.mxu0 %v2178
    %3447 = vmatprep.subr.bf16.mxu0 %v2187
    %3448 = vmatpush1.bf16.msra.mxu0 %v2186
    %3449 = vmatprep.subr.bf16.mxu0 %v2195
    %3450 = vmatpush1.bf16.msra.mxu0 %v2194
    %3451 = vmatprep.subr.bf16.mxu0 %v2203
    %3452 = vmatpush1.bf16.msra.mxu0 %v2202
    %3453 = vmatprep.subr.bf16.mxu0 %v2211
    %3454 = vmatpush1.bf16.msra.mxu0 %v2210
    %3455 = vmatprep.subr.bf16.mxu0 %v2219
    %3456 = vmatpush1.bf16.msra.mxu0 %v2218
    %3457 = vmatprep.subr.bf16.mxu0 %v2227
    %3458 = vmatpush1.bf16.msra.mxu0 %v2226
    %3459 = vmatprep.mubr.bf16.mxu0 %v134
    %3460 = vmatmul.mubr.bf16.gmra.mrb[0].mxu0 %v133
    %v3461 = vpop.f32.mrb[0].mxu0
    %v3462 = vadd.f32 %v3419, %v3461
    %v3463 = vpop.f32.mrb[0].mxu0
    %v3464 = vadd.f32 %v3421, %v3463
    %v3465 = vpop.f32.mrb[0].mxu0
    %v3466 = vadd.f32 %v3423, %v3465
    %v3467 = vpop.f32.mrb[0].mxu0
    %v3468 = vadd.f32 %v3425, %v3467
    %3469 = vdwg.mxu0
    %3470 = vmatprep.subr.bf16.mxu0 %v2235
    %3471 = vmatpush1.bf16.msra.mxu0 %v2234
    %3472 = vmatprep.subr.bf16.mxu0 %v2243
    %3473 = vmatpush1.bf16.msra.mxu0 %v2242
    %3474 = vmatprep.subr.bf16.mxu0 %v2251
    %3475 = vmatpush1.bf16.msra.mxu0 %v2250
    %3476 = vmatprep.subr.bf16.mxu0 %v2259
    %3477 = vmatpush1.bf16.msra.mxu0 %v2258
    %3478 = vmatprep.subr.bf16.mxu0 %v2267
    %3479 = vmatpush1.bf16.msra.mxu0 %v2266
    %3480 = vmatprep.subr.bf16.mxu0 %v2275
    %3481 = vmatpush1.bf16.msra.mxu0 %v2274
    %3482 = vmatprep.subr.bf16.mxu0 %v2283
    %3483 = vmatpush1.bf16.msra.mxu0 %v2282
    %3484 = vmatprep.subr.bf16.mxu0 %v2291
    %3485 = vmatpush1.bf16.msra.mxu0 %v2290
    %3486 = vmatprep.subr.bf16.mxu0 %v2299
    %3487 = vmatpush1.bf16.msra.mxu0 %v2298
    %3488 = vmatprep.subr.bf16.mxu0 %v2307
    %3489 = vmatpush1.bf16.msra.mxu0 %v2306
    %3490 = vmatprep.subr.bf16.mxu0 %v2315
    %3491 = vmatpush1.bf16.msra.mxu0 %v2314
    %3492 = vmatprep.subr.bf16.mxu0 %v2323
    %3493 = vmatpush1.bf16.msra.mxu0 %v2322
    %3494 = vmatprep.subr.bf16.mxu0 %v2331
    %3495 = vmatpush1.bf16.msra.mxu0 %v2330
    %3496 = vmatprep.subr.bf16.mxu0 %v2339
    %3497 = vmatpush1.bf16.msra.mxu0 %v2338
    %3498 = vmatprep.subr.bf16.mxu0 %v2347
    %3499 = vmatpush1.bf16.msra.mxu0 %v2346
    %3500 = vmatprep.subr.bf16.mxu0 %v2355
    %3501 = vmatpush1.bf16.msra.mxu0 %v2354
    %3502 = vmatprep.mubr.bf16.mxu0 %v136
    %3503 = vmatmul.mubr.bf16.gmra.mrb[0].mxu0 %v135
    %v3504 = vpop.f32.mrb[0].mxu0
    %v3505 = vadd.f32 %v3462, %v3504
    %v3506 = vpop.f32.mrb[0].mxu0
    %v3507 = vadd.f32 %v3464, %v3506
    %v3508 = vpop.f32.mrb[0].mxu0
    %v3509 = vadd.f32 %v3466, %v3508
    %v3510 = vpop.f32.mrb[0].mxu0
    %v3511 = vadd.f32 %v3468, %v3510
    %3512 = vdwg.mxu0
    %3513 = vmatprep.subr.bf16.mxu0 %v2363
    %3514 = vmatpush1.bf16.msra.mxu0 %v2362
    %3515 = vmatprep.subr.bf16.mxu0 %v2371
    %3516 = vmatpush1.bf16.msra.mxu0 %v2370
    %3517 = vmatprep.subr.bf16.mxu0 %v2379
    %3518 = vmatpush1.bf16.msra.mxu0 %v2378
    %3519 = vmatprep.subr.bf16.mxu0 %v2387
    %3520 = vmatpush1.bf16.msra.mxu0 %v2386
    %3521 = vmatprep.subr.bf16.mxu0 %v2395
    %3522 = vmatpush1.bf16.msra.mxu0 %v2394
    %3523 = vmatprep.subr.bf16.mxu0 %v2403
    %3524 = vmatpush1.bf16.msra.mxu0 %v2402
    %3525 = vmatprep.subr.bf16.mxu0 %v2411
    %3526 = vmatpush1.bf16.msra.mxu0 %v2410
    %3527 = vmatprep.subr.bf16.mxu0 %v2419
    %3528 = vmatpush1.bf16.msra.mxu0 %v2418
    %3529 = vmatprep.subr.bf16.mxu0 0
    %3530 = vmatpush1.bf16.msra.mxu0 0
    %3531 = vmatprep.subr.bf16.mxu0 0
    %3532 = vmatpush1.bf16.msra.mxu0 0
    %3533 = vmatprep.subr.bf16.mxu0 0
    %3534 = vmatpush1.bf16.msra.mxu0 0
    %3535 = vmatprep.subr.bf16.mxu0 0
    %3536 = vmatpush1.bf16.msra.mxu0 0
    %3537 = vmatprep.subr.bf16.mxu0 0
    %3538 = vmatpush1.bf16.msra.mxu0 0
    %3539 = vmatprep.subr.bf16.mxu0 0
    %3540 = vmatpush1.bf16.msra.mxu0 0
    %3541 = vmatprep.subr.bf16.mxu0 0
    %3542 = vmatpush1.bf16.msra.mxu0 0
    %3543 = vmatprep.subr.bf16.mxu0 0
    %3544 = vmatpush1.bf16.msra.mxu0 0
    %3545 = vmatprep.mubr.bf16.mxu0 0
    %3546 = vmatmul.mubr.bf16.gmra.mrb[0].mxu0 %v137
    %v3547 = vpop.f32.mrb[0].mxu0
    %v3548 = vadd.f32 %v3505, %v3547
    %v3549 = vpop.f32.mrb[0].mxu0
    %v3550 = vadd.f32 %v3507, %v3549
    %v3551 = vpop.f32.mrb[0].mxu0
    %v3552 = vadd.f32 %v3509, %v3551
    %v3553 = vpop.f32.mrb[0].mxu0
    %v3554 = vadd.f32 %v3511, %v3553
    %3555 = vdwg.mxu0
    %v3556 = vmax.f32 %v3032, 0.0
    %v3557 = vmax.f32 %v3034, 0.0
    %v3558 = vmax.f32 %v3204, 0.0
    %v3559 = vmax.f32 %v3206, 0.0
    %v3560 = vmax.f32 %v3376, 0.0
    %v3561 = vmax.f32 %v3378, 0.0
    %v3562 = vmax.f32 %v3548, 0.0
    %v3563 = vmax.f32 %v3550, 0.0
    %v3564 = vmax.f32 %v3036, 0.0
    %v3565 = vmax.f32 %v3038, 0.0
    %v3566 = vmax.f32 %v3208, 0.0
    %v3567 = vmax.f32 %v3210, 0.0
    %v3568 = vmax.f32 %v3380, 0.0
    %v3569 = vmax.f32 %v3382, 0.0
    %v3570 = vmax.f32 %v3552, 0.0
    %v3571 = vmax.f32 %v3554, 0.0
    %v3572 = vpack.c.bf16 %v3564, %v3556
    %v3573 = vpack.c.bf16 %v3565, %v3557
    %v3574 = vpack.c.bf16 %v3566, %v3558
    %v3575 = vpack.c.bf16 %v3567, %v3559
    %v3576 = vpack.c.bf16 %v3568, %v3560
    %v3577 = vpack.c.bf16 %v3569, %v3561
    %v3578 = vpack.c.bf16 %v3570, %v3562
    %v3579 = vpack.c.bf16 %v3571, %v3563
    %v3580 = vld [vmem:[#allocation8] sm:$0xff]
    %v3581 = vld [vmem:[#allocation8 + $0x8] sm:$0xff]
    %v3582 = vld [vmem:[#allocation8 + $0x10] sm:$0xff]
    %v3583 = vld [vmem:[#allocation8 + $0x18] sm:$0xff]
    %v3584 = vld [vmem:[#allocation8 + $0x20] sm:$0xff]
    %v3585 = vld [vmem:[#allocation8 + $0x28] sm:$0xff]
    %v3586 = vld [vmem:[#allocation8 + $0x30] sm:$0xff]
    %v3587 = vld [vmem:[#allocation8 + $0x38] sm:$0xff]
    %v3588 = vld [vmem:[#allocation8 + $0x40] sm:$0xff]
    %v3589 = vld [vmem:[#allocation8 + $0x48] sm:$0xff]
    %v3590 = vld [vmem:[#allocation8 + $0x50] sm:$0xff]
    %v3591 = vld [vmem:[#allocation8 + $0x58] sm:$0xff]
    %v3592 = vld [vmem:[#allocation8 + $0x60] sm:$0xff]
    %v3593 = vld [vmem:[#allocation8 + $0x68] sm:$0xff]
    %v3594 = vld [vmem:[#allocation8 + $0x70] sm:$0xff]
    %v3595 = vld [vmem:[#allocation8 + $0x78] sm:$0xff]
    %v3596 = vld [vmem:[#allocation8 + $0x80] sm:$0xff]
    %v3597 = vld [vmem:[#allocation8 + $0x88] sm:$0xff]
    %v3598 = vld [vmem:[#allocation8 + $0x90] sm:$0xff]
    %v3599 = vld [vmem:[#allocation8 + $0x98] sm:$0xff]
    %v3600 = vld [vmem:[#allocation8 + $0xa0] sm:$0xff]
    %v3601 = vld [vmem:[#allocation8 + $0xa8] sm:$0xff]
    %v3602 = vld [vmem:[#allocation8 + $0xb0] sm:$0xff]
    %v3603 = vld [vmem:[#allocation8 + $0xb8] sm:$0xff]
    %v3604 = vld [vmem:[#allocation8 + $0xc0] sm:$0xff]
    %v3605 = vld [vmem:[#allocation8 + $0xc8] sm:$0xff]
    %v3606 = vld [vmem:[#allocation8 + $0xd0] sm:$0xff]
    %v3607 = vld [vmem:[#allocation8 + $0xd8] sm:$0xff]
    %v3608 = vld [vmem:[#allocation8 + $0xe0] sm:$0xff]
    %v3609 = vld [vmem:[#allocation8 + $0xe8] sm:$0xff]
    %v3610 = vld [vmem:[#allocation8 + $0xf0] sm:$0xff]
    %v3611 = vld [vmem:[#allocation8 + $0xf8] sm:$0xff]
    %v3612 = vld [vmem:[#allocation8 + $0x100] sm:$0xff]
    %v3613 = vld [vmem:[#allocation8 + $0x108] sm:$0xff]
    %v3614 = vld [vmem:[#allocation8 + $0x110] sm:$0xff]
    %v3615 = vld [vmem:[#allocation8 + $0x118] sm:$0xff]
    %v3616 = vld [vmem:[#allocation8 + $0x120] sm:$0xff]
    %v3617 = vld [vmem:[#allocation8 + $0x128] sm:$0xff]
    %v3618 = vld [vmem:[#allocation8 + $0x130] sm:$0xff]
    %v3619 = vld [vmem:[#allocation8 + $0x138] sm:$0xff]
    %v3620 = vld [vmem:[#allocation8 + $0x140] sm:$0xff]
    %v3621 = vld [vmem:[#allocation8 + $0x148] sm:$0xff]
    %v3622 = vld [vmem:[#allocation8 + $0x150] sm:$0xff]
    %v3623 = vld [vmem:[#allocation8 + $0x158] sm:$0xff]
    %v3624 = vld [vmem:[#allocation8 + $0x160] sm:$0xff]
    %v3625 = vld [vmem:[#allocation8 + $0x168] sm:$0xff]
    %v3626 = vld [vmem:[#allocation8 + $0x170] sm:$0xff]
    %v3627 = vld [vmem:[#allocation8 + $0x178] sm:$0xff]
    %v3628 = vld [vmem:[#allocation8 + $0x180] sm:$0xff]
    %v3629 = vld [vmem:[#allocation8 + $0x188] sm:$0xff]
    %v3630 = vld [vmem:[#allocation8 + $0x190] sm:$0xff]
    %v3631 = vld [vmem:[#allocation8 + $0x198] sm:$0xff]
    %v3632 = vld [vmem:[#allocation8 + $0x1a0] sm:$0xff]
    %v3633 = vld [vmem:[#allocation8 + $0x1a8] sm:$0xff]
    %v3634 = vld [vmem:[#allocation8 + $0x1b0] sm:$0xff]
    %v3635 = vld [vmem:[#allocation8 + $0x1b8] sm:$0xff]
    %v3636 = vld [vmem:[#allocation8 + $0x1c0] sm:$0xff]
    %v3637 = vld [vmem:[#allocation8 + $0x1c8] sm:$0xff]
    %v3638 = vld [vmem:[#allocation8 + $0x1d0] sm:$0xff]
    %v3639 = vld [vmem:[#allocation8 + $0x1d8] sm:$0xff]
    %v3640 = vld [vmem:[#allocation8 + $0x1e0] sm:$0xff]
    %v3641 = vld [vmem:[#allocation8 + $0x1e8] sm:$0xff]
    %v3642 = vld [vmem:[#allocation8 + $0x1f0] sm:$0xff]
    %v3643 = vld [vmem:[#allocation8 + $0x1f8] sm:$0xff]
    %v3644 = vld [vmem:[#allocation8 + $0x200] sm:$0xff]
    %v3645 = vld [vmem:[#allocation8 + $0x208] sm:$0xff]
    %v3646 = vld [vmem:[#allocation8 + $0x210] sm:$0xff]
    %v3647 = vld [vmem:[#allocation8 + $0x218] sm:$0xff]
    %v3648 = vld [vmem:[#allocation8 + $0x220] sm:$0xff]
    %v3649 = vld [vmem:[#allocation8 + $0x228] sm:$0xff]
    %v3650 = vld [vmem:[#allocation8 + $0x230] sm:$0xff]
    %v3651 = vld [vmem:[#allocation8 + $0x238] sm:$0xff]
    %v3652 = vld [vmem:[#allocation8 + $0x240] sm:$0xff]
    %v3653 = vld [vmem:[#allocation8 + $0x248] sm:$0xff]
    %v3654 = vld [vmem:[#allocation8 + $0x250] sm:$0xff]
    %v3655 = vld [vmem:[#allocation8 + $0x258] sm:$0xff]
    %v3656 = vld [vmem:[#allocation8 + $0x260] sm:$0xff]
    %v3657 = vld [vmem:[#allocation8 + $0x268] sm:$0xff]
    %v3658 = vld [vmem:[#allocation8 + $0x270] sm:$0xff]
    %v3659 = vld [vmem:[#allocation8 + $0x278] sm:$0xff]
    %v3660 = vld [vmem:[#allocation8 + $0x280] sm:$0xff]
    %v3661 = vld [vmem:[#allocation8 + $0x288] sm:$0xff]
    %v3662 = vld [vmem:[#allocation8 + $0x290] sm:$0xff]
    %v3663 = vld [vmem:[#allocation8 + $0x298] sm:$0xff]
    %v3664 = vld [vmem:[#allocation8 + $0x2a0] sm:$0xff]
    %v3665 = vld [vmem:[#allocation8 + $0x2a8] sm:$0xff]
    %v3666 = vld [vmem:[#allocation8 + $0x2b0] sm:$0xff]
    %v3667 = vld [vmem:[#allocation8 + $0x2b8] sm:$0xff]
    %v3668 = vld [vmem:[#allocation8 + $0x2c0] sm:$0xff]
    %v3669 = vld [vmem:[#allocation8 + $0x2c8] sm:$0xff]
    %v3670 = vld [vmem:[#allocation8 + $0x2d0] sm:$0xff]
    %v3671 = vld [vmem:[#allocation8 + $0x2d8] sm:$0xff]
    %v3672 = vld [vmem:[#allocation8 + $0x2e0] sm:$0xff]
    %v3673 = vld [vmem:[#allocation8 + $0x2e8] sm:$0xff]
    %v3674 = vld [vmem:[#allocation8 + $0x2f0] sm:$0xff]
    %v3675 = vld [vmem:[#allocation8 + $0x2f8] sm:$0xff]
    %v3676 = vld [vmem:[#allocation8 + $0x300] sm:$0xff]
    %v3677 = vld [vmem:[#allocation8 + $0x308] sm:$0xff]
    %v3678 = vld [vmem:[#allocation8 + $0x310] sm:$0xff]
    %v3679 = vld [vmem:[#allocation8 + $0x318] sm:$0xff]
    %v3680 = vld [vmem:[#allocation8 + $0x320] sm:$0xff]
    %v3681 = vld [vmem:[#allocation8 + $0x328] sm:$0xff]
    %v3682 = vld [vmem:[#allocation8 + $0x330] sm:$0xff]
    %v3683 = vld [vmem:[#allocation8 + $0x338] sm:$0xff]
    %v3684 = vld [vmem:[#allocation8 + $0x340] sm:$0xff]
    %v3685 = vld [vmem:[#allocation8 + $0x348] sm:$0xff]
    %v3686 = vld [vmem:[#allocation8 + $0x350] sm:$0xff]
    %v3687 = vld [vmem:[#allocation8 + $0x358] sm:$0xff]
    %v3688 = vld [vmem:[#allocation8 + $0x360] sm:$0xff]
    %v3689 = vld [vmem:[#allocation8 + $0x368] sm:$0xff]
    %v3690 = vld [vmem:[#allocation8 + $0x370] sm:$0xff]
    %v3691 = vld [vmem:[#allocation8 + $0x378] sm:$0xff]
    %v3692 = vld [vmem:[#allocation8 + $0x380] sm:$0xff]
    %v3693 = vld [vmem:[#allocation8 + $0x388] sm:$0xff]
    %v3694 = vld [vmem:[#allocation8 + $0x390] sm:$0xff]
    %v3695 = vld [vmem:[#allocation8 + $0x398] sm:$0xff]
    %v3696 = vld [vmem:[#allocation8 + $0x3a0] sm:$0xff]
    %v3697 = vld [vmem:[#allocation8 + $0x3a8] sm:$0xff]
    %v3698 = vld [vmem:[#allocation8 + $0x3b0] sm:$0xff]
    %v3699 = vld [vmem:[#allocation8 + $0x3b8] sm:$0xff]
    %v3700 = vld [vmem:[#allocation8 + $0x3c0] sm:$0xff]
    %v3701 = vld [vmem:[#allocation8 + $0x3c8] sm:$0xff]
    %v3702 = vld [vmem:[#allocation8 + $0x3d0] sm:$0xff]
    %v3703 = vld [vmem:[#allocation8 + $0x3d8] sm:$0xff]
    %v3704 = vld [vmem:[#allocation8 + $0x3e0] sm:$0xff]
    %v3705 = vld [vmem:[#allocation8 + $0x3e8] sm:$0xff]
    %v3706 = vld [vmem:[#allocation8 + $0x3f0] sm:$0xff]
    %v3707 = vld [vmem:[#allocation8 + $0x3f8] sm:$0xff]
    %v3708 = vld [vmem:[#allocation8 + $0x400] sm:$0xff]
    %v3709 = vld [vmem:[#allocation8 + $0x408] sm:$0xff]
    %v3710 = vld [vmem:[#allocation8 + $0x410] sm:$0xff]
    %v3711 = vld [vmem:[#allocation8 + $0x418] sm:$0xff]
    %v3712 = vld [vmem:[#allocation8 + $0x420] sm:$0xff]
    %v3713 = vld [vmem:[#allocation8 + $0x428] sm:$0xff]
    %v3714 = vld [vmem:[#allocation8 + $0x430] sm:$0xff]
    %v3715 = vld [vmem:[#allocation8 + $0x438] sm:$0xff]
    %v3716 = vld [vmem:[#allocation8 + $0x440] sm:$0xff]
    %v3717 = vld [vmem:[#allocation8 + $0x448] sm:$0xff]
    %v3718 = vld [vmem:[#allocation8 + $0x450] sm:$0xff]
    %v3719 = vld [vmem:[#allocation8 + $0x458] sm:$0xff]
    %v3720 = vld [vmem:[#allocation8 + $0x460] sm:$0xff]
    %v3721 = vld [vmem:[#allocation8 + $0x468] sm:$0xff]
    %v3722 = vld [vmem:[#allocation8 + $0x470] sm:$0xff]
    %v3723 = vld [vmem:[#allocation8 + $0x478] sm:$0xff]
    %v3724 = vld [vmem:[#allocation8 + $0x480] sm:$0xff]
    %v3725 = vld [vmem:[#allocation8 + $0x488] sm:$0xff]
    %v3726 = vld [vmem:[#allocation8 + $0x490] sm:$0xff]
    %v3727 = vld [vmem:[#allocation8 + $0x498] sm:$0xff]
    %v3728 = vld [vmem:[#allocation8 + $0x4a0] sm:$0xff]
    %v3729 = vld [vmem:[#allocation8 + $0x4a8] sm:$0xff]
    %v3730 = vld [vmem:[#allocation8 + $0x4b0] sm:$0xff]
    %v3731 = vld [vmem:[#allocation8 + $0x4b8] sm:$0xff]
    %v3732 = vld [vmem:[#allocation8 + $0x4c0] sm:$0xff]
    %v3733 = vld [vmem:[#allocation8 + $0x4c8] sm:$0xff]
    %v3734 = vld [vmem:[#allocation8 + $0x4d0] sm:$0xff]
    %v3735 = vld [vmem:[#allocation8 + $0x4d8] sm:$0xff]
    %v3736 = vld [vmem:[#allocation8 + $0x4e0] sm:$0xff]
    %v3737 = vld [vmem:[#allocation8 + $0x4e8] sm:$0xff]
    %v3738 = vld [vmem:[#allocation8 + $0x4f0] sm:$0xff]
    %v3739 = vld [vmem:[#allocation8 + $0x4f8] sm:$0xff]
    %v3740 = vld [vmem:[#allocation8 + $0x500] sm:$0xff]
    %v3741 = vld [vmem:[#allocation8 + $0x508] sm:$0xff]
    %v3742 = vld [vmem:[#allocation8 + $0x510] sm:$0xff]
    %v3743 = vld [vmem:[#allocation8 + $0x518] sm:$0xff]
    %v3744 = vld [vmem:[#allocation8 + $0x520] sm:$0xff]
    %v3745 = vld [vmem:[#allocation8 + $0x528] sm:$0xff]
    %v3746 = vld [vmem:[#allocation8 + $0x530] sm:$0xff]
    %v3747 = vld [vmem:[#allocation8 + $0x538] sm:$0xff]
    %v3748 = vld [vmem:[#allocation8 + $0x540] sm:$0xff]
    %v3749 = vld [vmem:[#allocation8 + $0x548] sm:$0xff]
    %v3750 = vld [vmem:[#allocation8 + $0x550] sm:$0xff]
    %v3751 = vld [vmem:[#allocation8 + $0x558] sm:$0xff]
    %v3752 = vld [vmem:[#allocation8 + $0x560] sm:$0xff]
    %v3753 = vld [vmem:[#allocation8 + $0x568] sm:$0xff]
    %v3754 = vld [vmem:[#allocation8 + $0x570] sm:$0xff]
    %v3755 = vld [vmem:[#allocation8 + $0x578] sm:$0xff]
    %v3756 = vld [vmem:[#allocation8 + $0x580] sm:$0xff]
    %v3757 = vld [vmem:[#allocation8 + $0x588] sm:$0xff]
    %v3758 = vld [vmem:[#allocation8 + $0x590] sm:$0xff]
    %v3759 = vld [vmem:[#allocation8 + $0x598] sm:$0xff]
    %v3760 = vld [vmem:[#allocation8 + $0x5a0] sm:$0xff]
    %v3761 = vld [vmem:[#allocation8 + $0x5a8] sm:$0xff]
    %v3762 = vld [vmem:[#allocation8 + $0x5b0] sm:$0xff]
    %v3763 = vld [vmem:[#allocation8 + $0x5b8] sm:$0xff]
    %v3764 = vld [vmem:[#allocation8 + $0x5c0] sm:$0xff]
    %v3765 = vld [vmem:[#allocation8 + $0x5c8] sm:$0xff]
    %v3766 = vld [vmem:[#allocation8 + $0x5d0] sm:$0xff]
    %v3767 = vld [vmem:[#allocation8 + $0x5d8] sm:$0xff]
    %v3768 = vld [vmem:[#allocation8 + $0x5e0] sm:$0xff]
    %v3769 = vld [vmem:[#allocation8 + $0x5e8] sm:$0xff]
    %v3770 = vld [vmem:[#allocation8 + $0x5f0] sm:$0xff]
    %v3771 = vld [vmem:[#allocation8 + $0x5f8] sm:$0xff]
    %v3772 = vld [vmem:[#allocation8 + $0x600] sm:$0xff]
    %v3773 = vld [vmem:[#allocation8 + $0x608] sm:$0xff]
    %v3774 = vld [vmem:[#allocation8 + $0x610] sm:$0xff]
    %v3775 = vld [vmem:[#allocation8 + $0x618] sm:$0xff]
    %v3776 = vld [vmem:[#allocation8 + $0x620] sm:$0xff]
    %v3777 = vld [vmem:[#allocation8 + $0x628] sm:$0xff]
    %v3778 = vld [vmem:[#allocation8 + $0x630] sm:$0xff]
    %v3779 = vld [vmem:[#allocation8 + $0x638] sm:$0xff]
    %v3780 = vld [vmem:[#allocation8 + $0x640] sm:$0xff]
    %v3781 = vld [vmem:[#allocation8 + $0x648] sm:$0xff]
    %v3782 = vld [vmem:[#allocation8 + $0x650] sm:$0xff]
    %v3783 = vld [vmem:[#allocation8 + $0x658] sm:$0xff]
    %v3784 = vld [vmem:[#allocation8 + $0x660] sm:$0xff]
    %v3785 = vld [vmem:[#allocation8 + $0x668] sm:$0xff]
    %v3786 = vld [vmem:[#allocation8 + $0x670] sm:$0xff]
    %v3787 = vld [vmem:[#allocation8 + $0x678] sm:$0xff]
    %v3788 = vld [vmem:[#allocation8 + $0x680] sm:$0xff]
    %v3789 = vld [vmem:[#allocation8 + $0x688] sm:$0xff]
    %v3790 = vld [vmem:[#allocation8 + $0x690] sm:$0xff]
    %v3791 = vld [vmem:[#allocation8 + $0x698] sm:$0xff]
    %v3792 = vld [vmem:[#allocation8 + $0x6a0] sm:$0xff]
    %v3793 = vld [vmem:[#allocation8 + $0x6a8] sm:$0xff]
    %v3794 = vld [vmem:[#allocation8 + $0x6b0] sm:$0xff]
    %v3795 = vld [vmem:[#allocation8 + $0x6b8] sm:$0xff]
    %v3796 = vld [vmem:[#allocation8 + $0x6c0] sm:$0xff]
    %v3797 = vld [vmem:[#allocation8 + $0x6c8] sm:$0xff]
    %v3798 = vld [vmem:[#allocation8 + $0x6d0] sm:$0xff]
    %v3799 = vld [vmem:[#allocation8 + $0x6d8] sm:$0xff]
    %v3800 = vld [vmem:[#allocation8 + $0x6e0] sm:$0xff]
    %v3801 = vld [vmem:[#allocation8 + $0x6e8] sm:$0xff]
    %v3802 = vld [vmem:[#allocation8 + $0x6f0] sm:$0xff]
    %v3803 = vld [vmem:[#allocation8 + $0x6f8] sm:$0xff]
    %v3804 = vld [vmem:[#allocation8 + $0x700] sm:$0xff]
    %v3805 = vld [vmem:[#allocation8 + $0x708] sm:$0xff]
    %v3806 = vld [vmem:[#allocation8 + $0x710] sm:$0xff]
    %v3807 = vld [vmem:[#allocation8 + $0x718] sm:$0xff]
    %v3808 = vld [vmem:[#allocation8 + $0x720] sm:$0xff]
    %v3809 = vld [vmem:[#allocation8 + $0x728] sm:$0xff]
    %v3810 = vld [vmem:[#allocation8 + $0x730] sm:$0xff]
    %v3811 = vld [vmem:[#allocation8 + $0x738] sm:$0xff]
    %v3812 = vld [vmem:[#allocation8 + $0x740] sm:$0xff]
    %v3813 = vld [vmem:[#allocation8 + $0x748] sm:$0xff]
    %v3814 = vld [vmem:[#allocation8 + $0x750] sm:$0xff]
    %v3815 = vld [vmem:[#allocation8 + $0x758] sm:$0xff]
    %v3816 = vld [vmem:[#allocation8 + $0x760] sm:$0xff]
    %v3817 = vld [vmem:[#allocation8 + $0x768] sm:$0xff]
    %v3818 = vld [vmem:[#allocation8 + $0x770] sm:$0xff]
    %v3819 = vld [vmem:[#allocation8 + $0x778] sm:$0xff]
    %v3820 = vld [vmem:[#allocation8 + $0x780] sm:$0xff]
    %v3821 = vld [vmem:[#allocation8 + $0x788] sm:$0xff]
    %v3822 = vld [vmem:[#allocation8 + $0x790] sm:$0xff]
    %v3823 = vld [vmem:[#allocation8 + $0x798] sm:$0xff]
    %v3824 = vld [vmem:[#allocation8 + $0x7a0] sm:$0xff]
    %v3825 = vld [vmem:[#allocation8 + $0x7a8] sm:$0xff]
    %v3826 = vld [vmem:[#allocation8 + $0x7b0] sm:$0xff]
    %v3827 = vld [vmem:[#allocation8 + $0x7b8] sm:$0xff]
    %v3828 = vld [vmem:[#allocation8 + $0x7c0] sm:$0xff]
    %v3829 = vld [vmem:[#allocation8 + $0x7c8] sm:$0xff]
    %v3830 = vld [vmem:[#allocation8 + $0x7d0] sm:$0xff]
    %v3831 = vld [vmem:[#allocation8 + $0x7d8] sm:$0xff]
    %v3832 = vld [vmem:[#allocation8 + $0x7e0] sm:$0xff]
    %v3833 = vld [vmem:[#allocation8 + $0x7e8] sm:$0xff]
    %v3834 = vld [vmem:[#allocation8 + $0x7f0] sm:$0xff]
    %v3835 = vld [vmem:[#allocation8 + $0x7f8] sm:$0xff]
    %v3836 = vld [vmem:[#allocation8 + $0x800] sm:$0xff]
    %v3837 = vld [vmem:[#allocation8 + $0x808] sm:$0xff]
    %v3838 = vld [vmem:[#allocation8 + $0x810] sm:$0xff]
    %v3839 = vld [vmem:[#allocation8 + $0x818] sm:$0xff]
    %v3840 = vld [vmem:[#allocation8 + $0x820] sm:$0xff]
    %v3841 = vld [vmem:[#allocation8 + $0x828] sm:$0xff]
    %v3842 = vld [vmem:[#allocation8 + $0x830] sm:$0xff]
    %v3843 = vld [vmem:[#allocation8 + $0x838] sm:$0xff]
    %v3844 = vld [vmem:[#allocation8 + $0x840] sm:$0xff]
    %v3845 = vld [vmem:[#allocation8 + $0x848] sm:$0xff]
    %v3846 = vld [vmem:[#allocation8 + $0x850] sm:$0xff]
    %v3847 = vld [vmem:[#allocation8 + $0x858] sm:$0xff]
    %v3848 = vld [vmem:[#allocation8 + $0x860] sm:$0xff]
    %v3849 = vld [vmem:[#allocation8 + $0x868] sm:$0xff]
    %v3850 = vld [vmem:[#allocation8 + $0x870] sm:$0xff]
    %v3851 = vld [vmem:[#allocation8 + $0x878] sm:$0xff]
    %v3852 = vld [vmem:[#allocation8 + $0x880] sm:$0xff]
    %v3853 = vld [vmem:[#allocation8 + $0x888] sm:$0xff]
    %v3854 = vld [vmem:[#allocation8 + $0x890] sm:$0xff]
    %v3855 = vld [vmem:[#allocation8 + $0x898] sm:$0xff]
    %v3856 = vld [vmem:[#allocation8 + $0x8a0] sm:$0xff]
    %v3857 = vld [vmem:[#allocation8 + $0x8a8] sm:$0xff]
    %v3858 = vld [vmem:[#allocation8 + $0x8b0] sm:$0xff]
    %v3859 = vld [vmem:[#allocation8 + $0x8b8] sm:$0xff]
    %v3860 = vld [vmem:[#allocation8 + $0x8c0] sm:$0xff]
    %v3861 = vld [vmem:[#allocation8 + $0x8c8] sm:$0xff]
    %v3862 = vld [vmem:[#allocation8 + $0x8d0] sm:$0xff]
    %v3863 = vld [vmem:[#allocation8 + $0x8d8] sm:$0xff]
    %v3864 = vld [vmem:[#allocation8 + $0x8e0] sm:$0xff]
    %v3865 = vld [vmem:[#allocation8 + $0x8e8] sm:$0xff]
    %v3866 = vld [vmem:[#allocation8 + $0x8f0] sm:$0xff]
    %v3867 = vld [vmem:[#allocation8 + $0x8f8] sm:$0xff]
    %v3868 = vld [vmem:[#allocation8 + $0x900] sm:$0xff]
    %v3869 = vld [vmem:[#allocation8 + $0x908] sm:$0xff]
    %v3870 = vld [vmem:[#allocation8 + $0x910] sm:$0xff]
    %v3871 = vld [vmem:[#allocation8 + $0x918] sm:$0xff]
    %v3872 = vld [vmem:[#allocation8 + $0x920] sm:$0xff]
    %v3873 = vld [vmem:[#allocation8 + $0x928] sm:$0xff]
    %v3874 = vld [vmem:[#allocation8 + $0x930] sm:$0xff]
    %v3875 = vld [vmem:[#allocation8 + $0x938] sm:$0xff]
    %v3876 = vld [vmem:[#allocation8 + $0x940] sm:$0xff]
    %v3877 = vld [vmem:[#allocation8 + $0x948] sm:$0xff]
    %v3878 = vld [vmem:[#allocation8 + $0x950] sm:$0xff]
    %v3879 = vld [vmem:[#allocation8 + $0x958] sm:$0xff]
    %v3880 = vld [vmem:[#allocation8 + $0x960] sm:$0xff]
    %v3881 = vld [vmem:[#allocation8 + $0x968] sm:$0xff]
    %v3882 = vld [vmem:[#allocation8 + $0x970] sm:$0xff]
    %v3883 = vld [vmem:[#allocation8 + $0x978] sm:$0xff]
    %v3884 = vld [vmem:[#allocation8 + $0x980] sm:$0xff]
    %v3885 = vld [vmem:[#allocation8 + $0x988] sm:$0xff]
    %v3886 = vld [vmem:[#allocation8 + $0x990] sm:$0xff]
    %v3887 = vld [vmem:[#allocation8 + $0x998] sm:$0xff]
    %v3888 = vld [vmem:[#allocation8 + $0x9a0] sm:$0xff]
    %v3889 = vld [vmem:[#allocation8 + $0x9a8] sm:$0xff]
    %v3890 = vld [vmem:[#allocation8 + $0x9b0] sm:$0xff]
    %v3891 = vld [vmem:[#allocation8 + $0x9b8] sm:$0xff]
    %v3892 = vld [vmem:[#allocation8 + $0x9c0] sm:$0xff]
    %v3893 = vld [vmem:[#allocation8 + $0x9c8] sm:$0xff]
    %v3894 = vld [vmem:[#allocation8 + $0x9d0] sm:$0xff]
    %v3895 = vld [vmem:[#allocation8 + $0x9d8] sm:$0xff]
    %v3896 = vld [vmem:[#allocation8 + $0x9e0] sm:$0xff]
    %v3897 = vld [vmem:[#allocation8 + $0x9e8] sm:$0xff]
    %v3898 = vld [vmem:[#allocation8 + $0x9f0] sm:$0xff]
    %v3899 = vld [vmem:[#allocation8 + $0x9f8] sm:$0xff]
    %v3900 = vld [vmem:[#allocation8 + $0xa00] sm:$0xff]
    %v3901 = vld [vmem:[#allocation8 + $0xa08] sm:$0xff]
    %v3902 = vld [vmem:[#allocation8 + $0xa10] sm:$0xff]
    %v3903 = vld [vmem:[#allocation8 + $0xa18] sm:$0xff]
    %v3904 = vld [vmem:[#allocation8 + $0xa20] sm:$0xff]
    %v3905 = vld [vmem:[#allocation8 + $0xa28] sm:$0xff]
    %v3906 = vld [vmem:[#allocation8 + $0xa30] sm:$0xff]
    %v3907 = vld [vmem:[#allocation8 + $0xa38] sm:$0xff]
    %v3908 = vld [vmem:[#allocation8 + $0xa40] sm:$0xff]
    %v3909 = vld [vmem:[#allocation8 + $0xa48] sm:$0xff]
    %v3910 = vld [vmem:[#allocation8 + $0xa50] sm:$0xff]
    %v3911 = vld [vmem:[#allocation8 + $0xa58] sm:$0xff]
    %v3912 = vld [vmem:[#allocation8 + $0xa60] sm:$0xff]
    %v3913 = vld [vmem:[#allocation8 + $0xa68] sm:$0xff]
    %v3914 = vld [vmem:[#allocation8 + $0xa70] sm:$0xff]
    %v3915 = vld [vmem:[#allocation8 + $0xa78] sm:$0xff]
    %v3916 = vld [vmem:[#allocation8 + $0xa80] sm:$0xff]
    %v3917 = vld [vmem:[#allocation8 + $0xa88] sm:$0xff]
    %v3918 = vld [vmem:[#allocation8 + $0xa90] sm:$0xff]
    %v3919 = vld [vmem:[#allocation8 + $0xa98] sm:$0xff]
    %v3920 = vld [vmem:[#allocation8 + $0xaa0] sm:$0xff]
    %v3921 = vld [vmem:[#allocation8 + $0xaa8] sm:$0xff]
    %v3922 = vld [vmem:[#allocation8 + $0xab0] sm:$0xff]
    %v3923 = vld [vmem:[#allocation8 + $0xab8] sm:$0xff]
    %v3924 = vld [vmem:[#allocation8 + $0xac0] sm:$0xff]
    %v3925 = vld [vmem:[#allocation8 + $0xac8] sm:$0xff]
    %v3926 = vld [vmem:[#allocation8 + $0xad0] sm:$0xff]
    %v3927 = vld [vmem:[#allocation8 + $0xad8] sm:$0xff]
    %v3928 = vld [vmem:[#allocation8 + $0xae0] sm:$0xff]
    %v3929 = vld [vmem:[#allocation8 + $0xae8] sm:$0xff]
    %v3930 = vld [vmem:[#allocation8 + $0xaf0] sm:$0xff]
    %v3931 = vld [vmem:[#allocation8 + $0xaf8] sm:$0xff]
    %v3932 = vld [vmem:[#allocation8 + $0xb00] sm:$0xff]
    %v3933 = vld [vmem:[#allocation8 + $0xb08] sm:$0xff]
    %v3934 = vld [vmem:[#allocation8 + $0xb10] sm:$0xff]
    %v3935 = vld [vmem:[#allocation8 + $0xb18] sm:$0xff]
    %v3936 = vld [vmem:[#allocation8 + $0xb20] sm:$0xff]
    %v3937 = vld [vmem:[#allocation8 + $0xb28] sm:$0xff]
    %v3938 = vld [vmem:[#allocation8 + $0xb30] sm:$0xff]
    %v3939 = vld [vmem:[#allocation8 + $0xb38] sm:$0xff]
    %v3940 = vld [vmem:[#allocation8 + $0xb40] sm:$0xff]
    %v3941 = vld [vmem:[#allocation8 + $0xb48] sm:$0xff]
    %v3942 = vld [vmem:[#allocation8 + $0xb50] sm:$0xff]
    %v3943 = vld [vmem:[#allocation8 + $0xb58] sm:$0xff]
    %v3944 = vld [vmem:[#allocation8 + $0xb60] sm:$0xff]
    %v3945 = vld [vmem:[#allocation8 + $0xb68] sm:$0xff]
    %v3946 = vld [vmem:[#allocation8 + $0xb70] sm:$0xff]
    %v3947 = vld [vmem:[#allocation8 + $0xb78] sm:$0xff]
    %v3948 = vld [vmem:[#allocation8 + $0xb80] sm:$0xff]
    %v3949 = vld [vmem:[#allocation8 + $0xb88] sm:$0xff]
    %v3950 = vld [vmem:[#allocation8 + $0xb90] sm:$0xff]
    %v3951 = vld [vmem:[#allocation8 + $0xb98] sm:$0xff]
    %v3952 = vld [vmem:[#allocation8 + $0xba0] sm:$0xff]
    %v3953 = vld [vmem:[#allocation8 + $0xba8] sm:$0xff]
    %v3954 = vld [vmem:[#allocation8 + $0xbb0] sm:$0xff]
    %v3955 = vld [vmem:[#allocation8 + $0xbb8] sm:$0xff]
    %v3956 = vld [vmem:[#allocation8 + $0xbc0] sm:$0xff]
    %v3957 = vld [vmem:[#allocation8 + $0xbc8] sm:$0xff]
    %v3958 = vld [vmem:[#allocation8 + $0xbd0] sm:$0xff]
    %v3959 = vld [vmem:[#allocation8 + $0xbd8] sm:$0xff]
    %v3960 = vld [vmem:[#allocation8 + $0xbe0] sm:$0xff]
    %v3961 = vld [vmem:[#allocation8 + $0xbe8] sm:$0xff]
    %v3962 = vld [vmem:[#allocation8 + $0xbf0] sm:$0xff]
    %v3963 = vld [vmem:[#allocation8 + $0xbf8] sm:$0xff]
    %v3964 = vld [vmem:[#allocation8 + $0xc00] sm:$0xff]
    %v3965 = vld [vmem:[#allocation8 + $0xc08] sm:$0xff]
    %v3966 = vld [vmem:[#allocation8 + $0xc10] sm:$0xff]
    %v3967 = vld [vmem:[#allocation8 + $0xc18] sm:$0xff]
    %v3968 = vld [vmem:[#allocation8 + $0xc20] sm:$0xff]
    %v3969 = vld [vmem:[#allocation8 + $0xc28] sm:$0xff]
    %v3970 = vld [vmem:[#allocation8 + $0xc30] sm:$0xff]
    %v3971 = vld [vmem:[#allocation8 + $0xc38] sm:$0xff]
    %v3972 = vld [vmem:[#allocation8 + $0xc40] sm:$0xff]
    %v3973 = vld [vmem:[#allocation8 + $0xc48] sm:$0xff]
    %v3974 = vld [vmem:[#allocation8 + $0xc50] sm:$0xff]
    %v3975 = vld [vmem:[#allocation8 + $0xc58] sm:$0xff]
    %v3976 = vld [vmem:[#allocation8 + $0xc60] sm:$0xff]
    %v3977 = vld [vmem:[#allocation8 + $0xc68] sm:$0xff]
    %v3978 = vld [vmem:[#allocation8 + $0xc70] sm:$0xff]
    %v3979 = vld [vmem:[#allocation8 + $0xc78] sm:$0xff]
    %v3980 = vld [vmem:[#allocation8 + $0xc80] sm:$0xff]
    %v3981 = vld [vmem:[#allocation8 + $0xc88] sm:$0xff]
    %v3982 = vld [vmem:[#allocation8 + $0xc90] sm:$0xff]
    %v3983 = vld [vmem:[#allocation8 + $0xc98] sm:$0xff]
    %v3984 = vld [vmem:[#allocation8 + $0xca0] sm:$0xff]
    %v3985 = vld [vmem:[#allocation8 + $0xca8] sm:$0xff]
    %v3986 = vld [vmem:[#allocation8 + $0xcb0] sm:$0xff]
    %v3987 = vld [vmem:[#allocation8 + $0xcb8] sm:$0xff]
    %v3988 = vld [vmem:[#allocation8 + $0xcc0] sm:$0xff]
    %v3989 = vld [vmem:[#allocation8 + $0xcc8] sm:$0xff]
    %v3990 = vld [vmem:[#allocation8 + $0xcd0] sm:$0xff]
    %v3991 = vld [vmem:[#allocation8 + $0xcd8] sm:$0xff]
    %v3992 = vld [vmem:[#allocation8 + $0xce0] sm:$0xff]
    %v3993 = vld [vmem:[#allocation8 + $0xce8] sm:$0xff]
    %v3994 = vld [vmem:[#allocation8 + $0xcf0] sm:$0xff]
    %v3995 = vld [vmem:[#allocation8 + $0xcf8] sm:$0xff]
    %v3996 = vld [vmem:[#allocation8 + $0xd00] sm:$0xff]
    %v3997 = vld [vmem:[#allocation8 + $0xd08] sm:$0xff]
    %v3998 = vld [vmem:[#allocation8 + $0xd10] sm:$0xff]
    %v3999 = vld [vmem:[#allocation8 + $0xd18] sm:$0xff]
    %v4000 = vld [vmem:[#allocation8 + $0xd20] sm:$0xff]
    %v4001 = vld [vmem:[#allocation8 + $0xd28] sm:$0xff]
    %v4002 = vld [vmem:[#allocation8 + $0xd30] sm:$0xff]
    %v4003 = vld [vmem:[#allocation8 + $0xd38] sm:$0xff]
    %v4004 = vld [vmem:[#allocation8 + $0xd40] sm:$0xff]
    %v4005 = vld [vmem:[#allocation8 + $0xd48] sm:$0xff]
    %v4006 = vld [vmem:[#allocation8 + $0xd50] sm:$0xff]
    %v4007 = vld [vmem:[#allocation8 + $0xd58] sm:$0xff]
    %v4008 = vld [vmem:[#allocation8 + $0xd60] sm:$0xff]
    %v4009 = vld [vmem:[#allocation8 + $0xd68] sm:$0xff]
    %v4010 = vld [vmem:[#allocation8 + $0xd70] sm:$0xff]
    %v4011 = vld [vmem:[#allocation8 + $0xd78] sm:$0xff]
    %v4012 = vld [vmem:[#allocation8 + $0xd80] sm:$0xff]
    %v4013 = vld [vmem:[#allocation8 + $0xd88] sm:$0xff]
    %v4014 = vld [vmem:[#allocation8 + $0xd90] sm:$0xff]
    %v4015 = vld [vmem:[#allocation8 + $0xd98] sm:$0xff]
    %v4016 = vld [vmem:[#allocation8 + $0xda0] sm:$0xff]
    %v4017 = vld [vmem:[#allocation8 + $0xda8] sm:$0xff]
    %v4018 = vld [vmem:[#allocation8 + $0xdb0] sm:$0xff]
    %v4019 = vld [vmem:[#allocation8 + $0xdb8] sm:$0xff]
    %v4020 = vld [vmem:[#allocation8 + $0xdc0] sm:$0xff]
    %v4021 = vld [vmem:[#allocation8 + $0xdc8] sm:$0xff]
    %v4022 = vld [vmem:[#allocation8 + $0xdd0] sm:$0xff]
    %v4023 = vld [vmem:[#allocation8 + $0xdd8] sm:$0xff]
    %v4024 = vld [vmem:[#allocation8 + $0xde0] sm:$0xff]
    %v4025 = vld [vmem:[#allocation8 + $0xde8] sm:$0xff]
    %v4026 = vld [vmem:[#allocation8 + $0xdf0] sm:$0xff]
    %v4027 = vld [vmem:[#allocation8 + $0xdf8] sm:$0xff]
    %v4028 = vld [vmem:[#allocation8 + $0xe00] sm:$0xff]
    %v4029 = vld [vmem:[#allocation8 + $0xe08] sm:$0xff]
    %v4030 = vld [vmem:[#allocation8 + $0xe10] sm:$0xff]
    %v4031 = vld [vmem:[#allocation8 + $0xe18] sm:$0xff]
    %v4032 = vld [vmem:[#allocation8 + $0xe20] sm:$0xff]
    %v4033 = vld [vmem:[#allocation8 + $0xe28] sm:$0xff]
    %v4034 = vld [vmem:[#allocation8 + $0xe30] sm:$0xff]
    %v4035 = vld [vmem:[#allocation8 + $0xe38] sm:$0xff]
    %v4036 = vld [vmem:[#allocation8 + $0xe40] sm:$0xff]
    %v4037 = vld [vmem:[#allocation8 + $0xe48] sm:$0xff]
    %v4038 = vld [vmem:[#allocation8 + $0xe50] sm:$0xff]
    %v4039 = vld [vmem:[#allocation8 + $0xe58] sm:$0xff]
    %v4040 = vld [vmem:[#allocation8 + $0xe60] sm:$0xff]
    %v4041 = vld [vmem:[#allocation8 + $0xe68] sm:$0xff]
    %v4042 = vld [vmem:[#allocation8 + $0xe70] sm:$0xff]
    %v4043 = vld [vmem:[#allocation8 + $0xe78] sm:$0xff]
    %v4044 = vld [vmem:[#allocation8 + $0xe80] sm:$0xff]
    %v4045 = vld [vmem:[#allocation8 + $0xe88] sm:$0xff]
    %v4046 = vld [vmem:[#allocation8 + $0xe90] sm:$0xff]
    %v4047 = vld [vmem:[#allocation8 + $0xe98] sm:$0xff]
    %v4048 = vld [vmem:[#allocation8 + $0xea0] sm:$0xff]
    %v4049 = vld [vmem:[#allocation8 + $0xea8] sm:$0xff]
    %v4050 = vld [vmem:[#allocation8 + $0xeb0] sm:$0xff]
    %v4051 = vld [vmem:[#allocation8 + $0xeb8] sm:$0xff]
    %v4052 = vld [vmem:[#allocation8 + $0xec0] sm:$0xff]
    %v4053 = vld [vmem:[#allocation8 + $0xec8] sm:$0xff]
    %v4054 = vld [vmem:[#allocation8 + $0xed0] sm:$0xff]
    %v4055 = vld [vmem:[#allocation8 + $0xed8] sm:$0xff]
    %v4056 = vld [vmem:[#allocation8 + $0xee0] sm:$0xff]
    %v4057 = vld [vmem:[#allocation8 + $0xee8] sm:$0xff]
    %v4058 = vld [vmem:[#allocation8 + $0xef0] sm:$0xff]
    %v4059 = vld [vmem:[#allocation8 + $0xef8] sm:$0xff]
    %v4060 = vld [vmem:[#allocation8 + $0xf00] sm:$0xff]
    %v4061 = vld [vmem:[#allocation8 + $0xf08] sm:$0xff]
    %v4062 = vld [vmem:[#allocation8 + $0xf10] sm:$0xff]
    %v4063 = vld [vmem:[#allocation8 + $0xf18] sm:$0xff]
    %v4064 = vld [vmem:[#allocation8 + $0xf20] sm:$0xff]
    %v4065 = vld [vmem:[#allocation8 + $0xf28] sm:$0xff]
    %v4066 = vld [vmem:[#allocation8 + $0xf30] sm:$0xff]
    %v4067 = vld [vmem:[#allocation8 + $0xf38] sm:$0xff]
    %v4068 = vld [vmem:[#allocation8 + $0xf40] sm:$0xff]
    %v4069 = vld [vmem:[#allocation8 + $0xf48] sm:$0xff]
    %v4070 = vld [vmem:[#allocation8 + $0xf50] sm:$0xff]
    %v4071 = vld [vmem:[#allocation8 + $0xf58] sm:$0xff]
    %v4072 = vld [vmem:[#allocation8 + $0xf60] sm:$0xff]
    %v4073 = vld [vmem:[#allocation8 + $0xf68] sm:$0xff]
    %v4074 = vld [vmem:[#allocation8 + $0xf70] sm:$0xff]
    %v4075 = vld [vmem:[#allocation8 + $0xf78] sm:$0xff]
    %v4076 = vld [vmem:[#allocation8 + $0xf80] sm:$0xff]
    %v4077 = vld [vmem:[#allocation8 + $0xf88] sm:$0xff]
    %v4078 = vld [vmem:[#allocation8 + $0xf90] sm:$0xff]
    %v4079 = vld [vmem:[#allocation8 + $0xf98] sm:$0xff]
    %v4080 = vld [vmem:[#allocation8 + $0xfa0] sm:$0xff]
    %v4081 = vld [vmem:[#allocation8 + $0xfa8] sm:$0xff]
    %v4082 = vld [vmem:[#allocation8 + $0xfb0] sm:$0xff]
    %v4083 = vld [vmem:[#allocation8 + $0xfb8] sm:$0xff]
    %v4084 = vld [vmem:[#allocation8 + $0xfc0] sm:$0xff]
    %v4085 = vld [vmem:[#allocation8 + $0xfc8] sm:$0xff]
    %v4086 = vld [vmem:[#allocation8 + $0xfd0] sm:$0xff]
    %v4087 = vld [vmem:[#allocation8 + $0xfd8] sm:$0xff]
    %v4088 = vld [vmem:[#allocation8 + $0xfe0] sm:$0xff]
    %v4089 = vld [vmem:[#allocation8 + $0xfe8] sm:$0xff]
    %v4090 = vld [vmem:[#allocation8 + $0xff0] sm:$0xff]
    %v4091 = vld [vmem:[#allocation8 + $0xff8] sm:$0xff]
    %v4092 = vld [vmem:[#allocation10] sm:$0xff]
    %v4094 = vlaneseq
    %v4095 = vshrl.u32 %v4094, 7
    %v4096 = vsub.s32 0, %v4095
    %v4097 = vrot.slane %v4092, %v4096
    %v4098 = vlaneseq
    %v4099 = vshrl.u32 %v4098, 7
    %v4100 = vsub.s32 1, %v4099
    %v4101 = vrot.slane %v4092, %v4100
    %v4102 = vlaneseq
    %v4103 = vshrl.u32 %v4102, 7
    %v4104 = vsub.s32 2, %v4103
    %v4105 = vrot.slane %v4092, %v4104
    %v4106 = vlaneseq
    %v4107 = vshrl.u32 %v4106, 7
    %v4108 = vsub.s32 3, %v4107
    %v4109 = vrot.slane %v4092, %v4108
    %v4110 = vlaneseq
    %v4111 = vshrl.u32 %v4110, 7
    %v4112 = vsub.s32 4, %v4111
    %v4113 = vrot.slane %v4092, %v4112
    %v4114 = vlaneseq
    %v4115 = vshrl.u32 %v4114, 7
    %v4116 = vsub.s32 5, %v4115
    %v4117 = vrot.slane %v4092, %v4116
    %v4118 = vlaneseq
    %v4119 = vshrl.u32 %v4118, 7
    %v4120 = vsub.s32 6, %v4119
    %v4121 = vrot.slane %v4092, %v4120
    %v4122 = vlaneseq
    %v4123 = vshrl.u32 %v4122, 7
    %v4124 = vsub.s32 7, %v4123
    %v4125 = vrot.slane %v4092, %v4124
    %v4646 = vunpack.c.l.b16 %v3580
    %v4647 = vunpack.c.h.b16 %v3580
    %v4648 = vunpack.c.l.b16 %v3581
    %v4649 = vunpack.c.h.b16 %v3581
    %v4650 = vunpack.c.l.b16 %v3582
    %v4651 = vunpack.c.h.b16 %v3582
    %v4652 = vunpack.c.l.b16 %v3583
    %v4653 = vunpack.c.h.b16 %v3583
    %v4654 = vunpack.c.l.b16 %v3584
    %v4655 = vunpack.c.h.b16 %v3584
    %v4656 = vunpack.c.l.b16 %v3585
    %v4657 = vunpack.c.h.b16 %v3585
    %v4658 = vunpack.c.l.b16 %v3586
    %v4659 = vunpack.c.h.b16 %v3586
    %v4660 = vunpack.c.l.b16 %v3587
    %v4661 = vunpack.c.h.b16 %v3587
    %v4662 = vunpack.c.l.b16 %v3588
    %v4663 = vunpack.c.h.b16 %v3588
    %v4664 = vunpack.c.l.b16 %v3589
    %v4665 = vunpack.c.h.b16 %v3589
    %v4666 = vunpack.c.l.b16 %v3590
    %v4667 = vunpack.c.h.b16 %v3590
    %v4668 = vunpack.c.l.b16 %v3591
    %v4669 = vunpack.c.h.b16 %v3591
    %v4670 = vunpack.c.l.b16 %v3592
    %v4671 = vunpack.c.h.b16 %v3592
    %v4672 = vunpack.c.l.b16 %v3593
    %v4673 = vunpack.c.h.b16 %v3593
    %v4674 = vunpack.c.l.b16 %v3594
    %v4675 = vunpack.c.h.b16 %v3594
    %v4676 = vunpack.c.l.b16 %v3595
    %v4677 = vunpack.c.h.b16 %v3595
    %v4678 = vunpack.c.l.b16 %v3596
    %v4679 = vunpack.c.h.b16 %v3596
    %v4680 = vunpack.c.l.b16 %v3597
    %v4681 = vunpack.c.h.b16 %v3597
    %v4682 = vunpack.c.l.b16 %v3598
    %v4683 = vunpack.c.h.b16 %v3598
    %v4684 = vunpack.c.l.b16 %v3599
    %v4685 = vunpack.c.h.b16 %v3599
    %v4686 = vunpack.c.l.b16 %v3600
    %v4687 = vunpack.c.h.b16 %v3600
    %v4688 = vunpack.c.l.b16 %v3601
    %v4689 = vunpack.c.h.b16 %v3601
    %v4690 = vunpack.c.l.b16 %v3602
    %v4691 = vunpack.c.h.b16 %v3602
    %v4692 = vunpack.c.l.b16 %v3603
    %v4693 = vunpack.c.h.b16 %v3603
    %v4694 = vunpack.c.l.b16 %v3604
    %v4695 = vunpack.c.h.b16 %v3604
    %v4696 = vunpack.c.l.b16 %v3605
    %v4697 = vunpack.c.h.b16 %v3605
    %v4698 = vunpack.c.l.b16 %v3606
    %v4699 = vunpack.c.h.b16 %v3606
    %v4700 = vunpack.c.l.b16 %v3607
    %v4701 = vunpack.c.h.b16 %v3607
    %v4702 = vunpack.c.l.b16 %v3608
    %v4703 = vunpack.c.h.b16 %v3608
    %v4704 = vunpack.c.l.b16 %v3609
    %v4705 = vunpack.c.h.b16 %v3609
    %v4706 = vunpack.c.l.b16 %v3610
    %v4707 = vunpack.c.h.b16 %v3610
    %v4708 = vunpack.c.l.b16 %v3611
    %v4709 = vunpack.c.h.b16 %v3611
    %v4710 = vunpack.c.l.b16 %v3612
    %v4711 = vunpack.c.h.b16 %v3612
    %v4712 = vunpack.c.l.b16 %v3613
    %v4713 = vunpack.c.h.b16 %v3613
    %v4714 = vunpack.c.l.b16 %v3614
    %v4715 = vunpack.c.h.b16 %v3614
    %v4716 = vunpack.c.l.b16 %v3615
    %v4717 = vunpack.c.h.b16 %v3615
    %v4718 = vunpack.c.l.b16 %v3616
    %v4719 = vunpack.c.h.b16 %v3616
    %v4720 = vunpack.c.l.b16 %v3617
    %v4721 = vunpack.c.h.b16 %v3617
    %v4722 = vunpack.c.l.b16 %v3618
    %v4723 = vunpack.c.h.b16 %v3618
    %v4724 = vunpack.c.l.b16 %v3619
    %v4725 = vunpack.c.h.b16 %v3619
    %v4726 = vunpack.c.l.b16 %v3620
    %v4727 = vunpack.c.h.b16 %v3620
    %v4728 = vunpack.c.l.b16 %v3621
    %v4729 = vunpack.c.h.b16 %v3621
    %v4730 = vunpack.c.l.b16 %v3622
    %v4731 = vunpack.c.h.b16 %v3622
    %v4732 = vunpack.c.l.b16 %v3623
    %v4733 = vunpack.c.h.b16 %v3623
    %v4734 = vunpack.c.l.b16 %v3624
    %v4735 = vunpack.c.h.b16 %v3624
    %v4736 = vunpack.c.l.b16 %v3625
    %v4737 = vunpack.c.h.b16 %v3625
    %v4738 = vunpack.c.l.b16 %v3626
    %v4739 = vunpack.c.h.b16 %v3626
    %v4740 = vunpack.c.l.b16 %v3627
    %v4741 = vunpack.c.h.b16 %v3627
    %v4742 = vunpack.c.l.b16 %v3628
    %v4743 = vunpack.c.h.b16 %v3628
    %v4744 = vunpack.c.l.b16 %v3629
    %v4745 = vunpack.c.h.b16 %v3629
    %v4746 = vunpack.c.l.b16 %v3630
    %v4747 = vunpack.c.h.b16 %v3630
    %v4748 = vunpack.c.l.b16 %v3631
    %v4749 = vunpack.c.h.b16 %v3631
    %v4750 = vunpack.c.l.b16 %v3632
    %v4751 = vunpack.c.h.b16 %v3632
    %v4752 = vunpack.c.l.b16 %v3633
    %v4753 = vunpack.c.h.b16 %v3633
    %v4754 = vunpack.c.l.b16 %v3634
    %v4755 = vunpack.c.h.b16 %v3634
    %v4756 = vunpack.c.l.b16 %v3635
    %v4757 = vunpack.c.h.b16 %v3635
    %v4758 = vunpack.c.l.b16 %v3636
    %v4759 = vunpack.c.h.b16 %v3636
    %v4760 = vunpack.c.l.b16 %v3637
    %v4761 = vunpack.c.h.b16 %v3637
    %v4762 = vunpack.c.l.b16 %v3638
    %v4763 = vunpack.c.h.b16 %v3638
    %v4764 = vunpack.c.l.b16 %v3639
    %v4765 = vunpack.c.h.b16 %v3639
    %v4766 = vunpack.c.l.b16 %v3640
    %v4767 = vunpack.c.h.b16 %v3640
    %v4768 = vunpack.c.l.b16 %v3641
    %v4769 = vunpack.c.h.b16 %v3641
    %v4770 = vunpack.c.l.b16 %v3642
    %v4771 = vunpack.c.h.b16 %v3642
    %v4772 = vunpack.c.l.b16 %v3643
    %v4773 = vunpack.c.h.b16 %v3643
    %v4774 = vunpack.c.l.b16 %v3644
    %v4775 = vunpack.c.h.b16 %v3644
    %v4776 = vunpack.c.l.b16 %v3645
    %v4777 = vunpack.c.h.b16 %v3645
    %v4778 = vunpack.c.l.b16 %v3646
    %v4779 = vunpack.c.h.b16 %v3646
    %v4780 = vunpack.c.l.b16 %v3647
    %v4781 = vunpack.c.h.b16 %v3647
    %v4782 = vunpack.c.l.b16 %v3648
    %v4783 = vunpack.c.h.b16 %v3648
    %v4784 = vunpack.c.l.b16 %v3649
    %v4785 = vunpack.c.h.b16 %v3649
    %v4786 = vunpack.c.l.b16 %v3650
    %v4787 = vunpack.c.h.b16 %v3650
    %v4788 = vunpack.c.l.b16 %v3651
    %v4789 = vunpack.c.h.b16 %v3651
    %v4790 = vunpack.c.l.b16 %v3652
    %v4791 = vunpack.c.h.b16 %v3652
    %v4792 = vunpack.c.l.b16 %v3653
    %v4793 = vunpack.c.h.b16 %v3653
    %v4794 = vunpack.c.l.b16 %v3654
    %v4795 = vunpack.c.h.b16 %v3654
    %v4796 = vunpack.c.l.b16 %v3655
    %v4797 = vunpack.c.h.b16 %v3655
    %v4798 = vunpack.c.l.b16 %v3656
    %v4799 = vunpack.c.h.b16 %v3656
    %v4800 = vunpack.c.l.b16 %v3657
    %v4801 = vunpack.c.h.b16 %v3657
    %v4802 = vunpack.c.l.b16 %v3658
    %v4803 = vunpack.c.h.b16 %v3658
    %v4804 = vunpack.c.l.b16 %v3659
    %v4805 = vunpack.c.h.b16 %v3659
    %v4806 = vunpack.c.l.b16 %v3660
    %v4807 = vunpack.c.h.b16 %v3660
    %v4808 = vunpack.c.l.b16 %v3661
    %v4809 = vunpack.c.h.b16 %v3661
    %v4810 = vunpack.c.l.b16 %v3662
    %v4811 = vunpack.c.h.b16 %v3662
    %v4812 = vunpack.c.l.b16 %v3663
    %v4813 = vunpack.c.h.b16 %v3663
    %v4814 = vunpack.c.l.b16 %v3664
    %v4815 = vunpack.c.h.b16 %v3664
    %v4816 = vunpack.c.l.b16 %v3665
    %v4817 = vunpack.c.h.b16 %v3665
    %v4818 = vunpack.c.l.b16 %v3666
    %v4819 = vunpack.c.h.b16 %v3666
    %v4820 = vunpack.c.l.b16 %v3667
    %v4821 = vunpack.c.h.b16 %v3667
    %v4822 = vunpack.c.l.b16 %v3668
    %v4823 = vunpack.c.h.b16 %v3668
    %v4824 = vunpack.c.l.b16 %v3669
    %v4825 = vunpack.c.h.b16 %v3669
    %v4826 = vunpack.c.l.b16 %v3670
    %v4827 = vunpack.c.h.b16 %v3670
    %v4828 = vunpack.c.l.b16 %v3671
    %v4829 = vunpack.c.h.b16 %v3671
    %v4830 = vunpack.c.l.b16 %v3672
    %v4831 = vunpack.c.h.b16 %v3672
    %v4832 = vunpack.c.l.b16 %v3673
    %v4833 = vunpack.c.h.b16 %v3673
    %v4834 = vunpack.c.l.b16 %v3674
    %v4835 = vunpack.c.h.b16 %v3674
    %v4836 = vunpack.c.l.b16 %v3675
    %v4837 = vunpack.c.h.b16 %v3675
    %v4838 = vunpack.c.l.b16 %v3676
    %v4839 = vunpack.c.h.b16 %v3676
    %v4840 = vunpack.c.l.b16 %v3677
    %v4841 = vunpack.c.h.b16 %v3677
    %v4842 = vunpack.c.l.b16 %v3678
    %v4843 = vunpack.c.h.b16 %v3678
    %v4844 = vunpack.c.l.b16 %v3679
    %v4845 = vunpack.c.h.b16 %v3679
    %v4846 = vunpack.c.l.b16 %v3680
    %v4847 = vunpack.c.h.b16 %v3680
    %v4848 = vunpack.c.l.b16 %v3681
    %v4849 = vunpack.c.h.b16 %v3681
    %v4850 = vunpack.c.l.b16 %v3682
    %v4851 = vunpack.c.h.b16 %v3682
    %v4852 = vunpack.c.l.b16 %v3683
    %v4853 = vunpack.c.h.b16 %v3683
    %v4854 = vunpack.c.l.b16 %v3684
    %v4855 = vunpack.c.h.b16 %v3684
    %v4856 = vunpack.c.l.b16 %v3685
    %v4857 = vunpack.c.h.b16 %v3685
    %v4858 = vunpack.c.l.b16 %v3686
    %v4859 = vunpack.c.h.b16 %v3686
    %v4860 = vunpack.c.l.b16 %v3687
    %v4861 = vunpack.c.h.b16 %v3687
    %v4862 = vunpack.c.l.b16 %v3688
    %v4863 = vunpack.c.h.b16 %v3688
    %v4864 = vunpack.c.l.b16 %v3689
    %v4865 = vunpack.c.h.b16 %v3689
    %v4866 = vunpack.c.l.b16 %v3690
    %v4867 = vunpack.c.h.b16 %v3690
    %v4868 = vunpack.c.l.b16 %v3691
    %v4869 = vunpack.c.h.b16 %v3691
    %v4870 = vunpack.c.l.b16 %v3692
    %v4871 = vunpack.c.h.b16 %v3692
    %v4872 = vunpack.c.l.b16 %v3693
    %v4873 = vunpack.c.h.b16 %v3693
    %v4874 = vunpack.c.l.b16 %v3694
    %v4875 = vunpack.c.h.b16 %v3694
    %v4876 = vunpack.c.l.b16 %v3695
    %v4877 = vunpack.c.h.b16 %v3695
    %v4878 = vunpack.c.l.b16 %v3696
    %v4879 = vunpack.c.h.b16 %v3696
    %v4880 = vunpack.c.l.b16 %v3697
    %v4881 = vunpack.c.h.b16 %v3697
    %v4882 = vunpack.c.l.b16 %v3698
    %v4883 = vunpack.c.h.b16 %v3698
    %v4884 = vunpack.c.l.b16 %v3699
    %v4885 = vunpack.c.h.b16 %v3699
    %v4886 = vunpack.c.l.b16 %v3700
    %v4887 = vunpack.c.h.b16 %v3700
    %v4888 = vunpack.c.l.b16 %v3701
    %v4889 = vunpack.c.h.b16 %v3701
    %v4890 = vunpack.c.l.b16 %v3702
    %v4891 = vunpack.c.h.b16 %v3702
    %v4892 = vunpack.c.l.b16 %v3703
    %v4893 = vunpack.c.h.b16 %v3703
    %v4894 = vunpack.c.l.b16 %v3704
    %v4895 = vunpack.c.h.b16 %v3704
    %v4896 = vunpack.c.l.b16 %v3705
    %v4897 = vunpack.c.h.b16 %v3705
    %v4898 = vunpack.c.l.b16 %v3706
    %v4899 = vunpack.c.h.b16 %v3706
    %v4900 = vunpack.c.l.b16 %v3707
    %v4901 = vunpack.c.h.b16 %v3707
    %v4902 = vunpack.c.l.b16 %v3708
    %v4903 = vunpack.c.h.b16 %v3708
    %v4904 = vunpack.c.l.b16 %v3709
    %v4905 = vunpack.c.h.b16 %v3709
    %v4906 = vunpack.c.l.b16 %v3710
    %v4907 = vunpack.c.h.b16 %v3710
    %v4908 = vunpack.c.l.b16 %v3711
    %v4909 = vunpack.c.h.b16 %v3711
    %v4910 = vunpack.c.l.b16 %v3712
    %v4911 = vunpack.c.h.b16 %v3712
    %v4912 = vunpack.c.l.b16 %v3713
    %v4913 = vunpack.c.h.b16 %v3713
    %v4914 = vunpack.c.l.b16 %v3714
    %v4915 = vunpack.c.h.b16 %v3714
    %v4916 = vunpack.c.l.b16 %v3715
    %v4917 = vunpack.c.h.b16 %v3715
    %v4918 = vunpack.c.l.b16 %v3716
    %v4919 = vunpack.c.h.b16 %v3716
    %v4920 = vunpack.c.l.b16 %v3717
    %v4921 = vunpack.c.h.b16 %v3717
    %v4922 = vunpack.c.l.b16 %v3718
    %v4923 = vunpack.c.h.b16 %v3718
    %v4924 = vunpack.c.l.b16 %v3719
    %v4925 = vunpack.c.h.b16 %v3719
    %v4926 = vunpack.c.l.b16 %v3720
    %v4927 = vunpack.c.h.b16 %v3720
    %v4928 = vunpack.c.l.b16 %v3721
    %v4929 = vunpack.c.h.b16 %v3721
    %v4930 = vunpack.c.l.b16 %v3722
    %v4931 = vunpack.c.h.b16 %v3722
    %v4932 = vunpack.c.l.b16 %v3723
    %v4933 = vunpack.c.h.b16 %v3723
    %v4934 = vunpack.c.l.b16 %v3724
    %v4935 = vunpack.c.h.b16 %v3724
    %v4936 = vunpack.c.l.b16 %v3725
    %v4937 = vunpack.c.h.b16 %v3725
    %v4938 = vunpack.c.l.b16 %v3726
    %v4939 = vunpack.c.h.b16 %v3726
    %v4940 = vunpack.c.l.b16 %v3727
    %v4941 = vunpack.c.h.b16 %v3727
    %v4942 = vunpack.c.l.b16 %v3728
    %v4943 = vunpack.c.h.b16 %v3728
    %v4944 = vunpack.c.l.b16 %v3729
    %v4945 = vunpack.c.h.b16 %v3729
    %v4946 = vunpack.c.l.b16 %v3730
    %v4947 = vunpack.c.h.b16 %v3730
    %v4948 = vunpack.c.l.b16 %v3731
    %v4949 = vunpack.c.h.b16 %v3731
    %v4950 = vunpack.c.l.b16 %v3732
    %v4951 = vunpack.c.h.b16 %v3732
    %v4952 = vunpack.c.l.b16 %v3733
    %v4953 = vunpack.c.h.b16 %v3733
    %v4954 = vunpack.c.l.b16 %v3734
    %v4955 = vunpack.c.h.b16 %v3734
    %v4956 = vunpack.c.l.b16 %v3735
    %v4957 = vunpack.c.h.b16 %v3735
    %v4958 = vunpack.c.l.b16 %v3736
    %v4959 = vunpack.c.h.b16 %v3736
    %v4960 = vunpack.c.l.b16 %v3737
    %v4961 = vunpack.c.h.b16 %v3737
    %v4962 = vunpack.c.l.b16 %v3738
    %v4963 = vunpack.c.h.b16 %v3738
    %v4964 = vunpack.c.l.b16 %v3739
    %v4965 = vunpack.c.h.b16 %v3739
    %v4966 = vunpack.c.l.b16 %v3740
    %v4967 = vunpack.c.h.b16 %v3740
    %v4968 = vunpack.c.l.b16 %v3741
    %v4969 = vunpack.c.h.b16 %v3741
    %v4970 = vunpack.c.l.b16 %v3742
    %v4971 = vunpack.c.h.b16 %v3742
    %v4972 = vunpack.c.l.b16 %v3743
    %v4973 = vunpack.c.h.b16 %v3743
    %v4974 = vunpack.c.l.b16 %v3744
    %v4975 = vunpack.c.h.b16 %v3744
    %v4976 = vunpack.c.l.b16 %v3745
    %v4977 = vunpack.c.h.b16 %v3745
    %v4978 = vunpack.c.l.b16 %v3746
    %v4979 = vunpack.c.h.b16 %v3746
    %v4980 = vunpack.c.l.b16 %v3747
    %v4981 = vunpack.c.h.b16 %v3747
    %v4982 = vunpack.c.l.b16 %v3748
    %v4983 = vunpack.c.h.b16 %v3748
    %v4984 = vunpack.c.l.b16 %v3749
    %v4985 = vunpack.c.h.b16 %v3749
    %v4986 = vunpack.c.l.b16 %v3750
    %v4987 = vunpack.c.h.b16 %v3750
    %v4988 = vunpack.c.l.b16 %v3751
    %v4989 = vunpack.c.h.b16 %v3751
    %v4990 = vunpack.c.l.b16 %v3752
    %v4991 = vunpack.c.h.b16 %v3752
    %v4992 = vunpack.c.l.b16 %v3753
    %v4993 = vunpack.c.h.b16 %v3753
    %v4994 = vunpack.c.l.b16 %v3754
    %v4995 = vunpack.c.h.b16 %v3754
    %v4996 = vunpack.c.l.b16 %v3755
    %v4997 = vunpack.c.h.b16 %v3755
    %v4998 = vunpack.c.l.b16 %v3756
    %v4999 = vunpack.c.h.b16 %v3756
    %v5000 = vunpack.c.l.b16 %v3757
    %v5001 = vunpack.c.h.b16 %v3757
    %v5002 = vunpack.c.l.b16 %v3758
    %v5003 = vunpack.c.h.b16 %v3758
    %v5004 = vunpack.c.l.b16 %v3759
    %v5005 = vunpack.c.h.b16 %v3759
    %v5006 = vunpack.c.l.b16 %v3760
    %v5007 = vunpack.c.h.b16 %v3760
    %v5008 = vunpack.c.l.b16 %v3761
    %v5009 = vunpack.c.h.b16 %v3761
    %v5010 = vunpack.c.l.b16 %v3762
    %v5011 = vunpack.c.h.b16 %v3762
    %v5012 = vunpack.c.l.b16 %v3763
    %v5013 = vunpack.c.h.b16 %v3763
    %v5014 = vunpack.c.l.b16 %v3764
    %v5015 = vunpack.c.h.b16 %v3764
    %v5016 = vunpack.c.l.b16 %v3765
    %v5017 = vunpack.c.h.b16 %v3765
    %v5018 = vunpack.c.l.b16 %v3766
    %v5019 = vunpack.c.h.b16 %v3766
    %v5020 = vunpack.c.l.b16 %v3767
    %v5021 = vunpack.c.h.b16 %v3767
    %v5022 = vunpack.c.l.b16 %v3768
    %v5023 = vunpack.c.h.b16 %v3768
    %v5024 = vunpack.c.l.b16 %v3769
    %v5025 = vunpack.c.h.b16 %v3769
    %v5026 = vunpack.c.l.b16 %v3770
    %v5027 = vunpack.c.h.b16 %v3770
    %v5028 = vunpack.c.l.b16 %v3771
    %v5029 = vunpack.c.h.b16 %v3771
    %v5030 = vunpack.c.l.b16 %v3772
    %v5031 = vunpack.c.h.b16 %v3772
    %v5032 = vunpack.c.l.b16 %v3773
    %v5033 = vunpack.c.h.b16 %v3773
    %v5034 = vunpack.c.l.b16 %v3774
    %v5035 = vunpack.c.h.b16 %v3774
    %v5036 = vunpack.c.l.b16 %v3775
    %v5037 = vunpack.c.h.b16 %v3775
    %v5038 = vunpack.c.l.b16 %v3776
    %v5039 = vunpack.c.h.b16 %v3776
    %v5040 = vunpack.c.l.b16 %v3777
    %v5041 = vunpack.c.h.b16 %v3777
    %v5042 = vunpack.c.l.b16 %v3778
    %v5043 = vunpack.c.h.b16 %v3778
    %v5044 = vunpack.c.l.b16 %v3779
    %v5045 = vunpack.c.h.b16 %v3779
    %v5046 = vunpack.c.l.b16 %v3780
    %v5047 = vunpack.c.h.b16 %v3780
    %v5048 = vunpack.c.l.b16 %v3781
    %v5049 = vunpack.c.h.b16 %v3781
    %v5050 = vunpack.c.l.b16 %v3782
    %v5051 = vunpack.c.h.b16 %v3782
    %v5052 = vunpack.c.l.b16 %v3783
    %v5053 = vunpack.c.h.b16 %v3783
    %v5054 = vunpack.c.l.b16 %v3784
    %v5055 = vunpack.c.h.b16 %v3784
    %v5056 = vunpack.c.l.b16 %v3785
    %v5057 = vunpack.c.h.b16 %v3785
    %v5058 = vunpack.c.l.b16 %v3786
    %v5059 = vunpack.c.h.b16 %v3786
    %v5060 = vunpack.c.l.b16 %v3787
    %v5061 = vunpack.c.h.b16 %v3787
    %v5062 = vunpack.c.l.b16 %v3788
    %v5063 = vunpack.c.h.b16 %v3788
    %v5064 = vunpack.c.l.b16 %v3789
    %v5065 = vunpack.c.h.b16 %v3789
    %v5066 = vunpack.c.l.b16 %v3790
    %v5067 = vunpack.c.h.b16 %v3790
    %v5068 = vunpack.c.l.b16 %v3791
    %v5069 = vunpack.c.h.b16 %v3791
    %v5070 = vunpack.c.l.b16 %v3792
    %v5071 = vunpack.c.h.b16 %v3792
    %v5072 = vunpack.c.l.b16 %v3793
    %v5073 = vunpack.c.h.b16 %v3793
    %v5074 = vunpack.c.l.b16 %v3794
    %v5075 = vunpack.c.h.b16 %v3794
    %v5076 = vunpack.c.l.b16 %v3795
    %v5077 = vunpack.c.h.b16 %v3795
    %v5078 = vunpack.c.l.b16 %v3796
    %v5079 = vunpack.c.h.b16 %v3796
    %v5080 = vunpack.c.l.b16 %v3797
    %v5081 = vunpack.c.h.b16 %v3797
    %v5082 = vunpack.c.l.b16 %v3798
    %v5083 = vunpack.c.h.b16 %v3798
    %v5084 = vunpack.c.l.b16 %v3799
    %v5085 = vunpack.c.h.b16 %v3799
    %v5086 = vunpack.c.l.b16 %v3800
    %v5087 = vunpack.c.h.b16 %v3800
    %v5088 = vunpack.c.l.b16 %v3801
    %v5089 = vunpack.c.h.b16 %v3801
    %v5090 = vunpack.c.l.b16 %v3802
    %v5091 = vunpack.c.h.b16 %v3802
    %v5092 = vunpack.c.l.b16 %v3803
    %v5093 = vunpack.c.h.b16 %v3803
    %v5094 = vunpack.c.l.b16 %v3804
    %v5095 = vunpack.c.h.b16 %v3804
    %v5096 = vunpack.c.l.b16 %v3805
    %v5097 = vunpack.c.h.b16 %v3805
    %v5098 = vunpack.c.l.b16 %v3806
    %v5099 = vunpack.c.h.b16 %v3806
    %v5100 = vunpack.c.l.b16 %v3807
    %v5101 = vunpack.c.h.b16 %v3807
    %v5102 = vunpack.c.l.b16 %v3808
    %v5103 = vunpack.c.h.b16 %v3808
    %v5104 = vunpack.c.l.b16 %v3809
    %v5105 = vunpack.c.h.b16 %v3809
    %v5106 = vunpack.c.l.b16 %v3810
    %v5107 = vunpack.c.h.b16 %v3810
    %v5108 = vunpack.c.l.b16 %v3811
    %v5109 = vunpack.c.h.b16 %v3811
    %v5110 = vunpack.c.l.b16 %v3812
    %v5111 = vunpack.c.h.b16 %v3812
    %v5112 = vunpack.c.l.b16 %v3813
    %v5113 = vunpack.c.h.b16 %v3813
    %v5114 = vunpack.c.l.b16 %v3814
    %v5115 = vunpack.c.h.b16 %v3814
    %v5116 = vunpack.c.l.b16 %v3815
    %v5117 = vunpack.c.h.b16 %v3815
    %v5118 = vunpack.c.l.b16 %v3816
    %v5119 = vunpack.c.h.b16 %v3816
    %v5120 = vunpack.c.l.b16 %v3817
    %v5121 = vunpack.c.h.b16 %v3817
    %v5122 = vunpack.c.l.b16 %v3818
    %v5123 = vunpack.c.h.b16 %v3818
    %v5124 = vunpack.c.l.b16 %v3819
    %v5125 = vunpack.c.h.b16 %v3819
    %v5126 = vunpack.c.l.b16 %v3820
    %v5127 = vunpack.c.h.b16 %v3820
    %v5128 = vunpack.c.l.b16 %v3821
    %v5129 = vunpack.c.h.b16 %v3821
    %v5130 = vunpack.c.l.b16 %v3822
    %v5131 = vunpack.c.h.b16 %v3822
    %v5132 = vunpack.c.l.b16 %v3823
    %v5133 = vunpack.c.h.b16 %v3823
    %v5134 = vunpack.c.l.b16 %v3824
    %v5135 = vunpack.c.h.b16 %v3824
    %v5136 = vunpack.c.l.b16 %v3825
    %v5137 = vunpack.c.h.b16 %v3825
    %v5138 = vunpack.c.l.b16 %v3826
    %v5139 = vunpack.c.h.b16 %v3826
    %v5140 = vunpack.c.l.b16 %v3827
    %v5141 = vunpack.c.h.b16 %v3827
    %v5142 = vunpack.c.l.b16 %v3828
    %v5143 = vunpack.c.h.b16 %v3828
    %v5144 = vunpack.c.l.b16 %v3829
    %v5145 = vunpack.c.h.b16 %v3829
    %v5146 = vunpack.c.l.b16 %v3830
    %v5147 = vunpack.c.h.b16 %v3830
    %v5148 = vunpack.c.l.b16 %v3831
    %v5149 = vunpack.c.h.b16 %v3831
    %v5150 = vunpack.c.l.b16 %v3832
    %v5151 = vunpack.c.h.b16 %v3832
    %v5152 = vunpack.c.l.b16 %v3833
    %v5153 = vunpack.c.h.b16 %v3833
    %v5154 = vunpack.c.l.b16 %v3834
    %v5155 = vunpack.c.h.b16 %v3834
    %v5156 = vunpack.c.l.b16 %v3835
    %v5157 = vunpack.c.h.b16 %v3835
    %v5158 = vunpack.c.l.b16 %v3836
    %v5159 = vunpack.c.h.b16 %v3836
    %v5160 = vunpack.c.l.b16 %v3837
    %v5161 = vunpack.c.h.b16 %v3837
    %v5162 = vunpack.c.l.b16 %v3838
    %v5163 = vunpack.c.h.b16 %v3838
    %v5164 = vunpack.c.l.b16 %v3839
    %v5165 = vunpack.c.h.b16 %v3839
    %v5166 = vunpack.c.l.b16 %v3840
    %v5167 = vunpack.c.h.b16 %v3840
    %v5168 = vunpack.c.l.b16 %v3841
    %v5169 = vunpack.c.h.b16 %v3841
    %v5170 = vunpack.c.l.b16 %v3842
    %v5171 = vunpack.c.h.b16 %v3842
    %v5172 = vunpack.c.l.b16 %v3843
    %v5173 = vunpack.c.h.b16 %v3843
    %v5174 = vunpack.c.l.b16 %v3844
    %v5175 = vunpack.c.h.b16 %v3844
    %v5176 = vunpack.c.l.b16 %v3845
    %v5177 = vunpack.c.h.b16 %v3845
    %v5178 = vunpack.c.l.b16 %v3846
    %v5179 = vunpack.c.h.b16 %v3846
    %v5180 = vunpack.c.l.b16 %v3847
    %v5181 = vunpack.c.h.b16 %v3847
    %v5182 = vunpack.c.l.b16 %v3848
    %v5183 = vunpack.c.h.b16 %v3848
    %v5184 = vunpack.c.l.b16 %v3849
    %v5185 = vunpack.c.h.b16 %v3849
    %v5186 = vunpack.c.l.b16 %v3850
    %v5187 = vunpack.c.h.b16 %v3850
    %v5188 = vunpack.c.l.b16 %v3851
    %v5189 = vunpack.c.h.b16 %v3851
    %v5190 = vunpack.c.l.b16 %v3852
    %v5191 = vunpack.c.h.b16 %v3852
    %v5192 = vunpack.c.l.b16 %v3853
    %v5193 = vunpack.c.h.b16 %v3853
    %v5194 = vunpack.c.l.b16 %v3854
    %v5195 = vunpack.c.h.b16 %v3854
    %v5196 = vunpack.c.l.b16 %v3855
    %v5197 = vunpack.c.h.b16 %v3855
    %v5198 = vunpack.c.l.b16 %v3856
    %v5199 = vunpack.c.h.b16 %v3856
    %v5200 = vunpack.c.l.b16 %v3857
    %v5201 = vunpack.c.h.b16 %v3857
    %v5202 = vunpack.c.l.b16 %v3858
    %v5203 = vunpack.c.h.b16 %v3858
    %v5204 = vunpack.c.l.b16 %v3859
    %v5205 = vunpack.c.h.b16 %v3859
    %v5206 = vunpack.c.l.b16 %v3860
    %v5207 = vunpack.c.h.b16 %v3860
    %v5208 = vunpack.c.l.b16 %v3861
    %v5209 = vunpack.c.h.b16 %v3861
    %v5210 = vunpack.c.l.b16 %v3862
    %v5211 = vunpack.c.h.b16 %v3862
    %v5212 = vunpack.c.l.b16 %v3863
    %v5213 = vunpack.c.h.b16 %v3863
    %v5214 = vunpack.c.l.b16 %v3864
    %v5215 = vunpack.c.h.b16 %v3864
    %v5216 = vunpack.c.l.b16 %v3865
    %v5217 = vunpack.c.h.b16 %v3865
    %v5218 = vunpack.c.l.b16 %v3866
    %v5219 = vunpack.c.h.b16 %v3866
    %v5220 = vunpack.c.l.b16 %v3867
    %v5221 = vunpack.c.h.b16 %v3867
    %v5222 = vunpack.c.l.b16 %v3868
    %v5223 = vunpack.c.h.b16 %v3868
    %v5224 = vunpack.c.l.b16 %v3869
    %v5225 = vunpack.c.h.b16 %v3869
    %v5226 = vunpack.c.l.b16 %v3870
    %v5227 = vunpack.c.h.b16 %v3870
    %v5228 = vunpack.c.l.b16 %v3871
    %v5229 = vunpack.c.h.b16 %v3871
    %v5230 = vunpack.c.l.b16 %v3872
    %v5231 = vunpack.c.h.b16 %v3872
    %v5232 = vunpack.c.l.b16 %v3873
    %v5233 = vunpack.c.h.b16 %v3873
    %v5234 = vunpack.c.l.b16 %v3874
    %v5235 = vunpack.c.h.b16 %v3874
    %v5236 = vunpack.c.l.b16 %v3875
    %v5237 = vunpack.c.h.b16 %v3875
    %v5238 = vunpack.c.l.b16 %v3876
    %v5239 = vunpack.c.h.b16 %v3876
    %v5240 = vunpack.c.l.b16 %v3877
    %v5241 = vunpack.c.h.b16 %v3877
    %v5242 = vunpack.c.l.b16 %v3878
    %v5243 = vunpack.c.h.b16 %v3878
    %v5244 = vunpack.c.l.b16 %v3879
    %v5245 = vunpack.c.h.b16 %v3879
    %v5246 = vunpack.c.l.b16 %v3880
    %v5247 = vunpack.c.h.b16 %v3880
    %v5248 = vunpack.c.l.b16 %v3881
    %v5249 = vunpack.c.h.b16 %v3881
    %v5250 = vunpack.c.l.b16 %v3882
    %v5251 = vunpack.c.h.b16 %v3882
    %v5252 = vunpack.c.l.b16 %v3883
    %v5253 = vunpack.c.h.b16 %v3883
    %v5254 = vunpack.c.l.b16 %v3884
    %v5255 = vunpack.c.h.b16 %v3884
    %v5256 = vunpack.c.l.b16 %v3885
    %v5257 = vunpack.c.h.b16 %v3885
    %v5258 = vunpack.c.l.b16 %v3886
    %v5259 = vunpack.c.h.b16 %v3886
    %v5260 = vunpack.c.l.b16 %v3887
    %v5261 = vunpack.c.h.b16 %v3887
    %v5262 = vunpack.c.l.b16 %v3888
    %v5263 = vunpack.c.h.b16 %v3888
    %v5264 = vunpack.c.l.b16 %v3889
    %v5265 = vunpack.c.h.b16 %v3889
    %v5266 = vunpack.c.l.b16 %v3890
    %v5267 = vunpack.c.h.b16 %v3890
    %v5268 = vunpack.c.l.b16 %v3891
    %v5269 = vunpack.c.h.b16 %v3891
    %v5270 = vunpack.c.l.b16 %v3892
    %v5271 = vunpack.c.h.b16 %v3892
    %v5272 = vunpack.c.l.b16 %v3893
    %v5273 = vunpack.c.h.b16 %v3893
    %v5274 = vunpack.c.l.b16 %v3894
    %v5275 = vunpack.c.h.b16 %v3894
    %v5276 = vunpack.c.l.b16 %v3895
    %v5277 = vunpack.c.h.b16 %v3895
    %v5278 = vunpack.c.l.b16 %v3896
    %v5279 = vunpack.c.h.b16 %v3896
    %v5280 = vunpack.c.l.b16 %v3897
    %v5281 = vunpack.c.h.b16 %v3897
    %v5282 = vunpack.c.l.b16 %v3898
    %v5283 = vunpack.c.h.b16 %v3898
    %v5284 = vunpack.c.l.b16 %v3899
    %v5285 = vunpack.c.h.b16 %v3899
    %v5286 = vunpack.c.l.b16 %v3900
    %v5287 = vunpack.c.h.b16 %v3900
    %v5288 = vunpack.c.l.b16 %v3901
    %v5289 = vunpack.c.h.b16 %v3901
    %v5290 = vunpack.c.l.b16 %v3902
    %v5291 = vunpack.c.h.b16 %v3902
    %v5292 = vunpack.c.l.b16 %v3903
    %v5293 = vunpack.c.h.b16 %v3903
    %v5294 = vunpack.c.l.b16 %v3904
    %v5295 = vunpack.c.h.b16 %v3904
    %v5296 = vunpack.c.l.b16 %v3905
    %v5297 = vunpack.c.h.b16 %v3905
    %v5298 = vunpack.c.l.b16 %v3906
    %v5299 = vunpack.c.h.b16 %v3906
    %v5300 = vunpack.c.l.b16 %v3907
    %v5301 = vunpack.c.h.b16 %v3907
    %v5302 = vunpack.c.l.b16 %v3908
    %v5303 = vunpack.c.h.b16 %v3908
    %v5304 = vunpack.c.l.b16 %v3909
    %v5305 = vunpack.c.h.b16 %v3909
    %v5306 = vunpack.c.l.b16 %v3910
    %v5307 = vunpack.c.h.b16 %v3910
    %v5308 = vunpack.c.l.b16 %v3911
    %v5309 = vunpack.c.h.b16 %v3911
    %v5310 = vunpack.c.l.b16 %v3912
    %v5311 = vunpack.c.h.b16 %v3912
    %v5312 = vunpack.c.l.b16 %v3913
    %v5313 = vunpack.c.h.b16 %v3913
    %v5314 = vunpack.c.l.b16 %v3914
    %v5315 = vunpack.c.h.b16 %v3914
    %v5316 = vunpack.c.l.b16 %v3915
    %v5317 = vunpack.c.h.b16 %v3915
    %v5318 = vunpack.c.l.b16 %v3916
    %v5319 = vunpack.c.h.b16 %v3916
    %v5320 = vunpack.c.l.b16 %v3917
    %v5321 = vunpack.c.h.b16 %v3917
    %v5322 = vunpack.c.l.b16 %v3918
    %v5323 = vunpack.c.h.b16 %v3918
    %v5324 = vunpack.c.l.b16 %v3919
    %v5325 = vunpack.c.h.b16 %v3919
    %v5326 = vunpack.c.l.b16 %v3920
    %v5327 = vunpack.c.h.b16 %v3920
    %v5328 = vunpack.c.l.b16 %v3921
    %v5329 = vunpack.c.h.b16 %v3921
    %v5330 = vunpack.c.l.b16 %v3922
    %v5331 = vunpack.c.h.b16 %v3922
    %v5332 = vunpack.c.l.b16 %v3923
    %v5333 = vunpack.c.h.b16 %v3923
    %v5334 = vunpack.c.l.b16 %v3924
    %v5335 = vunpack.c.h.b16 %v3924
    %v5336 = vunpack.c.l.b16 %v3925
    %v5337 = vunpack.c.h.b16 %v3925
    %v5338 = vunpack.c.l.b16 %v3926
    %v5339 = vunpack.c.h.b16 %v3926
    %v5340 = vunpack.c.l.b16 %v3927
    %v5341 = vunpack.c.h.b16 %v3927
    %v5342 = vunpack.c.l.b16 %v3928
    %v5343 = vunpack.c.h.b16 %v3928
    %v5344 = vunpack.c.l.b16 %v3929
    %v5345 = vunpack.c.h.b16 %v3929
    %v5346 = vunpack.c.l.b16 %v3930
    %v5347 = vunpack.c.h.b16 %v3930
    %v5348 = vunpack.c.l.b16 %v3931
    %v5349 = vunpack.c.h.b16 %v3931
    %v5350 = vunpack.c.l.b16 %v3932
    %v5351 = vunpack.c.h.b16 %v3932
    %v5352 = vunpack.c.l.b16 %v3933
    %v5353 = vunpack.c.h.b16 %v3933
    %v5354 = vunpack.c.l.b16 %v3934
    %v5355 = vunpack.c.h.b16 %v3934
    %v5356 = vunpack.c.l.b16 %v3935
    %v5357 = vunpack.c.h.b16 %v3935
    %v5358 = vunpack.c.l.b16 %v3936
    %v5359 = vunpack.c.h.b16 %v3936
    %v5360 = vunpack.c.l.b16 %v3937
    %v5361 = vunpack.c.h.b16 %v3937
    %v5362 = vunpack.c.l.b16 %v3938
    %v5363 = vunpack.c.h.b16 %v3938
    %v5364 = vunpack.c.l.b16 %v3939
    %v5365 = vunpack.c.h.b16 %v3939
    %v5366 = vunpack.c.l.b16 %v3940
    %v5367 = vunpack.c.h.b16 %v3940
    %v5368 = vunpack.c.l.b16 %v3941
    %v5369 = vunpack.c.h.b16 %v3941
    %v5370 = vunpack.c.l.b16 %v3942
    %v5371 = vunpack.c.h.b16 %v3942
    %v5372 = vunpack.c.l.b16 %v3943
    %v5373 = vunpack.c.h.b16 %v3943
    %v5374 = vunpack.c.l.b16 %v3944
    %v5375 = vunpack.c.h.b16 %v3944
    %v5376 = vunpack.c.l.b16 %v3945
    %v5377 = vunpack.c.h.b16 %v3945
    %v5378 = vunpack.c.l.b16 %v3946
    %v5379 = vunpack.c.h.b16 %v3946
    %v5380 = vunpack.c.l.b16 %v3947
    %v5381 = vunpack.c.h.b16 %v3947
    %v5382 = vunpack.c.l.b16 %v3948
    %v5383 = vunpack.c.h.b16 %v3948
    %v5384 = vunpack.c.l.b16 %v3949
    %v5385 = vunpack.c.h.b16 %v3949
    %v5386 = vunpack.c.l.b16 %v3950
    %v5387 = vunpack.c.h.b16 %v3950
    %v5388 = vunpack.c.l.b16 %v3951
    %v5389 = vunpack.c.h.b16 %v3951
    %v5390 = vunpack.c.l.b16 %v3952
    %v5391 = vunpack.c.h.b16 %v3952
    %v5392 = vunpack.c.l.b16 %v3953
    %v5393 = vunpack.c.h.b16 %v3953
    %v5394 = vunpack.c.l.b16 %v3954
    %v5395 = vunpack.c.h.b16 %v3954
    %v5396 = vunpack.c.l.b16 %v3955
    %v5397 = vunpack.c.h.b16 %v3955
    %v5398 = vunpack.c.l.b16 %v3956
    %v5399 = vunpack.c.h.b16 %v3956
    %v5400 = vunpack.c.l.b16 %v3957
    %v5401 = vunpack.c.h.b16 %v3957
    %v5402 = vunpack.c.l.b16 %v3958
    %v5403 = vunpack.c.h.b16 %v3958
    %v5404 = vunpack.c.l.b16 %v3959
    %v5405 = vunpack.c.h.b16 %v3959
    %v5406 = vunpack.c.l.b16 %v3960
    %v5407 = vunpack.c.h.b16 %v3960
    %v5408 = vunpack.c.l.b16 %v3961
    %v5409 = vunpack.c.h.b16 %v3961
    %v5410 = vunpack.c.l.b16 %v3962
    %v5411 = vunpack.c.h.b16 %v3962
    %v5412 = vunpack.c.l.b16 %v3963
    %v5413 = vunpack.c.h.b16 %v3963
    %v5414 = vunpack.c.l.b16 %v3964
    %v5415 = vunpack.c.h.b16 %v3964
    %v5416 = vunpack.c.l.b16 %v3965
    %v5417 = vunpack.c.h.b16 %v3965
    %v5418 = vunpack.c.l.b16 %v3966
    %v5419 = vunpack.c.h.b16 %v3966
    %v5420 = vunpack.c.l.b16 %v3967
    %v5421 = vunpack.c.h.b16 %v3967
    %v5422 = vunpack.c.l.b16 %v3968
    %v5423 = vunpack.c.h.b16 %v3968
    %v5424 = vunpack.c.l.b16 %v3969
    %v5425 = vunpack.c.h.b16 %v3969
    %v5426 = vunpack.c.l.b16 %v3970
    %v5427 = vunpack.c.h.b16 %v3970
    %v5428 = vunpack.c.l.b16 %v3971
    %v5429 = vunpack.c.h.b16 %v3971
    %v5430 = vunpack.c.l.b16 %v3972
    %v5431 = vunpack.c.h.b16 %v3972
    %v5432 = vunpack.c.l.b16 %v3973
    %v5433 = vunpack.c.h.b16 %v3973
    %v5434 = vunpack.c.l.b16 %v3974
    %v5435 = vunpack.c.h.b16 %v3974
    %v5436 = vunpack.c.l.b16 %v3975
    %v5437 = vunpack.c.h.b16 %v3975
    %v5438 = vunpack.c.l.b16 %v3976
    %v5439 = vunpack.c.h.b16 %v3976
    %v5440 = vunpack.c.l.b16 %v3977
    %v5441 = vunpack.c.h.b16 %v3977
    %v5442 = vunpack.c.l.b16 %v3978
    %v5443 = vunpack.c.h.b16 %v3978
    %v5444 = vunpack.c.l.b16 %v3979
    %v5445 = vunpack.c.h.b16 %v3979
    %v5446 = vunpack.c.l.b16 %v3980
    %v5447 = vunpack.c.h.b16 %v3980
    %v5448 = vunpack.c.l.b16 %v3981
    %v5449 = vunpack.c.h.b16 %v3981
    %v5450 = vunpack.c.l.b16 %v3982
    %v5451 = vunpack.c.h.b16 %v3982
    %v5452 = vunpack.c.l.b16 %v3983
    %v5453 = vunpack.c.h.b16 %v3983
    %v5454 = vunpack.c.l.b16 %v3984
    %v5455 = vunpack.c.h.b16 %v3984
    %v5456 = vunpack.c.l.b16 %v3985
    %v5457 = vunpack.c.h.b16 %v3985
    %v5458 = vunpack.c.l.b16 %v3986
    %v5459 = vunpack.c.h.b16 %v3986
    %v5460 = vunpack.c.l.b16 %v3987
    %v5461 = vunpack.c.h.b16 %v3987
    %v5462 = vunpack.c.l.b16 %v3988
    %v5463 = vunpack.c.h.b16 %v3988
    %v5464 = vunpack.c.l.b16 %v3989
    %v5465 = vunpack.c.h.b16 %v3989
    %v5466 = vunpack.c.l.b16 %v3990
    %v5467 = vunpack.c.h.b16 %v3990
    %v5468 = vunpack.c.l.b16 %v3991
    %v5469 = vunpack.c.h.b16 %v3991
    %v5470 = vunpack.c.l.b16 %v3992
    %v5471 = vunpack.c.h.b16 %v3992
    %v5472 = vunpack.c.l.b16 %v3993
    %v5473 = vunpack.c.h.b16 %v3993
    %v5474 = vunpack.c.l.b16 %v3994
    %v5475 = vunpack.c.h.b16 %v3994
    %v5476 = vunpack.c.l.b16 %v3995
    %v5477 = vunpack.c.h.b16 %v3995
    %v5478 = vunpack.c.l.b16 %v3996
    %v5479 = vunpack.c.h.b16 %v3996
    %v5480 = vunpack.c.l.b16 %v3997
    %v5481 = vunpack.c.h.b16 %v3997
    %v5482 = vunpack.c.l.b16 %v3998
    %v5483 = vunpack.c.h.b16 %v3998
    %v5484 = vunpack.c.l.b16 %v3999
    %v5485 = vunpack.c.h.b16 %v3999
    %v5486 = vunpack.c.l.b16 %v4000
    %v5487 = vunpack.c.h.b16 %v4000
    %v5488 = vunpack.c.l.b16 %v4001
    %v5489 = vunpack.c.h.b16 %v4001
    %v5490 = vunpack.c.l.b16 %v4002
    %v5491 = vunpack.c.h.b16 %v4002
    %v5492 = vunpack.c.l.b16 %v4003
    %v5493 = vunpack.c.h.b16 %v4003
    %v5494 = vunpack.c.l.b16 %v4004
    %v5495 = vunpack.c.h.b16 %v4004
    %v5496 = vunpack.c.l.b16 %v4005
    %v5497 = vunpack.c.h.b16 %v4005
    %v5498 = vunpack.c.l.b16 %v4006
    %v5499 = vunpack.c.h.b16 %v4006
    %v5500 = vunpack.c.l.b16 %v4007
    %v5501 = vunpack.c.h.b16 %v4007
    %v5502 = vunpack.c.l.b16 %v4008
    %v5503 = vunpack.c.h.b16 %v4008
    %v5504 = vunpack.c.l.b16 %v4009
    %v5505 = vunpack.c.h.b16 %v4009
    %v5506 = vunpack.c.l.b16 %v4010
    %v5507 = vunpack.c.h.b16 %v4010
    %v5508 = vunpack.c.l.b16 %v4011
    %v5509 = vunpack.c.h.b16 %v4011
    %v5510 = vunpack.c.l.b16 %v4012
    %v5511 = vunpack.c.h.b16 %v4012
    %v5512 = vunpack.c.l.b16 %v4013
    %v5513 = vunpack.c.h.b16 %v4013
    %v5514 = vunpack.c.l.b16 %v4014
    %v5515 = vunpack.c.h.b16 %v4014
    %v5516 = vunpack.c.l.b16 %v4015
    %v5517 = vunpack.c.h.b16 %v4015
    %v5518 = vunpack.c.l.b16 %v4016
    %v5519 = vunpack.c.h.b16 %v4016
    %v5520 = vunpack.c.l.b16 %v4017
    %v5521 = vunpack.c.h.b16 %v4017
    %v5522 = vunpack.c.l.b16 %v4018
    %v5523 = vunpack.c.h.b16 %v4018
    %v5524 = vunpack.c.l.b16 %v4019
    %v5525 = vunpack.c.h.b16 %v4019
    %v5526 = vunpack.c.l.b16 %v4020
    %v5527 = vunpack.c.h.b16 %v4020
    %v5528 = vunpack.c.l.b16 %v4021
    %v5529 = vunpack.c.h.b16 %v4021
    %v5530 = vunpack.c.l.b16 %v4022
    %v5531 = vunpack.c.h.b16 %v4022
    %v5532 = vunpack.c.l.b16 %v4023
    %v5533 = vunpack.c.h.b16 %v4023
    %v5534 = vunpack.c.l.b16 %v4024
    %v5535 = vunpack.c.h.b16 %v4024
    %v5536 = vunpack.c.l.b16 %v4025
    %v5537 = vunpack.c.h.b16 %v4025
    %v5538 = vunpack.c.l.b16 %v4026
    %v5539 = vunpack.c.h.b16 %v4026
    %v5540 = vunpack.c.l.b16 %v4027
    %v5541 = vunpack.c.h.b16 %v4027
    %v5542 = vunpack.c.l.b16 %v4028
    %v5543 = vunpack.c.h.b16 %v4028
    %v5544 = vunpack.c.l.b16 %v4029
    %v5545 = vunpack.c.h.b16 %v4029
    %v5546 = vunpack.c.l.b16 %v4030
    %v5547 = vunpack.c.h.b16 %v4030
    %v5548 = vunpack.c.l.b16 %v4031
    %v5549 = vunpack.c.h.b16 %v4031
    %v5550 = vunpack.c.l.b16 %v4032
    %v5551 = vunpack.c.h.b16 %v4032
    %v5552 = vunpack.c.l.b16 %v4033
    %v5553 = vunpack.c.h.b16 %v4033
    %v5554 = vunpack.c.l.b16 %v4034
    %v5555 = vunpack.c.h.b16 %v4034
    %v5556 = vunpack.c.l.b16 %v4035
    %v5557 = vunpack.c.h.b16 %v4035
    %v5558 = vunpack.c.l.b16 %v4036
    %v5559 = vunpack.c.h.b16 %v4036
    %v5560 = vunpack.c.l.b16 %v4037
    %v5561 = vunpack.c.h.b16 %v4037
    %v5562 = vunpack.c.l.b16 %v4038
    %v5563 = vunpack.c.h.b16 %v4038
    %v5564 = vunpack.c.l.b16 %v4039
    %v5565 = vunpack.c.h.b16 %v4039
    %v5566 = vunpack.c.l.b16 %v4040
    %v5567 = vunpack.c.h.b16 %v4040
    %v5568 = vunpack.c.l.b16 %v4041
    %v5569 = vunpack.c.h.b16 %v4041
    %v5570 = vunpack.c.l.b16 %v4042
    %v5571 = vunpack.c.h.b16 %v4042
    %v5572 = vunpack.c.l.b16 %v4043
    %v5573 = vunpack.c.h.b16 %v4043
    %v5574 = vunpack.c.l.b16 %v4044
    %v5575 = vunpack.c.h.b16 %v4044
    %v5576 = vunpack.c.l.b16 %v4045
    %v5577 = vunpack.c.h.b16 %v4045
    %v5578 = vunpack.c.l.b16 %v4046
    %v5579 = vunpack.c.h.b16 %v4046
    %v5580 = vunpack.c.l.b16 %v4047
    %v5581 = vunpack.c.h.b16 %v4047
    %v5582 = vunpack.c.l.b16 %v4048
    %v5583 = vunpack.c.h.b16 %v4048
    %v5584 = vunpack.c.l.b16 %v4049
    %v5585 = vunpack.c.h.b16 %v4049
    %v5586 = vunpack.c.l.b16 %v4050
    %v5587 = vunpack.c.h.b16 %v4050
    %v5588 = vunpack.c.l.b16 %v4051
    %v5589 = vunpack.c.h.b16 %v4051
    %v5590 = vunpack.c.l.b16 %v4052
    %v5591 = vunpack.c.h.b16 %v4052
    %v5592 = vunpack.c.l.b16 %v4053
    %v5593 = vunpack.c.h.b16 %v4053
    %v5594 = vunpack.c.l.b16 %v4054
    %v5595 = vunpack.c.h.b16 %v4054
    %v5596 = vunpack.c.l.b16 %v4055
    %v5597 = vunpack.c.h.b16 %v4055
    %v5598 = vunpack.c.l.b16 %v4056
    %v5599 = vunpack.c.h.b16 %v4056
    %v5600 = vunpack.c.l.b16 %v4057
    %v5601 = vunpack.c.h.b16 %v4057
    %v5602 = vunpack.c.l.b16 %v4058
    %v5603 = vunpack.c.h.b16 %v4058
    %v5604 = vunpack.c.l.b16 %v4059
    %v5605 = vunpack.c.h.b16 %v4059
    %v5606 = vunpack.c.l.b16 %v4060
    %v5607 = vunpack.c.h.b16 %v4060
    %v5608 = vunpack.c.l.b16 %v4061
    %v5609 = vunpack.c.h.b16 %v4061
    %v5610 = vunpack.c.l.b16 %v4062
    %v5611 = vunpack.c.h.b16 %v4062
    %v5612 = vunpack.c.l.b16 %v4063
    %v5613 = vunpack.c.h.b16 %v4063
    %v5614 = vunpack.c.l.b16 %v4064
    %v5615 = vunpack.c.h.b16 %v4064
    %v5616 = vunpack.c.l.b16 %v4065
    %v5617 = vunpack.c.h.b16 %v4065
    %v5618 = vunpack.c.l.b16 %v4066
    %v5619 = vunpack.c.h.b16 %v4066
    %v5620 = vunpack.c.l.b16 %v4067
    %v5621 = vunpack.c.h.b16 %v4067
    %v5622 = vunpack.c.l.b16 %v4068
    %v5623 = vunpack.c.h.b16 %v4068
    %v5624 = vunpack.c.l.b16 %v4069
    %v5625 = vunpack.c.h.b16 %v4069
    %v5626 = vunpack.c.l.b16 %v4070
    %v5627 = vunpack.c.h.b16 %v4070
    %v5628 = vunpack.c.l.b16 %v4071
    %v5629 = vunpack.c.h.b16 %v4071
    %v5630 = vunpack.c.l.b16 %v4072
    %v5631 = vunpack.c.h.b16 %v4072
    %v5632 = vunpack.c.l.b16 %v4073
    %v5633 = vunpack.c.h.b16 %v4073
    %v5634 = vunpack.c.l.b16 %v4074
    %v5635 = vunpack.c.h.b16 %v4074
    %v5636 = vunpack.c.l.b16 %v4075
    %v5637 = vunpack.c.h.b16 %v4075
    %v5638 = vunpack.c.l.b16 %v4076
    %v5639 = vunpack.c.h.b16 %v4076
    %v5640 = vunpack.c.l.b16 %v4077
    %v5641 = vunpack.c.h.b16 %v4077
    %v5642 = vunpack.c.l.b16 %v4078
    %v5643 = vunpack.c.h.b16 %v4078
    %v5644 = vunpack.c.l.b16 %v4079
    %v5645 = vunpack.c.h.b16 %v4079
    %v5646 = vunpack.c.l.b16 %v4080
    %v5647 = vunpack.c.h.b16 %v4080
    %v5648 = vunpack.c.l.b16 %v4081
    %v5649 = vunpack.c.h.b16 %v4081
    %v5650 = vunpack.c.l.b16 %v4082
    %v5651 = vunpack.c.h.b16 %v4082
    %v5652 = vunpack.c.l.b16 %v4083
    %v5653 = vunpack.c.h.b16 %v4083
    %v5654 = vunpack.c.l.b16 %v4084
    %v5655 = vunpack.c.h.b16 %v4084
    %v5656 = vunpack.c.l.b16 %v4085
    %v5657 = vunpack.c.h.b16 %v4085
    %v5658 = vunpack.c.l.b16 %v4086
    %v5659 = vunpack.c.h.b16 %v4086
    %v5660 = vunpack.c.l.b16 %v4087
    %v5661 = vunpack.c.h.b16 %v4087
    %v5662 = vunpack.c.l.b16 %v4088
    %v5663 = vunpack.c.h.b16 %v4088
    %v5664 = vunpack.c.l.b16 %v4089
    %v5665 = vunpack.c.h.b16 %v4089
    %v5666 = vunpack.c.l.b16 %v4090
    %v5667 = vunpack.c.h.b16 %v4090
    %v5668 = vunpack.c.l.b16 %v4091
    %v5669 = vunpack.c.h.b16 %v4091
    %v5670 = vpack.c.b16 %v4654, %v4646
    %v5671 = vpack.c.b16 %v4655, %v4647
    %v5672 = vpack.c.b16 %v4656, %v4648
    %v5673 = vpack.c.b16 %v4657, %v4649
    %v5674 = vpack.c.b16 %v4658, %v4650
    %v5675 = vpack.c.b16 %v4659, %v4651
    %v5676 = vpack.c.b16 %v4660, %v4652
    %v5677 = vpack.c.b16 %v4661, %v4653
    %v5678 = vpack.c.b16 %v4670, %v4662
    %v5679 = vpack.c.b16 %v4671, %v4663
    %v5680 = vpack.c.b16 %v4672, %v4664
    %v5681 = vpack.c.b16 %v4673, %v4665
    %v5682 = vpack.c.b16 %v4674, %v4666
    %v5683 = vpack.c.b16 %v4675, %v4667
    %v5684 = vpack.c.b16 %v4676, %v4668
    %v5685 = vpack.c.b16 %v4677, %v4669
    %v5686 = vpack.c.b16 %v4686, %v4678
    %v5687 = vpack.c.b16 %v4687, %v4679
    %v5688 = vpack.c.b16 %v4688, %v4680
    %v5689 = vpack.c.b16 %v4689, %v4681
    %v5690 = vpack.c.b16 %v4690, %v4682
    %v5691 = vpack.c.b16 %v4691, %v4683
    %v5692 = vpack.c.b16 %v4692, %v4684
    %v5693 = vpack.c.b16 %v4693, %v4685
    %v5694 = vpack.c.b16 %v4702, %v4694
    %v5695 = vpack.c.b16 %v4703, %v4695
    %v5696 = vpack.c.b16 %v4704, %v4696
    %v5697 = vpack.c.b16 %v4705, %v4697
    %v5698 = vpack.c.b16 %v4706, %v4698
    %v5699 = vpack.c.b16 %v4707, %v4699
    %v5700 = vpack.c.b16 %v4708, %v4700
    %v5701 = vpack.c.b16 %v4709, %v4701
    %v5702 = vpack.c.b16 %v4718, %v4710
    %v5703 = vpack.c.b16 %v4719, %v4711
    %v5704 = vpack.c.b16 %v4720, %v4712
    %v5705 = vpack.c.b16 %v4721, %v4713
    %v5706 = vpack.c.b16 %v4722, %v4714
    %v5707 = vpack.c.b16 %v4723, %v4715
    %v5708 = vpack.c.b16 %v4724, %v4716
    %v5709 = vpack.c.b16 %v4725, %v4717
    %v5710 = vpack.c.b16 %v4734, %v4726
    %v5711 = vpack.c.b16 %v4735, %v4727
    %v5712 = vpack.c.b16 %v4736, %v4728
    %v5713 = vpack.c.b16 %v4737, %v4729
    %v5714 = vpack.c.b16 %v4738, %v4730
    %v5715 = vpack.c.b16 %v4739, %v4731
    %v5716 = vpack.c.b16 %v4740, %v4732
    %v5717 = vpack.c.b16 %v4741, %v4733
    %v5718 = vpack.c.b16 %v4750, %v4742
    %v5719 = vpack.c.b16 %v4751, %v4743
    %v5720 = vpack.c.b16 %v4752, %v4744
    %v5721 = vpack.c.b16 %v4753, %v4745
    %v5722 = vpack.c.b16 %v4754, %v4746
    %v5723 = vpack.c.b16 %v4755, %v4747
    %v5724 = vpack.c.b16 %v4756, %v4748
    %v5725 = vpack.c.b16 %v4757, %v4749
    %v5726 = vpack.c.b16 %v4766, %v4758
    %v5727 = vpack.c.b16 %v4767, %v4759
    %v5728 = vpack.c.b16 %v4768, %v4760
    %v5729 = vpack.c.b16 %v4769, %v4761
    %v5730 = vpack.c.b16 %v4770, %v4762
    %v5731 = vpack.c.b16 %v4771, %v4763
    %v5732 = vpack.c.b16 %v4772, %v4764
    %v5733 = vpack.c.b16 %v4773, %v4765
    %v5734 = vpack.c.b16 %v4782, %v4774
    %v5735 = vpack.c.b16 %v4783, %v4775
    %v5736 = vpack.c.b16 %v4784, %v4776
    %v5737 = vpack.c.b16 %v4785, %v4777
    %v5738 = vpack.c.b16 %v4786, %v4778
    %v5739 = vpack.c.b16 %v4787, %v4779
    %v5740 = vpack.c.b16 %v4788, %v4780
    %v5741 = vpack.c.b16 %v4789, %v4781
    %v5742 = vpack.c.b16 %v4798, %v4790
    %v5743 = vpack.c.b16 %v4799, %v4791
    %v5744 = vpack.c.b16 %v4800, %v4792
    %v5745 = vpack.c.b16 %v4801, %v4793
    %v5746 = vpack.c.b16 %v4802, %v4794
    %v5747 = vpack.c.b16 %v4803, %v4795
    %v5748 = vpack.c.b16 %v4804, %v4796
    %v5749 = vpack.c.b16 %v4805, %v4797
    %v5750 = vpack.c.b16 %v4814, %v4806
    %v5751 = vpack.c.b16 %v4815, %v4807
    %v5752 = vpack.c.b16 %v4816, %v4808
    %v5753 = vpack.c.b16 %v4817, %v4809
    %v5754 = vpack.c.b16 %v4818, %v4810
    %v5755 = vpack.c.b16 %v4819, %v4811
    %v5756 = vpack.c.b16 %v4820, %v4812
    %v5757 = vpack.c.b16 %v4821, %v4813
    %v5758 = vpack.c.b16 %v4830, %v4822
    %v5759 = vpack.c.b16 %v4831, %v4823
    %v5760 = vpack.c.b16 %v4832, %v4824
    %v5761 = vpack.c.b16 %v4833, %v4825
    %v5762 = vpack.c.b16 %v4834, %v4826
    %v5763 = vpack.c.b16 %v4835, %v4827
    %v5764 = vpack.c.b16 %v4836, %v4828
    %v5765 = vpack.c.b16 %v4837, %v4829
    %v5766 = vpack.c.b16 %v4846, %v4838
    %v5767 = vpack.c.b16 %v4847, %v4839
    %v5768 = vpack.c.b16 %v4848, %v4840
    %v5769 = vpack.c.b16 %v4849, %v4841
    %v5770 = vpack.c.b16 %v4850, %v4842
    %v5771 = vpack.c.b16 %v4851, %v4843
    %v5772 = vpack.c.b16 %v4852, %v4844
    %v5773 = vpack.c.b16 %v4853, %v4845
    %v5774 = vpack.c.b16 %v4862, %v4854
    %v5775 = vpack.c.b16 %v4863, %v4855
    %v5776 = vpack.c.b16 %v4864, %v4856
    %v5777 = vpack.c.b16 %v4865, %v4857
    %v5778 = vpack.c.b16 %v4866, %v4858
    %v5779 = vpack.c.b16 %v4867, %v4859
    %v5780 = vpack.c.b16 %v4868, %v4860
    %v5781 = vpack.c.b16 %v4869, %v4861
    %v5782 = vpack.c.b16 %v4878, %v4870
    %v5783 = vpack.c.b16 %v4879, %v4871
    %v5784 = vpack.c.b16 %v4880, %v4872
    %v5785 = vpack.c.b16 %v4881, %v4873
    %v5786 = vpack.c.b16 %v4882, %v4874
    %v5787 = vpack.c.b16 %v4883, %v4875
    %v5788 = vpack.c.b16 %v4884, %v4876
    %v5789 = vpack.c.b16 %v4885, %v4877
    %v5790 = vpack.c.b16 %v4894, %v4886
    %v5791 = vpack.c.b16 %v4895, %v4887
    %v5792 = vpack.c.b16 %v4896, %v4888
    %v5793 = vpack.c.b16 %v4897, %v4889
    %v5794 = vpack.c.b16 %v4898, %v4890
    %v5795 = vpack.c.b16 %v4899, %v4891
    %v5796 = vpack.c.b16 %v4900, %v4892
    %v5797 = vpack.c.b16 %v4901, %v4893
    %v5798 = vpack.c.b16 %v4910, %v4902
    %v5799 = vpack.c.b16 %v4911, %v4903
    %v5800 = vpack.c.b16 %v4912, %v4904
    %v5801 = vpack.c.b16 %v4913, %v4905
    %v5802 = vpack.c.b16 %v4914, %v4906
    %v5803 = vpack.c.b16 %v4915, %v4907
    %v5804 = vpack.c.b16 %v4916, %v4908
    %v5805 = vpack.c.b16 %v4917, %v4909
    %v5806 = vpack.c.b16 %v4926, %v4918
    %v5807 = vpack.c.b16 %v4927, %v4919
    %v5808 = vpack.c.b16 %v4928, %v4920
    %v5809 = vpack.c.b16 %v4929, %v4921
    %v5810 = vpack.c.b16 %v4930, %v4922
    %v5811 = vpack.c.b16 %v4931, %v4923
    %v5812 = vpack.c.b16 %v4932, %v4924
    %v5813 = vpack.c.b16 %v4933, %v4925
    %v5814 = vpack.c.b16 %v4942, %v4934
    %v5815 = vpack.c.b16 %v4943, %v4935
    %v5816 = vpack.c.b16 %v4944, %v4936
    %v5817 = vpack.c.b16 %v4945, %v4937
    %v5818 = vpack.c.b16 %v4946, %v4938
    %v5819 = vpack.c.b16 %v4947, %v4939
    %v5820 = vpack.c.b16 %v4948, %v4940
    %v5821 = vpack.c.b16 %v4949, %v4941
    %v5822 = vpack.c.b16 %v4958, %v4950
    %v5823 = vpack.c.b16 %v4959, %v4951
    %v5824 = vpack.c.b16 %v4960, %v4952
    %v5825 = vpack.c.b16 %v4961, %v4953
    %v5826 = vpack.c.b16 %v4962, %v4954
    %v5827 = vpack.c.b16 %v4963, %v4955
    %v5828 = vpack.c.b16 %v4964, %v4956
    %v5829 = vpack.c.b16 %v4965, %v4957
    %v5830 = vpack.c.b16 %v4974, %v4966
    %v5831 = vpack.c.b16 %v4975, %v4967
    %v5832 = vpack.c.b16 %v4976, %v4968
    %v5833 = vpack.c.b16 %v4977, %v4969
    %v5834 = vpack.c.b16 %v4978, %v4970
    %v5835 = vpack.c.b16 %v4979, %v4971
    %v5836 = vpack.c.b16 %v4980, %v4972
    %v5837 = vpack.c.b16 %v4981, %v4973
    %v5838 = vpack.c.b16 %v4990, %v4982
    %v5839 = vpack.c.b16 %v4991, %v4983
    %v5840 = vpack.c.b16 %v4992, %v4984
    %v5841 = vpack.c.b16 %v4993, %v4985
    %v5842 = vpack.c.b16 %v4994, %v4986
    %v5843 = vpack.c.b16 %v4995, %v4987
    %v5844 = vpack.c.b16 %v4996, %v4988
    %v5845 = vpack.c.b16 %v4997, %v4989
    %v5846 = vpack.c.b16 %v5006, %v4998
    %v5847 = vpack.c.b16 %v5007, %v4999
    %v5848 = vpack.c.b16 %v5008, %v5000
    %v5849 = vpack.c.b16 %v5009, %v5001
    %v5850 = vpack.c.b16 %v5010, %v5002
    %v5851 = vpack.c.b16 %v5011, %v5003
    %v5852 = vpack.c.b16 %v5012, %v5004
    %v5853 = vpack.c.b16 %v5013, %v5005
    %v5854 = vpack.c.b16 %v5022, %v5014
    %v5855 = vpack.c.b16 %v5023, %v5015
    %v5856 = vpack.c.b16 %v5024, %v5016
    %v5857 = vpack.c.b16 %v5025, %v5017
    %v5858 = vpack.c.b16 %v5026, %v5018
    %v5859 = vpack.c.b16 %v5027, %v5019
    %v5860 = vpack.c.b16 %v5028, %v5020
    %v5861 = vpack.c.b16 %v5029, %v5021
    %v5862 = vpack.c.b16 %v5038, %v5030
    %v5863 = vpack.c.b16 %v5039, %v5031
    %v5864 = vpack.c.b16 %v5040, %v5032
    %v5865 = vpack.c.b16 %v5041, %v5033
    %v5866 = vpack.c.b16 %v5042, %v5034
    %v5867 = vpack.c.b16 %v5043, %v5035
    %v5868 = vpack.c.b16 %v5044, %v5036
    %v5869 = vpack.c.b16 %v5045, %v5037
    %v5870 = vpack.c.b16 %v5054, %v5046
    %v5871 = vpack.c.b16 %v5055, %v5047
    %v5872 = vpack.c.b16 %v5056, %v5048
    %v5873 = vpack.c.b16 %v5057, %v5049
    %v5874 = vpack.c.b16 %v5058, %v5050
    %v5875 = vpack.c.b16 %v5059, %v5051
    %v5876 = vpack.c.b16 %v5060, %v5052
    %v5877 = vpack.c.b16 %v5061, %v5053
    %v5878 = vpack.c.b16 %v5070, %v5062
    %v5879 = vpack.c.b16 %v5071, %v5063
    %v5880 = vpack.c.b16 %v5072, %v5064
    %v5881 = vpack.c.b16 %v5073, %v5065
    %v5882 = vpack.c.b16 %v5074, %v5066
    %v5883 = vpack.c.b16 %v5075, %v5067
    %v5884 = vpack.c.b16 %v5076, %v5068
    %v5885 = vpack.c.b16 %v5077, %v5069
    %v5886 = vpack.c.b16 %v5086, %v5078
    %v5887 = vpack.c.b16 %v5087, %v5079
    %v5888 = vpack.c.b16 %v5088, %v5080
    %v5889 = vpack.c.b16 %v5089, %v5081
    %v5890 = vpack.c.b16 %v5090, %v5082
    %v5891 = vpack.c.b16 %v5091, %v5083
    %v5892 = vpack.c.b16 %v5092, %v5084
    %v5893 = vpack.c.b16 %v5093, %v5085
    %v5894 = vpack.c.b16 %v5102, %v5094
    %v5895 = vpack.c.b16 %v5103, %v5095
    %v5896 = vpack.c.b16 %v5104, %v5096
    %v5897 = vpack.c.b16 %v5105, %v5097
    %v5898 = vpack.c.b16 %v5106, %v5098
    %v5899 = vpack.c.b16 %v5107, %v5099
    %v5900 = vpack.c.b16 %v5108, %v5100
    %v5901 = vpack.c.b16 %v5109, %v5101
    %v5902 = vpack.c.b16 %v5118, %v5110
    %v5903 = vpack.c.b16 %v5119, %v5111
    %v5904 = vpack.c.b16 %v5120, %v5112
    %v5905 = vpack.c.b16 %v5121, %v5113
    %v5906 = vpack.c.b16 %v5122, %v5114
    %v5907 = vpack.c.b16 %v5123, %v5115
    %v5908 = vpack.c.b16 %v5124, %v5116
    %v5909 = vpack.c.b16 %v5125, %v5117
    %v5910 = vpack.c.b16 %v5134, %v5126
    %v5911 = vpack.c.b16 %v5135, %v5127
    %v5912 = vpack.c.b16 %v5136, %v5128
    %v5913 = vpack.c.b16 %v5137, %v5129
    %v5914 = vpack.c.b16 %v5138, %v5130
    %v5915 = vpack.c.b16 %v5139, %v5131
    %v5916 = vpack.c.b16 %v5140, %v5132
    %v5917 = vpack.c.b16 %v5141, %v5133
    %v5918 = vpack.c.b16 %v5150, %v5142
    %v5919 = vpack.c.b16 %v5151, %v5143
    %v5920 = vpack.c.b16 %v5152, %v5144
    %v5921 = vpack.c.b16 %v5153, %v5145
    %v5922 = vpack.c.b16 %v5154, %v5146
    %v5923 = vpack.c.b16 %v5155, %v5147
    %v5924 = vpack.c.b16 %v5156, %v5148
    %v5925 = vpack.c.b16 %v5157, %v5149
    %v5926 = vpack.c.b16 %v5166, %v5158
    %v5927 = vpack.c.b16 %v5167, %v5159
    %v5928 = vpack.c.b16 %v5168, %v5160
    %v5929 = vpack.c.b16 %v5169, %v5161
    %v5930 = vpack.c.b16 %v5170, %v5162
    %v5931 = vpack.c.b16 %v5171, %v5163
    %v5932 = vpack.c.b16 %v5172, %v5164
    %v5933 = vpack.c.b16 %v5173, %v5165
    %v5934 = vpack.c.b16 %v5182, %v5174
    %v5935 = vpack.c.b16 %v5183, %v5175
    %v5936 = vpack.c.b16 %v5184, %v5176
    %v5937 = vpack.c.b16 %v5185, %v5177
    %v5938 = vpack.c.b16 %v5186, %v5178
    %v5939 = vpack.c.b16 %v5187, %v5179
    %v5940 = vpack.c.b16 %v5188, %v5180
    %v5941 = vpack.c.b16 %v5189, %v5181
    %v5942 = vpack.c.b16 %v5198, %v5190
    %v5943 = vpack.c.b16 %v5199, %v5191
    %v5944 = vpack.c.b16 %v5200, %v5192
    %v5945 = vpack.c.b16 %v5201, %v5193
    %v5946 = vpack.c.b16 %v5202, %v5194
    %v5947 = vpack.c.b16 %v5203, %v5195
    %v5948 = vpack.c.b16 %v5204, %v5196
    %v5949 = vpack.c.b16 %v5205, %v5197
    %v5950 = vpack.c.b16 %v5214, %v5206
    %v5951 = vpack.c.b16 %v5215, %v5207
    %v5952 = vpack.c.b16 %v5216, %v5208
    %v5953 = vpack.c.b16 %v5217, %v5209
    %v5954 = vpack.c.b16 %v5218, %v5210
    %v5955 = vpack.c.b16 %v5219, %v5211
    %v5956 = vpack.c.b16 %v5220, %v5212
    %v5957 = vpack.c.b16 %v5221, %v5213
    %v5958 = vpack.c.b16 %v5230, %v5222
    %v5959 = vpack.c.b16 %v5231, %v5223
    %v5960 = vpack.c.b16 %v5232, %v5224
    %v5961 = vpack.c.b16 %v5233, %v5225
    %v5962 = vpack.c.b16 %v5234, %v5226
    %v5963 = vpack.c.b16 %v5235, %v5227
    %v5964 = vpack.c.b16 %v5236, %v5228
    %v5965 = vpack.c.b16 %v5237, %v5229
    %v5966 = vpack.c.b16 %v5246, %v5238
    %v5967 = vpack.c.b16 %v5247, %v5239
    %v5968 = vpack.c.b16 %v5248, %v5240
    %v5969 = vpack.c.b16 %v5249, %v5241
    %v5970 = vpack.c.b16 %v5250, %v5242
    %v5971 = vpack.c.b16 %v5251, %v5243
    %v5972 = vpack.c.b16 %v5252, %v5244
    %v5973 = vpack.c.b16 %v5253, %v5245
    %v5974 = vpack.c.b16 %v5262, %v5254
    %v5975 = vpack.c.b16 %v5263, %v5255
    %v5976 = vpack.c.b16 %v5264, %v5256
    %v5977 = vpack.c.b16 %v5265, %v5257
    %v5978 = vpack.c.b16 %v5266, %v5258
    %v5979 = vpack.c.b16 %v5267, %v5259
    %v5980 = vpack.c.b16 %v5268, %v5260
    %v5981 = vpack.c.b16 %v5269, %v5261
    %v5982 = vpack.c.b16 %v5278, %v5270
    %v5983 = vpack.c.b16 %v5279, %v5271
    %v5984 = vpack.c.b16 %v5280, %v5272
    %v5985 = vpack.c.b16 %v5281, %v5273
    %v5986 = vpack.c.b16 %v5282, %v5274
    %v5987 = vpack.c.b16 %v5283, %v5275
    %v5988 = vpack.c.b16 %v5284, %v5276
    %v5989 = vpack.c.b16 %v5285, %v5277
    %v5990 = vpack.c.b16 %v5294, %v5286
    %v5991 = vpack.c.b16 %v5295, %v5287
    %v5992 = vpack.c.b16 %v5296, %v5288
    %v5993 = vpack.c.b16 %v5297, %v5289
    %v5994 = vpack.c.b16 %v5298, %v5290
    %v5995 = vpack.c.b16 %v5299, %v5291
    %v5996 = vpack.c.b16 %v5300, %v5292
    %v5997 = vpack.c.b16 %v5301, %v5293
    %v5998 = vpack.c.b16 %v5310, %v5302
    %v5999 = vpack.c.b16 %v5311, %v5303
    %v6000 = vpack.c.b16 %v5312, %v5304
    %v6001 = vpack.c.b16 %v5313, %v5305
    %v6002 = vpack.c.b16 %v5314, %v5306
    %v6003 = vpack.c.b16 %v5315, %v5307
    %v6004 = vpack.c.b16 %v5316, %v5308
    %v6005 = vpack.c.b16 %v5317, %v5309
    %v6006 = vpack.c.b16 %v5326, %v5318
    %v6007 = vpack.c.b16 %v5327, %v5319
    %v6008 = vpack.c.b16 %v5328, %v5320
    %v6009 = vpack.c.b16 %v5329, %v5321
    %v6010 = vpack.c.b16 %v5330, %v5322
    %v6011 = vpack.c.b16 %v5331, %v5323
    %v6012 = vpack.c.b16 %v5332, %v5324
    %v6013 = vpack.c.b16 %v5333, %v5325
    %v6014 = vpack.c.b16 %v5342, %v5334
    %v6015 = vpack.c.b16 %v5343, %v5335
    %v6016 = vpack.c.b16 %v5344, %v5336
    %v6017 = vpack.c.b16 %v5345, %v5337
    %v6018 = vpack.c.b16 %v5346, %v5338
    %v6019 = vpack.c.b16 %v5347, %v5339
    %v6020 = vpack.c.b16 %v5348, %v5340
    %v6021 = vpack.c.b16 %v5349, %v5341
    %v6022 = vpack.c.b16 %v5358, %v5350
    %v6023 = vpack.c.b16 %v5359, %v5351
    %v6024 = vpack.c.b16 %v5360, %v5352
    %v6025 = vpack.c.b16 %v5361, %v5353
    %v6026 = vpack.c.b16 %v5362, %v5354
    %v6027 = vpack.c.b16 %v5363, %v5355
    %v6028 = vpack.c.b16 %v5364, %v5356
    %v6029 = vpack.c.b16 %v5365, %v5357
    %v6030 = vpack.c.b16 %v5374, %v5366
    %v6031 = vpack.c.b16 %v5375, %v5367
    %v6032 = vpack.c.b16 %v5376, %v5368
    %v6033 = vpack.c.b16 %v5377, %v5369
    %v6034 = vpack.c.b16 %v5378, %v5370
    %v6035 = vpack.c.b16 %v5379, %v5371
    %v6036 = vpack.c.b16 %v5380, %v5372
    %v6037 = vpack.c.b16 %v5381, %v5373
    %v6038 = vpack.c.b16 %v5390, %v5382
    %v6039 = vpack.c.b16 %v5391, %v5383
    %v6040 = vpack.c.b16 %v5392, %v5384
    %v6041 = vpack.c.b16 %v5393, %v5385
    %v6042 = vpack.c.b16 %v5394, %v5386
    %v6043 = vpack.c.b16 %v5395, %v5387
    %v6044 = vpack.c.b16 %v5396, %v5388
    %v6045 = vpack.c.b16 %v5397, %v5389
    %v6046 = vpack.c.b16 %v5406, %v5398
    %v6047 = vpack.c.b16 %v5407, %v5399
    %v6048 = vpack.c.b16 %v5408, %v5400
    %v6049 = vpack.c.b16 %v5409, %v5401
    %v6050 = vpack.c.b16 %v5410, %v5402
    %v6051 = vpack.c.b16 %v5411, %v5403
    %v6052 = vpack.c.b16 %v5412, %v5404
    %v6053 = vpack.c.b16 %v5413, %v5405
    %v6054 = vpack.c.b16 %v5422, %v5414
    %v6055 = vpack.c.b16 %v5423, %v5415
    %v6056 = vpack.c.b16 %v5424, %v5416
    %v6057 = vpack.c.b16 %v5425, %v5417
    %v6058 = vpack.c.b16 %v5426, %v5418
    %v6059 = vpack.c.b16 %v5427, %v5419
    %v6060 = vpack.c.b16 %v5428, %v5420
    %v6061 = vpack.c.b16 %v5429, %v5421
    %v6062 = vpack.c.b16 %v5438, %v5430
    %v6063 = vpack.c.b16 %v5439, %v5431
    %v6064 = vpack.c.b16 %v5440, %v5432
    %v6065 = vpack.c.b16 %v5441, %v5433
    %v6066 = vpack.c.b16 %v5442, %v5434
    %v6067 = vpack.c.b16 %v5443, %v5435
    %v6068 = vpack.c.b16 %v5444, %v5436
    %v6069 = vpack.c.b16 %v5445, %v5437
    %v6070 = vpack.c.b16 %v5454, %v5446
    %v6071 = vpack.c.b16 %v5455, %v5447
    %v6072 = vpack.c.b16 %v5456, %v5448
    %v6073 = vpack.c.b16 %v5457, %v5449
    %v6074 = vpack.c.b16 %v5458, %v5450
    %v6075 = vpack.c.b16 %v5459, %v5451
    %v6076 = vpack.c.b16 %v5460, %v5452
    %v6077 = vpack.c.b16 %v5461, %v5453
    %v6078 = vpack.c.b16 %v5470, %v5462
    %v6079 = vpack.c.b16 %v5471, %v5463
    %v6080 = vpack.c.b16 %v5472, %v5464
    %v6081 = vpack.c.b16 %v5473, %v5465
    %v6082 = vpack.c.b16 %v5474, %v5466
    %v6083 = vpack.c.b16 %v5475, %v5467
    %v6084 = vpack.c.b16 %v5476, %v5468
    %v6085 = vpack.c.b16 %v5477, %v5469
    %v6086 = vpack.c.b16 %v5486, %v5478
    %v6087 = vpack.c.b16 %v5487, %v5479
    %v6088 = vpack.c.b16 %v5488, %v5480
    %v6089 = vpack.c.b16 %v5489, %v5481
    %v6090 = vpack.c.b16 %v5490, %v5482
    %v6091 = vpack.c.b16 %v5491, %v5483
    %v6092 = vpack.c.b16 %v5492, %v5484
    %v6093 = vpack.c.b16 %v5493, %v5485
    %v6094 = vpack.c.b16 %v5502, %v5494
    %v6095 = vpack.c.b16 %v5503, %v5495
    %v6096 = vpack.c.b16 %v5504, %v5496
    %v6097 = vpack.c.b16 %v5505, %v5497
    %v6098 = vpack.c.b16 %v5506, %v5498
    %v6099 = vpack.c.b16 %v5507, %v5499
    %v6100 = vpack.c.b16 %v5508, %v5500
    %v6101 = vpack.c.b16 %v5509, %v5501
    %v6102 = vpack.c.b16 %v5518, %v5510
    %v6103 = vpack.c.b16 %v5519, %v5511
    %v6104 = vpack.c.b16 %v5520, %v5512
    %v6105 = vpack.c.b16 %v5521, %v5513
    %v6106 = vpack.c.b16 %v5522, %v5514
    %v6107 = vpack.c.b16 %v5523, %v5515
    %v6108 = vpack.c.b16 %v5524, %v5516
    %v6109 = vpack.c.b16 %v5525, %v5517
    %v6110 = vpack.c.b16 %v5534, %v5526
    %v6111 = vpack.c.b16 %v5535, %v5527
    %v6112 = vpack.c.b16 %v5536, %v5528
    %v6113 = vpack.c.b16 %v5537, %v5529
    %v6114 = vpack.c.b16 %v5538, %v5530
    %v6115 = vpack.c.b16 %v5539, %v5531
    %v6116 = vpack.c.b16 %v5540, %v5532
    %v6117 = vpack.c.b16 %v5541, %v5533
    %v6118 = vpack.c.b16 %v5550, %v5542
    %v6119 = vpack.c.b16 %v5551, %v5543
    %v6120 = vpack.c.b16 %v5552, %v5544
    %v6121 = vpack.c.b16 %v5553, %v5545
    %v6122 = vpack.c.b16 %v5554, %v5546
    %v6123 = vpack.c.b16 %v5555, %v5547
    %v6124 = vpack.c.b16 %v5556, %v5548
    %v6125 = vpack.c.b16 %v5557, %v5549
    %v6126 = vpack.c.b16 %v5566, %v5558
    %v6127 = vpack.c.b16 %v5567, %v5559
    %v6128 = vpack.c.b16 %v5568, %v5560
    %v6129 = vpack.c.b16 %v5569, %v5561
    %v6130 = vpack.c.b16 %v5570, %v5562
    %v6131 = vpack.c.b16 %v5571, %v5563
    %v6132 = vpack.c.b16 %v5572, %v5564
    %v6133 = vpack.c.b16 %v5573, %v5565
    %v6134 = vpack.c.b16 %v5582, %v5574
    %v6135 = vpack.c.b16 %v5583, %v5575
    %v6136 = vpack.c.b16 %v5584, %v5576
    %v6137 = vpack.c.b16 %v5585, %v5577
    %v6138 = vpack.c.b16 %v5586, %v5578
    %v6139 = vpack.c.b16 %v5587, %v5579
    %v6140 = vpack.c.b16 %v5588, %v5580
    %v6141 = vpack.c.b16 %v5589, %v5581
    %v6142 = vpack.c.b16 %v5598, %v5590
    %v6143 = vpack.c.b16 %v5599, %v5591
    %v6144 = vpack.c.b16 %v5600, %v5592
    %v6145 = vpack.c.b16 %v5601, %v5593
    %v6146 = vpack.c.b16 %v5602, %v5594
    %v6147 = vpack.c.b16 %v5603, %v5595
    %v6148 = vpack.c.b16 %v5604, %v5596
    %v6149 = vpack.c.b16 %v5605, %v5597
    %v6150 = vpack.c.b16 %v5614, %v5606
    %v6151 = vpack.c.b16 %v5615, %v5607
    %v6152 = vpack.c.b16 %v5616, %v5608
    %v6153 = vpack.c.b16 %v5617, %v5609
    %v6154 = vpack.c.b16 %v5618, %v5610
    %v6155 = vpack.c.b16 %v5619, %v5611
    %v6156 = vpack.c.b16 %v5620, %v5612
    %v6157 = vpack.c.b16 %v5621, %v5613
    %v6158 = vpack.c.b16 %v5630, %v5622
    %v6159 = vpack.c.b16 %v5631, %v5623
    %v6160 = vpack.c.b16 %v5632, %v5624
    %v6161 = vpack.c.b16 %v5633, %v5625
    %v6162 = vpack.c.b16 %v5634, %v5626
    %v6163 = vpack.c.b16 %v5635, %v5627
    %v6164 = vpack.c.b16 %v5636, %v5628
    %v6165 = vpack.c.b16 %v5637, %v5629
    %v6166 = vpack.c.b16 %v5646, %v5638
    %v6167 = vpack.c.b16 %v5647, %v5639
    %v6168 = vpack.c.b16 %v5648, %v5640
    %v6169 = vpack.c.b16 %v5649, %v5641
    %v6170 = vpack.c.b16 %v5650, %v5642
    %v6171 = vpack.c.b16 %v5651, %v5643
    %v6172 = vpack.c.b16 %v5652, %v5644
    %v6173 = vpack.c.b16 %v5653, %v5645
    %v6174 = vpack.c.b16 %v5662, %v5654
    %v6175 = vpack.c.b16 %v5663, %v5655
    %v6176 = vpack.c.b16 %v5664, %v5656
    %v6177 = vpack.c.b16 %v5665, %v5657
    %v6178 = vpack.c.b16 %v5666, %v5658
    %v6179 = vpack.c.b16 %v5667, %v5659
    %v6180 = vpack.c.b16 %v5668, %v5660
    %v6181 = vpack.c.b16 %v5669, %v5661
    %6694 = vmatprep.subr.bf16.mxu0 %v5671
    %6695 = vmatpush1.bf16.msra.mxu0 %v5670
    %6696 = vmatprep.subr.bf16.mxu0 %v5679
    %6697 = vmatpush1.bf16.msra.mxu0 %v5678
    %6698 = vmatprep.subr.bf16.mxu0 %v5687
    %6699 = vmatpush1.bf16.msra.mxu0 %v5686
    %6700 = vmatprep.subr.bf16.mxu0 %v5695
    %6701 = vmatpush1.bf16.msra.mxu0 %v5694
    %6702 = vmatprep.subr.bf16.mxu0 %v5703
    %6703 = vmatpush1.bf16.msra.mxu0 %v5702
    %6704 = vmatprep.subr.bf16.mxu0 %v5711
    %6705 = vmatpush1.bf16.msra.mxu0 %v5710
    %6706 = vmatprep.subr.bf16.mxu0 %v5719
    %6707 = vmatpush1.bf16.msra.mxu0 %v5718
    %6708 = vmatprep.subr.bf16.mxu0 %v5727
    %6709 = vmatpush1.bf16.msra.mxu0 %v5726
    %6710 = vmatprep.subr.bf16.mxu0 %v5735
    %6711 = vmatpush1.bf16.msra.mxu0 %v5734
    %6712 = vmatprep.subr.bf16.mxu0 %v5743
    %6713 = vmatpush1.bf16.msra.mxu0 %v5742
    %6714 = vmatprep.subr.bf16.mxu0 %v5751
    %6715 = vmatpush1.bf16.msra.mxu0 %v5750
    %6716 = vmatprep.subr.bf16.mxu0 %v5759
    %6717 = vmatpush1.bf16.msra.mxu0 %v5758
    %6718 = vmatprep.subr.bf16.mxu0 %v5767
    %6719 = vmatpush1.bf16.msra.mxu0 %v5766
    %6720 = vmatprep.subr.bf16.mxu0 %v5775
    %6721 = vmatpush1.bf16.msra.mxu0 %v5774
    %6722 = vmatprep.subr.bf16.mxu0 %v5783
    %6723 = vmatpush1.bf16.msra.mxu0 %v5782
    %6724 = vmatprep.subr.bf16.mxu0 %v5791
    %6725 = vmatpush1.bf16.msra.mxu0 %v5790
    %6726 = vmatprep.mubr.bf16.mxu0 %v3573
    %6727 = vmatmul.mubr.bf16.gmra.mrb[0].mxu0 %v3572
    %v6728 = vpop.f32.mrb[0].mxu0
    %v6729 = vadd.f32 %v4097, %v6728
    %v6730 = vpop.f32.mrb[0].mxu0
    %v6731 = vadd.f32 %v4101, %v6730
    %v6732 = vpop.f32.mrb[0].mxu0
    %v6733 = vadd.f32 %v4097, %v6732
    %v6734 = vpop.f32.mrb[0].mxu0
    %v6735 = vadd.f32 %v4101, %v6734
    %6736 = vdwg.mxu0
    %6737 = vmatprep.subr.bf16.mxu0 %v5799
    %6738 = vmatpush1.bf16.msra.mxu0 %v5798
    %6739 = vmatprep.subr.bf16.mxu0 %v5807
    %6740 = vmatpush1.bf16.msra.mxu0 %v5806
    %6741 = vmatprep.subr.bf16.mxu0 %v5815
    %6742 = vmatpush1.bf16.msra.mxu0 %v5814
    %6743 = vmatprep.subr.bf16.mxu0 %v5823
    %6744 = vmatpush1.bf16.msra.mxu0 %v5822
    %6745 = vmatprep.subr.bf16.mxu0 %v5831
    %6746 = vmatpush1.bf16.msra.mxu0 %v5830
    %6747 = vmatprep.subr.bf16.mxu0 %v5839
    %6748 = vmatpush1.bf16.msra.mxu0 %v5838
    %6749 = vmatprep.subr.bf16.mxu0 %v5847
    %6750 = vmatpush1.bf16.msra.mxu0 %v5846
    %6751 = vmatprep.subr.bf16.mxu0 %v5855
    %6752 = vmatpush1.bf16.msra.mxu0 %v5854
    %6753 = vmatprep.subr.bf16.mxu0 %v5863
    %6754 = vmatpush1.bf16.msra.mxu0 %v5862
    %6755 = vmatprep.subr.bf16.mxu0 %v5871
    %6756 = vmatpush1.bf16.msra.mxu0 %v5870
    %6757 = vmatprep.subr.bf16.mxu0 %v5879
    %6758 = vmatpush1.bf16.msra.mxu0 %v5878
    %6759 = vmatprep.subr.bf16.mxu0 %v5887
    %6760 = vmatpush1.bf16.msra.mxu0 %v5886
    %6761 = vmatprep.subr.bf16.mxu0 %v5895
    %6762 = vmatpush1.bf16.msra.mxu0 %v5894
    %6763 = vmatprep.subr.bf16.mxu0 %v5903
    %6764 = vmatpush1.bf16.msra.mxu0 %v5902
    %6765 = vmatprep.subr.bf16.mxu0 %v5911
    %6766 = vmatpush1.bf16.msra.mxu0 %v5910
    %6767 = vmatprep.subr.bf16.mxu0 %v5919
    %6768 = vmatpush1.bf16.msra.mxu0 %v5918
    %6769 = vmatprep.mubr.bf16.mxu0 %v3575
    %6770 = vmatmul.mubr.bf16.gmra.mrb[0].mxu0 %v3574
    %v6771 = vpop.f32.mrb[0].mxu0
    %v6772 = vadd.f32 %v6729, %v6771
    %v6773 = vpop.f32.mrb[0].mxu0
    %v6774 = vadd.f32 %v6731, %v6773
    %v6775 = vpop.f32.mrb[0].mxu0
    %v6776 = vadd.f32 %v6733, %v6775
    %v6777 = vpop.f32.mrb[0].mxu0
    %v6778 = vadd.f32 %v6735, %v6777
    %6779 = vdwg.mxu0
    %6780 = vmatprep.subr.bf16.mxu0 %v5927
    %6781 = vmatpush1.bf16.msra.mxu0 %v5926
    %6782 = vmatprep.subr.bf16.mxu0 %v5935
    %6783 = vmatpush1.bf16.msra.mxu0 %v5934
    %6784 = vmatprep.subr.bf16.mxu0 %v5943
    %6785 = vmatpush1.bf16.msra.mxu0 %v5942
    %6786 = vmatprep.subr.bf16.mxu0 %v5951
    %6787 = vmatpush1.bf16.msra.mxu0 %v5950
    %6788 = vmatprep.subr.bf16.mxu0 %v5959
    %6789 = vmatpush1.bf16.msra.mxu0 %v5958
    %6790 = vmatprep.subr.bf16.mxu0 %v5967
    %6791 = vmatpush1.bf16.msra.mxu0 %v5966
    %6792 = vmatprep.subr.bf16.mxu0 %v5975
    %6793 = vmatpush1.bf16.msra.mxu0 %v5974
    %6794 = vmatprep.subr.bf16.mxu0 %v5983
    %6795 = vmatpush1.bf16.msra.mxu0 %v5982
    %6796 = vmatprep.subr.bf16.mxu0 %v5991
    %6797 = vmatpush1.bf16.msra.mxu0 %v5990
    %6798 = vmatprep.subr.bf16.mxu0 %v5999
    %6799 = vmatpush1.bf16.msra.mxu0 %v5998
    %6800 = vmatprep.subr.bf16.mxu0 %v6007
    %6801 = vmatpush1.bf16.msra.mxu0 %v6006
    %6802 = vmatprep.subr.bf16.mxu0 %v6015
    %6803 = vmatpush1.bf16.msra.mxu0 %v6014
    %6804 = vmatprep.subr.bf16.mxu0 %v6023
    %6805 = vmatpush1.bf16.msra.mxu0 %v6022
    %6806 = vmatprep.subr.bf16.mxu0 %v6031
    %6807 = vmatpush1.bf16.msra.mxu0 %v6030
    %6808 = vmatprep.subr.bf16.mxu0 %v6039
    %6809 = vmatpush1.bf16.msra.mxu0 %v6038
    %6810 = vmatprep.subr.bf16.mxu0 %v6047
    %6811 = vmatpush1.bf16.msra.mxu0 %v6046
    %6812 = vmatprep.mubr.bf16.mxu0 %v3577
    %6813 = vmatmul.mubr.bf16.gmra.mrb[0].mxu0 %v3576
    %v6814 = vpop.f32.mrb[0].mxu0
    %v6815 = vadd.f32 %v6772, %v6814
    %v6816 = vpop.f32.mrb[0].mxu0
    %v6817 = vadd.f32 %v6774, %v6816
    %v6818 = vpop.f32.mrb[0].mxu0
    %v6819 = vadd.f32 %v6776, %v6818
    %v6820 = vpop.f32.mrb[0].mxu0
    %v6821 = vadd.f32 %v6778, %v6820
    %6822 = vdwg.mxu0
    %6823 = vmatprep.subr.bf16.mxu0 %v6055
    %6824 = vmatpush1.bf16.msra.mxu0 %v6054
    %6825 = vmatprep.subr.bf16.mxu0 %v6063
    %6826 = vmatpush1.bf16.msra.mxu0 %v6062
    %6827 = vmatprep.subr.bf16.mxu0 %v6071
    %6828 = vmatpush1.bf16.msra.mxu0 %v6070
    %6829 = vmatprep.subr.bf16.mxu0 %v6079
    %6830 = vmatpush1.bf16.msra.mxu0 %v6078
    %6831 = vmatprep.subr.bf16.mxu0 %v6087
    %6832 = vmatpush1.bf16.msra.mxu0 %v6086
    %6833 = vmatprep.subr.bf16.mxu0 %v6095
    %6834 = vmatpush1.bf16.msra.mxu0 %v6094
    %6835 = vmatprep.subr.bf16.mxu0 %v6103
    %6836 = vmatpush1.bf16.msra.mxu0 %v6102
    %6837 = vmatprep.subr.bf16.mxu0 %v6111
    %6838 = vmatpush1.bf16.msra.mxu0 %v6110
    %6839 = vmatprep.subr.bf16.mxu0 %v6119
    %6840 = vmatpush1.bf16.msra.mxu0 %v6118
    %6841 = vmatprep.subr.bf16.mxu0 %v6127
    %6842 = vmatpush1.bf16.msra.mxu0 %v6126
    %6843 = vmatprep.subr.bf16.mxu0 %v6135
    %6844 = vmatpush1.bf16.msra.mxu0 %v6134
    %6845 = vmatprep.subr.bf16.mxu0 %v6143
    %6846 = vmatpush1.bf16.msra.mxu0 %v6142
    %6847 = vmatprep.subr.bf16.mxu0 %v6151
    %6848 = vmatpush1.bf16.msra.mxu0 %v6150
    %6849 = vmatprep.subr.bf16.mxu0 %v6159
    %6850 = vmatpush1.bf16.msra.mxu0 %v6158
    %6851 = vmatprep.subr.bf16.mxu0 %v6167
    %6852 = vmatpush1.bf16.msra.mxu0 %v6166
    %6853 = vmatprep.subr.bf16.mxu0 %v6175
    %6854 = vmatpush1.bf16.msra.mxu0 %v6174
    %6855 = vmatprep.mubr.bf16.mxu0 %v3579
    %6856 = vmatmul.mubr.bf16.gmra.mrb[0].mxu0 %v3578
    %v6857 = vpop.f32.mrb[0].mxu0
    %v6858 = vadd.f32 %v6815, %v6857
    %v6859 = vpop.f32.mrb[0].mxu0
    %v6860 = vadd.f32 %v6817, %v6859
    %v6861 = vpop.f32.mrb[0].mxu0
    %v6862 = vadd.f32 %v6819, %v6861
    %v6863 = vpop.f32.mrb[0].mxu0
    %v6864 = vadd.f32 %v6821, %v6863
    %6865 = vdwg.mxu0
    %6866 = vmatprep.subr.bf16.mxu0 %v5673
    %6867 = vmatpush1.bf16.msra.mxu0 %v5672
    %6868 = vmatprep.subr.bf16.mxu0 %v5681
    %6869 = vmatpush1.bf16.msra.mxu0 %v5680
    %6870 = vmatprep.subr.bf16.mxu0 %v5689
    %6871 = vmatpush1.bf16.msra.mxu0 %v5688
    %6872 = vmatprep.subr.bf16.mxu0 %v5697
    %6873 = vmatpush1.bf16.msra.mxu0 %v5696
    %6874 = vmatprep.subr.bf16.mxu0 %v5705
    %6875 = vmatpush1.bf16.msra.mxu0 %v5704
    %6876 = vmatprep.subr.bf16.mxu0 %v5713
    %6877 = vmatpush1.bf16.msra.mxu0 %v5712
    %6878 = vmatprep.subr.bf16.mxu0 %v5721
    %6879 = vmatpush1.bf16.msra.mxu0 %v5720
    %6880 = vmatprep.subr.bf16.mxu0 %v5729
    %6881 = vmatpush1.bf16.msra.mxu0 %v5728
    %6882 = vmatprep.subr.bf16.mxu0 %v5737
    %6883 = vmatpush1.bf16.msra.mxu0 %v5736
    %6884 = vmatprep.subr.bf16.mxu0 %v5745
    %6885 = vmatpush1.bf16.msra.mxu0 %v5744
    %6886 = vmatprep.subr.bf16.mxu0 %v5753
    %6887 = vmatpush1.bf16.msra.mxu0 %v5752
    %6888 = vmatprep.subr.bf16.mxu0 %v5761
    %6889 = vmatpush1.bf16.msra.mxu0 %v5760
    %6890 = vmatprep.subr.bf16.mxu0 %v5769
    %6891 = vmatpush1.bf16.msra.mxu0 %v5768
    %6892 = vmatprep.subr.bf16.mxu0 %v5777
    %6893 = vmatpush1.bf16.msra.mxu0 %v5776
    %6894 = vmatprep.subr.bf16.mxu0 %v5785
    %6895 = vmatpush1.bf16.msra.mxu0 %v5784
    %6896 = vmatprep.subr.bf16.mxu0 %v5793
    %6897 = vmatpush1.bf16.msra.mxu0 %v5792
    %6898 = vmatprep.mubr.bf16.mxu0 %v3573
    %6899 = vmatmul.mubr.bf16.gmra.mrb[0].mxu0 %v3572
    %v6900 = vpop.f32.mrb[0].mxu0
    %v6901 = vadd.f32 %v4105, %v6900
    %v6902 = vpop.f32.mrb[0].mxu0
    %v6903 = vadd.f32 %v4109, %v6902
    %v6904 = vpop.f32.mrb[0].mxu0
    %v6905 = vadd.f32 %v4105, %v6904
    %v6906 = vpop.f32.mrb[0].mxu0
    %v6907 = vadd.f32 %v4109, %v6906
    %6908 = vdwg.mxu0
    %6909 = vmatprep.subr.bf16.mxu0 %v5801
    %6910 = vmatpush1.bf16.msra.mxu0 %v5800
    %6911 = vmatprep.subr.bf16.mxu0 %v5809
    %6912 = vmatpush1.bf16.msra.mxu0 %v5808
    %6913 = vmatprep.subr.bf16.mxu0 %v5817
    %6914 = vmatpush1.bf16.msra.mxu0 %v5816
    %6915 = vmatprep.subr.bf16.mxu0 %v5825
    %6916 = vmatpush1.bf16.msra.mxu0 %v5824
    %6917 = vmatprep.subr.bf16.mxu0 %v5833
    %6918 = vmatpush1.bf16.msra.mxu0 %v5832
    %6919 = vmatprep.subr.bf16.mxu0 %v5841
    %6920 = vmatpush1.bf16.msra.mxu0 %v5840
    %6921 = vmatprep.subr.bf16.mxu0 %v5849
    %6922 = vmatpush1.bf16.msra.mxu0 %v5848
    %6923 = vmatprep.subr.bf16.mxu0 %v5857
    %6924 = vmatpush1.bf16.msra.mxu0 %v5856
    %6925 = vmatprep.subr.bf16.mxu0 %v5865
    %6926 = vmatpush1.bf16.msra.mxu0 %v5864
    %6927 = vmatprep.subr.bf16.mxu0 %v5873
    %6928 = vmatpush1.bf16.msra.mxu0 %v5872
    %6929 = vmatprep.subr.bf16.mxu0 %v5881
    %6930 = vmatpush1.bf16.msra.mxu0 %v5880
    %6931 = vmatprep.subr.bf16.mxu0 %v5889
    %6932 = vmatpush1.bf16.msra.mxu0 %v5888
    %6933 = vmatprep.subr.bf16.mxu0 %v5897
    %6934 = vmatpush1.bf16.msra.mxu0 %v5896
    %6935 = vmatprep.subr.bf16.mxu0 %v5905
    %6936 = vmatpush1.bf16.msra.mxu0 %v5904
    %6937 = vmatprep.subr.bf16.mxu0 %v5913
    %6938 = vmatpush1.bf16.msra.mxu0 %v5912
    %6939 = vmatprep.subr.bf16.mxu0 %v5921
    %6940 = vmatpush1.bf16.msra.mxu0 %v5920
    %6941 = vmatprep.mubr.bf16.mxu0 %v3575
    %6942 = vmatmul.mubr.bf16.gmra.mrb[0].mxu0 %v3574
    %v6943 = vpop.f32.mrb[0].mxu0
    %v6944 = vadd.f32 %v6901, %v6943
    %v6945 = vpop.f32.mrb[0].mxu0
    %v6946 = vadd.f32 %v6903, %v6945
    %v6947 = vpop.f32.mrb[0].mxu0
    %v6948 = vadd.f32 %v6905, %v6947
    %v6949 = vpop.f32.mrb[0].mxu0
    %v6950 = vadd.f32 %v6907, %v6949
    %6951 = vdwg.mxu0
    %6952 = vmatprep.subr.bf16.mxu0 %v5929
    %6953 = vmatpush1.bf16.msra.mxu0 %v5928
    %6954 = vmatprep.subr.bf16.mxu0 %v5937
    %6955 = vmatpush1.bf16.msra.mxu0 %v5936
    %6956 = vmatprep.subr.bf16.mxu0 %v5945
    %6957 = vmatpush1.bf16.msra.mxu0 %v5944
    %6958 = vmatprep.subr.bf16.mxu0 %v5953
    %6959 = vmatpush1.bf16.msra.mxu0 %v5952
    %6960 = vmatprep.subr.bf16.mxu0 %v5961
    %6961 = vmatpush1.bf16.msra.mxu0 %v5960
    %6962 = vmatprep.subr.bf16.mxu0 %v5969
    %6963 = vmatpush1.bf16.msra.mxu0 %v5968
    %6964 = vmatprep.subr.bf16.mxu0 %v5977
    %6965 = vmatpush1.bf16.msra.mxu0 %v5976
    %6966 = vmatprep.subr.bf16.mxu0 %v5985
    %6967 = vmatpush1.bf16.msra.mxu0 %v5984
    %6968 = vmatprep.subr.bf16.mxu0 %v5993
    %6969 = vmatpush1.bf16.msra.mxu0 %v5992
    %6970 = vmatprep.subr.bf16.mxu0 %v6001
    %6971 = vmatpush1.bf16.msra.mxu0 %v6000
    %6972 = vmatprep.subr.bf16.mxu0 %v6009
    %6973 = vmatpush1.bf16.msra.mxu0 %v6008
    %6974 = vmatprep.subr.bf16.mxu0 %v6017
    %6975 = vmatpush1.bf16.msra.mxu0 %v6016
    %6976 = vmatprep.subr.bf16.mxu0 %v6025
    %6977 = vmatpush1.bf16.msra.mxu0 %v6024
    %6978 = vmatprep.subr.bf16.mxu0 %v6033
    %6979 = vmatpush1.bf16.msra.mxu0 %v6032
    %6980 = vmatprep.subr.bf16.mxu0 %v6041
    %6981 = vmatpush1.bf16.msra.mxu0 %v6040
    %6982 = vmatprep.subr.bf16.mxu0 %v6049
    %6983 = vmatpush1.bf16.msra.mxu0 %v6048
    %6984 = vmatprep.mubr.bf16.mxu0 %v3577
    %6985 = vmatmul.mubr.bf16.gmra.mrb[0].mxu0 %v3576
    %v6986 = vpop.f32.mrb[0].mxu0
    %v6987 = vadd.f32 %v6944, %v6986
    %v6988 = vpop.f32.mrb[0].mxu0
    %v6989 = vadd.f32 %v6946, %v6988
    %v6990 = vpop.f32.mrb[0].mxu0
    %v6991 = vadd.f32 %v6948, %v6990
    %v6992 = vpop.f32.mrb[0].mxu0
    %v6993 = vadd.f32 %v6950, %v6992
    %6994 = vdwg.mxu0
    %6995 = vmatprep.subr.bf16.mxu0 %v6057
    %6996 = vmatpush1.bf16.msra.mxu0 %v6056
    %6997 = vmatprep.subr.bf16.mxu0 %v6065
    %6998 = vmatpush1.bf16.msra.mxu0 %v6064
    %6999 = vmatprep.subr.bf16.mxu0 %v6073
    %7000 = vmatpush1.bf16.msra.mxu0 %v6072
    %7001 = vmatprep.subr.bf16.mxu0 %v6081
    %7002 = vmatpush1.bf16.msra.mxu0 %v6080
    %7003 = vmatprep.subr.bf16.mxu0 %v6089
    %7004 = vmatpush1.bf16.msra.mxu0 %v6088
    %7005 = vmatprep.subr.bf16.mxu0 %v6097
    %7006 = vmatpush1.bf16.msra.mxu0 %v6096
    %7007 = vmatprep.subr.bf16.mxu0 %v6105
    %7008 = vmatpush1.bf16.msra.mxu0 %v6104
    %7009 = vmatprep.subr.bf16.mxu0 %v6113
    %7010 = vmatpush1.bf16.msra.mxu0 %v6112
    %7011 = vmatprep.subr.bf16.mxu0 %v6121
    %7012 = vmatpush1.bf16.msra.mxu0 %v6120
    %7013 = vmatprep.subr.bf16.mxu0 %v6129
    %7014 = vmatpush1.bf16.msra.mxu0 %v6128
    %7015 = vmatprep.subr.bf16.mxu0 %v6137
    %7016 = vmatpush1.bf16.msra.mxu0 %v6136
    %7017 = vmatprep.subr.bf16.mxu0 %v6145
    %7018 = vmatpush1.bf16.msra.mxu0 %v6144
    %7019 = vmatprep.subr.bf16.mxu0 %v6153
    %7020 = vmatpush1.bf16.msra.mxu0 %v6152
    %7021 = vmatprep.subr.bf16.mxu0 %v6161
    %7022 = vmatpush1.bf16.msra.mxu0 %v6160
    %7023 = vmatprep.subr.bf16.mxu0 %v6169
    %7024 = vmatpush1.bf16.msra.mxu0 %v6168
    %7025 = vmatprep.subr.bf16.mxu0 %v6177
    %7026 = vmatpush1.bf16.msra.mxu0 %v6176
    %7027 = vmatprep.mubr.bf16.mxu0 %v3579
    %7028 = vmatmul.mubr.bf16.gmra.mrb[0].mxu0 %v3578
    %v7029 = vpop.f32.mrb[0].mxu0
    %v7030 = vadd.f32 %v6987, %v7029
    %v7031 = vpop.f32.mrb[0].mxu0
    %v7032 = vadd.f32 %v6989, %v7031
    %v7033 = vpop.f32.mrb[0].mxu0
    %v7034 = vadd.f32 %v6991, %v7033
    %v7035 = vpop.f32.mrb[0].mxu0
    %v7036 = vadd.f32 %v6993, %v7035
    %7037 = vdwg.mxu0
    %7038 = vmatprep.subr.bf16.mxu0 %v5675
    %7039 = vmatpush1.bf16.msra.mxu0 %v5674
    %7040 = vmatprep.subr.bf16.mxu0 %v5683
    %7041 = vmatpush1.bf16.msra.mxu0 %v5682
    %7042 = vmatprep.subr.bf16.mxu0 %v5691
    %7043 = vmatpush1.bf16.msra.mxu0 %v5690
    %7044 = vmatprep.subr.bf16.mxu0 %v5699
    %7045 = vmatpush1.bf16.msra.mxu0 %v5698
    %7046 = vmatprep.subr.bf16.mxu0 %v5707
    %7047 = vmatpush1.bf16.msra.mxu0 %v5706
    %7048 = vmatprep.subr.bf16.mxu0 %v5715
    %7049 = vmatpush1.bf16.msra.mxu0 %v5714
    %7050 = vmatprep.subr.bf16.mxu0 %v5723
    %7051 = vmatpush1.bf16.msra.mxu0 %v5722
    %7052 = vmatprep.subr.bf16.mxu0 %v5731
    %7053 = vmatpush1.bf16.msra.mxu0 %v5730
    %7054 = vmatprep.subr.bf16.mxu0 %v5739
    %7055 = vmatpush1.bf16.msra.mxu0 %v5738
    %7056 = vmatprep.subr.bf16.mxu0 %v5747
    %7057 = vmatpush1.bf16.msra.mxu0 %v5746
    %7058 = vmatprep.subr.bf16.mxu0 %v5755
    %7059 = vmatpush1.bf16.msra.mxu0 %v5754
    %7060 = vmatprep.subr.bf16.mxu0 %v5763
    %7061 = vmatpush1.bf16.msra.mxu0 %v5762
    %7062 = vmatprep.subr.bf16.mxu0 %v5771
    %7063 = vmatpush1.bf16.msra.mxu0 %v5770
    %7064 = vmatprep.subr.bf16.mxu0 %v5779
    %7065 = vmatpush1.bf16.msra.mxu0 %v5778
    %7066 = vmatprep.subr.bf16.mxu0 %v5787
    %7067 = vmatpush1.bf16.msra.mxu0 %v5786
    %7068 = vmatprep.subr.bf16.mxu0 %v5795
    %7069 = vmatpush1.bf16.msra.mxu0 %v5794
    %7070 = vmatprep.mubr.bf16.mxu0 %v3573
    %7071 = vmatmul.mubr.bf16.gmra.mrb[0].mxu0 %v3572
    %v7072 = vpop.f32.mrb[0].mxu0
    %v7073 = vadd.f32 %v4113, %v7072
    %v7074 = vpop.f32.mrb[0].mxu0
    %v7075 = vadd.f32 %v4117, %v7074
    %v7076 = vpop.f32.mrb[0].mxu0
    %v7077 = vadd.f32 %v4113, %v7076
    %v7078 = vpop.f32.mrb[0].mxu0
    %v7079 = vadd.f32 %v4117, %v7078
    %7080 = vdwg.mxu0
    %7081 = vmatprep.subr.bf16.mxu0 %v5803
    %7082 = vmatpush1.bf16.msra.mxu0 %v5802
    %7083 = vmatprep.subr.bf16.mxu0 %v5811
    %7084 = vmatpush1.bf16.msra.mxu0 %v5810
    %7085 = vmatprep.subr.bf16.mxu0 %v5819
    %7086 = vmatpush1.bf16.msra.mxu0 %v5818
    %7087 = vmatprep.subr.bf16.mxu0 %v5827
    %7088 = vmatpush1.bf16.msra.mxu0 %v5826
    %7089 = vmatprep.subr.bf16.mxu0 %v5835
    %7090 = vmatpush1.bf16.msra.mxu0 %v5834
    %7091 = vmatprep.subr.bf16.mxu0 %v5843
    %7092 = vmatpush1.bf16.msra.mxu0 %v5842
    %7093 = vmatprep.subr.bf16.mxu0 %v5851
    %7094 = vmatpush1.bf16.msra.mxu0 %v5850
    %7095 = vmatprep.subr.bf16.mxu0 %v5859
    %7096 = vmatpush1.bf16.msra.mxu0 %v5858
    %7097 = vmatprep.subr.bf16.mxu0 %v5867
    %7098 = vmatpush1.bf16.msra.mxu0 %v5866
    %7099 = vmatprep.subr.bf16.mxu0 %v5875
    %7100 = vmatpush1.bf16.msra.mxu0 %v5874
    %7101 = vmatprep.subr.bf16.mxu0 %v5883
    %7102 = vmatpush1.bf16.msra.mxu0 %v5882
    %7103 = vmatprep.subr.bf16.mxu0 %v5891
    %7104 = vmatpush1.bf16.msra.mxu0 %v5890
    %7105 = vmatprep.subr.bf16.mxu0 %v5899
    %7106 = vmatpush1.bf16.msra.mxu0 %v5898
    %7107 = vmatprep.subr.bf16.mxu0 %v5907
    %7108 = vmatpush1.bf16.msra.mxu0 %v5906
    %7109 = vmatprep.subr.bf16.mxu0 %v5915
    %7110 = vmatpush1.bf16.msra.mxu0 %v5914
    %7111 = vmatprep.subr.bf16.mxu0 %v5923
    %7112 = vmatpush1.bf16.msra.mxu0 %v5922
    %7113 = vmatprep.mubr.bf16.mxu0 %v3575
    %7114 = vmatmul.mubr.bf16.gmra.mrb[0].mxu0 %v3574
    %v7115 = vpop.f32.mrb[0].mxu0
    %v7116 = vadd.f32 %v7073, %v7115
    %v7117 = vpop.f32.mrb[0].mxu0
    %v7118 = vadd.f32 %v7075, %v7117
    %v7119 = vpop.f32.mrb[0].mxu0
    %v7120 = vadd.f32 %v7077, %v7119
    %v7121 = vpop.f32.mrb[0].mxu0
    %v7122 = vadd.f32 %v7079, %v7121
    %7123 = vdwg.mxu0
    %7124 = vmatprep.subr.bf16.mxu0 %v5931
    %7125 = vmatpush1.bf16.msra.mxu0 %v5930
    %7126 = vmatprep.subr.bf16.mxu0 %v5939
    %7127 = vmatpush1.bf16.msra.mxu0 %v5938
    %7128 = vmatprep.subr.bf16.mxu0 %v5947
    %7129 = vmatpush1.bf16.msra.mxu0 %v5946
    %7130 = vmatprep.subr.bf16.mxu0 %v5955
    %7131 = vmatpush1.bf16.msra.mxu0 %v5954
    %7132 = vmatprep.subr.bf16.mxu0 %v5963
    %7133 = vmatpush1.bf16.msra.mxu0 %v5962
    %7134 = vmatprep.subr.bf16.mxu0 %v5971
    %7135 = vmatpush1.bf16.msra.mxu0 %v5970
    %7136 = vmatprep.subr.bf16.mxu0 %v5979
    %7137 = vmatpush1.bf16.msra.mxu0 %v5978
    %7138 = vmatprep.subr.bf16.mxu0 %v5987
    %7139 = vmatpush1.bf16.msra.mxu0 %v5986
    %7140 = vmatprep.subr.bf16.mxu0 %v5995
    %7141 = vmatpush1.bf16.msra.mxu0 %v5994
    %7142 = vmatprep.subr.bf16.mxu0 %v6003
    %7143 = vmatpush1.bf16.msra.mxu0 %v6002
    %7144 = vmatprep.subr.bf16.mxu0 %v6011
    %7145 = vmatpush1.bf16.msra.mxu0 %v6010
    %7146 = vmatprep.subr.bf16.mxu0 %v6019
    %7147 = vmatpush1.bf16.msra.mxu0 %v6018
    %7148 = vmatprep.subr.bf16.mxu0 %v6027
    %7149 = vmatpush1.bf16.msra.mxu0 %v6026
    %7150 = vmatprep.subr.bf16.mxu0 %v6035
    %7151 = vmatpush1.bf16.msra.mxu0 %v6034
    %7152 = vmatprep.subr.bf16.mxu0 %v6043
    %7153 = vmatpush1.bf16.msra.mxu0 %v6042
    %7154 = vmatprep.subr.bf16.mxu0 %v6051
    %7155 = vmatpush1.bf16.msra.mxu0 %v6050
    %7156 = vmatprep.mubr.bf16.mxu0 %v3577
    %7157 = vmatmul.mubr.bf16.gmra.mrb[0].mxu0 %v3576
    %v7158 = vpop.f32.mrb[0].mxu0
    %v7159 = vadd.f32 %v7116, %v7158
    %v7160 = vpop.f32.mrb[0].mxu0
    %v7161 = vadd.f32 %v7118, %v7160
    %v7162 = vpop.f32.mrb[0].mxu0
    %v7163 = vadd.f32 %v7120, %v7162
    %v7164 = vpop.f32.mrb[0].mxu0
    %v7165 = vadd.f32 %v7122, %v7164
    %7166 = vdwg.mxu0
    %7167 = vmatprep.subr.bf16.mxu0 %v6059
    %7168 = vmatpush1.bf16.msra.mxu0 %v6058
    %7169 = vmatprep.subr.bf16.mxu0 %v6067
    %7170 = vmatpush1.bf16.msra.mxu0 %v6066
    %7171 = vmatprep.subr.bf16.mxu0 %v6075
    %7172 = vmatpush1.bf16.msra.mxu0 %v6074
    %7173 = vmatprep.subr.bf16.mxu0 %v6083
    %7174 = vmatpush1.bf16.msra.mxu0 %v6082
    %7175 = vmatprep.subr.bf16.mxu0 %v6091
    %7176 = vmatpush1.bf16.msra.mxu0 %v6090
    %7177 = vmatprep.subr.bf16.mxu0 %v6099
    %7178 = vmatpush1.bf16.msra.mxu0 %v6098
    %7179 = vmatprep.subr.bf16.mxu0 %v6107
    %7180 = vmatpush1.bf16.msra.mxu0 %v6106
    %7181 = vmatprep.subr.bf16.mxu0 %v6115
    %7182 = vmatpush1.bf16.msra.mxu0 %v6114
    %7183 = vmatprep.subr.bf16.mxu0 %v6123
    %7184 = vmatpush1.bf16.msra.mxu0 %v6122
    %7185 = vmatprep.subr.bf16.mxu0 %v6131
    %7186 = vmatpush1.bf16.msra.mxu0 %v6130
    %7187 = vmatprep.subr.bf16.mxu0 %v6139
    %7188 = vmatpush1.bf16.msra.mxu0 %v6138
    %7189 = vmatprep.subr.bf16.mxu0 %v6147
    %7190 = vmatpush1.bf16.msra.mxu0 %v6146
    %7191 = vmatprep.subr.bf16.mxu0 %v6155
    %7192 = vmatpush1.bf16.msra.mxu0 %v6154
    %7193 = vmatprep.subr.bf16.mxu0 %v6163
    %7194 = vmatpush1.bf16.msra.mxu0 %v6162
    %7195 = vmatprep.subr.bf16.mxu0 %v6171
    %7196 = vmatpush1.bf16.msra.mxu0 %v6170
    %7197 = vmatprep.subr.bf16.mxu0 %v6179
    %7198 = vmatpush1.bf16.msra.mxu0 %v6178
    %7199 = vmatprep.mubr.bf16.mxu0 %v3579
    %7200 = vmatmul.mubr.bf16.gmra.mrb[0].mxu0 %v3578
    %v7201 = vpop.f32.mrb[0].mxu0
    %v7202 = vadd.f32 %v7159, %v7201
    %v7203 = vpop.f32.mrb[0].mxu0
    %v7204 = vadd.f32 %v7161, %v7203
    %v7205 = vpop.f32.mrb[0].mxu0
    %v7206 = vadd.f32 %v7163, %v7205
    %v7207 = vpop.f32.mrb[0].mxu0
    %v7208 = vadd.f32 %v7165, %v7207
    %7209 = vdwg.mxu0
    %7210 = vmatprep.subr.bf16.mxu0 %v5677
    %7211 = vmatpush1.bf16.msra.mxu0 %v5676
    %7212 = vmatprep.subr.bf16.mxu0 %v5685
    %7213 = vmatpush1.bf16.msra.mxu0 %v5684
    %7214 = vmatprep.subr.bf16.mxu0 %v5693
    %7215 = vmatpush1.bf16.msra.mxu0 %v5692
    %7216 = vmatprep.subr.bf16.mxu0 %v5701
    %7217 = vmatpush1.bf16.msra.mxu0 %v5700
    %7218 = vmatprep.subr.bf16.mxu0 %v5709
    %7219 = vmatpush1.bf16.msra.mxu0 %v5708
    %7220 = vmatprep.subr.bf16.mxu0 %v5717
    %7221 = vmatpush1.bf16.msra.mxu0 %v5716
    %7222 = vmatprep.subr.bf16.mxu0 %v5725
    %7223 = vmatpush1.bf16.msra.mxu0 %v5724
    %7224 = vmatprep.subr.bf16.mxu0 %v5733
    %7225 = vmatpush1.bf16.msra.mxu0 %v5732
    %7226 = vmatprep.subr.bf16.mxu0 %v5741
    %7227 = vmatpush1.bf16.msra.mxu0 %v5740
    %7228 = vmatprep.subr.bf16.mxu0 %v5749
    %7229 = vmatpush1.bf16.msra.mxu0 %v5748
    %7230 = vmatprep.subr.bf16.mxu0 %v5757
    %7231 = vmatpush1.bf16.msra.mxu0 %v5756
    %7232 = vmatprep.subr.bf16.mxu0 %v5765
    %7233 = vmatpush1.bf16.msra.mxu0 %v5764
    %7234 = vmatprep.subr.bf16.mxu0 %v5773
    %7235 = vmatpush1.bf16.msra.mxu0 %v5772
    %7236 = vmatprep.subr.bf16.mxu0 %v5781
    %7237 = vmatpush1.bf16.msra.mxu0 %v5780
    %7238 = vmatprep.subr.bf16.mxu0 %v5789
    %7239 = vmatpush1.bf16.msra.mxu0 %v5788
    %7240 = vmatprep.subr.bf16.mxu0 %v5797
    %7241 = vmatpush1.bf16.msra.mxu0 %v5796
    %7242 = vmatprep.mubr.bf16.mxu0 %v3573
    %7243 = vmatmul.mubr.bf16.gmra.mrb[0].mxu0 %v3572
    %v7244 = vpop.f32.mrb[0].mxu0
    %v7245 = vadd.f32 %v4121, %v7244
    %v7246 = vpop.f32.mrb[0].mxu0
    %v7247 = vadd.f32 %v4125, %v7246
    %v7248 = vpop.f32.mrb[0].mxu0
    %v7249 = vadd.f32 %v4121, %v7248
    %v7250 = vpop.f32.mrb[0].mxu0
    %v7251 = vadd.f32 %v4125, %v7250
    %7252 = vdwg.mxu0
    %7253 = vmatprep.subr.bf16.mxu0 %v5805
    %7254 = vmatpush1.bf16.msra.mxu0 %v5804
    %7255 = vmatprep.subr.bf16.mxu0 %v5813
    %7256 = vmatpush1.bf16.msra.mxu0 %v5812
    %7257 = vmatprep.subr.bf16.mxu0 %v5821
    %7258 = vmatpush1.bf16.msra.mxu0 %v5820
    %7259 = vmatprep.subr.bf16.mxu0 %v5829
    %7260 = vmatpush1.bf16.msra.mxu0 %v5828
    %7261 = vmatprep.subr.bf16.mxu0 %v5837
    %7262 = vmatpush1.bf16.msra.mxu0 %v5836
    %7263 = vmatprep.subr.bf16.mxu0 %v5845
    %7264 = vmatpush1.bf16.msra.mxu0 %v5844
    %7265 = vmatprep.subr.bf16.mxu0 %v5853
    %7266 = vmatpush1.bf16.msra.mxu0 %v5852
    %7267 = vmatprep.subr.bf16.mxu0 %v5861
    %7268 = vmatpush1.bf16.msra.mxu0 %v5860
    %7269 = vmatprep.subr.bf16.mxu0 %v5869
    %7270 = vmatpush1.bf16.msra.mxu0 %v5868
    %7271 = vmatprep.subr.bf16.mxu0 %v5877
    %7272 = vmatpush1.bf16.msra.mxu0 %v5876
    %7273 = vmatprep.subr.bf16.mxu0 %v5885
    %7274 = vmatpush1.bf16.msra.mxu0 %v5884
    %7275 = vmatprep.subr.bf16.mxu0 %v5893
    %7276 = vmatpush1.bf16.msra.mxu0 %v5892
    %7277 = vmatprep.subr.bf16.mxu0 %v5901
    %7278 = vmatpush1.bf16.msra.mxu0 %v5900
    %7279 = vmatprep.subr.bf16.mxu0 %v5909
    %7280 = vmatpush1.bf16.msra.mxu0 %v5908
    %7281 = vmatprep.subr.bf16.mxu0 %v5917
    %7282 = vmatpush1.bf16.msra.mxu0 %v5916
    %7283 = vmatprep.subr.bf16.mxu0 %v5925
    %7284 = vmatpush1.bf16.msra.mxu0 %v5924
    %7285 = vmatprep.mubr.bf16.mxu0 %v3575
    %7286 = vmatmul.mubr.bf16.gmra.mrb[0].mxu0 %v3574
    %v7287 = vpop.f32.mrb[0].mxu0
    %v7288 = vadd.f32 %v7245, %v7287
    %v7289 = vpop.f32.mrb[0].mxu0
    %v7290 = vadd.f32 %v7247, %v7289
    %v7291 = vpop.f32.mrb[0].mxu0
    %v7292 = vadd.f32 %v7249, %v7291
    %v7293 = vpop.f32.mrb[0].mxu0
    %v7294 = vadd.f32 %v7251, %v7293
    %7295 = vdwg.mxu0
    %7296 = vmatprep.subr.bf16.mxu0 %v5933
    %7297 = vmatpush1.bf16.msra.mxu0 %v5932
    %7298 = vmatprep.subr.bf16.mxu0 %v5941
    %7299 = vmatpush1.bf16.msra.mxu0 %v5940
    %7300 = vmatprep.subr.bf16.mxu0 %v5949
    %7301 = vmatpush1.bf16.msra.mxu0 %v5948
    %7302 = vmatprep.subr.bf16.mxu0 %v5957
    %7303 = vmatpush1.bf16.msra.mxu0 %v5956
    %7304 = vmatprep.subr.bf16.mxu0 %v5965
    %7305 = vmatpush1.bf16.msra.mxu0 %v5964
    %7306 = vmatprep.subr.bf16.mxu0 %v5973
    %7307 = vmatpush1.bf16.msra.mxu0 %v5972
    %7308 = vmatprep.subr.bf16.mxu0 %v5981
    %7309 = vmatpush1.bf16.msra.mxu0 %v5980
    %7310 = vmatprep.subr.bf16.mxu0 %v5989
    %7311 = vmatpush1.bf16.msra.mxu0 %v5988
    %7312 = vmatprep.subr.bf16.mxu0 %v5997
    %7313 = vmatpush1.bf16.msra.mxu0 %v5996
    %7314 = vmatprep.subr.bf16.mxu0 %v6005
    %7315 = vmatpush1.bf16.msra.mxu0 %v6004
    %7316 = vmatprep.subr.bf16.mxu0 %v6013
    %7317 = vmatpush1.bf16.msra.mxu0 %v6012
    %7318 = vmatprep.subr.bf16.mxu0 %v6021
    %7319 = vmatpush1.bf16.msra.mxu0 %v6020
    %7320 = vmatprep.subr.bf16.mxu0 %v6029
    %7321 = vmatpush1.bf16.msra.mxu0 %v6028
    %7322 = vmatprep.subr.bf16.mxu0 %v6037
    %7323 = vmatpush1.bf16.msra.mxu0 %v6036
    %7324 = vmatprep.subr.bf16.mxu0 %v6045
    %7325 = vmatpush1.bf16.msra.mxu0 %v6044
    %7326 = vmatprep.subr.bf16.mxu0 %v6053
    %7327 = vmatpush1.bf16.msra.mxu0 %v6052
    %7328 = vmatprep.mubr.bf16.mxu0 %v3577
    %7329 = vmatmul.mubr.bf16.gmra.mrb[0].mxu0 %v3576
    %v7330 = vpop.f32.mrb[0].mxu0
    %v7331 = vadd.f32 %v7288, %v7330
    %v7332 = vpop.f32.mrb[0].mxu0
    %v7333 = vadd.f32 %v7290, %v7332
    %v7334 = vpop.f32.mrb[0].mxu0
    %v7335 = vadd.f32 %v7292, %v7334
    %v7336 = vpop.f32.mrb[0].mxu0
    %v7337 = vadd.f32 %v7294, %v7336
    %7338 = vdwg.mxu0
    %7339 = vmatprep.subr.bf16.mxu0 %v6061
    %7340 = vmatpush1.bf16.msra.mxu0 %v6060
    %7341 = vmatprep.subr.bf16.mxu0 %v6069
    %7342 = vmatpush1.bf16.msra.mxu0 %v6068
    %7343 = vmatprep.subr.bf16.mxu0 %v6077
    %7344 = vmatpush1.bf16.msra.mxu0 %v6076
    %7345 = vmatprep.subr.bf16.mxu0 %v6085
    %7346 = vmatpush1.bf16.msra.mxu0 %v6084
    %7347 = vmatprep.subr.bf16.mxu0 %v6093
    %7348 = vmatpush1.bf16.msra.mxu0 %v6092
    %7349 = vmatprep.subr.bf16.mxu0 %v6101
    %7350 = vmatpush1.bf16.msra.mxu0 %v6100
    %7351 = vmatprep.subr.bf16.mxu0 %v6109
    %7352 = vmatpush1.bf16.msra.mxu0 %v6108
    %7353 = vmatprep.subr.bf16.mxu0 %v6117
    %7354 = vmatpush1.bf16.msra.mxu0 %v6116
    %7355 = vmatprep.subr.bf16.mxu0 %v6125
    %7356 = vmatpush1.bf16.msra.mxu0 %v6124
    %7357 = vmatprep.subr.bf16.mxu0 %v6133
    %7358 = vmatpush1.bf16.msra.mxu0 %v6132
    %7359 = vmatprep.subr.bf16.mxu0 %v6141
    %7360 = vmatpush1.bf16.msra.mxu0 %v6140
    %7361 = vmatprep.subr.bf16.mxu0 %v6149
    %7362 = vmatpush1.bf16.msra.mxu0 %v6148
    %7363 = vmatprep.subr.bf16.mxu0 %v6157
    %7364 = vmatpush1.bf16.msra.mxu0 %v6156
    %7365 = vmatprep.subr.bf16.mxu0 %v6165
    %7366 = vmatpush1.bf16.msra.mxu0 %v6164
    %7367 = vmatprep.subr.bf16.mxu0 %v6173
    %7368 = vmatpush1.bf16.msra.mxu0 %v6172
    %7369 = vmatprep.subr.bf16.mxu0 %v6181
    %7370 = vmatpush1.bf16.msra.mxu0 %v6180
    %7371 = vmatprep.mubr.bf16.mxu0 %v3579
    %7372 = vmatmul.mubr.bf16.gmra.mrb[0].mxu0 %v3578
    %v7373 = vpop.f32.mrb[0].mxu0
    %v7374 = vadd.f32 %v7331, %v7373
    %v7375 = vpop.f32.mrb[0].mxu0
    %v7376 = vadd.f32 %v7333, %v7375
    %v7377 = vpop.f32.mrb[0].mxu0
    %v7378 = vadd.f32 %v7335, %v7377
    %v7379 = vpop.f32.mrb[0].mxu0
    %v7380 = vadd.f32 %v7337, %v7379
    %7381 = vdwg.mxu0
    %v7382 = vmax.f32 %v6858, 0.0
    %v7383 = vmax.f32 %v6860, 0.0
    %v7384 = vmax.f32 %v7030, 0.0
    %v7385 = vmax.f32 %v7032, 0.0
    %v7386 = vmax.f32 %v7202, 0.0
    %v7387 = vmax.f32 %v7204, 0.0
    %v7388 = vmax.f32 %v7374, 0.0
    %v7389 = vmax.f32 %v7376, 0.0
    %v7390 = vmax.f32 %v6862, 0.0
    %v7391 = vmax.f32 %v6864, 0.0
    %v7392 = vmax.f32 %v7034, 0.0
    %v7393 = vmax.f32 %v7036, 0.0
    %v7394 = vmax.f32 %v7206, 0.0
    %v7395 = vmax.f32 %v7208, 0.0
    %v7396 = vmax.f32 %v7378, 0.0
    %v7397 = vmax.f32 %v7380, 0.0
    %v7398 = vpack.c.bf16 %v7390, %v7382
    %v7399 = vpack.c.bf16 %v7391, %v7383
    %v7400 = vpack.c.bf16 %v7392, %v7384
    %v7401 = vpack.c.bf16 %v7393, %v7385
    %v7402 = vpack.c.bf16 %v7394, %v7386
    %v7403 = vpack.c.bf16 %v7395, %v7387
    %v7404 = vpack.c.bf16 %v7396, %v7388
    %v7405 = vpack.c.bf16 %v7397, %v7389
    %v7406 = vld [vmem:[#allocation11] sm:$0xf]
    %v7407 = vld [vmem:[#allocation11 + $0x4] sm:$0xf]
    %v7408 = vld [vmem:[#allocation11 + $0x8] sm:$0xf]
    %v7409 = vld [vmem:[#allocation11 + $0xc] sm:$0xf]
    %v7410 = vld [vmem:[#allocation11 + $0x10] sm:$0xf]
    %v7411 = vld [vmem:[#allocation11 + $0x14] sm:$0xf]
    %v7412 = vld [vmem:[#allocation11 + $0x18] sm:$0xf]
    %v7413 = vld [vmem:[#allocation11 + $0x1c] sm:$0xf]
    %v7414 = vld [vmem:[#allocation11 + $0x20] sm:$0xf]
    %v7415 = vld [vmem:[#allocation11 + $0x24] sm:$0xf]
    %v7416 = vld [vmem:[#allocation11 + $0x28] sm:$0xf]
    %v7417 = vld [vmem:[#allocation11 + $0x2c] sm:$0xf]
    %v7418 = vld [vmem:[#allocation11 + $0x30] sm:$0xf]
    %v7419 = vld [vmem:[#allocation11 + $0x34] sm:$0xf]
    %v7420 = vld [vmem:[#allocation11 + $0x38] sm:$0xf]
    %v7421 = vld [vmem:[#allocation11 + $0x3c] sm:$0xf]
    %v7422 = vld [vmem:[#allocation11 + $0x40] sm:$0xf]
    %v7423 = vld [vmem:[#allocation11 + $0x44] sm:$0xf]
    %v7424 = vld [vmem:[#allocation11 + $0x48] sm:$0xf]
    %v7425 = vld [vmem:[#allocation11 + $0x4c] sm:$0xf]
    %v7426 = vld [vmem:[#allocation11 + $0x50] sm:$0xf]
    %v7427 = vld [vmem:[#allocation11 + $0x54] sm:$0xf]
    %v7428 = vld [vmem:[#allocation11 + $0x58] sm:$0xf]
    %v7429 = vld [vmem:[#allocation11 + $0x5c] sm:$0xf]
    %v7430 = vld [vmem:[#allocation11 + $0x60] sm:$0xf]
    %v7431 = vld [vmem:[#allocation11 + $0x64] sm:$0xf]
    %v7432 = vld [vmem:[#allocation11 + $0x68] sm:$0xf]
    %v7433 = vld [vmem:[#allocation11 + $0x6c] sm:$0xf]
    %v7434 = vld [vmem:[#allocation11 + $0x70] sm:$0xf]
    %v7435 = vld [vmem:[#allocation11 + $0x74] sm:$0xf]
    %v7436 = vld [vmem:[#allocation11 + $0x78] sm:$0xf]
    %v7437 = vld [vmem:[#allocation11 + $0x7c] sm:$0xf]
    %v7438 = vld [vmem:[#allocation11 + $0x80] sm:$0xf]
    %v7439 = vld [vmem:[#allocation11 + $0x84] sm:$0xf]
    %v7440 = vld [vmem:[#allocation11 + $0x88] sm:$0xf]
    %v7441 = vld [vmem:[#allocation11 + $0x8c] sm:$0xf]
    %v7442 = vld [vmem:[#allocation11 + $0x90] sm:$0xf]
    %v7443 = vld [vmem:[#allocation11 + $0x94] sm:$0xf]
    %v7444 = vld [vmem:[#allocation11 + $0x98] sm:$0xf]
    %v7445 = vld [vmem:[#allocation11 + $0x9c] sm:$0xf]
    %v7446 = vld [vmem:[#allocation11 + $0xa0] sm:$0xf]
    %v7447 = vld [vmem:[#allocation11 + $0xa4] sm:$0xf]
    %v7448 = vld [vmem:[#allocation11 + $0xa8] sm:$0xf]
    %v7449 = vld [vmem:[#allocation11 + $0xac] sm:$0xf]
    %v7450 = vld [vmem:[#allocation11 + $0xb0] sm:$0xf]
    %v7451 = vld [vmem:[#allocation11 + $0xb4] sm:$0xf]
    %v7452 = vld [vmem:[#allocation11 + $0xb8] sm:$0xf]
    %v7453 = vld [vmem:[#allocation11 + $0xbc] sm:$0xf]
    %v7454 = vld [vmem:[#allocation11 + $0xc0] sm:$0xf]
    %v7455 = vld [vmem:[#allocation11 + $0xc4] sm:$0xf]
    %v7456 = vld [vmem:[#allocation11 + $0xc8] sm:$0xf]
    %v7457 = vld [vmem:[#allocation11 + $0xcc] sm:$0xf]
    %v7458 = vld [vmem:[#allocation11 + $0xd0] sm:$0xf]
    %v7459 = vld [vmem:[#allocation11 + $0xd4] sm:$0xf]
    %v7460 = vld [vmem:[#allocation11 + $0xd8] sm:$0xf]
    %v7461 = vld [vmem:[#allocation11 + $0xdc] sm:$0xf]
    %v7462 = vld [vmem:[#allocation11 + $0xe0] sm:$0xf]
    %v7463 = vld [vmem:[#allocation11 + $0xe4] sm:$0xf]
    %v7464 = vld [vmem:[#allocation11 + $0xe8] sm:$0xf]
    %v7465 = vld [vmem:[#allocation11 + $0xec] sm:$0xf]
    %v7466 = vld [vmem:[#allocation11 + $0xf0] sm:$0xf]
    %v7467 = vld [vmem:[#allocation11 + $0xf4] sm:$0xf]
    %v7468 = vld [vmem:[#allocation11 + $0xf8] sm:$0xf]
    %v7469 = vld [vmem:[#allocation11 + $0xfc] sm:$0xf]
    %v7470 = vld [vmem:[#allocation11 + $0x100] sm:$0xf]
    %v7471 = vld [vmem:[#allocation11 + $0x104] sm:$0xf]
    %v7472 = vld [vmem:[#allocation11 + $0x108] sm:$0xf]
    %v7473 = vld [vmem:[#allocation11 + $0x10c] sm:$0xf]
    %v7474 = vld [vmem:[#allocation11 + $0x110] sm:$0xf]
    %v7475 = vld [vmem:[#allocation11 + $0x114] sm:$0xf]
    %v7476 = vld [vmem:[#allocation11 + $0x118] sm:$0xf]
    %v7477 = vld [vmem:[#allocation11 + $0x11c] sm:$0xf]
    %v7478 = vld [vmem:[#allocation11 + $0x120] sm:$0xf]
    %v7479 = vld [vmem:[#allocation11 + $0x124] sm:$0xf]
    %v7480 = vld [vmem:[#allocation11 + $0x128] sm:$0xf]
    %v7481 = vld [vmem:[#allocation11 + $0x12c] sm:$0xf]
    %v7482 = vld [vmem:[#allocation11 + $0x130] sm:$0xf]
    %v7483 = vld [vmem:[#allocation11 + $0x134] sm:$0xf]
    %v7484 = vld [vmem:[#allocation11 + $0x138] sm:$0xf]
    %v7485 = vld [vmem:[#allocation11 + $0x13c] sm:$0xf]
    %v7486 = vld [vmem:[#allocation11 + $0x140] sm:$0xf]
    %v7487 = vld [vmem:[#allocation11 + $0x144] sm:$0xf]
    %v7488 = vld [vmem:[#allocation11 + $0x148] sm:$0xf]
    %v7489 = vld [vmem:[#allocation11 + $0x14c] sm:$0xf]
    %v7490 = vld [vmem:[#allocation11 + $0x150] sm:$0xf]
    %v7491 = vld [vmem:[#allocation11 + $0x154] sm:$0xf]
    %v7492 = vld [vmem:[#allocation11 + $0x158] sm:$0xf]
    %v7493 = vld [vmem:[#allocation11 + $0x15c] sm:$0xf]
    %v7494 = vld [vmem:[#allocation11 + $0x160] sm:$0xf]
    %v7495 = vld [vmem:[#allocation11 + $0x164] sm:$0xf]
    %v7496 = vld [vmem:[#allocation11 + $0x168] sm:$0xf]
    %v7497 = vld [vmem:[#allocation11 + $0x16c] sm:$0xf]
    %v7498 = vld [vmem:[#allocation11 + $0x170] sm:$0xf]
    %v7499 = vld [vmem:[#allocation11 + $0x174] sm:$0xf]
    %v7500 = vld [vmem:[#allocation11 + $0x178] sm:$0xf]
    %v7501 = vld [vmem:[#allocation11 + $0x17c] sm:$0xf]
    %v7502 = vld [vmem:[#allocation11 + $0x180] sm:$0xf]
    %v7503 = vld [vmem:[#allocation11 + $0x184] sm:$0xf]
    %v7504 = vld [vmem:[#allocation11 + $0x188] sm:$0xf]
    %v7505 = vld [vmem:[#allocation11 + $0x18c] sm:$0xf]
    %v7506 = vld [vmem:[#allocation11 + $0x190] sm:$0xf]
    %v7507 = vld [vmem:[#allocation11 + $0x194] sm:$0xf]
    %v7508 = vld [vmem:[#allocation11 + $0x198] sm:$0xf]
    %v7509 = vld [vmem:[#allocation11 + $0x19c] sm:$0xf]
    %v7510 = vld [vmem:[#allocation11 + $0x1a0] sm:$0xf]
    %v7511 = vld [vmem:[#allocation11 + $0x1a4] sm:$0xf]
    %v7512 = vld [vmem:[#allocation11 + $0x1a8] sm:$0xf]
    %v7513 = vld [vmem:[#allocation11 + $0x1ac] sm:$0xf]
    %v7514 = vld [vmem:[#allocation11 + $0x1b0] sm:$0xf]
    %v7515 = vld [vmem:[#allocation11 + $0x1b4] sm:$0xf]
    %v7516 = vld [vmem:[#allocation11 + $0x1b8] sm:$0xf]
    %v7517 = vld [vmem:[#allocation11 + $0x1bc] sm:$0xf]
    %v7518 = vld [vmem:[#allocation11 + $0x1c0] sm:$0xf]
    %v7519 = vld [vmem:[#allocation11 + $0x1c4] sm:$0xf]
    %v7520 = vld [vmem:[#allocation11 + $0x1c8] sm:$0xf]
    %v7521 = vld [vmem:[#allocation11 + $0x1cc] sm:$0xf]
    %v7522 = vld [vmem:[#allocation11 + $0x1d0] sm:$0xf]
    %v7523 = vld [vmem:[#allocation11 + $0x1d4] sm:$0xf]
    %v7524 = vld [vmem:[#allocation11 + $0x1d8] sm:$0xf]
    %v7525 = vld [vmem:[#allocation11 + $0x1dc] sm:$0xf]
    %v7526 = vld [vmem:[#allocation11 + $0x1e0] sm:$0xf]
    %v7527 = vld [vmem:[#allocation11 + $0x1e4] sm:$0xf]
    %v7528 = vld [vmem:[#allocation11 + $0x1e8] sm:$0xf]
    %v7529 = vld [vmem:[#allocation11 + $0x1ec] sm:$0xf]
    %v7530 = vld [vmem:[#allocation11 + $0x1f0] sm:$0xf]
    %v7531 = vld [vmem:[#allocation11 + $0x1f4] sm:$0xf]
    %v7532 = vld [vmem:[#allocation11 + $0x1f8] sm:$0xf]
    %v7533 = vld [vmem:[#allocation11 + $0x1fc] sm:$0xf]
    %v7534 = vld [vmem:[#allocation13] sm:$0x1]
    %v7536 = vlaneseq
    %v7537 = vshrl.u32 %v7536, 7
    %v7538 = vsub.s32 0, %v7537
    %v7539 = vrot.slane %v7534, %v7538
    %v7669 = vunpack.c.l.b16 %v7406
    %v7670 = vunpack.c.l.b16 %v7407
    %v7671 = vunpack.c.l.b16 %v7408
    %v7672 = vunpack.c.l.b16 %v7409
    %v7673 = vunpack.c.l.b16 %v7410
    %v7674 = vunpack.c.l.b16 %v7411
    %v7675 = vunpack.c.l.b16 %v7412
    %v7676 = vunpack.c.l.b16 %v7413
    %v7677 = vunpack.c.l.b16 %v7414
    %v7678 = vunpack.c.l.b16 %v7415
    %v7679 = vunpack.c.l.b16 %v7416
    %v7680 = vunpack.c.l.b16 %v7417
    %v7681 = vunpack.c.l.b16 %v7418
    %v7682 = vunpack.c.l.b16 %v7419
    %v7683 = vunpack.c.l.b16 %v7420
    %v7684 = vunpack.c.l.b16 %v7421
    %v7685 = vunpack.c.l.b16 %v7422
    %v7686 = vunpack.c.l.b16 %v7423
    %v7687 = vunpack.c.l.b16 %v7424
    %v7688 = vunpack.c.l.b16 %v7425
    %v7689 = vunpack.c.l.b16 %v7426
    %v7690 = vunpack.c.l.b16 %v7427
    %v7691 = vunpack.c.l.b16 %v7428
    %v7692 = vunpack.c.l.b16 %v7429
    %v7693 = vunpack.c.l.b16 %v7430
    %v7694 = vunpack.c.l.b16 %v7431
    %v7695 = vunpack.c.l.b16 %v7432
    %v7696 = vunpack.c.l.b16 %v7433
    %v7697 = vunpack.c.l.b16 %v7434
    %v7698 = vunpack.c.l.b16 %v7435
    %v7699 = vunpack.c.l.b16 %v7436
    %v7700 = vunpack.c.l.b16 %v7437
    %v7701 = vunpack.c.l.b16 %v7438
    %v7702 = vunpack.c.l.b16 %v7439
    %v7703 = vunpack.c.l.b16 %v7440
    %v7704 = vunpack.c.l.b16 %v7441
    %v7705 = vunpack.c.l.b16 %v7442
    %v7706 = vunpack.c.l.b16 %v7443
    %v7707 = vunpack.c.l.b16 %v7444
    %v7708 = vunpack.c.l.b16 %v7445
    %v7709 = vunpack.c.l.b16 %v7446
    %v7710 = vunpack.c.l.b16 %v7447
    %v7711 = vunpack.c.l.b16 %v7448
    %v7712 = vunpack.c.l.b16 %v7449
    %v7713 = vunpack.c.l.b16 %v7450
    %v7714 = vunpack.c.l.b16 %v7451
    %v7715 = vunpack.c.l.b16 %v7452
    %v7716 = vunpack.c.l.b16 %v7453
    %v7717 = vunpack.c.l.b16 %v7454
    %v7718 = vunpack.c.l.b16 %v7455
    %v7719 = vunpack.c.l.b16 %v7456
    %v7720 = vunpack.c.l.b16 %v7457
    %v7721 = vunpack.c.l.b16 %v7458
    %v7722 = vunpack.c.l.b16 %v7459
    %v7723 = vunpack.c.l.b16 %v7460
    %v7724 = vunpack.c.l.b16 %v7461
    %v7725 = vunpack.c.l.b16 %v7462
    %v7726 = vunpack.c.l.b16 %v7463
    %v7727 = vunpack.c.l.b16 %v7464
    %v7728 = vunpack.c.l.b16 %v7465
    %v7729 = vunpack.c.l.b16 %v7466
    %v7730 = vunpack.c.l.b16 %v7467
    %v7731 = vunpack.c.l.b16 %v7468
    %v7732 = vunpack.c.l.b16 %v7469
    %v7733 = vunpack.c.l.b16 %v7470
    %v7734 = vunpack.c.l.b16 %v7471
    %v7735 = vunpack.c.l.b16 %v7472
    %v7736 = vunpack.c.l.b16 %v7473
    %v7737 = vunpack.c.l.b16 %v7474
    %v7738 = vunpack.c.l.b16 %v7475
    %v7739 = vunpack.c.l.b16 %v7476
    %v7740 = vunpack.c.l.b16 %v7477
    %v7741 = vunpack.c.l.b16 %v7478
    %v7742 = vunpack.c.l.b16 %v7479
    %v7743 = vunpack.c.l.b16 %v7480
    %v7744 = vunpack.c.l.b16 %v7481
    %v7745 = vunpack.c.l.b16 %v7482
    %v7746 = vunpack.c.l.b16 %v7483
    %v7747 = vunpack.c.l.b16 %v7484
    %v7748 = vunpack.c.l.b16 %v7485
    %v7749 = vunpack.c.l.b16 %v7486
    %v7750 = vunpack.c.l.b16 %v7487
    %v7751 = vunpack.c.l.b16 %v7488
    %v7752 = vunpack.c.l.b16 %v7489
    %v7753 = vunpack.c.l.b16 %v7490
    %v7754 = vunpack.c.l.b16 %v7491
    %v7755 = vunpack.c.l.b16 %v7492
    %v7756 = vunpack.c.l.b16 %v7493
    %v7757 = vunpack.c.l.b16 %v7494
    %v7758 = vunpack.c.l.b16 %v7495
    %v7759 = vunpack.c.l.b16 %v7496
    %v7760 = vunpack.c.l.b16 %v7497
    %v7761 = vunpack.c.l.b16 %v7498
    %v7762 = vunpack.c.l.b16 %v7499
    %v7763 = vunpack.c.l.b16 %v7500
    %v7764 = vunpack.c.l.b16 %v7501
    %v7765 = vunpack.c.l.b16 %v7502
    %v7766 = vunpack.c.l.b16 %v7503
    %v7767 = vunpack.c.l.b16 %v7504
    %v7768 = vunpack.c.l.b16 %v7505
    %v7769 = vunpack.c.l.b16 %v7506
    %v7770 = vunpack.c.l.b16 %v7507
    %v7771 = vunpack.c.l.b16 %v7508
    %v7772 = vunpack.c.l.b16 %v7509
    %v7773 = vunpack.c.l.b16 %v7510
    %v7774 = vunpack.c.l.b16 %v7511
    %v7775 = vunpack.c.l.b16 %v7512
    %v7776 = vunpack.c.l.b16 %v7513
    %v7777 = vunpack.c.l.b16 %v7514
    %v7778 = vunpack.c.l.b16 %v7515
    %v7779 = vunpack.c.l.b16 %v7516
    %v7780 = vunpack.c.l.b16 %v7517
    %v7781 = vunpack.c.l.b16 %v7518
    %v7782 = vunpack.c.l.b16 %v7519
    %v7783 = vunpack.c.l.b16 %v7520
    %v7784 = vunpack.c.l.b16 %v7521
    %v7785 = vunpack.c.l.b16 %v7522
    %v7786 = vunpack.c.l.b16 %v7523
    %v7787 = vunpack.c.l.b16 %v7524
    %v7788 = vunpack.c.l.b16 %v7525
    %v7789 = vunpack.c.l.b16 %v7526
    %v7790 = vunpack.c.l.b16 %v7527
    %v7791 = vunpack.c.l.b16 %v7528
    %v7792 = vunpack.c.l.b16 %v7529
    %v7793 = vunpack.c.l.b16 %v7530
    %v7794 = vunpack.c.l.b16 %v7531
    %v7795 = vunpack.c.l.b16 %v7532
    %v7796 = vunpack.c.l.b16 %v7533
    %v7797 = vpack.c.b16 %v7670, %v7669
    %v7798 = vpack.c.b16 %v7672, %v7671
    %v7799 = vpack.c.b16 %v7674, %v7673
    %v7800 = vpack.c.b16 %v7676, %v7675
    %v7801 = vpack.c.b16 %v7678, %v7677
    %v7802 = vpack.c.b16 %v7680, %v7679
    %v7803 = vpack.c.b16 %v7682, %v7681
    %v7804 = vpack.c.b16 %v7684, %v7683
    %v7805 = vpack.c.b16 %v7686, %v7685
    %v7806 = vpack.c.b16 %v7688, %v7687
    %v7807 = vpack.c.b16 %v7690, %v7689
    %v7808 = vpack.c.b16 %v7692, %v7691
    %v7809 = vpack.c.b16 %v7694, %v7693
    %v7810 = vpack.c.b16 %v7696, %v7695
    %v7811 = vpack.c.b16 %v7698, %v7697
    %v7812 = vpack.c.b16 %v7700, %v7699
    %v7813 = vpack.c.b16 %v7702, %v7701
    %v7814 = vpack.c.b16 %v7704, %v7703
    %v7815 = vpack.c.b16 %v7706, %v7705
    %v7816 = vpack.c.b16 %v7708, %v7707
    %v7817 = vpack.c.b16 %v7710, %v7709
    %v7818 = vpack.c.b16 %v7712, %v7711
    %v7819 = vpack.c.b16 %v7714, %v7713
    %v7820 = vpack.c.b16 %v7716, %v7715
    %v7821 = vpack.c.b16 %v7718, %v7717
    %v7822 = vpack.c.b16 %v7720, %v7719
    %v7823 = vpack.c.b16 %v7722, %v7721
    %v7824 = vpack.c.b16 %v7724, %v7723
    %v7825 = vpack.c.b16 %v7726, %v7725
    %v7826 = vpack.c.b16 %v7728, %v7727
    %v7827 = vpack.c.b16 %v7730, %v7729
    %v7828 = vpack.c.b16 %v7732, %v7731
    %v7829 = vpack.c.b16 %v7734, %v7733
    %v7830 = vpack.c.b16 %v7736, %v7735
    %v7831 = vpack.c.b16 %v7738, %v7737
    %v7832 = vpack.c.b16 %v7740, %v7739
    %v7833 = vpack.c.b16 %v7742, %v7741
    %v7834 = vpack.c.b16 %v7744, %v7743
    %v7835 = vpack.c.b16 %v7746, %v7745
    %v7836 = vpack.c.b16 %v7748, %v7747
    %v7837 = vpack.c.b16 %v7750, %v7749
    %v7838 = vpack.c.b16 %v7752, %v7751
    %v7839 = vpack.c.b16 %v7754, %v7753
    %v7840 = vpack.c.b16 %v7756, %v7755
    %v7841 = vpack.c.b16 %v7758, %v7757
    %v7842 = vpack.c.b16 %v7760, %v7759
    %v7843 = vpack.c.b16 %v7762, %v7761
    %v7844 = vpack.c.b16 %v7764, %v7763
    %v7845 = vpack.c.b16 %v7766, %v7765
    %v7846 = vpack.c.b16 %v7768, %v7767
    %v7847 = vpack.c.b16 %v7770, %v7769
    %v7848 = vpack.c.b16 %v7772, %v7771
    %v7849 = vpack.c.b16 %v7774, %v7773
    %v7850 = vpack.c.b16 %v7776, %v7775
    %v7851 = vpack.c.b16 %v7778, %v7777
    %v7852 = vpack.c.b16 %v7780, %v7779
    %v7853 = vpack.c.b16 %v7782, %v7781
    %v7854 = vpack.c.b16 %v7784, %v7783
    %v7855 = vpack.c.b16 %v7786, %v7785
    %v7856 = vpack.c.b16 %v7788, %v7787
    %v7857 = vpack.c.b16 %v7790, %v7789
    %v7858 = vpack.c.b16 %v7792, %v7791
    %v7859 = vpack.c.b16 %v7794, %v7793
    %v7860 = vpack.c.b16 %v7796, %v7795
    %7925 = vmatprep.subr.bf16.mxu0 0
    %7926 = vmatpush1.bf16.msra.mxu0 %v7797
    %7927 = vmatprep.subr.bf16.mxu0 0
    %7928 = vmatpush1.bf16.msra.mxu0 %v7798
    %7929 = vmatprep.subr.bf16.mxu0 0
    %7930 = vmatpush1.bf16.msra.mxu0 %v7799
    %7931 = vmatprep.subr.bf16.mxu0 0
    %7932 = vmatpush1.bf16.msra.mxu0 %v7800
    %7933 = vmatprep.subr.bf16.mxu0 0
    %7934 = vmatpush1.bf16.msra.mxu0 %v7801
    %7935 = vmatprep.subr.bf16.mxu0 0
    %7936 = vmatpush1.bf16.msra.mxu0 %v7802
    %7937 = vmatprep.subr.bf16.mxu0 0
    %7938 = vmatpush1.bf16.msra.mxu0 %v7803
    %7939 = vmatprep.subr.bf16.mxu0 0
    %7940 = vmatpush1.bf16.msra.mxu0 %v7804
    %7941 = vmatprep.subr.bf16.mxu0 0
    %7942 = vmatpush1.bf16.msra.mxu0 %v7805
    %7943 = vmatprep.subr.bf16.mxu0 0
    %7944 = vmatpush1.bf16.msra.mxu0 %v7806
    %7945 = vmatprep.subr.bf16.mxu0 0
    %7946 = vmatpush1.bf16.msra.mxu0 %v7807
    %7947 = vmatprep.subr.bf16.mxu0 0
    %7948 = vmatpush1.bf16.msra.mxu0 %v7808
    %7949 = vmatprep.subr.bf16.mxu0 0
    %7950 = vmatpush1.bf16.msra.mxu0 %v7809
    %7951 = vmatprep.subr.bf16.mxu0 0
    %7952 = vmatpush1.bf16.msra.mxu0 %v7810
    %7953 = vmatprep.subr.bf16.mxu0 0
    %7954 = vmatpush1.bf16.msra.mxu0 %v7811
    %7955 = vmatprep.subr.bf16.mxu0 0
    %7956 = vmatpush1.bf16.msra.mxu0 %v7812
    %7957 = vmatprep.mubr.bf16.mxu0 %v7399
    %7958 = vmatmul.mubr.bf16.gmra.mrb[0].mxu0 %v7398
    %v7959 = vpop.f32.mrb[0].mxu0
    %v7960 = vadd.f32 %v7539, %v7959
    %v7961 = vpop.f32.mrb[0].mxu0
    %v7962 = vpop.f32.mrb[0].mxu0
    %v7963 = vadd.f32 %v7539, %v7962
    %v7964 = vpop.f32.mrb[0].mxu0
    %7965 = vdwg.mxu0
    %7966 = vmatprep.subr.bf16.mxu0 0
    %7967 = vmatpush1.bf16.msra.mxu0 %v7813
    %7968 = vmatprep.subr.bf16.mxu0 0
    %7969 = vmatpush1.bf16.msra.mxu0 %v7814
    %7970 = vmatprep.subr.bf16.mxu0 0
    %7971 = vmatpush1.bf16.msra.mxu0 %v7815
    %7972 = vmatprep.subr.bf16.mxu0 0
    %7973 = vmatpush1.bf16.msra.mxu0 %v7816
    %7974 = vmatprep.subr.bf16.mxu0 0
    %7975 = vmatpush1.bf16.msra.mxu0 %v7817
    %7976 = vmatprep.subr.bf16.mxu0 0
    %7977 = vmatpush1.bf16.msra.mxu0 %v7818
    %7978 = vmatprep.subr.bf16.mxu0 0
    %7979 = vmatpush1.bf16.msra.mxu0 %v7819
    %7980 = vmatprep.subr.bf16.mxu0 0
    %7981 = vmatpush1.bf16.msra.mxu0 %v7820
    %7982 = vmatprep.subr.bf16.mxu0 0
    %7983 = vmatpush1.bf16.msra.mxu0 %v7821
    %7984 = vmatprep.subr.bf16.mxu0 0
    %7985 = vmatpush1.bf16.msra.mxu0 %v7822
    %7986 = vmatprep.subr.bf16.mxu0 0
    %7987 = vmatpush1.bf16.msra.mxu0 %v7823
    %7988 = vmatprep.subr.bf16.mxu0 0
    %7989 = vmatpush1.bf16.msra.mxu0 %v7824
    %7990 = vmatprep.subr.bf16.mxu0 0
    %7991 = vmatpush1.bf16.msra.mxu0 %v7825
    %7992 = vmatprep.subr.bf16.mxu0 0
    %7993 = vmatpush1.bf16.msra.mxu0 %v7826
    %7994 = vmatprep.subr.bf16.mxu0 0
    %7995 = vmatpush1.bf16.msra.mxu0 %v7827
    %7996 = vmatprep.subr.bf16.mxu0 0
    %7997 = vmatpush1.bf16.msra.mxu0 %v7828
    %7998 = vmatprep.mubr.bf16.mxu0 %v7401
    %7999 = vmatmul.mubr.bf16.gmra.mrb[0].mxu0 %v7400
    %v8000 = vpop.f32.mrb[0].mxu0
    %v8001 = vadd.f32 %v7960, %v8000
    %v8002 = vpop.f32.mrb[0].mxu0
    %v8003 = vpop.f32.mrb[0].mxu0
    %v8004 = vadd.f32 %v7963, %v8003
    %v8005 = vpop.f32.mrb[0].mxu0
    %8006 = vdwg.mxu0
    %8007 = vmatprep.subr.bf16.mxu0 0
    %8008 = vmatpush1.bf16.msra.mxu0 %v7829
    %8009 = vmatprep.subr.bf16.mxu0 0
    %8010 = vmatpush1.bf16.msra.mxu0 %v7830
    %8011 = vmatprep.subr.bf16.mxu0 0
    %8012 = vmatpush1.bf16.msra.mxu0 %v7831
    %8013 = vmatprep.subr.bf16.mxu0 0
    %8014 = vmatpush1.bf16.msra.mxu0 %v7832
    %8015 = vmatprep.subr.bf16.mxu0 0
    %8016 = vmatpush1.bf16.msra.mxu0 %v7833
    %8017 = vmatprep.subr.bf16.mxu0 0
    %8018 = vmatpush1.bf16.msra.mxu0 %v7834
    %8019 = vmatprep.subr.bf16.mxu0 0
    %8020 = vmatpush1.bf16.msra.mxu0 %v7835
    %8021 = vmatprep.subr.bf16.mxu0 0
    %8022 = vmatpush1.bf16.msra.mxu0 %v7836
    %8023 = vmatprep.subr.bf16.mxu0 0
    %8024 = vmatpush1.bf16.msra.mxu0 %v7837
    %8025 = vmatprep.subr.bf16.mxu0 0
    %8026 = vmatpush1.bf16.msra.mxu0 %v7838
    %8027 = vmatprep.subr.bf16.mxu0 0
    %8028 = vmatpush1.bf16.msra.mxu0 %v7839
    %8029 = vmatprep.subr.bf16.mxu0 0
    %8030 = vmatpush1.bf16.msra.mxu0 %v7840
    %8031 = vmatprep.subr.bf16.mxu0 0
    %8032 = vmatpush1.bf16.msra.mxu0 %v7841
    %8033 = vmatprep.subr.bf16.mxu0 0
    %8034 = vmatpush1.bf16.msra.mxu0 %v7842
    %8035 = vmatprep.subr.bf16.mxu0 0
    %8036 = vmatpush1.bf16.msra.mxu0 %v7843
    %8037 = vmatprep.subr.bf16.mxu0 0
    %8038 = vmatpush1.bf16.msra.mxu0 %v7844
    %8039 = vmatprep.mubr.bf16.mxu0 %v7403
    %8040 = vmatmul.mubr.bf16.gmra.mrb[0].mxu0 %v7402
    %v8041 = vpop.f32.mrb[0].mxu0
    %v8042 = vadd.f32 %v8001, %v8041
    %v8043 = vpop.f32.mrb[0].mxu0
    %v8044 = vpop.f32.mrb[0].mxu0
    %v8045 = vadd.f32 %v8004, %v8044
    %v8046 = vpop.f32.mrb[0].mxu0
    %8047 = vdwg.mxu0
    %8048 = vmatprep.subr.bf16.mxu0 0
    %8049 = vmatpush1.bf16.msra.mxu0 %v7845
    %8050 = vmatprep.subr.bf16.mxu0 0
    %8051 = vmatpush1.bf16.msra.mxu0 %v7846
    %8052 = vmatprep.subr.bf16.mxu0 0
    %8053 = vmatpush1.bf16.msra.mxu0 %v7847
    %8054 = vmatprep.subr.bf16.mxu0 0
    %8055 = vmatpush1.bf16.msra.mxu0 %v7848
    %8056 = vmatprep.subr.bf16.mxu0 0
    %8057 = vmatpush1.bf16.msra.mxu0 %v7849
    %8058 = vmatprep.subr.bf16.mxu0 0
    %8059 = vmatpush1.bf16.msra.mxu0 %v7850
    %8060 = vmatprep.subr.bf16.mxu0 0
    %8061 = vmatpush1.bf16.msra.mxu0 %v7851
    %8062 = vmatprep.subr.bf16.mxu0 0
    %8063 = vmatpush1.bf16.msra.mxu0 %v7852
    %8064 = vmatprep.subr.bf16.mxu0 0
    %8065 = vmatpush1.bf16.msra.mxu0 %v7853
    %8066 = vmatprep.subr.bf16.mxu0 0
    %8067 = vmatpush1.bf16.msra.mxu0 %v7854
    %8068 = vmatprep.subr.bf16.mxu0 0
    %8069 = vmatpush1.bf16.msra.mxu0 %v7855
    %8070 = vmatprep.subr.bf16.mxu0 0
    %8071 = vmatpush1.bf16.msra.mxu0 %v7856
    %8072 = vmatprep.subr.bf16.mxu0 0
    %8073 = vmatpush1.bf16.msra.mxu0 %v7857
    %8074 = vmatprep.subr.bf16.mxu0 0
    %8075 = vmatpush1.bf16.msra.mxu0 %v7858
    %8076 = vmatprep.subr.bf16.mxu0 0
    %8077 = vmatpush1.bf16.msra.mxu0 %v7859
    %8078 = vmatprep.subr.bf16.mxu0 0
    %8079 = vmatpush1.bf16.msra.mxu0 %v7860
    %8080 = vmatprep.mubr.bf16.mxu0 %v7405
    %8081 = vmatmul.mubr.bf16.gmra.mrb[0].mxu0 %v7404
    %v8082 = vpop.f32.mrb[0].mxu0
    %v8083 = vadd.f32 %v8042, %v8082
    %v8084 = vpop.f32.mrb[0].mxu0
    %v8085 = vpop.f32.mrb[0].mxu0
    %v8086 = vadd.f32 %v8045, %v8085
    %v8087 = vpop.f32.mrb[0].mxu0
    %8088 = vdwg.mxu0
    %v8089 = vpack.c.bf16 %v8086, %v8083
    %v8091 = vunpack.c.l.b16 %v8089
    %v8092 = vunpack.c.h.b16 %v8089
    %v8093 = vpack.c.b16 %v8091, %v8091
    %v8094 = vpack.c.b16 %v8092, %v8092
    %8097 = vst [vmem:[#allocation14] sm:$0xf] %v8093
    %8098 = vst [vmem:[#allocation14 + $0x4] sm:$0xf] %v8094
    // Predicated region
    $region58: #{tpu_custom_call.1} parent=1 // pred_check
      _
    $region59: #{tpu_custom_call.1} parent=1 // pred_check_branch
      %8100 = sbr.rel (0) target = $region61
    $region60: #{tpu_custom_call.1} parent=1 // pred_region
      %s8102 = ssub.s32 128, 128
      %8103 = vsyncadd [#allocation4], %s8102
      %s8104 = sshll.u32 [#allocation14], 4
      %s8105 = int_to_ptr.vmem [resolvable:$true] %s8104
      %8110 = dma.vmem_to_hbm [thread:$0]  %s8105, 128, %s7, [#allocation4], 64, 64, 4
    $region61: #{tpu_custom_call.1} parent=1 // pred_fallthru
      _
    // Predicated region
    $region62: #{tpu_custom_call.1} parent=1 // pred_check
      _
    $region63: #{tpu_custom_call.1} parent=1 // pred_check_branch
      %8112 = sbr.rel (0) target = $region65
    $region64: #{tpu_custom_call.1} parent=1 // pred_region
      %8113 = dma.done [#allocation4], 128
    $region65: #{tpu_custom_call.1} parent=1 // pred_fallthru
      _
    %8114 = vsyncpa [#allocation3], 1
    %8115 = vsyncpa [#allocation6], 1
    %8116 = vsyncpa [#allocation9], 1
    %8117 = vsyncpa [#allocation12], 1
    %8118 = vsyncpa [#allocation4], 1

</llo_original>
